<compile_context>
chip_gen: v6e
topology: v6e:2x2x1
jax: 0.10.0
libtpu: 0.0.40
codegen_flags: <defaults>
</compile_context>

<pallas_src>
import jax
import jax.numpy as jnp
from jax.experimental import pallas as pl
from jax.experimental.pallas import tpu as pltpu

# (fan_in, fan_out) per layer, matching the PyTorch module.
_LAYER_DIMS = [(784, 660), (660, 480), (480, 350), (350, 120), (120, 62)]
_LANE = 128
_SUBLANE = 8


def _round_up(x, m):
    return (x + m - 1) // m * m


# Lane-padded (K, N) per layer: [(896,768),(768,512),(512,384),(384,128),(128,128)]
_PADDED_DIMS = [(_round_up(k, _LANE), _round_up(n, _LANE)) for k, n in _LAYER_DIMS]


# ----------------------------- fused kernel ---------------------------------


def _fused_mlp_kernel(x_ref,
                      w1_ref, b1_ref, w2_ref, b2_ref, w3_ref, b3_ref,
                      w4_ref, b4_ref, w5_ref, b5_ref,
                      o_ref):
    """One batch tile through all 5 layers; activations never leave VMEM."""

    def layer(h, w_ref, b_ref, relu):
        # bf16 (or f32) operands into the MXU, f32 accumulation.
        y = jnp.dot(h.astype(w_ref.dtype), w_ref[...],
                    preferred_element_type=jnp.float32)
        # Bias add / ReLU stay on the VPU in f32 (v5e VPU/EUP have no bf16).
        y = y + b_ref[...].astype(jnp.float32)
        return jnp.maximum(y, 0.0) if relu else y

    h = x_ref[...]                       # already in the matmul input dtype
    h = layer(h, w1_ref, b1_ref, True)
    h = layer(h, w2_ref, b2_ref, True)
    h = layer(h, w3_ref, b3_ref, True)
    h = layer(h, w4_ref, b4_ref, True)
    o_ref[...] = layer(h, w5_ref, b5_ref, False).astype(o_ref.dtype)


def _vmem_limit_bytes(batch_tile, compute_dtype):
    """Explicit scoped-VMEM budget from the real footprint (+headroom)."""
    itemsize = jnp.dtype(compute_dtype).itemsize
    # Worst case: weights double-buffered (covers the Buffered(1) fallback).
    weights = 2 * sum(kp * np_ + np_ for kp, np_ in _PADDED_DIMS) * itemsize
    x_tile = 2 * batch_tile * _PADDED_DIMS[0][0] * itemsize       # double-buffered
    o_tile = 2 * batch_tile * _PADDED_DIMS[-1][1] * 4             # double-buffered
    acts = batch_tile * sum(np_ for _, np_ in _PADDED_DIMS) * 4   # f32 layer temps
    total = weights + x_tile + o_tile + acts
    # 1.5x + 8MB headroom for compiler scratch; cap under v7x's 64MiB/TC VMEM.
    return min(int(total * 1.5) + (8 << 20), 48 << 20)


def fused_mlp(x2d, padded_params, *, batch_tile=None, single_buffer_weights=True):
    """x2d: (B, 784) f32.  padded_params: list of (W (Kp,Np), b (1,Np)).

    Returns (B, 62) f32."""
    B, K_in = x2d.shape
    K0 = _PADDED_DIMS[0][0]
    NL = _PADDED_DIMS[-1][1]
    compute_dtype = padded_params[0][0].dtype   # bf16 by default, f32 optional

    if batch_tile is None:
        if B < 128:
            # Very small batch: one sublane-rounded tile (accept single-TC).
            batch_tile = _round_up(max(B, 1), _SUBLANE)
        elif B < 1024:
            # Mid-size batch: ~half the rows per tile so the "parallel" grid
            # axis has >= 2 steps and shards across both TCs on v7x.
            batch_tile = _round_up(pl.cdiv(B, 2), _SUBLANE)
        else:
            # Large batch: big tiles keep the MXU fed across the 5-layer chain
            # and amortize the ~0.35us per-step pipeline overhead.
            batch_tile = 512
    Bp = _round_up(B, batch_tile)

    # Pad rows to the tile multiple and columns 784 -> 896 (lane-dense), fused
    # with the cast to the matmul input dtype (halves the x-tile DMA in bf16).
    # Zero padding is numerically exact through matmul + ReLU.
    xp = jnp.zeros((Bp, K0), compute_dtype).at[:B, :K_in].set(
        x2d.astype(compute_dtype))

    flat_params = []
    for w, b in padded_params:
        flat_params += [w, b]

    vmem_limit = _vmem_limit_bytes(batch_tile, compute_dtype)

    def call(weight_mode):
        def wspec(shape):
            # Constant block index -> weights/biases DMA'd once, VMEM-resident
            # across all batch tiles.  Buffered(1) = single buffer (no point
            # double-buffering a constant-index operand).
            if weight_mode is None:
                return pl.BlockSpec(shape, lambda i: (0, 0))
            return pl.BlockSpec(shape, lambda i: (0, 0), pipeline_mode=weight_mode)

        in_specs = [pl.BlockSpec((batch_tile, K0), lambda i: (i, 0))]
        for kp, np_ in _PADDED_DIMS:
            in_specs += [wspec((kp, np_)), wspec((1, np_))]

        return pl.pallas_call(
            _fused_mlp_kernel,
            out_shape=jax.ShapeDtypeStruct((Bp, NL), jnp.float32),
            grid=(Bp // batch_tile,),
            in_specs=in_specs,
            out_specs=pl.BlockSpec((batch_tile, NL), lambda i: (i, 0)),
            compiler_params=pltpu.CompilerParams(
                dimension_semantics=("parallel",),
                vmem_limit_bytes=vmem_limit,
            ),
        )(xp, *flat_params)

    if single_buffer_weights and hasattr(pl, "Buffered"):
        try:
            out = call(pl.Buffered(1))
        except Exception:
            # pipeline_mode / Buffered(1) not supported on this jax build:
            # fall back to the default double-buffered (still correct) path.
            out = call(None)
    else:
        out = call(None)

    # Strip batch-row and lane padding (62 real output columns).
    return out[:B, :_LAYER_DIMS[-1][1]]


# --------------------- parameters (mirror nn.Linear init) -------------------


def init_params(key):
    """Unpadded f32 params, stored pre-transposed as (in, out) == PyTorch weight.T."""
    params = []
    for fan_in, fan_out in _LAYER_DIMS:
        key, kw, kb = jax.random.split(key, 3)
        bound = 1.0 / jnp.sqrt(jnp.float32(fan_in))
        w = jax.random.uniform(kw, (fan_in, fan_out), jnp.float32,
                               minval=-bound, maxval=bound)
        b = jax.random.uniform(kb, (fan_out,), jnp.float32,
                               minval=-bound, maxval=bound)
        params.append((w, b))
    return params


def pad_params(params, param_dtype=jnp.bfloat16):
    """Zero-pad weights/biases to lane multiples of 128 and cast to param_dtype.

    bf16 (default) halves resident weight bytes and runs MXU-native; the kernel
    still accumulates in f32.  Use param_dtype=jnp.float32 for the bit-accurate
    path."""
    padded = []
    for (w, b), (kp, np_) in zip(params, _PADDED_DIMS):
        k, n = w.shape
        wp = jnp.zeros((kp, np_), param_dtype).at[:k, :n].set(w.astype(param_dtype))
        bp = jnp.zeros((1, np_), param_dtype).at[0, :n].set(b.astype(param_dtype))
        padded.append((wp, bp))
    return padded


def standard_neural_net_forward(padded_params, x, *, batch_tile=None,
                                single_buffer_weights=True):
    # x: any shape whose trailing dims flatten to 784 (e.g. (B, 1, 28, 28)).
    h = x.reshape(-1, _LAYER_DIMS[0][0])        # == x.view(-1, 784)
    return fused_mlp(h, padded_params, batch_tile=batch_tile,
                     single_buffer_weights=single_buffer_weights)


def _reference_forward(params, x):
    h = x.reshape(-1, _LAYER_DIMS[0][0])
    for idx, (w, b) in enumerate(params):
        h = h @ w + b
        if idx < len(params) - 1:
            h = jnp.maximum(h, 0.0)
    return h


if __name__ == "__main__":
    key = jax.random.PRNGKey(0)
    key_params, key_x, key_xb = jax.random.split(key, 3)

    params = init_params(key_params)

    # MNIST-like input: (batch, 1, 28, 28) -> flattened to (batch, 784).
    x = jax.random.normal(key_x, (8, 1, 28, 28), dtype=jnp.float32)
    ref = jax.block_until_ready(_reference_forward(params, x))

    # 1) Default bf16 compute path (MXU-native) -- loose tolerance vs f32 ref.
    bf16_params = pad_params(params, param_dtype=jnp.bfloat16)
    out_bf16 = jax.block_until_ready(standard_neural_net_forward(bf16_params, x))
    assert out_bf16.shape == (8, 62), out_bf16.shape
    assert jnp.allclose(out_bf16, ref, atol=5e-2, rtol=5e-2), "bf16 path mismatch"

    # 2) f32 parameter path -- matches the PyTorch-f32 module numerics tightly.
    f32_params = pad_params(params, param_dtype=jnp.float32)
    out_f32 = jax.block_until_ready(standard_neural_net_forward(f32_params, x))
    assert jnp.allclose(out_f32, ref, atol=1e-4, rtol=1e-4), "f32 path mismatch"

    # 3) Multi-tile batch: exercises grid > 1 ("parallel" megacore axis),
    #    mid-size tile heuristic, and batch-row padding/stripping.
    xb = jax.random.normal(key_xb, (200, 784), dtype=jnp.float32)
    refb = jax.block_until_ready(_reference_forward(params, xb))
    outb = jax.block_until_ready(standard_neural_net_forward(bf16_params, xb))
    assert outb.shape == (200, 62), outb.shape
    assert jnp.allclose(outb, refb, atol=5e-2, rtol=5e-2), "batched bf16 mismatch"

    print("KERNEL_OK")
</pallas_src>

<mosaic_0001>
module attributes {stable_mosaic.version = 11 : i64} {
  func.func @_fused_mlp_kernel(%arg0: i32, %arg1: memref<8x896xbf16, #tpu.memory_space<vmem>>, %arg2: memref<896x768xbf16, #tpu.memory_space<vmem>>, %arg3: memref<1x768xbf16, #tpu.memory_space<vmem>>, %arg4: memref<768x512xbf16, #tpu.memory_space<vmem>>, %arg5: memref<1x512xbf16, #tpu.memory_space<vmem>>, %arg6: memref<512x384xbf16, #tpu.memory_space<vmem>>, %arg7: memref<1x384xbf16, #tpu.memory_space<vmem>>, %arg8: memref<384x128xbf16, #tpu.memory_space<vmem>>, %arg9: memref<1x128xbf16, #tpu.memory_space<vmem>>, %arg10: memref<128x128xbf16, #tpu.memory_space<vmem>>, %arg11: memref<1x128xbf16, #tpu.memory_space<vmem>>, %arg12: memref<8x128xf32, #tpu.memory_space<vmem>>) attributes {dimension_semantics = [#tpu.dimension_semantics<parallel>], iteration_bounds = array<i64: 1>, scalar_prefetch = 0 : i64, scratch_operands = 0 : i64, tpu.core_type = #tpu.core_type<tc>, window_params = [{transform_indices = @transform_0, window_bounds = array<i64: 8, 896>}, {pipeline_mode = #tpu.pipeline_mode<synchronous>, transform_indices = @transform_1, window_bounds = array<i64: 896, 768>}, {pipeline_mode = #tpu.pipeline_mode<synchronous>, transform_indices = @transform_2, window_bounds = array<i64: 1, 768>}, {pipeline_mode = #tpu.pipeline_mode<synchronous>, transform_indices = @transform_3, window_bounds = array<i64: 768, 512>}, {pipeline_mode = #tpu.pipeline_mode<synchronous>, transform_indices = @transform_4, window_bounds = array<i64: 1, 512>}, {pipeline_mode = #tpu.pipeline_mode<synchronous>, transform_indices = @transform_5, window_bounds = array<i64: 512, 384>}, {pipeline_mode = #tpu.pipeline_mode<synchronous>, transform_indices = @transform_6, window_bounds = array<i64: 1, 384>}, {pipeline_mode = #tpu.pipeline_mode<synchronous>, transform_indices = @transform_7, window_bounds = array<i64: 384, 128>}, {pipeline_mode = #tpu.pipeline_mode<synchronous>, transform_indices = @transform_8, window_bounds = array<i64: 1, 128>}, {pipeline_mode = #tpu.pipeline_mode<synchronous>, transform_indices = @transform_9, window_bounds = array<i64: 128, 128>}, {pipeline_mode = #tpu.pipeline_mode<synchronous>, transform_indices = @transform_10, window_bounds = array<i64: 1, 128>}, {transform_indices = @transform_11, window_bounds = array<i64: 8, 128>}]} {
    %c0 = arith.constant 0 : index
    %c0_0 = arith.constant 0 : index
    %0 = vector.load %arg1[%c0, %c0_0] : memref<8x896xbf16, #tpu.memory_space<vmem>>, vector<8x896xbf16>
    %c0_1 = arith.constant 0 : index
    %c0_2 = arith.constant 0 : index
    %1 = vector.load %arg2[%c0_1, %c0_2] : memref<896x768xbf16, #tpu.memory_space<vmem>>, vector<896x768xbf16>
    %cst = arith.constant dense<0.000000e+00> : vector<8x768xf32>
    %2 = tpu.matmul %0, %1, %cst {dimension_numbers = #tpu.dot_dimension_numbers<[1], [0], [0], [1], [0, 0, 1, 1], [], []>} : vector<8x896xbf16>, vector<896x768xbf16>, vector<8x768xf32> -> vector<8x768xf32>
    %c0_3 = arith.constant 0 : index
    %c0_4 = arith.constant 0 : index
    %3 = vector.load %arg3[%c0_3, %c0_4] : memref<1x768xbf16, #tpu.memory_space<vmem>>, vector<1x768xbf16>
    %4 = arith.extf %3 : vector<1x768xbf16> to vector<1x768xf32>
    %5 = vector.broadcast %4 : vector<1x768xf32> to vector<8x768xf32>
    %6 = arith.addf %2, %5 : vector<8x768xf32>
    %cst_5 = arith.constant 0.000000e+00 : f32
    %7 = vector.broadcast %cst_5 : f32 to vector<8x768xf32>
    %8 = arith.maximumf %6, %7 : vector<8x768xf32>
    %9 = arith.truncf %8 : vector<8x768xf32> to vector<8x768xbf16>
    %c0_6 = arith.constant 0 : index
    %c0_7 = arith.constant 0 : index
    %10 = vector.load %arg4[%c0_6, %c0_7] : memref<768x512xbf16, #tpu.memory_space<vmem>>, vector<768x512xbf16>
    %cst_8 = arith.constant dense<0.000000e+00> : vector<8x512xf32>
    %11 = tpu.matmul %9, %10, %cst_8 {dimension_numbers = #tpu.dot_dimension_numbers<[1], [0], [0], [1], [0, 0, 1, 1], [], []>} : vector<8x768xbf16>, vector<768x512xbf16>, vector<8x512xf32> -> vector<8x512xf32>
    %c0_9 = arith.constant 0 : index
    %c0_10 = arith.constant 0 : index
    %12 = vector.load %arg5[%c0_9, %c0_10] : memref<1x512xbf16, #tpu.memory_space<vmem>>, vector<1x512xbf16>
    %13 = arith.extf %12 : vector<1x512xbf16> to vector<1x512xf32>
    %14 = vector.broadcast %13 : vector<1x512xf32> to vector<8x512xf32>
    %15 = arith.addf %11, %14 : vector<8x512xf32>
    %cst_11 = arith.constant 0.000000e+00 : f32
    %16 = vector.broadcast %cst_11 : f32 to vector<8x512xf32>
    %17 = arith.maximumf %15, %16 : vector<8x512xf32>
    %18 = arith.truncf %17 : vector<8x512xf32> to vector<8x512xbf16>
    %c0_12 = arith.constant 0 : index
    %c0_13 = arith.constant 0 : index
    %19 = vector.load %arg6[%c0_12, %c0_13] : memref<512x384xbf16, #tpu.memory_space<vmem>>, vector<512x384xbf16>
    %cst_14 = arith.constant dense<0.000000e+00> : vector<8x384xf32>
    %20 = tpu.matmul %18, %19, %cst_14 {dimension_numbers = #tpu.dot_dimension_numbers<[1], [0], [0], [1], [0, 0, 1, 1], [], []>} : vector<8x512xbf16>, vector<512x384xbf16>, vector<8x384xf32> -> vector<8x384xf32>
    %c0_15 = arith.constant 0 : index
    %c0_16 = arith.constant 0 : index
    %21 = vector.load %arg7[%c0_15, %c0_16] : memref<1x384xbf16, #tpu.memory_space<vmem>>, vector<1x384xbf16>
    %22 = arith.extf %21 : vector<1x384xbf16> to vector<1x384xf32>
    %23 = vector.broadcast %22 : vector<1x384xf32> to vector<8x384xf32>
    %24 = arith.addf %20, %23 : vector<8x384xf32>
    %cst_17 = arith.constant 0.000000e+00 : f32
    %25 = vector.broadcast %cst_17 : f32 to vector<8x384xf32>
    %26 = arith.maximumf %24, %25 : vector<8x384xf32>
    %27 = arith.truncf %26 : vector<8x384xf32> to vector<8x384xbf16>
    %c0_18 = arith.constant 0 : index
    %c0_19 = arith.constant 0 : index
    %28 = vector.load %arg8[%c0_18, %c0_19] : memref<384x128xbf16, #tpu.memory_space<vmem>>, vector<384x128xbf16>
    %cst_20 = arith.constant dense<0.000000e+00> : vector<8x128xf32>
    %29 = tpu.matmul %27, %28, %cst_20 {dimension_numbers = #tpu.dot_dimension_numbers<[1], [0], [0], [1], [0, 0, 1, 1], [], []>} : vector<8x384xbf16>, vector<384x128xbf16>, vector<8x128xf32> -> vector<8x128xf32>
    %c0_21 = arith.constant 0 : index
    %c0_22 = arith.constant 0 : index
    %30 = vector.load %arg9[%c0_21, %c0_22] : memref<1x128xbf16, #tpu.memory_space<vmem>>, vector<1x128xbf16>
    %31 = arith.extf %30 : vector<1x128xbf16> to vector<1x128xf32>
    %32 = vector.broadcast %31 : vector<1x128xf32> to vector<8x128xf32>
    %33 = arith.addf %29, %32 : vector<8x128xf32>
    %cst_23 = arith.constant 0.000000e+00 : f32
    %34 = vector.broadcast %cst_23 : f32 to vector<8x128xf32>
    %35 = arith.maximumf %33, %34 : vector<8x128xf32>
    %36 = arith.truncf %35 : vector<8x128xf32> to vector<8x128xbf16>
    %c0_24 = arith.constant 0 : index
    %c0_25 = arith.constant 0 : index
    %37 = vector.load %arg10[%c0_24, %c0_25] : memref<128x128xbf16, #tpu.memory_space<vmem>>, vector<128x128xbf16>
    %cst_26 = arith.constant dense<0.000000e+00> : vector<8x128xf32>
    %38 = tpu.matmul %36, %37, %cst_26 {dimension_numbers = #tpu.dot_dimension_numbers<[1], [0], [0], [1], [0, 0, 1, 1], [], []>} : vector<8x128xbf16>, vector<128x128xbf16>, vector<8x128xf32> -> vector<8x128xf32>
    %c0_27 = arith.constant 0 : index
    %c0_28 = arith.constant 0 : index
    %39 = vector.load %arg11[%c0_27, %c0_28] : memref<1x128xbf16, #tpu.memory_space<vmem>>, vector<1x128xbf16>
    %40 = arith.extf %39 : vector<1x128xbf16> to vector<1x128xf32>
    %41 = vector.broadcast %40 : vector<1x128xf32> to vector<8x128xf32>
    %42 = arith.addf %38, %41 : vector<8x128xf32>
    %c0_29 = arith.constant 0 : index
    %c0_30 = arith.constant 0 : index
    %43 = vector.load %arg12[%c0_29, %c0_30] : memref<8x128xf32, #tpu.memory_space<vmem>>, vector<8x128xf32>
    tpu.vector_store %arg12[%c0_29, %c0_30], %42 {strides = array<i32>} : memref<8x128xf32, #tpu.memory_space<vmem>>, vector<8x128xf32>,
    return
  }
  func.func @transform_0(%arg0: i32) -> (i32, i32) {
    %c0_i32 = arith.constant 0 : i32
    %c0_i32_0 = arith.constant 0 : i32
    return %arg0, %c0_i32 : i32, i32
  }
  func.func @transform_1(%arg0: i32) -> (i32, i32) {
    %c0_i32 = arith.constant 0 : i32
    %c0_i32_0 = arith.constant 0 : i32
    %c0_i32_1 = arith.constant 0 : i32
    return %c0_i32, %c0_i32_0 : i32, i32
  }
  func.func @transform_2(%arg0: i32) -> (i32, i32) {
    %c0_i32 = arith.constant 0 : i32
    %c0_i32_0 = arith.constant 0 : i32
    %c0_i32_1 = arith.constant 0 : i32
    return %c0_i32, %c0_i32_0 : i32, i32
  }
  func.func @transform_3(%arg0: i32) -> (i32, i32) {
    %c0_i32 = arith.constant 0 : i32
    %c0_i32_0 = arith.constant 0 : i32
    %c0_i32_1 = arith.constant 0 : i32
    return %c0_i32, %c0_i32_0 : i32, i32
  }
  func.func @transform_4(%arg0: i32) -> (i32, i32) {
    %c0_i32 = arith.constant 0 : i32
    %c0_i32_0 = arith.constant 0 : i32
    %c0_i32_1 = arith.constant 0 : i32
    return %c0_i32, %c0_i32_0 : i32, i32
  }
  func.func @transform_5(%arg0: i32) -> (i32, i32) {
    %c0_i32 = arith.constant 0 : i32
    %c0_i32_0 = arith.constant 0 : i32
    %c0_i32_1 = arith.constant 0 : i32
    return %c0_i32, %c0_i32_0 : i32, i32
  }
  func.func @transform_6(%arg0: i32) -> (i32, i32) {
    %c0_i32 = arith.constant 0 : i32
    %c0_i32_0 = arith.constant 0 : i32
    %c0_i32_1 = arith.constant 0 : i32
    return %c0_i32, %c0_i32_0 : i32, i32
  }
  func.func @transform_7(%arg0: i32) -> (i32, i32) {
    %c0_i32 = arith.constant 0 : i32
    %c0_i32_0 = arith.constant 0 : i32
    %c0_i32_1 = arith.constant 0 : i32
    return %c0_i32, %c0_i32_0 : i32, i32
  }
  func.func @transform_8(%arg0: i32) -> (i32, i32) {
    %c0_i32 = arith.constant 0 : i32
    %c0_i32_0 = arith.constant 0 : i32
    %c0_i32_1 = arith.constant 0 : i32
    return %c0_i32, %c0_i32_0 : i32, i32
  }
  func.func @transform_9(%arg0: i32) -> (i32, i32) {
    %c0_i32 = arith.constant 0 : i32
    %c0_i32_0 = arith.constant 0 : i32
    %c0_i32_1 = arith.constant 0 : i32
    return %c0_i32, %c0_i32_0 : i32, i32
  }
  func.func @transform_10(%arg0: i32) -> (i32, i32) {
    %c0_i32 = arith.constant 0 : i32
    %c0_i32_0 = arith.constant 0 : i32
    %c0_i32_1 = arith.constant 0 : i32
    return %c0_i32, %c0_i32_0 : i32, i32
  }
  func.func @transform_11(%arg0: i32) -> (i32, i32) {
    %c0_i32 = arith.constant 0 : i32
    %c0_i32_0 = arith.constant 0 : i32
    return %arg0, %c0_i32 : i32, i32
  }
}

module attributes {stable_mosaic.version = 11 : i64} {
  func.func @_fused_mlp_kernel(%arg0: i32, %arg1: memref<8x896xbf16, #tpu.memory_space<vmem>>, %arg2: memref<896x768xbf16, #tpu.memory_space<vmem>>, %arg3: memref<1x768xbf16, #tpu.memory_space<vmem>>, %arg4: memref<768x512xbf16, #tpu.memory_space<vmem>>, %arg5: memref<1x512xbf16, #tpu.memory_space<vmem>>, %arg6: memref<512x384xbf16, #tpu.memory_space<vmem>>, %arg7: memref<1x384xbf16, #tpu.memory_space<vmem>>, %arg8: memref<384x128xbf16, #tpu.memory_space<vmem>>, %arg9: memref<1x128xbf16, #tpu.memory_space<vmem>>, %arg10: memref<128x128xbf16, #tpu.memory_space<vmem>>, %arg11: memref<1x128xbf16, #tpu.memory_space<vmem>>, %arg12: memref<8x128xf32, #tpu.memory_space<vmem>>) attributes {dimension_semantics = [#tpu.dimension_semantics<parallel>], iteration_bounds = array<i64: 1>, scalar_prefetch = 0 : i64, scratch_operands = 0 : i64, tpu.core_type = #tpu.core_type<tc>, window_params = [{transform_indices = @transform_0, window_bounds = array<i64: 8, 896>}, {pipeline_mode = #tpu.pipeline_mode<synchronous>, transform_indices = @transform_1, window_bounds = array<i64: 896, 768>}, {pipeline_mode = #tpu.pipeline_mode<synchronous>, transform_indices = @transform_2, window_bounds = array<i64: 1, 768>}, {pipeline_mode = #tpu.pipeline_mode<synchronous>, transform_indices = @transform_3, window_bounds = array<i64: 768, 512>}, {pipeline_mode = #tpu.pipeline_mode<synchronous>, transform_indices = @transform_4, window_bounds = array<i64: 1, 512>}, {pipeline_mode = #tpu.pipeline_mode<synchronous>, transform_indices = @transform_5, window_bounds = array<i64: 512, 384>}, {pipeline_mode = #tpu.pipeline_mode<synchronous>, transform_indices = @transform_6, window_bounds = array<i64: 1, 384>}, {pipeline_mode = #tpu.pipeline_mode<synchronous>, transform_indices = @transform_7, window_bounds = array<i64: 384, 128>}, {pipeline_mode = #tpu.pipeline_mode<synchronous>, transform_indices = @transform_8, window_bounds = array<i64: 1, 128>}, {pipeline_mode = #tpu.pipeline_mode<synchronous>, transform_indices = @transform_9, window_bounds = array<i64: 128, 128>}, {pipeline_mode = #tpu.pipeline_mode<synchronous>, transform_indices = @transform_10, window_bounds = array<i64: 1, 128>}, {transform_indices = @transform_11, window_bounds = array<i64: 8, 128>}]} {
    %c0 = arith.constant 0 : index
    %c0_0 = arith.constant 0 : index
    %0 = vector.load %arg1[%c0, %c0_0] : memref<8x896xbf16, #tpu.memory_space<vmem>>, vector<8x896xbf16>
    %c0_1 = arith.constant 0 : index
    %c0_2 = arith.constant 0 : index
    %1 = vector.load %arg2[%c0_1, %c0_2] : memref<896x768xbf16, #tpu.memory_space<vmem>>, vector<896x768xbf16>
    %cst = arith.constant dense<0.000000e+00> : vector<8x768xf32>
    %2 = tpu.matmul %0, %1, %cst {dimension_numbers = #tpu.dot_dimension_numbers<[1], [0], [0], [1], [0, 0, 1, 1], [], []>} : vector<8x896xbf16>, vector<896x768xbf16>, vector<8x768xf32> -> vector<8x768xf32>
    %c0_3 = arith.constant 0 : index
    %c0_4 = arith.constant 0 : index
    %3 = vector.load %arg3[%c0_3, %c0_4] : memref<1x768xbf16, #tpu.memory_space<vmem>>, vector<1x768xbf16>
    %4 = arith.extf %3 : vector<1x768xbf16> to vector<1x768xf32>
    %5 = vector.broadcast %4 : vector<1x768xf32> to vector<8x768xf32>
    %6 = arith.addf %2, %5 : vector<8x768xf32>
    %cst_5 = arith.constant 0.000000e+00 : f32
    %7 = vector.broadcast %cst_5 : f32 to vector<8x768xf32>
    %8 = arith.maximumf %6, %7 : vector<8x768xf32>
    %9 = arith.truncf %8 : vector<8x768xf32> to vector<8x768xbf16>
    %c0_6 = arith.constant 0 : index
    %c0_7 = arith.constant 0 : index
    %10 = vector.load %arg4[%c0_6, %c0_7] : memref<768x512xbf16, #tpu.memory_space<vmem>>, vector<768x512xbf16>
    %cst_8 = arith.constant dense<0.000000e+00> : vector<8x512xf32>
    %11 = tpu.matmul %9, %10, %cst_8 {dimension_numbers = #tpu.dot_dimension_numbers<[1], [0], [0], [1], [0, 0, 1, 1], [], []>} : vector<8x768xbf16>, vector<768x512xbf16>, vector<8x512xf32> -> vector<8x512xf32>
    %c0_9 = arith.constant 0 : index
    %c0_10 = arith.constant 0 : index
    %12 = vector.load %arg5[%c0_9, %c0_10] : memref<1x512xbf16, #tpu.memory_space<vmem>>, vector<1x512xbf16>
    %13 = arith.extf %12 : vector<1x512xbf16> to vector<1x512xf32>
    %14 = vector.broadcast %13 : vector<1x512xf32> to vector<8x512xf32>
    %15 = arith.addf %11, %14 : vector<8x512xf32>
    %cst_11 = arith.constant 0.000000e+00 : f32
    %16 = vector.broadcast %cst_11 : f32 to vector<8x512xf32>
    %17 = arith.maximumf %15, %16 : vector<8x512xf32>
    %18 = arith.truncf %17 : vector<8x512xf32> to vector<8x512xbf16>
    %c0_12 = arith.constant 0 : index
    %c0_13 = arith.constant 0 : index
    %19 = vector.load %arg6[%c0_12, %c0_13] : memref<512x384xbf16, #tpu.memory_space<vmem>>, vector<512x384xbf16>
    %cst_14 = arith.constant dense<0.000000e+00> : vector<8x384xf32>
    %20 = tpu.matmul %18, %19, %cst_14 {dimension_numbers = #tpu.dot_dimension_numbers<[1], [0], [0], [1], [0, 0, 1, 1], [], []>} : vector<8x512xbf16>, vector<512x384xbf16>, vector<8x384xf32> -> vector<8x384xf32>
    %c0_15 = arith.constant 0 : index
    %c0_16 = arith.constant 0 : index
    %21 = vector.load %arg7[%c0_15, %c0_16] : memref<1x384xbf16, #tpu.memory_space<vmem>>, vector<1x384xbf16>
    %22 = arith.extf %21 : vector<1x384xbf16> to vector<1x384xf32>
    %23 = vector.broadcast %22 : vector<1x384xf32> to vector<8x384xf32>
    %24 = arith.addf %20, %23 : vector<8x384xf32>
    %cst_17 = arith.constant 0.000000e+00 : f32
    %25 = vector.broadcast %cst_17 : f32 to vector<8x384xf32>
    %26 = arith.maximumf %24, %25 : vector<8x384xf32>
    %27 = arith.truncf %26 : vector<8x384xf32> to vector<8x384xbf16>
    %c0_18 = arith.constant 0 : index
    %c0_19 = arith.constant 0 : index
    %28 = vector.load %arg8[%c0_18, %c0_19] : memref<384x128xbf16, #tpu.memory_space<vmem>>, vector<384x128xbf16>
    %cst_20 = arith.constant dense<0.000000e+00> : vector<8x128xf32>
    %29 = tpu.matmul %27, %28, %cst_20 {dimension_numbers = #tpu.dot_dimension_numbers<[1], [0], [0], [1], [0, 0, 1, 1], [], []>} : vector<8x384xbf16>, vector<384x128xbf16>, vector<8x128xf32> -> vector<8x128xf32>
    %c0_21 = arith.constant 0 : index
    %c0_22 = arith.constant 0 : index
    %30 = vector.load %arg9[%c0_21, %c0_22] : memref<1x128xbf16, #tpu.memory_space<vmem>>, vector<1x128xbf16>
    %31 = arith.extf %30 : vector<1x128xbf16> to vector<1x128xf32>
    %32 = vector.broadcast %31 : vector<1x128xf32> to vector<8x128xf32>
    %33 = arith.addf %29, %32 : vector<8x128xf32>
    %cst_23 = arith.constant 0.000000e+00 : f32
    %34 = vector.broadcast %cst_23 : f32 to vector<8x128xf32>
    %35 = arith.maximumf %33, %34 : vector<8x128xf32>
    %36 = arith.truncf %35 : vector<8x128xf32> to vector<8x128xbf16>
    %c0_24 = arith.constant 0 : index
    %c0_25 = arith.constant 0 : index
    %37 = vector.load %arg10[%c0_24, %c0_25] : memref<128x128xbf16, #tpu.memory_space<vmem>>, vector<128x128xbf16>
    %cst_26 = arith.constant dense<0.000000e+00> : vector<8x128xf32>
    %38 = tpu.matmul %36, %37, %cst_26 {dimension_numbers = #tpu.dot_dimension_numbers<[1], [0], [0], [1], [0, 0, 1, 1], [], []>} : vector<8x128xbf16>, vector<128x128xbf16>, vector<8x128xf32> -> vector<8x128xf32>
    %c0_27 = arith.constant 0 : index
    %c0_28 = arith.constant 0 : index
    %39 = vector.load %arg11[%c0_27, %c0_28] : memref<1x128xbf16, #tpu.memory_space<vmem>>, vector<1x128xbf16>
    %40 = arith.extf %39 : vector<1x128xbf16> to vector<1x128xf32>
    %41 = vector.broadcast %40 : vector<1x128xf32> to vector<8x128xf32>
    %42 = arith.addf %38, %41 : vector<8x128xf32>
    %c0_29 = arith.constant 0 : index
    %c0_30 = arith.constant 0 : index
    %43 = vector.load %arg12[%c0_29, %c0_30] : memref<8x128xf32, #tpu.memory_space<vmem>>, vector<8x128xf32>
    tpu.vector_store %arg12[%c0_29, %c0_30], %42 {strides = array<i32>} : memref<8x128xf32, #tpu.memory_space<vmem>>, vector<8x128xf32>,
    return
  }
  func.func @transform_0(%arg0: i32) -> (i32, i32) {
    %c0_i32 = arith.constant 0 : i32
    %c0_i32_0 = arith.constant 0 : i32
    return %arg0, %c0_i32 : i32, i32
  }
  func.func @transform_1(%arg0: i32) -> (i32, i32) {
    %c0_i32 = arith.constant 0 : i32
    %c0_i32_0 = arith.constant 0 : i32
    %c0_i32_1 = arith.constant 0 : i32
    return %c0_i32, %c0_i32_0 : i32, i32
  }
  func.func @transform_2(%arg0: i32) -> (i32, i32) {
    %c0_i32 = arith.constant 0 : i32
    %c0_i32_0 = arith.constant 0 : i32
    %c0_i32_1 = arith.constant 0 : i32
    return %c0_i32, %c0_i32_0 : i32, i32
  }
  func.func @transform_3(%arg0: i32) -> (i32, i32) {
    %c0_i32 = arith.constant 0 : i32
    %c0_i32_0 = arith.constant 0 : i32
    %c0_i32_1 = arith.constant 0 : i32
    return %c0_i32, %c0_i32_0 : i32, i32
  }
  func.func @transform_4(%arg0: i32) -> (i32, i32) {
    %c0_i32 = arith.constant 0 : i32
    %c0_i32_0 = arith.constant 0 : i32
    %c0_i32_1 = arith.constant 0 : i32
    return %c0_i32, %c0_i32_0 : i32, i32
  }
  func.func @transform_5(%arg0: i32) -> (i32, i32) {
    %c0_i32 = arith.constant 0 : i32
    %c0_i32_0 = arith.constant 0 : i32
    %c0_i32_1 = arith.constant 0 : i32
    return %c0_i32, %c0_i32_0 : i32, i32
  }
  func.func @transform_6(%arg0: i32) -> (i32, i32) {
    %c0_i32 = arith.constant 0 : i32
    %c0_i32_0 = arith.constant 0 : i32
    %c0_i32_1 = arith.constant 0 : i32
    return %c0_i32, %c0_i32_0 : i32, i32
  }
  func.func @transform_7(%arg0: i32) -> (i32, i32) {
    %c0_i32 = arith.constant 0 : i32
    %c0_i32_0 = arith.constant 0 : i32
    %c0_i32_1 = arith.constant 0 : i32
    return %c0_i32, %c0_i32_0 : i32, i32
  }
  func.func @transform_8(%arg0: i32) -> (i32, i32) {
    %c0_i32 = arith.constant 0 : i32
    %c0_i32_0 = arith.constant 0 : i32
    %c0_i32_1 = arith.constant 0 : i32
    return %c0_i32, %c0_i32_0 : i32, i32
  }
  func.func @transform_9(%arg0: i32) -> (i32, i32) {
    %c0_i32 = arith.constant 0 : i32
    %c0_i32_0 = arith.constant 0 : i32
    %c0_i32_1 = arith.constant 0 : i32
    return %c0_i32, %c0_i32_0 : i32, i32
  }
  func.func @transform_10(%arg0: i32) -> (i32, i32) {
    %c0_i32 = arith.constant 0 : i32
    %c0_i32_0 = arith.constant 0 : i32
    %c0_i32_1 = arith.constant 0 : i32
    return %c0_i32, %c0_i32_0 : i32, i32
  }
  func.func @transform_11(%arg0: i32) -> (i32, i32) {
    %c0_i32 = arith.constant 0 : i32
    %c0_i32_0 = arith.constant 0 : i32
    return %arg0, %c0_i32 : i32, i32
  }
}

</mosaic_0001>

<llo_original>
// kernel: tpu_custom_call.1
$region0: #{tpu_custom_call.1}
  #allocation0 [shape = 'u32[]', space=smem, size = 0x4, offset = 0x4, fixed_abs, tag = 'smem constant byte address 0x4 - core index']
  #allocation1 [shape = 'u32[144,128]{1,0:T(1,128)}', space=vmem, size = 0x12000, scoped, tag = 'internal scratch']
  %s0 = inlined_call_operand.hbm [shape: bf16[8,896], index: 0, kind: input, shape index: {}]
  %s1 = inlined_call_operand.hbm [shape: bf16[896,768], index: 1, kind: input, shape index: {}]
  %s2 = inlined_call_operand.hbm [shape: bf16[1,768], index: 2, kind: input, shape index: {}]
  %s3 = inlined_call_operand.hbm [shape: bf16[768,512], index: 3, kind: input, shape index: {}]
  %s4 = inlined_call_operand.hbm [shape: bf16[1,512], index: 4, kind: input, shape index: {}]
  %s5 = inlined_call_operand.hbm [shape: bf16[512,384], index: 5, kind: input, shape index: {}]
  %s6 = inlined_call_operand.hbm [shape: bf16[1,384], index: 6, kind: input, shape index: {}]
  %s7 = inlined_call_operand.hbm [shape: bf16[384,128], index: 7, kind: input, shape index: {}]
  %s8 = inlined_call_operand.hbm [shape: bf16[1,128], index: 8, kind: input, shape index: {}]
  %s9 = inlined_call_operand.hbm [shape: bf16[128,128], index: 9, kind: input, shape index: {}]
  %s10 = inlined_call_operand.hbm [shape: bf16[1,128], index: 10, kind: input, shape index: {}]
  %s11 = inlined_call_operand.hbm [shape: f32[8,128], index: 11, kind: output, shape index: {}]
  %s12 = sld [smem:[#allocation0]]
  $region98: #{tpu_custom_call.1} parent=0
    _
  %s14 = ssub.s32 1, %s12
  %s15 = scalar_select 0, %s14, %s12
  $region1: #{tpu_custom_call.1} parent=0
    #allocation2 [shape = 'u8[14336]{0}', space=vmem, size = 0x3800, scoped, tag = 'input window, operand 0, single buffered']
    #allocation3 [shape = 's32[1]{0}', space=sflag, size = 0x4, scoped, tag = 'scoped memory for tpu_custom_call.1']
    #allocation4 [shape = 's32[1]{0}', space=sflag, size = 0x4, scoped, tag = 'scoped memory for tpu_custom_call.1']
    #allocation5 [shape = 'u8[1376256]{0}', space=vmem, size = 0x150000, scoped, tag = 'input window, operand 1, single buffered']
    #allocation6 [shape = 's32[1]{0}', space=sflag, size = 0x4, scoped, tag = 'scoped memory for tpu_custom_call.1']
    #allocation7 [shape = 'u8[3072]{0}', space=vmem, size = 0xc00, scoped, tag = 'input window, operand 2, single buffered']
    #allocation8 [shape = 'u8[786432]{0}', space=vmem, size = 0xc0000, scoped, tag = 'input window, operand 3, single buffered']
    #allocation9 [shape = 's32[1]{0}', space=sflag, size = 0x4, scoped, tag = 'scoped memory for tpu_custom_call.1']
    #allocation10 [shape = 'u8[2048]{0}', space=vmem, size = 0x800, scoped, tag = 'input window, operand 4, single buffered']
    #allocation11 [shape = 'u8[393216]{0}', space=vmem, size = 0x60000, scoped, tag = 'input window, operand 5, single buffered']
    #allocation12 [shape = 's32[1]{0}', space=sflag, size = 0x4, scoped, tag = 'scoped memory for tpu_custom_call.1']
    #allocation13 [shape = 'u8[1536]{0}', space=vmem, size = 0x800, scoped, tag = 'input window, operand 6, single buffered']
    #allocation14 [shape = 'u8[98304]{0}', space=vmem, size = 0x18000, scoped, tag = 'input window, operand 7, single buffered']
    #allocation15 [shape = 's32[1]{0}', space=sflag, size = 0x4, scoped, tag = 'scoped memory for tpu_custom_call.1']
    #allocation16 [shape = 'u8[512]{0}', space=vmem, size = 0x400, scoped, tag = 'input window, operand 8, single buffered']
    #allocation17 [shape = 'u8[32768]{0}', space=vmem, size = 0x8000, scoped, tag = 'input window, operand 9, single buffered']
    #allocation18 [shape = 's32[1]{0}', space=sflag, size = 0x4, scoped, tag = 'scoped memory for tpu_custom_call.1']
    #allocation19 [shape = 'u8[512]{0}', space=vmem, size = 0x400, scoped, tag = 'input window, operand 10, single buffered']
    #allocation20 [shape = 'u8[4096]{0}', space=vmem, size = 0x1000, scoped, tag = 'output window, operand 0, single buffered']
    %16 = vsyncpa [#allocation3], 0
    %17 = vsyncpa [#allocation6], 0
    %18 = vsyncpa [#allocation9], 0
    %19 = vsyncpa [#allocation12], 0
    %20 = vsyncpa [#allocation15], 0
    %21 = vsyncpa [#allocation18], 0
    %22 = vsyncpa [#allocation4], 0
    // Predicated region
    $region2: #{tpu_custom_call.1} parent=1 // pred_check
      _
    $region3: #{tpu_custom_call.1} parent=1 // pred_check_branch
      %24 = sbr.rel (0) target = $region5
    $region4: #{tpu_custom_call.1} parent=1 // pred_region
      %s26 = ssub.s32 448, 448
      %27 = vsyncadd [#allocation3], %s26
      %s29 = sshll.u32 [#allocation2], 4
      %s30 = int_to_ptr.vmem [resolvable:$true] %s29
      %32 = dma.hbm_to_vmem [thread:$0]  %s0, 448, %s30, [#allocation3]
    $region5: #{tpu_custom_call.1} parent=1 // pred_fallthru
      _
    // Predicated region
    $region6: #{tpu_custom_call.1} parent=1 // pred_check
      _
    $region7: #{tpu_custom_call.1} parent=1 // pred_check_branch
      %34 = sbr.rel (0) target = $region9
    $region8: #{tpu_custom_call.1} parent=1 // pred_region
      %s36 = ssub.s32 43008, 43008
      %37 = vsyncadd [#allocation6], %s36
      %s38 = sshll.u32 [#allocation5], 4
      %s39 = int_to_ptr.vmem [resolvable:$true] %s38
      %44 = dma.hbm_to_vmem [thread:$0]  %s1, 43008, %s39, [#allocation6], 384, 384, 24
    $region9: #{tpu_custom_call.1} parent=1 // pred_fallthru
      _
    // Predicated region
    $region10: #{tpu_custom_call.1} parent=1 // pred_check
      _
    $region11: #{tpu_custom_call.1} parent=1 // pred_check_branch
      %46 = sbr.rel (0) target = $region13
    $region12: #{tpu_custom_call.1} parent=1 // pred_region
      %s48 = ssub.s32 96, 96
      %49 = vsyncadd [#allocation6], %s48
      %s51 = sshll.u32 [#allocation7], 4
      %s52 = int_to_ptr.vmem [resolvable:$true] %s51
      %54 = dma.hbm_to_vmem [thread:$0]  %s2, 96, %s52, [#allocation6]
    $region13: #{tpu_custom_call.1} parent=1 // pred_fallthru
      _
    // Predicated region
    $region14: #{tpu_custom_call.1} parent=1 // pred_check
      _
    $region15: #{tpu_custom_call.1} parent=1 // pred_check_branch
      %56 = sbr.rel (0) target = $region17
    $region16: #{tpu_custom_call.1} parent=1 // pred_region
      %s58 = ssub.s32 24576, 24576
      %59 = vsyncadd [#allocation9], %s58
      %s60 = sshll.u32 [#allocation8], 4
      %s61 = int_to_ptr.vmem [resolvable:$true] %s60
      %66 = dma.hbm_to_vmem [thread:$0]  %s3, 24576, %s61, [#allocation9], 256, 256, 16
    $region17: #{tpu_custom_call.1} parent=1 // pred_fallthru
      _
    // Predicated region
    $region18: #{tpu_custom_call.1} parent=1 // pred_check
      _
    $region19: #{tpu_custom_call.1} parent=1 // pred_check_branch
      %68 = sbr.rel (0) target = $region21
    $region20: #{tpu_custom_call.1} parent=1 // pred_region
      %s70 = ssub.s32 64, 64
      %71 = vsyncadd [#allocation9], %s70
      %s73 = sshll.u32 [#allocation10], 4
      %s74 = int_to_ptr.vmem [resolvable:$true] %s73
      %76 = dma.hbm_to_vmem [thread:$0]  %s4, 64, %s74, [#allocation9]
    $region21: #{tpu_custom_call.1} parent=1 // pred_fallthru
      _
    // Predicated region
    $region22: #{tpu_custom_call.1} parent=1 // pred_check
      _
    $region23: #{tpu_custom_call.1} parent=1 // pred_check_branch
      %78 = sbr.rel (0) target = $region25
    $region24: #{tpu_custom_call.1} parent=1 // pred_region
      %s80 = ssub.s32 12288, 12288
      %81 = vsyncadd [#allocation12], %s80
      %s82 = sshll.u32 [#allocation11], 4
      %s83 = int_to_ptr.vmem [resolvable:$true] %s82
      %88 = dma.hbm_to_vmem [thread:$0]  %s5, 12288, %s83, [#allocation12], 192, 192, 12
    $region25: #{tpu_custom_call.1} parent=1 // pred_fallthru
      _
    // Predicated region
    $region26: #{tpu_custom_call.1} parent=1 // pred_check
      _
    $region27: #{tpu_custom_call.1} parent=1 // pred_check_branch
      %90 = sbr.rel (0) target = $region29
    $region28: #{tpu_custom_call.1} parent=1 // pred_region
      %s92 = ssub.s32 48, 48
      %93 = vsyncadd [#allocation12], %s92
      %s95 = sshll.u32 [#allocation13], 4
      %s96 = int_to_ptr.vmem [resolvable:$true] %s95
      %98 = dma.hbm_to_vmem [thread:$0]  %s6, 48, %s96, [#allocation12]
    $region29: #{tpu_custom_call.1} parent=1 // pred_fallthru
      _
    // Predicated region
    $region30: #{tpu_custom_call.1} parent=1 // pred_check
      _
    $region31: #{tpu_custom_call.1} parent=1 // pred_check_branch
      %100 = sbr.rel (0) target = $region33
    $region32: #{tpu_custom_call.1} parent=1 // pred_region
      %s102 = ssub.s32 3072, 3072
      %103 = vsyncadd [#allocation15], %s102
      %s104 = sshll.u32 [#allocation14], 4
      %s105 = int_to_ptr.vmem [resolvable:$true] %s104
      %110 = dma.hbm_to_vmem [thread:$0]  %s7, 3072, %s105, [#allocation15], 64, 64, 4
    $region33: #{tpu_custom_call.1} parent=1 // pred_fallthru
      _
    // Predicated region
    $region34: #{tpu_custom_call.1} parent=1 // pred_check
      _
    $region35: #{tpu_custom_call.1} parent=1 // pred_check_branch
      %112 = sbr.rel (0) target = $region37
    $region36: #{tpu_custom_call.1} parent=1 // pred_region
      %s114 = ssub.s32 16, 16
      %115 = vsyncadd [#allocation15], %s114
      %s117 = sshll.u32 [#allocation16], 4
      %s118 = int_to_ptr.vmem [resolvable:$true] %s117
      %120 = dma.hbm_to_vmem [thread:$0]  %s8, 16, %s118, [#allocation15]
    $region37: #{tpu_custom_call.1} parent=1 // pred_fallthru
      _
    // Predicated region
    $region38: #{tpu_custom_call.1} parent=1 // pred_check
      _
    $region39: #{tpu_custom_call.1} parent=1 // pred_check_branch
      %122 = sbr.rel (0) target = $region41
    $region40: #{tpu_custom_call.1} parent=1 // pred_region
      %s124 = ssub.s32 1024, 1024
      %125 = vsyncadd [#allocation18], %s124
      %s126 = sshll.u32 [#allocation17], 4
      %s127 = int_to_ptr.vmem [resolvable:$true] %s126
      %132 = dma.hbm_to_vmem [thread:$0]  %s9, 1024, %s127, [#allocation18], 64, 64, 4
    $region41: #{tpu_custom_call.1} parent=1 // pred_fallthru
      _
    // Predicated region
    $region42: #{tpu_custom_call.1} parent=1 // pred_check
      _
    $region43: #{tpu_custom_call.1} parent=1 // pred_check_branch
      %134 = sbr.rel (0) target = $region45
    $region44: #{tpu_custom_call.1} parent=1 // pred_region
      %s136 = ssub.s32 16, 16
      %137 = vsyncadd [#allocation18], %s136
      %s139 = sshll.u32 [#allocation19], 4
      %s140 = int_to_ptr.vmem [resolvable:$true] %s139
      %142 = dma.hbm_to_vmem [thread:$0]  %s10, 16, %s140, [#allocation18]
    $region45: #{tpu_custom_call.1} parent=1 // pred_fallthru
      _
    // Predicated region
    $region46: #{tpu_custom_call.1} parent=1 // pred_check
      _
    $region47: #{tpu_custom_call.1} parent=1 // pred_check_branch
      %144 = sbr.rel (0) target = $region49
    $region48: #{tpu_custom_call.1} parent=1 // pred_region
      %145 = dma.done [#allocation3], 448
    $region49: #{tpu_custom_call.1} parent=1 // pred_fallthru
      _
    // Predicated region
    $region50: #{tpu_custom_call.1} parent=1 // pred_check
      _
    $region51: #{tpu_custom_call.1} parent=1 // pred_check_branch
      %147 = sbr.rel (0) target = $region53
    $region52: #{tpu_custom_call.1} parent=1 // pred_region
      %148 = dma.done [#allocation6], 43008
    $region53: #{tpu_custom_call.1} parent=1 // pred_fallthru
      _
    // Predicated region
    $region54: #{tpu_custom_call.1} parent=1 // pred_check
      _
    $region55: #{tpu_custom_call.1} parent=1 // pred_check_branch
      %150 = sbr.rel (0) target = $region57
    $region56: #{tpu_custom_call.1} parent=1 // pred_region
      %151 = dma.done [#allocation6], 96
    $region57: #{tpu_custom_call.1} parent=1 // pred_fallthru
      _
    // Predicated region
    $region58: #{tpu_custom_call.1} parent=1 // pred_check
      _
    $region59: #{tpu_custom_call.1} parent=1 // pred_check_branch
      %153 = sbr.rel (0) target = $region61
    $region60: #{tpu_custom_call.1} parent=1 // pred_region
      %154 = dma.done [#allocation9], 24576
    $region61: #{tpu_custom_call.1} parent=1 // pred_fallthru
      _
    // Predicated region
    $region62: #{tpu_custom_call.1} parent=1 // pred_check
      _
    $region63: #{tpu_custom_call.1} parent=1 // pred_check_branch
      %156 = sbr.rel (0) target = $region65
    $region64: #{tpu_custom_call.1} parent=1 // pred_region
      %157 = dma.done [#allocation9], 64
    $region65: #{tpu_custom_call.1} parent=1 // pred_fallthru
      _
    // Predicated region
    $region66: #{tpu_custom_call.1} parent=1 // pred_check
      _
    $region67: #{tpu_custom_call.1} parent=1 // pred_check_branch
      %159 = sbr.rel (0) target = $region69
    $region68: #{tpu_custom_call.1} parent=1 // pred_region
      %160 = dma.done [#allocation12], 12288
    $region69: #{tpu_custom_call.1} parent=1 // pred_fallthru
      _
    // Predicated region
    $region70: #{tpu_custom_call.1} parent=1 // pred_check
      _
    $region71: #{tpu_custom_call.1} parent=1 // pred_check_branch
      %162 = sbr.rel (0) target = $region73
    $region72: #{tpu_custom_call.1} parent=1 // pred_region
      %163 = dma.done [#allocation12], 48
    $region73: #{tpu_custom_call.1} parent=1 // pred_fallthru
      _
    // Predicated region
    $region74: #{tpu_custom_call.1} parent=1 // pred_check
      _
    $region75: #{tpu_custom_call.1} parent=1 // pred_check_branch
      %165 = sbr.rel (0) target = $region77
    $region76: #{tpu_custom_call.1} parent=1 // pred_region
      %166 = dma.done [#allocation15], 3072
    $region77: #{tpu_custom_call.1} parent=1 // pred_fallthru
      _
    // Predicated region
    $region78: #{tpu_custom_call.1} parent=1 // pred_check
      _
    $region79: #{tpu_custom_call.1} parent=1 // pred_check_branch
      %168 = sbr.rel (0) target = $region81
    $region80: #{tpu_custom_call.1} parent=1 // pred_region
      %169 = dma.done [#allocation15], 16
    $region81: #{tpu_custom_call.1} parent=1 // pred_fallthru
      _
    // Predicated region
    $region82: #{tpu_custom_call.1} parent=1 // pred_check
      _
    $region83: #{tpu_custom_call.1} parent=1 // pred_check_branch
      %171 = sbr.rel (0) target = $region85
    $region84: #{tpu_custom_call.1} parent=1 // pred_region
      %172 = dma.done [#allocation18], 1024
    $region85: #{tpu_custom_call.1} parent=1 // pred_fallthru
      _
    // Predicated region
    $region86: #{tpu_custom_call.1} parent=1 // pred_check
      _
    $region87: #{tpu_custom_call.1} parent=1 // pred_check_branch
      %174 = sbr.rel (0) target = $region89
    $region88: #{tpu_custom_call.1} parent=1 // pred_region
      %175 = dma.done [#allocation18], 16
    $region89: #{tpu_custom_call.1} parent=1 // pred_fallthru
      _
    %v177 = vld [vmem:[#allocation2] sm:$0xff]
    %v178 = vld [vmem:[#allocation2 + $0x8] sm:$0xff]
    %v179 = vld [vmem:[#allocation2 + $0x10] sm:$0xff]
    %v180 = vld [vmem:[#allocation2 + $0x18] sm:$0xf]
    %v181 = vld [vmem:[#allocation5] sm:$0xff]
    %v182 = vld [vmem:[#allocation5 + $0x8] sm:$0xff]
    %v183 = vld [vmem:[#allocation5 + $0x10] sm:$0xff]
    %v184 = vld [vmem:[#allocation5 + $0x18] sm:$0xff]
    %v185 = vld [vmem:[#allocation5 + $0x20] sm:$0xff]
    %v186 = vld [vmem:[#allocation5 + $0x28] sm:$0xff]
    %v187 = vld [vmem:[#allocation5 + $0x30] sm:$0xff]
    %v188 = vld [vmem:[#allocation5 + $0x38] sm:$0xff]
    %v189 = vld [vmem:[#allocation5 + $0x40] sm:$0xff]
    %v190 = vld [vmem:[#allocation5 + $0x48] sm:$0xff]
    %v191 = vld [vmem:[#allocation5 + $0x50] sm:$0xff]
    %v192 = vld [vmem:[#allocation5 + $0x58] sm:$0xff]
    %v193 = vld [vmem:[#allocation5 + $0x60] sm:$0xff]
    %v194 = vld [vmem:[#allocation5 + $0x68] sm:$0xff]
    %v195 = vld [vmem:[#allocation5 + $0x70] sm:$0xff]
    %v196 = vld [vmem:[#allocation5 + $0x78] sm:$0xff]
    %v197 = vld [vmem:[#allocation5 + $0x80] sm:$0xff]
    %v198 = vld [vmem:[#allocation5 + $0x88] sm:$0xff]
    %v199 = vld [vmem:[#allocation5 + $0x90] sm:$0xff]
    %v200 = vld [vmem:[#allocation5 + $0x98] sm:$0xff]
    %v201 = vld [vmem:[#allocation5 + $0xa0] sm:$0xff]
    %v202 = vld [vmem:[#allocation5 + $0xa8] sm:$0xff]
    %v203 = vld [vmem:[#allocation5 + $0xb0] sm:$0xff]
    %v204 = vld [vmem:[#allocation5 + $0xb8] sm:$0xff]
    %v205 = vld [vmem:[#allocation5 + $0xc0] sm:$0xff]
    %v206 = vld [vmem:[#allocation5 + $0xc8] sm:$0xff]
    %v207 = vld [vmem:[#allocation5 + $0xd0] sm:$0xff]
    %v208 = vld [vmem:[#allocation5 + $0xd8] sm:$0xff]
    %v209 = vld [vmem:[#allocation5 + $0xe0] sm:$0xff]
    %v210 = vld [vmem:[#allocation5 + $0xe8] sm:$0xff]
    %v211 = vld [vmem:[#allocation5 + $0xf0] sm:$0xff]
    %v212 = vld [vmem:[#allocation5 + $0xf8] sm:$0xff]
    %v213 = vld [vmem:[#allocation5 + $0x100] sm:$0xff]
    %v214 = vld [vmem:[#allocation5 + $0x108] sm:$0xff]
    %v215 = vld [vmem:[#allocation5 + $0x110] sm:$0xff]
    %v216 = vld [vmem:[#allocation5 + $0x118] sm:$0xff]
    %v217 = vld [vmem:[#allocation5 + $0x120] sm:$0xff]
    %v218 = vld [vmem:[#allocation5 + $0x128] sm:$0xff]
    %v219 = vld [vmem:[#allocation5 + $0x130] sm:$0xff]
    %v220 = vld [vmem:[#allocation5 + $0x138] sm:$0xff]
    %v221 = vld [vmem:[#allocation5 + $0x140] sm:$0xff]
    %v222 = vld [vmem:[#allocation5 + $0x148] sm:$0xff]
    %v223 = vld [vmem:[#allocation5 + $0x150] sm:$0xff]
    %v224 = vld [vmem:[#allocation5 + $0x158] sm:$0xff]
    %v225 = vld [vmem:[#allocation5 + $0x160] sm:$0xff]
    %v226 = vld [vmem:[#allocation5 + $0x168] sm:$0xff]
    %v227 = vld [vmem:[#allocation5 + $0x170] sm:$0xff]
    %v228 = vld [vmem:[#allocation5 + $0x178] sm:$0xff]
    %v229 = vld [vmem:[#allocation5 + $0x180] sm:$0xff]
    %v230 = vld [vmem:[#allocation5 + $0x188] sm:$0xff]
    %v231 = vld [vmem:[#allocation5 + $0x190] sm:$0xff]
    %v232 = vld [vmem:[#allocation5 + $0x198] sm:$0xff]
    %v233 = vld [vmem:[#allocation5 + $0x1a0] sm:$0xff]
    %v234 = vld [vmem:[#allocation5 + $0x1a8] sm:$0xff]
    %v235 = vld [vmem:[#allocation5 + $0x1b0] sm:$0xff]
    %v236 = vld [vmem:[#allocation5 + $0x1b8] sm:$0xff]
    %v237 = vld [vmem:[#allocation5 + $0x1c0] sm:$0xff]
    %v238 = vld [vmem:[#allocation5 + $0x1c8] sm:$0xff]
    %v239 = vld [vmem:[#allocation5 + $0x1d0] sm:$0xff]
    %v240 = vld [vmem:[#allocation5 + $0x1d8] sm:$0xff]
    %v241 = vld [vmem:[#allocation5 + $0x1e0] sm:$0xff]
    %v242 = vld [vmem:[#allocation5 + $0x1e8] sm:$0xff]
    %v243 = vld [vmem:[#allocation5 + $0x1f0] sm:$0xff]
    %v244 = vld [vmem:[#allocation5 + $0x1f8] sm:$0xff]
    %v245 = vld [vmem:[#allocation5 + $0x200] sm:$0xff]
    %v246 = vld [vmem:[#allocation5 + $0x208] sm:$0xff]
    %v247 = vld [vmem:[#allocation5 + $0x210] sm:$0xff]
    %v248 = vld [vmem:[#allocation5 + $0x218] sm:$0xff]
    %v249 = vld [vmem:[#allocation5 + $0x220] sm:$0xff]
    %v250 = vld [vmem:[#allocation5 + $0x228] sm:$0xff]
    %v251 = vld [vmem:[#allocation5 + $0x230] sm:$0xff]
    %v252 = vld [vmem:[#allocation5 + $0x238] sm:$0xff]
    %v253 = vld [vmem:[#allocation5 + $0x240] sm:$0xff]
    %v254 = vld [vmem:[#allocation5 + $0x248] sm:$0xff]
    %v255 = vld [vmem:[#allocation5 + $0x250] sm:$0xff]
    %v256 = vld [vmem:[#allocation5 + $0x258] sm:$0xff]
    %v257 = vld [vmem:[#allocation5 + $0x260] sm:$0xff]
    %v258 = vld [vmem:[#allocation5 + $0x268] sm:$0xff]
    %v259 = vld [vmem:[#allocation5 + $0x270] sm:$0xff]
    %v260 = vld [vmem:[#allocation5 + $0x278] sm:$0xff]
    %v261 = vld [vmem:[#allocation5 + $0x280] sm:$0xff]
    %v262 = vld [vmem:[#allocation5 + $0x288] sm:$0xff]
    %v263 = vld [vmem:[#allocation5 + $0x290] sm:$0xff]
    %v264 = vld [vmem:[#allocation5 + $0x298] sm:$0xff]
    %v265 = vld [vmem:[#allocation5 + $0x2a0] sm:$0xff]
    %v266 = vld [vmem:[#allocation5 + $0x2a8] sm:$0xff]
    %v267 = vld [vmem:[#allocation5 + $0x2b0] sm:$0xff]
    %v268 = vld [vmem:[#allocation5 + $0x2b8] sm:$0xff]
    %v269 = vld [vmem:[#allocation5 + $0x2c0] sm:$0xff]
    %v270 = vld [vmem:[#allocation5 + $0x2c8] sm:$0xff]
    %v271 = vld [vmem:[#allocation5 + $0x2d0] sm:$0xff]
    %v272 = vld [vmem:[#allocation5 + $0x2d8] sm:$0xff]
    %v273 = vld [vmem:[#allocation5 + $0x2e0] sm:$0xff]
    %v274 = vld [vmem:[#allocation5 + $0x2e8] sm:$0xff]
    %v275 = vld [vmem:[#allocation5 + $0x2f0] sm:$0xff]
    %v276 = vld [vmem:[#allocation5 + $0x2f8] sm:$0xff]
    %v277 = vld [vmem:[#allocation5 + $0x300] sm:$0xff]
    %v278 = vld [vmem:[#allocation5 + $0x308] sm:$0xff]
    %v279 = vld [vmem:[#allocation5 + $0x310] sm:$0xff]
    %v280 = vld [vmem:[#allocation5 + $0x318] sm:$0xff]
    %v281 = vld [vmem:[#allocation5 + $0x320] sm:$0xff]
    %v282 = vld [vmem:[#allocation5 + $0x328] sm:$0xff]
    %v283 = vld [vmem:[#allocation5 + $0x330] sm:$0xff]
    %v284 = vld [vmem:[#allocation5 + $0x338] sm:$0xff]
    %v285 = vld [vmem:[#allocation5 + $0x340] sm:$0xff]
    %v286 = vld [vmem:[#allocation5 + $0x348] sm:$0xff]
    %v287 = vld [vmem:[#allocation5 + $0x350] sm:$0xff]
    %v288 = vld [vmem:[#allocation5 + $0x358] sm:$0xff]
    %v289 = vld [vmem:[#allocation5 + $0x360] sm:$0xff]
    %v290 = vld [vmem:[#allocation5 + $0x368] sm:$0xff]
    %v291 = vld [vmem:[#allocation5 + $0x370] sm:$0xff]
    %v292 = vld [vmem:[#allocation5 + $0x378] sm:$0xff]
    %v293 = vld [vmem:[#allocation5 + $0x380] sm:$0xff]
    %v294 = vld [vmem:[#allocation5 + $0x388] sm:$0xff]
    %v295 = vld [vmem:[#allocation5 + $0x390] sm:$0xff]
    %v296 = vld [vmem:[#allocation5 + $0x398] sm:$0xff]
    %v297 = vld [vmem:[#allocation5 + $0x3a0] sm:$0xff]
    %v298 = vld [vmem:[#allocation5 + $0x3a8] sm:$0xff]
    %v299 = vld [vmem:[#allocation5 + $0x3b0] sm:$0xff]
    %v300 = vld [vmem:[#allocation5 + $0x3b8] sm:$0xff]
    %v301 = vld [vmem:[#allocation5 + $0x3c0] sm:$0xff]
    %v302 = vld [vmem:[#allocation5 + $0x3c8] sm:$0xff]
    %v303 = vld [vmem:[#allocation5 + $0x3d0] sm:$0xff]
    %v304 = vld [vmem:[#allocation5 + $0x3d8] sm:$0xff]
    %v305 = vld [vmem:[#allocation5 + $0x3e0] sm:$0xff]
    %v306 = vld [vmem:[#allocation5 + $0x3e8] sm:$0xff]
    %v307 = vld [vmem:[#allocation5 + $0x3f0] sm:$0xff]
    %v308 = vld [vmem:[#allocation5 + $0x3f8] sm:$0xff]
    %v309 = vld [vmem:[#allocation5 + $0x400] sm:$0xff]
    %v310 = vld [vmem:[#allocation5 + $0x408] sm:$0xff]
    %v311 = vld [vmem:[#allocation5 + $0x410] sm:$0xff]
    %v312 = vld [vmem:[#allocation5 + $0x418] sm:$0xff]
    %v313 = vld [vmem:[#allocation5 + $0x420] sm:$0xff]
    %v314 = vld [vmem:[#allocation5 + $0x428] sm:$0xff]
    %v315 = vld [vmem:[#allocation5 + $0x430] sm:$0xff]
    %v316 = vld [vmem:[#allocation5 + $0x438] sm:$0xff]
    %v317 = vld [vmem:[#allocation5 + $0x440] sm:$0xff]
    %v318 = vld [vmem:[#allocation5 + $0x448] sm:$0xff]
    %v319 = vld [vmem:[#allocation5 + $0x450] sm:$0xff]
    %v320 = vld [vmem:[#allocation5 + $0x458] sm:$0xff]
    %v321 = vld [vmem:[#allocation5 + $0x460] sm:$0xff]
    %v322 = vld [vmem:[#allocation5 + $0x468] sm:$0xff]
    %v323 = vld [vmem:[#allocation5 + $0x470] sm:$0xff]
    %v324 = vld [vmem:[#allocation5 + $0x478] sm:$0xff]
    %v325 = vld [vmem:[#allocation5 + $0x480] sm:$0xff]
    %v326 = vld [vmem:[#allocation5 + $0x488] sm:$0xff]
    %v327 = vld [vmem:[#allocation5 + $0x490] sm:$0xff]
    %v328 = vld [vmem:[#allocation5 + $0x498] sm:$0xff]
    %v329 = vld [vmem:[#allocation5 + $0x4a0] sm:$0xff]
    %v330 = vld [vmem:[#allocation5 + $0x4a8] sm:$0xff]
    %v331 = vld [vmem:[#allocation5 + $0x4b0] sm:$0xff]
    %v332 = vld [vmem:[#allocation5 + $0x4b8] sm:$0xff]
    %v333 = vld [vmem:[#allocation5 + $0x4c0] sm:$0xff]
    %v334 = vld [vmem:[#allocation5 + $0x4c8] sm:$0xff]
    %v335 = vld [vmem:[#allocation5 + $0x4d0] sm:$0xff]
    %v336 = vld [vmem:[#allocation5 + $0x4d8] sm:$0xff]
    %v337 = vld [vmem:[#allocation5 + $0x4e0] sm:$0xff]
    %v338 = vld [vmem:[#allocation5 + $0x4e8] sm:$0xff]
    %v339 = vld [vmem:[#allocation5 + $0x4f0] sm:$0xff]
    %v340 = vld [vmem:[#allocation5 + $0x4f8] sm:$0xff]
    %v341 = vld [vmem:[#allocation5 + $0x500] sm:$0xff]
    %v342 = vld [vmem:[#allocation5 + $0x508] sm:$0xff]
    %v343 = vld [vmem:[#allocation5 + $0x510] sm:$0xff]
    %v344 = vld [vmem:[#allocation5 + $0x518] sm:$0xff]
    %v345 = vld [vmem:[#allocation5 + $0x520] sm:$0xff]
    %v346 = vld [vmem:[#allocation5 + $0x528] sm:$0xff]
    %v347 = vld [vmem:[#allocation5 + $0x530] sm:$0xff]
    %v348 = vld [vmem:[#allocation5 + $0x538] sm:$0xff]
    %v349 = vld [vmem:[#allocation5 + $0x540] sm:$0xff]
    %v350 = vld [vmem:[#allocation5 + $0x548] sm:$0xff]
    %v351 = vld [vmem:[#allocation5 + $0x550] sm:$0xff]
    %v352 = vld [vmem:[#allocation5 + $0x558] sm:$0xff]
    %v353 = vld [vmem:[#allocation5 + $0x560] sm:$0xff]
    %v354 = vld [vmem:[#allocation5 + $0x568] sm:$0xff]
    %v355 = vld [vmem:[#allocation5 + $0x570] sm:$0xff]
    %v356 = vld [vmem:[#allocation5 + $0x578] sm:$0xff]
    %v357 = vld [vmem:[#allocation5 + $0x580] sm:$0xff]
    %v358 = vld [vmem:[#allocation5 + $0x588] sm:$0xff]
    %v359 = vld [vmem:[#allocation5 + $0x590] sm:$0xff]
    %v360 = vld [vmem:[#allocation5 + $0x598] sm:$0xff]
    %v361 = vld [vmem:[#allocation5 + $0x5a0] sm:$0xff]
    %v362 = vld [vmem:[#allocation5 + $0x5a8] sm:$0xff]
    %v363 = vld [vmem:[#allocation5 + $0x5b0] sm:$0xff]
    %v364 = vld [vmem:[#allocation5 + $0x5b8] sm:$0xff]
    %v365 = vld [vmem:[#allocation5 + $0x5c0] sm:$0xff]
    %v366 = vld [vmem:[#allocation5 + $0x5c8] sm:$0xff]
    %v367 = vld [vmem:[#allocation5 + $0x5d0] sm:$0xff]
    %v368 = vld [vmem:[#allocation5 + $0x5d8] sm:$0xff]
    %v369 = vld [vmem:[#allocation5 + $0x5e0] sm:$0xff]
    %v370 = vld [vmem:[#allocation5 + $0x5e8] sm:$0xff]
    %v371 = vld [vmem:[#allocation5 + $0x5f0] sm:$0xff]
    %v372 = vld [vmem:[#allocation5 + $0x5f8] sm:$0xff]
    %v373 = vld [vmem:[#allocation5 + $0x600] sm:$0xff]
    %v374 = vld [vmem:[#allocation5 + $0x608] sm:$0xff]
    %v375 = vld [vmem:[#allocation5 + $0x610] sm:$0xff]
    %v376 = vld [vmem:[#allocation5 + $0x618] sm:$0xff]
    %v377 = vld [vmem:[#allocation5 + $0x620] sm:$0xff]
    %v378 = vld [vmem:[#allocation5 + $0x628] sm:$0xff]
    %v379 = vld [vmem:[#allocation5 + $0x630] sm:$0xff]
    %v380 = vld [vmem:[#allocation5 + $0x638] sm:$0xff]
    %v381 = vld [vmem:[#allocation5 + $0x640] sm:$0xff]
    %v382 = vld [vmem:[#allocation5 + $0x648] sm:$0xff]
    %v383 = vld [vmem:[#allocation5 + $0x650] sm:$0xff]
    %v384 = vld [vmem:[#allocation5 + $0x658] sm:$0xff]
    %v385 = vld [vmem:[#allocation5 + $0x660] sm:$0xff]
    %v386 = vld [vmem:[#allocation5 + $0x668] sm:$0xff]
    %v387 = vld [vmem:[#allocation5 + $0x670] sm:$0xff]
    %v388 = vld [vmem:[#allocation5 + $0x678] sm:$0xff]
    %v389 = vld [vmem:[#allocation5 + $0x680] sm:$0xff]
    %v390 = vld [vmem:[#allocation5 + $0x688] sm:$0xff]
    %v391 = vld [vmem:[#allocation5 + $0x690] sm:$0xff]
    %v392 = vld [vmem:[#allocation5 + $0x698] sm:$0xff]
    %v393 = vld [vmem:[#allocation5 + $0x6a0] sm:$0xff]
    %v394 = vld [vmem:[#allocation5 + $0x6a8] sm:$0xff]
    %v395 = vld [vmem:[#allocation5 + $0x6b0] sm:$0xff]
    %v396 = vld [vmem:[#allocation5 + $0x6b8] sm:$0xff]
    %v397 = vld [vmem:[#allocation5 + $0x6c0] sm:$0xff]
    %v398 = vld [vmem:[#allocation5 + $0x6c8] sm:$0xff]
    %v399 = vld [vmem:[#allocation5 + $0x6d0] sm:$0xff]
    %v400 = vld [vmem:[#allocation5 + $0x6d8] sm:$0xff]
    %v401 = vld [vmem:[#allocation5 + $0x6e0] sm:$0xff]
    %v402 = vld [vmem:[#allocation5 + $0x6e8] sm:$0xff]
    %v403 = vld [vmem:[#allocation5 + $0x6f0] sm:$0xff]
    %v404 = vld [vmem:[#allocation5 + $0x6f8] sm:$0xff]
    %v405 = vld [vmem:[#allocation5 + $0x700] sm:$0xff]
    %v406 = vld [vmem:[#allocation5 + $0x708] sm:$0xff]
    %v407 = vld [vmem:[#allocation5 + $0x710] sm:$0xff]
    %v408 = vld [vmem:[#allocation5 + $0x718] sm:$0xff]
    %v409 = vld [vmem:[#allocation5 + $0x720] sm:$0xff]
    %v410 = vld [vmem:[#allocation5 + $0x728] sm:$0xff]
    %v411 = vld [vmem:[#allocation5 + $0x730] sm:$0xff]
    %v412 = vld [vmem:[#allocation5 + $0x738] sm:$0xff]
    %v413 = vld [vmem:[#allocation5 + $0x740] sm:$0xff]
    %v414 = vld [vmem:[#allocation5 + $0x748] sm:$0xff]
    %v415 = vld [vmem:[#allocation5 + $0x750] sm:$0xff]
    %v416 = vld [vmem:[#allocation5 + $0x758] sm:$0xff]
    %v417 = vld [vmem:[#allocation5 + $0x760] sm:$0xff]
    %v418 = vld [vmem:[#allocation5 + $0x768] sm:$0xff]
    %v419 = vld [vmem:[#allocation5 + $0x770] sm:$0xff]
    %v420 = vld [vmem:[#allocation5 + $0x778] sm:$0xff]
    %v421 = vld [vmem:[#allocation5 + $0x780] sm:$0xff]
    %v422 = vld [vmem:[#allocation5 + $0x788] sm:$0xff]
    %v423 = vld [vmem:[#allocation5 + $0x790] sm:$0xff]
    %v424 = vld [vmem:[#allocation5 + $0x798] sm:$0xff]
    %v425 = vld [vmem:[#allocation5 + $0x7a0] sm:$0xff]
    %v426 = vld [vmem:[#allocation5 + $0x7a8] sm:$0xff]
    %v427 = vld [vmem:[#allocation5 + $0x7b0] sm:$0xff]
    %v428 = vld [vmem:[#allocation5 + $0x7b8] sm:$0xff]
    %v429 = vld [vmem:[#allocation5 + $0x7c0] sm:$0xff]
    %v430 = vld [vmem:[#allocation5 + $0x7c8] sm:$0xff]
    %v431 = vld [vmem:[#allocation5 + $0x7d0] sm:$0xff]
    %v432 = vld [vmem:[#allocation5 + $0x7d8] sm:$0xff]
    %v433 = vld [vmem:[#allocation5 + $0x7e0] sm:$0xff]
    %v434 = vld [vmem:[#allocation5 + $0x7e8] sm:$0xff]
    %v435 = vld [vmem:[#allocation5 + $0x7f0] sm:$0xff]
    %v436 = vld [vmem:[#allocation5 + $0x7f8] sm:$0xff]
    %v437 = vld [vmem:[#allocation5 + $0x800] sm:$0xff]
    %v438 = vld [vmem:[#allocation5 + $0x808] sm:$0xff]
    %v439 = vld [vmem:[#allocation5 + $0x810] sm:$0xff]
    %v440 = vld [vmem:[#allocation5 + $0x818] sm:$0xff]
    %v441 = vld [vmem:[#allocation5 + $0x820] sm:$0xff]
    %v442 = vld [vmem:[#allocation5 + $0x828] sm:$0xff]
    %v443 = vld [vmem:[#allocation5 + $0x830] sm:$0xff]
    %v444 = vld [vmem:[#allocation5 + $0x838] sm:$0xff]
    %v445 = vld [vmem:[#allocation5 + $0x840] sm:$0xff]
    %v446 = vld [vmem:[#allocation5 + $0x848] sm:$0xff]
    %v447 = vld [vmem:[#allocation5 + $0x850] sm:$0xff]
    %v448 = vld [vmem:[#allocation5 + $0x858] sm:$0xff]
    %v449 = vld [vmem:[#allocation5 + $0x860] sm:$0xff]
    %v450 = vld [vmem:[#allocation5 + $0x868] sm:$0xff]
    %v451 = vld [vmem:[#allocation5 + $0x870] sm:$0xff]
    %v452 = vld [vmem:[#allocation5 + $0x878] sm:$0xff]
    %v453 = vld [vmem:[#allocation5 + $0x880] sm:$0xff]
    %v454 = vld [vmem:[#allocation5 + $0x888] sm:$0xff]
    %v455 = vld [vmem:[#allocation5 + $0x890] sm:$0xff]
    %v456 = vld [vmem:[#allocation5 + $0x898] sm:$0xff]
    %v457 = vld [vmem:[#allocation5 + $0x8a0] sm:$0xff]
    %v458 = vld [vmem:[#allocation5 + $0x8a8] sm:$0xff]
    %v459 = vld [vmem:[#allocation5 + $0x8b0] sm:$0xff]
    %v460 = vld [vmem:[#allocation5 + $0x8b8] sm:$0xff]
    %v461 = vld [vmem:[#allocation5 + $0x8c0] sm:$0xff]
    %v462 = vld [vmem:[#allocation5 + $0x8c8] sm:$0xff]
    %v463 = vld [vmem:[#allocation5 + $0x8d0] sm:$0xff]
    %v464 = vld [vmem:[#allocation5 + $0x8d8] sm:$0xff]
    %v465 = vld [vmem:[#allocation5 + $0x8e0] sm:$0xff]
    %v466 = vld [vmem:[#allocation5 + $0x8e8] sm:$0xff]
    %v467 = vld [vmem:[#allocation5 + $0x8f0] sm:$0xff]
    %v468 = vld [vmem:[#allocation5 + $0x8f8] sm:$0xff]
    %v469 = vld [vmem:[#allocation5 + $0x900] sm:$0xff]
    %v470 = vld [vmem:[#allocation5 + $0x908] sm:$0xff]
    %v471 = vld [vmem:[#allocation5 + $0x910] sm:$0xff]
    %v472 = vld [vmem:[#allocation5 + $0x918] sm:$0xff]
    %v473 = vld [vmem:[#allocation5 + $0x920] sm:$0xff]
    %v474 = vld [vmem:[#allocation5 + $0x928] sm:$0xff]
    %v475 = vld [vmem:[#allocation5 + $0x930] sm:$0xff]
    %v476 = vld [vmem:[#allocation5 + $0x938] sm:$0xff]
    %v477 = vld [vmem:[#allocation5 + $0x940] sm:$0xff]
    %v478 = vld [vmem:[#allocation5 + $0x948] sm:$0xff]
    %v479 = vld [vmem:[#allocation5 + $0x950] sm:$0xff]
    %v480 = vld [vmem:[#allocation5 + $0x958] sm:$0xff]
    %v481 = vld [vmem:[#allocation5 + $0x960] sm:$0xff]
    %v482 = vld [vmem:[#allocation5 + $0x968] sm:$0xff]
    %v483 = vld [vmem:[#allocation5 + $0x970] sm:$0xff]
    %v484 = vld [vmem:[#allocation5 + $0x978] sm:$0xff]
    %v485 = vld [vmem:[#allocation5 + $0x980] sm:$0xff]
    %v486 = vld [vmem:[#allocation5 + $0x988] sm:$0xff]
    %v487 = vld [vmem:[#allocation5 + $0x990] sm:$0xff]
    %v488 = vld [vmem:[#allocation5 + $0x998] sm:$0xff]
    %v489 = vld [vmem:[#allocation5 + $0x9a0] sm:$0xff]
    %v490 = vld [vmem:[#allocation5 + $0x9a8] sm:$0xff]
    %v491 = vld [vmem:[#allocation5 + $0x9b0] sm:$0xff]
    %v492 = vld [vmem:[#allocation5 + $0x9b8] sm:$0xff]
    %v493 = vld [vmem:[#allocation5 + $0x9c0] sm:$0xff]
    %v494 = vld [vmem:[#allocation5 + $0x9c8] sm:$0xff]
    %v495 = vld [vmem:[#allocation5 + $0x9d0] sm:$0xff]
    %v496 = vld [vmem:[#allocation5 + $0x9d8] sm:$0xff]
    %v497 = vld [vmem:[#allocation5 + $0x9e0] sm:$0xff]
    %v498 = vld [vmem:[#allocation5 + $0x9e8] sm:$0xff]
    %v499 = vld [vmem:[#allocation5 + $0x9f0] sm:$0xff]
    %v500 = vld [vmem:[#allocation5 + $0x9f8] sm:$0xff]
    %v501 = vld [vmem:[#allocation5 + $0xa00] sm:$0xff]
    %v502 = vld [vmem:[#allocation5 + $0xa08] sm:$0xff]
    %v503 = vld [vmem:[#allocation5 + $0xa10] sm:$0xff]
    %v504 = vld [vmem:[#allocation5 + $0xa18] sm:$0xff]
    %v505 = vld [vmem:[#allocation5 + $0xa20] sm:$0xff]
    %v506 = vld [vmem:[#allocation5 + $0xa28] sm:$0xff]
    %v507 = vld [vmem:[#allocation5 + $0xa30] sm:$0xff]
    %v508 = vld [vmem:[#allocation5 + $0xa38] sm:$0xff]
    %v509 = vld [vmem:[#allocation5 + $0xa40] sm:$0xff]
    %v510 = vld [vmem:[#allocation5 + $0xa48] sm:$0xff]
    %v511 = vld [vmem:[#allocation5 + $0xa50] sm:$0xff]
    %v512 = vld [vmem:[#allocation5 + $0xa58] sm:$0xff]
    %v513 = vld [vmem:[#allocation5 + $0xa60] sm:$0xff]
    %v514 = vld [vmem:[#allocation5 + $0xa68] sm:$0xff]
    %v515 = vld [vmem:[#allocation5 + $0xa70] sm:$0xff]
    %v516 = vld [vmem:[#allocation5 + $0xa78] sm:$0xff]
    %v517 = vld [vmem:[#allocation7] sm:$0x3f]
    %v518 = vunpack.c.l.bf16 %v517
    %v519 = vunpack.c.h.bf16 %v517
    %v522 = vlaneseq
    %v523 = vshrl.u32 %v522, 7
    %v524 = vsub.s32 0, %v523
    %v525 = vrot.slane %v518, %v524
    %v526 = vlaneseq
    %v527 = vshrl.u32 %v526, 7
    %v528 = vsub.s32 2, %v527
    %v529 = vrot.slane %v518, %v528
    %v530 = vlaneseq
    %v531 = vshrl.u32 %v530, 7
    %v532 = vsub.s32 4, %v531
    %v533 = vrot.slane %v518, %v532
    %v534 = vlaneseq
    %v535 = vshrl.u32 %v534, 7
    %v536 = vsub.s32 6, %v535
    %v537 = vrot.slane %v518, %v536
    %v538 = vlaneseq
    %v539 = vshrl.u32 %v538, 7
    %v540 = vsub.s32 0, %v539
    %v541 = vrot.slane %v519, %v540
    %v542 = vlaneseq
    %v543 = vshrl.u32 %v542, 7
    %v544 = vsub.s32 2, %v543
    %v545 = vrot.slane %v519, %v544
    %v552 = vlaneseq
    %v553 = vshrl.u32 %v552, 7
    %v554 = vsub.s32 0, %v553
    %v555 = vrot.slane %v525, %v554
    %v556 = vlaneseq
    %v557 = vshrl.u32 %v556, 7
    %v558 = vsub.s32 0, %v557
    %v559 = vrot.slane %v529, %v558
    %v560 = vlaneseq
    %v561 = vshrl.u32 %v560, 7
    %v562 = vsub.s32 0, %v561
    %v563 = vrot.slane %v533, %v562
    %v564 = vlaneseq
    %v565 = vshrl.u32 %v564, 7
    %v566 = vsub.s32 0, %v565
    %v567 = vrot.slane %v537, %v566
    %v568 = vlaneseq
    %v569 = vshrl.u32 %v568, 7
    %v570 = vsub.s32 0, %v569
    %v571 = vrot.slane %v541, %v570
    %v572 = vlaneseq
    %v573 = vshrl.u32 %v572, 7
    %v574 = vsub.s32 0, %v573
    %v575 = vrot.slane %v545, %v574
    %v580 = vunpack.c.l.b16 %v177
    %v581 = vunpack.c.h.b16 %v177
    %v582 = vunpack.c.l.b16 %v178
    %v583 = vunpack.c.h.b16 %v178
    %v584 = vunpack.c.l.b16 %v179
    %v585 = vunpack.c.h.b16 %v179
    %v586 = vunpack.c.l.b16 %v180
    %v587 = vpack.c.b16 %v580, %v580
    %v588 = vpack.c.b16 %v581, %v581
    %v589 = vpack.c.b16 %v582, %v582
    %v590 = vpack.c.b16 %v583, %v583
    %v591 = vpack.c.b16 %v584, %v584
    %v592 = vpack.c.b16 %v585, %v585
    %v593 = vpack.c.b16 %v586, %v586
    %v937 = vunpack.c.l.b16 %v181
    %v938 = vunpack.c.h.b16 %v181
    %v939 = vunpack.c.l.b16 %v182
    %v940 = vunpack.c.h.b16 %v182
    %v941 = vunpack.c.l.b16 %v183
    %v942 = vunpack.c.h.b16 %v183
    %v943 = vunpack.c.l.b16 %v184
    %v944 = vunpack.c.h.b16 %v184
    %v945 = vunpack.c.l.b16 %v185
    %v946 = vunpack.c.h.b16 %v185
    %v947 = vunpack.c.l.b16 %v186
    %v948 = vunpack.c.h.b16 %v186
    %v949 = vunpack.c.l.b16 %v187
    %v950 = vunpack.c.h.b16 %v187
    %v951 = vunpack.c.l.b16 %v188
    %v952 = vunpack.c.h.b16 %v188
    %v953 = vunpack.c.l.b16 %v189
    %v954 = vunpack.c.h.b16 %v189
    %v955 = vunpack.c.l.b16 %v190
    %v956 = vunpack.c.h.b16 %v190
    %v957 = vunpack.c.l.b16 %v191
    %v958 = vunpack.c.h.b16 %v191
    %v959 = vunpack.c.l.b16 %v192
    %v960 = vunpack.c.h.b16 %v192
    %v961 = vunpack.c.l.b16 %v193
    %v962 = vunpack.c.h.b16 %v193
    %v963 = vunpack.c.l.b16 %v194
    %v964 = vunpack.c.h.b16 %v194
    %v965 = vunpack.c.l.b16 %v195
    %v966 = vunpack.c.h.b16 %v195
    %v967 = vunpack.c.l.b16 %v196
    %v968 = vunpack.c.h.b16 %v196
    %v969 = vunpack.c.l.b16 %v197
    %v970 = vunpack.c.h.b16 %v197
    %v971 = vunpack.c.l.b16 %v198
    %v972 = vunpack.c.h.b16 %v198
    %v973 = vunpack.c.l.b16 %v199
    %v974 = vunpack.c.h.b16 %v199
    %v975 = vunpack.c.l.b16 %v200
    %v976 = vunpack.c.h.b16 %v200
    %v977 = vunpack.c.l.b16 %v201
    %v978 = vunpack.c.h.b16 %v201
    %v979 = vunpack.c.l.b16 %v202
    %v980 = vunpack.c.h.b16 %v202
    %v981 = vunpack.c.l.b16 %v203
    %v982 = vunpack.c.h.b16 %v203
    %v983 = vunpack.c.l.b16 %v204
    %v984 = vunpack.c.h.b16 %v204
    %v985 = vunpack.c.l.b16 %v205
    %v986 = vunpack.c.h.b16 %v205
    %v987 = vunpack.c.l.b16 %v206
    %v988 = vunpack.c.h.b16 %v206
    %v989 = vunpack.c.l.b16 %v207
    %v990 = vunpack.c.h.b16 %v207
    %v991 = vunpack.c.l.b16 %v208
    %v992 = vunpack.c.h.b16 %v208
    %v993 = vunpack.c.l.b16 %v209
    %v994 = vunpack.c.h.b16 %v209
    %v995 = vunpack.c.l.b16 %v210
    %v996 = vunpack.c.h.b16 %v210
    %v997 = vunpack.c.l.b16 %v211
    %v998 = vunpack.c.h.b16 %v211
    %v999 = vunpack.c.l.b16 %v212
    %v1000 = vunpack.c.h.b16 %v212
    %v1001 = vunpack.c.l.b16 %v213
    %v1002 = vunpack.c.h.b16 %v213
    %v1003 = vunpack.c.l.b16 %v214
    %v1004 = vunpack.c.h.b16 %v214
    %v1005 = vunpack.c.l.b16 %v215
    %v1006 = vunpack.c.h.b16 %v215
    %v1007 = vunpack.c.l.b16 %v216
    %v1008 = vunpack.c.h.b16 %v216
    %v1009 = vunpack.c.l.b16 %v217
    %v1010 = vunpack.c.h.b16 %v217
    %v1011 = vunpack.c.l.b16 %v218
    %v1012 = vunpack.c.h.b16 %v218
    %v1013 = vunpack.c.l.b16 %v219
    %v1014 = vunpack.c.h.b16 %v219
    %v1015 = vunpack.c.l.b16 %v220
    %v1016 = vunpack.c.h.b16 %v220
    %v1017 = vunpack.c.l.b16 %v221
    %v1018 = vunpack.c.h.b16 %v221
    %v1019 = vunpack.c.l.b16 %v222
    %v1020 = vunpack.c.h.b16 %v222
    %v1021 = vunpack.c.l.b16 %v223
    %v1022 = vunpack.c.h.b16 %v223
    %v1023 = vunpack.c.l.b16 %v224
    %v1024 = vunpack.c.h.b16 %v224
    %v1025 = vunpack.c.l.b16 %v225
    %v1026 = vunpack.c.h.b16 %v225
    %v1027 = vunpack.c.l.b16 %v226
    %v1028 = vunpack.c.h.b16 %v226
    %v1029 = vunpack.c.l.b16 %v227
    %v1030 = vunpack.c.h.b16 %v227
    %v1031 = vunpack.c.l.b16 %v228
    %v1032 = vunpack.c.h.b16 %v228
    %v1033 = vunpack.c.l.b16 %v229
    %v1034 = vunpack.c.h.b16 %v229
    %v1035 = vunpack.c.l.b16 %v230
    %v1036 = vunpack.c.h.b16 %v230
    %v1037 = vunpack.c.l.b16 %v231
    %v1038 = vunpack.c.h.b16 %v231
    %v1039 = vunpack.c.l.b16 %v232
    %v1040 = vunpack.c.h.b16 %v232
    %v1041 = vunpack.c.l.b16 %v233
    %v1042 = vunpack.c.h.b16 %v233
    %v1043 = vunpack.c.l.b16 %v234
    %v1044 = vunpack.c.h.b16 %v234
    %v1045 = vunpack.c.l.b16 %v235
    %v1046 = vunpack.c.h.b16 %v235
    %v1047 = vunpack.c.l.b16 %v236
    %v1048 = vunpack.c.h.b16 %v236
    %v1049 = vunpack.c.l.b16 %v237
    %v1050 = vunpack.c.h.b16 %v237
    %v1051 = vunpack.c.l.b16 %v238
    %v1052 = vunpack.c.h.b16 %v238
    %v1053 = vunpack.c.l.b16 %v239
    %v1054 = vunpack.c.h.b16 %v239
    %v1055 = vunpack.c.l.b16 %v240
    %v1056 = vunpack.c.h.b16 %v240
    %v1057 = vunpack.c.l.b16 %v241
    %v1058 = vunpack.c.h.b16 %v241
    %v1059 = vunpack.c.l.b16 %v242
    %v1060 = vunpack.c.h.b16 %v242
    %v1061 = vunpack.c.l.b16 %v243
    %v1062 = vunpack.c.h.b16 %v243
    %v1063 = vunpack.c.l.b16 %v244
    %v1064 = vunpack.c.h.b16 %v244
    %v1065 = vunpack.c.l.b16 %v245
    %v1066 = vunpack.c.h.b16 %v245
    %v1067 = vunpack.c.l.b16 %v246
    %v1068 = vunpack.c.h.b16 %v246
    %v1069 = vunpack.c.l.b16 %v247
    %v1070 = vunpack.c.h.b16 %v247
    %v1071 = vunpack.c.l.b16 %v248
    %v1072 = vunpack.c.h.b16 %v248
    %v1073 = vunpack.c.l.b16 %v249
    %v1074 = vunpack.c.h.b16 %v249
    %v1075 = vunpack.c.l.b16 %v250
    %v1076 = vunpack.c.h.b16 %v250
    %v1077 = vunpack.c.l.b16 %v251
    %v1078 = vunpack.c.h.b16 %v251
    %v1079 = vunpack.c.l.b16 %v252
    %v1080 = vunpack.c.h.b16 %v252
    %v1081 = vunpack.c.l.b16 %v253
    %v1082 = vunpack.c.h.b16 %v253
    %v1083 = vunpack.c.l.b16 %v254
    %v1084 = vunpack.c.h.b16 %v254
    %v1085 = vunpack.c.l.b16 %v255
    %v1086 = vunpack.c.h.b16 %v255
    %v1087 = vunpack.c.l.b16 %v256
    %v1088 = vunpack.c.h.b16 %v256
    %v1089 = vunpack.c.l.b16 %v257
    %v1090 = vunpack.c.h.b16 %v257
    %v1091 = vunpack.c.l.b16 %v258
    %v1092 = vunpack.c.h.b16 %v258
    %v1093 = vunpack.c.l.b16 %v259
    %v1094 = vunpack.c.h.b16 %v259
    %v1095 = vunpack.c.l.b16 %v260
    %v1096 = vunpack.c.h.b16 %v260
    %v1097 = vunpack.c.l.b16 %v261
    %v1098 = vunpack.c.h.b16 %v261
    %v1099 = vunpack.c.l.b16 %v262
    %v1100 = vunpack.c.h.b16 %v262
    %v1101 = vunpack.c.l.b16 %v263
    %v1102 = vunpack.c.h.b16 %v263
    %v1103 = vunpack.c.l.b16 %v264
    %v1104 = vunpack.c.h.b16 %v264
    %v1105 = vunpack.c.l.b16 %v265
    %v1106 = vunpack.c.h.b16 %v265
    %v1107 = vunpack.c.l.b16 %v266
    %v1108 = vunpack.c.h.b16 %v266
    %v1109 = vunpack.c.l.b16 %v267
    %v1110 = vunpack.c.h.b16 %v267
    %v1111 = vunpack.c.l.b16 %v268
    %v1112 = vunpack.c.h.b16 %v268
    %v1113 = vunpack.c.l.b16 %v269
    %v1114 = vunpack.c.h.b16 %v269
    %v1115 = vunpack.c.l.b16 %v270
    %v1116 = vunpack.c.h.b16 %v270
    %v1117 = vunpack.c.l.b16 %v271
    %v1118 = vunpack.c.h.b16 %v271
    %v1119 = vunpack.c.l.b16 %v272
    %v1120 = vunpack.c.h.b16 %v272
    %v1121 = vunpack.c.l.b16 %v273
    %v1122 = vunpack.c.h.b16 %v273
    %v1123 = vunpack.c.l.b16 %v274
    %v1124 = vunpack.c.h.b16 %v274
    %v1125 = vunpack.c.l.b16 %v275
    %v1126 = vunpack.c.h.b16 %v275
    %v1127 = vunpack.c.l.b16 %v276
    %v1128 = vunpack.c.h.b16 %v276
    %v1129 = vunpack.c.l.b16 %v277
    %v1130 = vunpack.c.h.b16 %v277
    %v1131 = vunpack.c.l.b16 %v278
    %v1132 = vunpack.c.h.b16 %v278
    %v1133 = vunpack.c.l.b16 %v279
    %v1134 = vunpack.c.h.b16 %v279
    %v1135 = vunpack.c.l.b16 %v280
    %v1136 = vunpack.c.h.b16 %v280
    %v1137 = vunpack.c.l.b16 %v281
    %v1138 = vunpack.c.h.b16 %v281
    %v1139 = vunpack.c.l.b16 %v282
    %v1140 = vunpack.c.h.b16 %v282
    %v1141 = vunpack.c.l.b16 %v283
    %v1142 = vunpack.c.h.b16 %v283
    %v1143 = vunpack.c.l.b16 %v284
    %v1144 = vunpack.c.h.b16 %v284
    %v1145 = vunpack.c.l.b16 %v285
    %v1146 = vunpack.c.h.b16 %v285
    %v1147 = vunpack.c.l.b16 %v286
    %v1148 = vunpack.c.h.b16 %v286
    %v1149 = vunpack.c.l.b16 %v287
    %v1150 = vunpack.c.h.b16 %v287
    %v1151 = vunpack.c.l.b16 %v288
    %v1152 = vunpack.c.h.b16 %v288
    %v1153 = vunpack.c.l.b16 %v289
    %v1154 = vunpack.c.h.b16 %v289
    %v1155 = vunpack.c.l.b16 %v290
    %v1156 = vunpack.c.h.b16 %v290
    %v1157 = vunpack.c.l.b16 %v291
    %v1158 = vunpack.c.h.b16 %v291
    %v1159 = vunpack.c.l.b16 %v292
    %v1160 = vunpack.c.h.b16 %v292
    %v1161 = vunpack.c.l.b16 %v293
    %v1162 = vunpack.c.h.b16 %v293
    %v1163 = vunpack.c.l.b16 %v294
    %v1164 = vunpack.c.h.b16 %v294
    %v1165 = vunpack.c.l.b16 %v295
    %v1166 = vunpack.c.h.b16 %v295
    %v1167 = vunpack.c.l.b16 %v296
    %v1168 = vunpack.c.h.b16 %v296
    %v1169 = vunpack.c.l.b16 %v297
    %v1170 = vunpack.c.h.b16 %v297
    %v1171 = vunpack.c.l.b16 %v298
    %v1172 = vunpack.c.h.b16 %v298
    %v1173 = vunpack.c.l.b16 %v299
    %v1174 = vunpack.c.h.b16 %v299
    %v1175 = vunpack.c.l.b16 %v300
    %v1176 = vunpack.c.h.b16 %v300
    %v1177 = vunpack.c.l.b16 %v301
    %v1178 = vunpack.c.h.b16 %v301
    %v1179 = vunpack.c.l.b16 %v302
    %v1180 = vunpack.c.h.b16 %v302
    %v1181 = vunpack.c.l.b16 %v303
    %v1182 = vunpack.c.h.b16 %v303
    %v1183 = vunpack.c.l.b16 %v304
    %v1184 = vunpack.c.h.b16 %v304
    %v1185 = vunpack.c.l.b16 %v305
    %v1186 = vunpack.c.h.b16 %v305
    %v1187 = vunpack.c.l.b16 %v306
    %v1188 = vunpack.c.h.b16 %v306
    %v1189 = vunpack.c.l.b16 %v307
    %v1190 = vunpack.c.h.b16 %v307
    %v1191 = vunpack.c.l.b16 %v308
    %v1192 = vunpack.c.h.b16 %v308
    %v1193 = vunpack.c.l.b16 %v309
    %v1194 = vunpack.c.h.b16 %v309
    %v1195 = vunpack.c.l.b16 %v310
    %v1196 = vunpack.c.h.b16 %v310
    %v1197 = vunpack.c.l.b16 %v311
    %v1198 = vunpack.c.h.b16 %v311
    %v1199 = vunpack.c.l.b16 %v312
    %v1200 = vunpack.c.h.b16 %v312
    %v1201 = vunpack.c.l.b16 %v313
    %v1202 = vunpack.c.h.b16 %v313
    %v1203 = vunpack.c.l.b16 %v314
    %v1204 = vunpack.c.h.b16 %v314
    %v1205 = vunpack.c.l.b16 %v315
    %v1206 = vunpack.c.h.b16 %v315
    %v1207 = vunpack.c.l.b16 %v316
    %v1208 = vunpack.c.h.b16 %v316
    %v1209 = vunpack.c.l.b16 %v317
    %v1210 = vunpack.c.h.b16 %v317
    %v1211 = vunpack.c.l.b16 %v318
    %v1212 = vunpack.c.h.b16 %v318
    %v1213 = vunpack.c.l.b16 %v319
    %v1214 = vunpack.c.h.b16 %v319
    %v1215 = vunpack.c.l.b16 %v320
    %v1216 = vunpack.c.h.b16 %v320
    %v1217 = vunpack.c.l.b16 %v321
    %v1218 = vunpack.c.h.b16 %v321
    %v1219 = vunpack.c.l.b16 %v322
    %v1220 = vunpack.c.h.b16 %v322
    %v1221 = vunpack.c.l.b16 %v323
    %v1222 = vunpack.c.h.b16 %v323
    %v1223 = vunpack.c.l.b16 %v324
    %v1224 = vunpack.c.h.b16 %v324
    %v1225 = vunpack.c.l.b16 %v325
    %v1226 = vunpack.c.h.b16 %v325
    %v1227 = vunpack.c.l.b16 %v326
    %v1228 = vunpack.c.h.b16 %v326
    %v1229 = vunpack.c.l.b16 %v327
    %v1230 = vunpack.c.h.b16 %v327
    %v1231 = vunpack.c.l.b16 %v328
    %v1232 = vunpack.c.h.b16 %v328
    %v1233 = vunpack.c.l.b16 %v329
    %v1234 = vunpack.c.h.b16 %v329
    %v1235 = vunpack.c.l.b16 %v330
    %v1236 = vunpack.c.h.b16 %v330
    %v1237 = vunpack.c.l.b16 %v331
    %v1238 = vunpack.c.h.b16 %v331
    %v1239 = vunpack.c.l.b16 %v332
    %v1240 = vunpack.c.h.b16 %v332
    %v1241 = vunpack.c.l.b16 %v333
    %v1242 = vunpack.c.h.b16 %v333
    %v1243 = vunpack.c.l.b16 %v334
    %v1244 = vunpack.c.h.b16 %v334
    %v1245 = vunpack.c.l.b16 %v335
    %v1246 = vunpack.c.h.b16 %v335
    %v1247 = vunpack.c.l.b16 %v336
    %v1248 = vunpack.c.h.b16 %v336
    %v1249 = vunpack.c.l.b16 %v337
    %v1250 = vunpack.c.h.b16 %v337
    %v1251 = vunpack.c.l.b16 %v338
    %v1252 = vunpack.c.h.b16 %v338
    %v1253 = vunpack.c.l.b16 %v339
    %v1254 = vunpack.c.h.b16 %v339
    %v1255 = vunpack.c.l.b16 %v340
    %v1256 = vunpack.c.h.b16 %v340
    %v1257 = vunpack.c.l.b16 %v341
    %v1258 = vunpack.c.h.b16 %v341
    %v1259 = vunpack.c.l.b16 %v342
    %v1260 = vunpack.c.h.b16 %v342
    %v1261 = vunpack.c.l.b16 %v343
    %v1262 = vunpack.c.h.b16 %v343
    %v1263 = vunpack.c.l.b16 %v344
    %v1264 = vunpack.c.h.b16 %v344
    %v1265 = vunpack.c.l.b16 %v345
    %v1266 = vunpack.c.h.b16 %v345
    %v1267 = vunpack.c.l.b16 %v346
    %v1268 = vunpack.c.h.b16 %v346
    %v1269 = vunpack.c.l.b16 %v347
    %v1270 = vunpack.c.h.b16 %v347
    %v1271 = vunpack.c.l.b16 %v348
    %v1272 = vunpack.c.h.b16 %v348
    %v1273 = vunpack.c.l.b16 %v349
    %v1274 = vunpack.c.h.b16 %v349
    %v1275 = vunpack.c.l.b16 %v350
    %v1276 = vunpack.c.h.b16 %v350
    %v1277 = vunpack.c.l.b16 %v351
    %v1278 = vunpack.c.h.b16 %v351
    %v1279 = vunpack.c.l.b16 %v352
    %v1280 = vunpack.c.h.b16 %v352
    %v1281 = vunpack.c.l.b16 %v353
    %v1282 = vunpack.c.h.b16 %v353
    %v1283 = vunpack.c.l.b16 %v354
    %v1284 = vunpack.c.h.b16 %v354
    %v1285 = vunpack.c.l.b16 %v355
    %v1286 = vunpack.c.h.b16 %v355
    %v1287 = vunpack.c.l.b16 %v356
    %v1288 = vunpack.c.h.b16 %v356
    %v1289 = vunpack.c.l.b16 %v357
    %v1290 = vunpack.c.h.b16 %v357
    %v1291 = vunpack.c.l.b16 %v358
    %v1292 = vunpack.c.h.b16 %v358
    %v1293 = vunpack.c.l.b16 %v359
    %v1294 = vunpack.c.h.b16 %v359
    %v1295 = vunpack.c.l.b16 %v360
    %v1296 = vunpack.c.h.b16 %v360
    %v1297 = vunpack.c.l.b16 %v361
    %v1298 = vunpack.c.h.b16 %v361
    %v1299 = vunpack.c.l.b16 %v362
    %v1300 = vunpack.c.h.b16 %v362
    %v1301 = vunpack.c.l.b16 %v363
    %v1302 = vunpack.c.h.b16 %v363
    %v1303 = vunpack.c.l.b16 %v364
    %v1304 = vunpack.c.h.b16 %v364
    %v1305 = vunpack.c.l.b16 %v365
    %v1306 = vunpack.c.h.b16 %v365
    %v1307 = vunpack.c.l.b16 %v366
    %v1308 = vunpack.c.h.b16 %v366
    %v1309 = vunpack.c.l.b16 %v367
    %v1310 = vunpack.c.h.b16 %v367
    %v1311 = vunpack.c.l.b16 %v368
    %v1312 = vunpack.c.h.b16 %v368
    %v1313 = vunpack.c.l.b16 %v369
    %v1314 = vunpack.c.h.b16 %v369
    %v1315 = vunpack.c.l.b16 %v370
    %v1316 = vunpack.c.h.b16 %v370
    %v1317 = vunpack.c.l.b16 %v371
    %v1318 = vunpack.c.h.b16 %v371
    %v1319 = vunpack.c.l.b16 %v372
    %v1320 = vunpack.c.h.b16 %v372
    %v1321 = vunpack.c.l.b16 %v373
    %v1322 = vunpack.c.h.b16 %v373
    %v1323 = vunpack.c.l.b16 %v374
    %v1324 = vunpack.c.h.b16 %v374
    %v1325 = vunpack.c.l.b16 %v375
    %v1326 = vunpack.c.h.b16 %v375
    %v1327 = vunpack.c.l.b16 %v376
    %v1328 = vunpack.c.h.b16 %v376
    %v1329 = vunpack.c.l.b16 %v377
    %v1330 = vunpack.c.h.b16 %v377
    %v1331 = vunpack.c.l.b16 %v378
    %v1332 = vunpack.c.h.b16 %v378
    %v1333 = vunpack.c.l.b16 %v379
    %v1334 = vunpack.c.h.b16 %v379
    %v1335 = vunpack.c.l.b16 %v380
    %v1336 = vunpack.c.h.b16 %v380
    %v1337 = vunpack.c.l.b16 %v381
    %v1338 = vunpack.c.h.b16 %v381
    %v1339 = vunpack.c.l.b16 %v382
    %v1340 = vunpack.c.h.b16 %v382
    %v1341 = vunpack.c.l.b16 %v383
    %v1342 = vunpack.c.h.b16 %v383
    %v1343 = vunpack.c.l.b16 %v384
    %v1344 = vunpack.c.h.b16 %v384
    %v1345 = vunpack.c.l.b16 %v385
    %v1346 = vunpack.c.h.b16 %v385
    %v1347 = vunpack.c.l.b16 %v386
    %v1348 = vunpack.c.h.b16 %v386
    %v1349 = vunpack.c.l.b16 %v387
    %v1350 = vunpack.c.h.b16 %v387
    %v1351 = vunpack.c.l.b16 %v388
    %v1352 = vunpack.c.h.b16 %v388
    %v1353 = vunpack.c.l.b16 %v389
    %v1354 = vunpack.c.h.b16 %v389
    %v1355 = vunpack.c.l.b16 %v390
    %v1356 = vunpack.c.h.b16 %v390
    %v1357 = vunpack.c.l.b16 %v391
    %v1358 = vunpack.c.h.b16 %v391
    %v1359 = vunpack.c.l.b16 %v392
    %v1360 = vunpack.c.h.b16 %v392
    %v1361 = vunpack.c.l.b16 %v393
    %v1362 = vunpack.c.h.b16 %v393
    %v1363 = vunpack.c.l.b16 %v394
    %v1364 = vunpack.c.h.b16 %v394
    %v1365 = vunpack.c.l.b16 %v395
    %v1366 = vunpack.c.h.b16 %v395
    %v1367 = vunpack.c.l.b16 %v396
    %v1368 = vunpack.c.h.b16 %v396
    %v1369 = vunpack.c.l.b16 %v397
    %v1370 = vunpack.c.h.b16 %v397
    %v1371 = vunpack.c.l.b16 %v398
    %v1372 = vunpack.c.h.b16 %v398
    %v1373 = vunpack.c.l.b16 %v399
    %v1374 = vunpack.c.h.b16 %v399
    %v1375 = vunpack.c.l.b16 %v400
    %v1376 = vunpack.c.h.b16 %v400
    %v1377 = vunpack.c.l.b16 %v401
    %v1378 = vunpack.c.h.b16 %v401
    %v1379 = vunpack.c.l.b16 %v402
    %v1380 = vunpack.c.h.b16 %v402
    %v1381 = vunpack.c.l.b16 %v403
    %v1382 = vunpack.c.h.b16 %v403
    %v1383 = vunpack.c.l.b16 %v404
    %v1384 = vunpack.c.h.b16 %v404
    %v1385 = vunpack.c.l.b16 %v405
    %v1386 = vunpack.c.h.b16 %v405
    %v1387 = vunpack.c.l.b16 %v406
    %v1388 = vunpack.c.h.b16 %v406
    %v1389 = vunpack.c.l.b16 %v407
    %v1390 = vunpack.c.h.b16 %v407
    %v1391 = vunpack.c.l.b16 %v408
    %v1392 = vunpack.c.h.b16 %v408
    %v1393 = vunpack.c.l.b16 %v409
    %v1394 = vunpack.c.h.b16 %v409
    %v1395 = vunpack.c.l.b16 %v410
    %v1396 = vunpack.c.h.b16 %v410
    %v1397 = vunpack.c.l.b16 %v411
    %v1398 = vunpack.c.h.b16 %v411
    %v1399 = vunpack.c.l.b16 %v412
    %v1400 = vunpack.c.h.b16 %v412
    %v1401 = vunpack.c.l.b16 %v413
    %v1402 = vunpack.c.h.b16 %v413
    %v1403 = vunpack.c.l.b16 %v414
    %v1404 = vunpack.c.h.b16 %v414
    %v1405 = vunpack.c.l.b16 %v415
    %v1406 = vunpack.c.h.b16 %v415
    %v1407 = vunpack.c.l.b16 %v416
    %v1408 = vunpack.c.h.b16 %v416
    %v1409 = vunpack.c.l.b16 %v417
    %v1410 = vunpack.c.h.b16 %v417
    %v1411 = vunpack.c.l.b16 %v418
    %v1412 = vunpack.c.h.b16 %v418
    %v1413 = vunpack.c.l.b16 %v419
    %v1414 = vunpack.c.h.b16 %v419
    %v1415 = vunpack.c.l.b16 %v420
    %v1416 = vunpack.c.h.b16 %v420
    %v1417 = vunpack.c.l.b16 %v421
    %v1418 = vunpack.c.h.b16 %v421
    %v1419 = vunpack.c.l.b16 %v422
    %v1420 = vunpack.c.h.b16 %v422
    %v1421 = vunpack.c.l.b16 %v423
    %v1422 = vunpack.c.h.b16 %v423
    %v1423 = vunpack.c.l.b16 %v424
    %v1424 = vunpack.c.h.b16 %v424
    %v1425 = vunpack.c.l.b16 %v425
    %v1426 = vunpack.c.h.b16 %v425
    %v1427 = vunpack.c.l.b16 %v426
    %v1428 = vunpack.c.h.b16 %v426
    %v1429 = vunpack.c.l.b16 %v427
    %v1430 = vunpack.c.h.b16 %v427
    %v1431 = vunpack.c.l.b16 %v428
    %v1432 = vunpack.c.h.b16 %v428
    %v1433 = vunpack.c.l.b16 %v429
    %v1434 = vunpack.c.h.b16 %v429
    %v1435 = vunpack.c.l.b16 %v430
    %v1436 = vunpack.c.h.b16 %v430
    %v1437 = vunpack.c.l.b16 %v431
    %v1438 = vunpack.c.h.b16 %v431
    %v1439 = vunpack.c.l.b16 %v432
    %v1440 = vunpack.c.h.b16 %v432
    %v1441 = vunpack.c.l.b16 %v433
    %v1442 = vunpack.c.h.b16 %v433
    %v1443 = vunpack.c.l.b16 %v434
    %v1444 = vunpack.c.h.b16 %v434
    %v1445 = vunpack.c.l.b16 %v435
    %v1446 = vunpack.c.h.b16 %v435
    %v1447 = vunpack.c.l.b16 %v436
    %v1448 = vunpack.c.h.b16 %v436
    %v1449 = vunpack.c.l.b16 %v437
    %v1450 = vunpack.c.h.b16 %v437
    %v1451 = vunpack.c.l.b16 %v438
    %v1452 = vunpack.c.h.b16 %v438
    %v1453 = vunpack.c.l.b16 %v439
    %v1454 = vunpack.c.h.b16 %v439
    %v1455 = vunpack.c.l.b16 %v440
    %v1456 = vunpack.c.h.b16 %v440
    %v1457 = vunpack.c.l.b16 %v441
    %v1458 = vunpack.c.h.b16 %v441
    %v1459 = vunpack.c.l.b16 %v442
    %v1460 = vunpack.c.h.b16 %v442
    %v1461 = vunpack.c.l.b16 %v443
    %v1462 = vunpack.c.h.b16 %v443
    %v1463 = vunpack.c.l.b16 %v444
    %v1464 = vunpack.c.h.b16 %v444
    %v1465 = vunpack.c.l.b16 %v445
    %v1466 = vunpack.c.h.b16 %v445
    %v1467 = vunpack.c.l.b16 %v446
    %v1468 = vunpack.c.h.b16 %v446
    %v1469 = vunpack.c.l.b16 %v447
    %v1470 = vunpack.c.h.b16 %v447
    %v1471 = vunpack.c.l.b16 %v448
    %v1472 = vunpack.c.h.b16 %v448
    %v1473 = vunpack.c.l.b16 %v449
    %v1474 = vunpack.c.h.b16 %v449
    %v1475 = vunpack.c.l.b16 %v450
    %v1476 = vunpack.c.h.b16 %v450
    %v1477 = vunpack.c.l.b16 %v451
    %v1478 = vunpack.c.h.b16 %v451
    %v1479 = vunpack.c.l.b16 %v452
    %v1480 = vunpack.c.h.b16 %v452
    %v1481 = vunpack.c.l.b16 %v453
    %v1482 = vunpack.c.h.b16 %v453
    %v1483 = vunpack.c.l.b16 %v454
    %v1484 = vunpack.c.h.b16 %v454
    %v1485 = vunpack.c.l.b16 %v455
    %v1486 = vunpack.c.h.b16 %v455
    %v1487 = vunpack.c.l.b16 %v456
    %v1488 = vunpack.c.h.b16 %v456
    %v1489 = vunpack.c.l.b16 %v457
    %v1490 = vunpack.c.h.b16 %v457
    %v1491 = vunpack.c.l.b16 %v458
    %v1492 = vunpack.c.h.b16 %v458
    %v1493 = vunpack.c.l.b16 %v459
    %v1494 = vunpack.c.h.b16 %v459
    %v1495 = vunpack.c.l.b16 %v460
    %v1496 = vunpack.c.h.b16 %v460
    %v1497 = vunpack.c.l.b16 %v461
    %v1498 = vunpack.c.h.b16 %v461
    %v1499 = vunpack.c.l.b16 %v462
    %v1500 = vunpack.c.h.b16 %v462
    %v1501 = vunpack.c.l.b16 %v463
    %v1502 = vunpack.c.h.b16 %v463
    %v1503 = vunpack.c.l.b16 %v464
    %v1504 = vunpack.c.h.b16 %v464
    %v1505 = vunpack.c.l.b16 %v465
    %v1506 = vunpack.c.h.b16 %v465
    %v1507 = vunpack.c.l.b16 %v466
    %v1508 = vunpack.c.h.b16 %v466
    %v1509 = vunpack.c.l.b16 %v467
    %v1510 = vunpack.c.h.b16 %v467
    %v1511 = vunpack.c.l.b16 %v468
    %v1512 = vunpack.c.h.b16 %v468
    %v1513 = vunpack.c.l.b16 %v469
    %v1514 = vunpack.c.h.b16 %v469
    %v1515 = vunpack.c.l.b16 %v470
    %v1516 = vunpack.c.h.b16 %v470
    %v1517 = vunpack.c.l.b16 %v471
    %v1518 = vunpack.c.h.b16 %v471
    %v1519 = vunpack.c.l.b16 %v472
    %v1520 = vunpack.c.h.b16 %v472
    %v1521 = vunpack.c.l.b16 %v473
    %v1522 = vunpack.c.h.b16 %v473
    %v1523 = vunpack.c.l.b16 %v474
    %v1524 = vunpack.c.h.b16 %v474
    %v1525 = vunpack.c.l.b16 %v475
    %v1526 = vunpack.c.h.b16 %v475
    %v1527 = vunpack.c.l.b16 %v476
    %v1528 = vunpack.c.h.b16 %v476
    %v1529 = vunpack.c.l.b16 %v477
    %v1530 = vunpack.c.h.b16 %v477
    %v1531 = vunpack.c.l.b16 %v478
    %v1532 = vunpack.c.h.b16 %v478
    %v1533 = vunpack.c.l.b16 %v479
    %v1534 = vunpack.c.h.b16 %v479
    %v1535 = vunpack.c.l.b16 %v480
    %v1536 = vunpack.c.h.b16 %v480
    %v1537 = vunpack.c.l.b16 %v481
    %v1538 = vunpack.c.h.b16 %v481
    %v1539 = vunpack.c.l.b16 %v482
    %v1540 = vunpack.c.h.b16 %v482
    %v1541 = vunpack.c.l.b16 %v483
    %v1542 = vunpack.c.h.b16 %v483
    %v1543 = vunpack.c.l.b16 %v484
    %v1544 = vunpack.c.h.b16 %v484
    %v1545 = vunpack.c.l.b16 %v485
    %v1546 = vunpack.c.h.b16 %v485
    %v1547 = vunpack.c.l.b16 %v486
    %v1548 = vunpack.c.h.b16 %v486
    %v1549 = vunpack.c.l.b16 %v487
    %v1550 = vunpack.c.h.b16 %v487
    %v1551 = vunpack.c.l.b16 %v488
    %v1552 = vunpack.c.h.b16 %v488
    %v1553 = vunpack.c.l.b16 %v489
    %v1554 = vunpack.c.h.b16 %v489
    %v1555 = vunpack.c.l.b16 %v490
    %v1556 = vunpack.c.h.b16 %v490
    %v1557 = vunpack.c.l.b16 %v491
    %v1558 = vunpack.c.h.b16 %v491
    %v1559 = vunpack.c.l.b16 %v492
    %v1560 = vunpack.c.h.b16 %v492
    %v1561 = vunpack.c.l.b16 %v493
    %v1562 = vunpack.c.h.b16 %v493
    %v1563 = vunpack.c.l.b16 %v494
    %v1564 = vunpack.c.h.b16 %v494
    %v1565 = vunpack.c.l.b16 %v495
    %v1566 = vunpack.c.h.b16 %v495
    %v1567 = vunpack.c.l.b16 %v496
    %v1568 = vunpack.c.h.b16 %v496
    %v1569 = vunpack.c.l.b16 %v497
    %v1570 = vunpack.c.h.b16 %v497
    %v1571 = vunpack.c.l.b16 %v498
    %v1572 = vunpack.c.h.b16 %v498
    %v1573 = vunpack.c.l.b16 %v499
    %v1574 = vunpack.c.h.b16 %v499
    %v1575 = vunpack.c.l.b16 %v500
    %v1576 = vunpack.c.h.b16 %v500
    %v1577 = vunpack.c.l.b16 %v501
    %v1578 = vunpack.c.h.b16 %v501
    %v1579 = vunpack.c.l.b16 %v502
    %v1580 = vunpack.c.h.b16 %v502
    %v1581 = vunpack.c.l.b16 %v503
    %v1582 = vunpack.c.h.b16 %v503
    %v1583 = vunpack.c.l.b16 %v504
    %v1584 = vunpack.c.h.b16 %v504
    %v1585 = vunpack.c.l.b16 %v505
    %v1586 = vunpack.c.h.b16 %v505
    %v1587 = vunpack.c.l.b16 %v506
    %v1588 = vunpack.c.h.b16 %v506
    %v1589 = vunpack.c.l.b16 %v507
    %v1590 = vunpack.c.h.b16 %v507
    %v1591 = vunpack.c.l.b16 %v508
    %v1592 = vunpack.c.h.b16 %v508
    %v1593 = vunpack.c.l.b16 %v509
    %v1594 = vunpack.c.h.b16 %v509
    %v1595 = vunpack.c.l.b16 %v510
    %v1596 = vunpack.c.h.b16 %v510
    %v1597 = vunpack.c.l.b16 %v511
    %v1598 = vunpack.c.h.b16 %v511
    %v1599 = vunpack.c.l.b16 %v512
    %v1600 = vunpack.c.h.b16 %v512
    %v1601 = vunpack.c.l.b16 %v513
    %v1602 = vunpack.c.h.b16 %v513
    %v1603 = vunpack.c.l.b16 %v514
    %v1604 = vunpack.c.h.b16 %v514
    %v1605 = vunpack.c.l.b16 %v515
    %v1606 = vunpack.c.h.b16 %v515
    %v1607 = vunpack.c.l.b16 %v516
    %v1608 = vunpack.c.h.b16 %v516
    %v1609 = vpack.c.b16 %v943, %v937
    %v1610 = vpack.c.b16 %v944, %v938
    %v1611 = vpack.c.b16 %v945, %v939
    %v1612 = vpack.c.b16 %v946, %v940
    %v1613 = vpack.c.b16 %v947, %v941
    %v1614 = vpack.c.b16 %v948, %v942
    %v1615 = vpack.c.b16 %v955, %v949
    %v1616 = vpack.c.b16 %v956, %v950
    %v1617 = vpack.c.b16 %v957, %v951
    %v1618 = vpack.c.b16 %v958, %v952
    %v1619 = vpack.c.b16 %v959, %v953
    %v1620 = vpack.c.b16 %v960, %v954
    %v1621 = vpack.c.b16 %v967, %v961
    %v1622 = vpack.c.b16 %v968, %v962
    %v1623 = vpack.c.b16 %v969, %v963
    %v1624 = vpack.c.b16 %v970, %v964
    %v1625 = vpack.c.b16 %v971, %v965
    %v1626 = vpack.c.b16 %v972, %v966
    %v1627 = vpack.c.b16 %v979, %v973
    %v1628 = vpack.c.b16 %v980, %v974
    %v1629 = vpack.c.b16 %v981, %v975
    %v1630 = vpack.c.b16 %v982, %v976
    %v1631 = vpack.c.b16 %v983, %v977
    %v1632 = vpack.c.b16 %v984, %v978
    %v1633 = vpack.c.b16 %v991, %v985
    %v1634 = vpack.c.b16 %v992, %v986
    %v1635 = vpack.c.b16 %v993, %v987
    %v1636 = vpack.c.b16 %v994, %v988
    %v1637 = vpack.c.b16 %v995, %v989
    %v1638 = vpack.c.b16 %v996, %v990
    %v1639 = vpack.c.b16 %v1003, %v997
    %v1640 = vpack.c.b16 %v1004, %v998
    %v1641 = vpack.c.b16 %v1005, %v999
    %v1642 = vpack.c.b16 %v1006, %v1000
    %v1643 = vpack.c.b16 %v1007, %v1001
    %v1644 = vpack.c.b16 %v1008, %v1002
    %v1645 = vpack.c.b16 %v1015, %v1009
    %v1646 = vpack.c.b16 %v1016, %v1010
    %v1647 = vpack.c.b16 %v1017, %v1011
    %v1648 = vpack.c.b16 %v1018, %v1012
    %v1649 = vpack.c.b16 %v1019, %v1013
    %v1650 = vpack.c.b16 %v1020, %v1014
    %v1651 = vpack.c.b16 %v1027, %v1021
    %v1652 = vpack.c.b16 %v1028, %v1022
    %v1653 = vpack.c.b16 %v1029, %v1023
    %v1654 = vpack.c.b16 %v1030, %v1024
    %v1655 = vpack.c.b16 %v1031, %v1025
    %v1656 = vpack.c.b16 %v1032, %v1026
    %v1657 = vpack.c.b16 %v1039, %v1033
    %v1658 = vpack.c.b16 %v1040, %v1034
    %v1659 = vpack.c.b16 %v1041, %v1035
    %v1660 = vpack.c.b16 %v1042, %v1036
    %v1661 = vpack.c.b16 %v1043, %v1037
    %v1662 = vpack.c.b16 %v1044, %v1038
    %v1663 = vpack.c.b16 %v1051, %v1045
    %v1664 = vpack.c.b16 %v1052, %v1046
    %v1665 = vpack.c.b16 %v1053, %v1047
    %v1666 = vpack.c.b16 %v1054, %v1048
    %v1667 = vpack.c.b16 %v1055, %v1049
    %v1668 = vpack.c.b16 %v1056, %v1050
    %v1669 = vpack.c.b16 %v1063, %v1057
    %v1670 = vpack.c.b16 %v1064, %v1058
    %v1671 = vpack.c.b16 %v1065, %v1059
    %v1672 = vpack.c.b16 %v1066, %v1060
    %v1673 = vpack.c.b16 %v1067, %v1061
    %v1674 = vpack.c.b16 %v1068, %v1062
    %v1675 = vpack.c.b16 %v1075, %v1069
    %v1676 = vpack.c.b16 %v1076, %v1070
    %v1677 = vpack.c.b16 %v1077, %v1071
    %v1678 = vpack.c.b16 %v1078, %v1072
    %v1679 = vpack.c.b16 %v1079, %v1073
    %v1680 = vpack.c.b16 %v1080, %v1074
    %v1681 = vpack.c.b16 %v1087, %v1081
    %v1682 = vpack.c.b16 %v1088, %v1082
    %v1683 = vpack.c.b16 %v1089, %v1083
    %v1684 = vpack.c.b16 %v1090, %v1084
    %v1685 = vpack.c.b16 %v1091, %v1085
    %v1686 = vpack.c.b16 %v1092, %v1086
    %v1687 = vpack.c.b16 %v1099, %v1093
    %v1688 = vpack.c.b16 %v1100, %v1094
    %v1689 = vpack.c.b16 %v1101, %v1095
    %v1690 = vpack.c.b16 %v1102, %v1096
    %v1691 = vpack.c.b16 %v1103, %v1097
    %v1692 = vpack.c.b16 %v1104, %v1098
    %v1693 = vpack.c.b16 %v1111, %v1105
    %v1694 = vpack.c.b16 %v1112, %v1106
    %v1695 = vpack.c.b16 %v1113, %v1107
    %v1696 = vpack.c.b16 %v1114, %v1108
    %v1697 = vpack.c.b16 %v1115, %v1109
    %v1698 = vpack.c.b16 %v1116, %v1110
    %v1699 = vpack.c.b16 %v1123, %v1117
    %v1700 = vpack.c.b16 %v1124, %v1118
    %v1701 = vpack.c.b16 %v1125, %v1119
    %v1702 = vpack.c.b16 %v1126, %v1120
    %v1703 = vpack.c.b16 %v1127, %v1121
    %v1704 = vpack.c.b16 %v1128, %v1122
    %v1705 = vpack.c.b16 %v1135, %v1129
    %v1706 = vpack.c.b16 %v1136, %v1130
    %v1707 = vpack.c.b16 %v1137, %v1131
    %v1708 = vpack.c.b16 %v1138, %v1132
    %v1709 = vpack.c.b16 %v1139, %v1133
    %v1710 = vpack.c.b16 %v1140, %v1134
    %v1711 = vpack.c.b16 %v1147, %v1141
    %v1712 = vpack.c.b16 %v1148, %v1142
    %v1713 = vpack.c.b16 %v1149, %v1143
    %v1714 = vpack.c.b16 %v1150, %v1144
    %v1715 = vpack.c.b16 %v1151, %v1145
    %v1716 = vpack.c.b16 %v1152, %v1146
    %v1717 = vpack.c.b16 %v1159, %v1153
    %v1718 = vpack.c.b16 %v1160, %v1154
    %v1719 = vpack.c.b16 %v1161, %v1155
    %v1720 = vpack.c.b16 %v1162, %v1156
    %v1721 = vpack.c.b16 %v1163, %v1157
    %v1722 = vpack.c.b16 %v1164, %v1158
    %v1723 = vpack.c.b16 %v1171, %v1165
    %v1724 = vpack.c.b16 %v1172, %v1166
    %v1725 = vpack.c.b16 %v1173, %v1167
    %v1726 = vpack.c.b16 %v1174, %v1168
    %v1727 = vpack.c.b16 %v1175, %v1169
    %v1728 = vpack.c.b16 %v1176, %v1170
    %v1729 = vpack.c.b16 %v1183, %v1177
    %v1730 = vpack.c.b16 %v1184, %v1178
    %v1731 = vpack.c.b16 %v1185, %v1179
    %v1732 = vpack.c.b16 %v1186, %v1180
    %v1733 = vpack.c.b16 %v1187, %v1181
    %v1734 = vpack.c.b16 %v1188, %v1182
    %v1735 = vpack.c.b16 %v1195, %v1189
    %v1736 = vpack.c.b16 %v1196, %v1190
    %v1737 = vpack.c.b16 %v1197, %v1191
    %v1738 = vpack.c.b16 %v1198, %v1192
    %v1739 = vpack.c.b16 %v1199, %v1193
    %v1740 = vpack.c.b16 %v1200, %v1194
    %v1741 = vpack.c.b16 %v1207, %v1201
    %v1742 = vpack.c.b16 %v1208, %v1202
    %v1743 = vpack.c.b16 %v1209, %v1203
    %v1744 = vpack.c.b16 %v1210, %v1204
    %v1745 = vpack.c.b16 %v1211, %v1205
    %v1746 = vpack.c.b16 %v1212, %v1206
    %v1747 = vpack.c.b16 %v1219, %v1213
    %v1748 = vpack.c.b16 %v1220, %v1214
    %v1749 = vpack.c.b16 %v1221, %v1215
    %v1750 = vpack.c.b16 %v1222, %v1216
    %v1751 = vpack.c.b16 %v1223, %v1217
    %v1752 = vpack.c.b16 %v1224, %v1218
    %v1753 = vpack.c.b16 %v1231, %v1225
    %v1754 = vpack.c.b16 %v1232, %v1226
    %v1755 = vpack.c.b16 %v1233, %v1227
    %v1756 = vpack.c.b16 %v1234, %v1228
    %v1757 = vpack.c.b16 %v1235, %v1229
    %v1758 = vpack.c.b16 %v1236, %v1230
    %v1759 = vpack.c.b16 %v1243, %v1237
    %v1760 = vpack.c.b16 %v1244, %v1238
    %v1761 = vpack.c.b16 %v1245, %v1239
    %v1762 = vpack.c.b16 %v1246, %v1240
    %v1763 = vpack.c.b16 %v1247, %v1241
    %v1764 = vpack.c.b16 %v1248, %v1242
    %v1765 = vpack.c.b16 %v1255, %v1249
    %v1766 = vpack.c.b16 %v1256, %v1250
    %v1767 = vpack.c.b16 %v1257, %v1251
    %v1768 = vpack.c.b16 %v1258, %v1252
    %v1769 = vpack.c.b16 %v1259, %v1253
    %v1770 = vpack.c.b16 %v1260, %v1254
    %v1771 = vpack.c.b16 %v1267, %v1261
    %v1772 = vpack.c.b16 %v1268, %v1262
    %v1773 = vpack.c.b16 %v1269, %v1263
    %v1774 = vpack.c.b16 %v1270, %v1264
    %v1775 = vpack.c.b16 %v1271, %v1265
    %v1776 = vpack.c.b16 %v1272, %v1266
    %v1777 = vpack.c.b16 %v1279, %v1273
    %v1778 = vpack.c.b16 %v1280, %v1274
    %v1779 = vpack.c.b16 %v1281, %v1275
    %v1780 = vpack.c.b16 %v1282, %v1276
    %v1781 = vpack.c.b16 %v1283, %v1277
    %v1782 = vpack.c.b16 %v1284, %v1278
    %v1783 = vpack.c.b16 %v1291, %v1285
    %v1784 = vpack.c.b16 %v1292, %v1286
    %v1785 = vpack.c.b16 %v1293, %v1287
    %v1786 = vpack.c.b16 %v1294, %v1288
    %v1787 = vpack.c.b16 %v1295, %v1289
    %v1788 = vpack.c.b16 %v1296, %v1290
    %v1789 = vpack.c.b16 %v1303, %v1297
    %v1790 = vpack.c.b16 %v1304, %v1298
    %v1791 = vpack.c.b16 %v1305, %v1299
    %v1792 = vpack.c.b16 %v1306, %v1300
    %v1793 = vpack.c.b16 %v1307, %v1301
    %v1794 = vpack.c.b16 %v1308, %v1302
    %v1795 = vpack.c.b16 %v1315, %v1309
    %v1796 = vpack.c.b16 %v1316, %v1310
    %v1797 = vpack.c.b16 %v1317, %v1311
    %v1798 = vpack.c.b16 %v1318, %v1312
    %v1799 = vpack.c.b16 %v1319, %v1313
    %v1800 = vpack.c.b16 %v1320, %v1314
    %v1801 = vpack.c.b16 %v1327, %v1321
    %v1802 = vpack.c.b16 %v1328, %v1322
    %v1803 = vpack.c.b16 %v1329, %v1323
    %v1804 = vpack.c.b16 %v1330, %v1324
    %v1805 = vpack.c.b16 %v1331, %v1325
    %v1806 = vpack.c.b16 %v1332, %v1326
    %v1807 = vpack.c.b16 %v1339, %v1333
    %v1808 = vpack.c.b16 %v1340, %v1334
    %v1809 = vpack.c.b16 %v1341, %v1335
    %v1810 = vpack.c.b16 %v1342, %v1336
    %v1811 = vpack.c.b16 %v1343, %v1337
    %v1812 = vpack.c.b16 %v1344, %v1338
    %v1813 = vpack.c.b16 %v1351, %v1345
    %v1814 = vpack.c.b16 %v1352, %v1346
    %v1815 = vpack.c.b16 %v1353, %v1347
    %v1816 = vpack.c.b16 %v1354, %v1348
    %v1817 = vpack.c.b16 %v1355, %v1349
    %v1818 = vpack.c.b16 %v1356, %v1350
    %v1819 = vpack.c.b16 %v1363, %v1357
    %v1820 = vpack.c.b16 %v1364, %v1358
    %v1821 = vpack.c.b16 %v1365, %v1359
    %v1822 = vpack.c.b16 %v1366, %v1360
    %v1823 = vpack.c.b16 %v1367, %v1361
    %v1824 = vpack.c.b16 %v1368, %v1362
    %v1825 = vpack.c.b16 %v1375, %v1369
    %v1826 = vpack.c.b16 %v1376, %v1370
    %v1827 = vpack.c.b16 %v1377, %v1371
    %v1828 = vpack.c.b16 %v1378, %v1372
    %v1829 = vpack.c.b16 %v1379, %v1373
    %v1830 = vpack.c.b16 %v1380, %v1374
    %v1831 = vpack.c.b16 %v1387, %v1381
    %v1832 = vpack.c.b16 %v1388, %v1382
    %v1833 = vpack.c.b16 %v1389, %v1383
    %v1834 = vpack.c.b16 %v1390, %v1384
    %v1835 = vpack.c.b16 %v1391, %v1385
    %v1836 = vpack.c.b16 %v1392, %v1386
    %v1837 = vpack.c.b16 %v1399, %v1393
    %v1838 = vpack.c.b16 %v1400, %v1394
    %v1839 = vpack.c.b16 %v1401, %v1395
    %v1840 = vpack.c.b16 %v1402, %v1396
    %v1841 = vpack.c.b16 %v1403, %v1397
    %v1842 = vpack.c.b16 %v1404, %v1398
    %v1843 = vpack.c.b16 %v1411, %v1405
    %v1844 = vpack.c.b16 %v1412, %v1406
    %v1845 = vpack.c.b16 %v1413, %v1407
    %v1846 = vpack.c.b16 %v1414, %v1408
    %v1847 = vpack.c.b16 %v1415, %v1409
    %v1848 = vpack.c.b16 %v1416, %v1410
    %v1849 = vpack.c.b16 %v1423, %v1417
    %v1850 = vpack.c.b16 %v1424, %v1418
    %v1851 = vpack.c.b16 %v1425, %v1419
    %v1852 = vpack.c.b16 %v1426, %v1420
    %v1853 = vpack.c.b16 %v1427, %v1421
    %v1854 = vpack.c.b16 %v1428, %v1422
    %v1855 = vpack.c.b16 %v1435, %v1429
    %v1856 = vpack.c.b16 %v1436, %v1430
    %v1857 = vpack.c.b16 %v1437, %v1431
    %v1858 = vpack.c.b16 %v1438, %v1432
    %v1859 = vpack.c.b16 %v1439, %v1433
    %v1860 = vpack.c.b16 %v1440, %v1434
    %v1861 = vpack.c.b16 %v1447, %v1441
    %v1862 = vpack.c.b16 %v1448, %v1442
    %v1863 = vpack.c.b16 %v1449, %v1443
    %v1864 = vpack.c.b16 %v1450, %v1444
    %v1865 = vpack.c.b16 %v1451, %v1445
    %v1866 = vpack.c.b16 %v1452, %v1446
    %v1867 = vpack.c.b16 %v1459, %v1453
    %v1868 = vpack.c.b16 %v1460, %v1454
    %v1869 = vpack.c.b16 %v1461, %v1455
    %v1870 = vpack.c.b16 %v1462, %v1456
    %v1871 = vpack.c.b16 %v1463, %v1457
    %v1872 = vpack.c.b16 %v1464, %v1458
    %v1873 = vpack.c.b16 %v1471, %v1465
    %v1874 = vpack.c.b16 %v1472, %v1466
    %v1875 = vpack.c.b16 %v1473, %v1467
    %v1876 = vpack.c.b16 %v1474, %v1468
    %v1877 = vpack.c.b16 %v1475, %v1469
    %v1878 = vpack.c.b16 %v1476, %v1470
    %v1879 = vpack.c.b16 %v1483, %v1477
    %v1880 = vpack.c.b16 %v1484, %v1478
    %v1881 = vpack.c.b16 %v1485, %v1479
    %v1882 = vpack.c.b16 %v1486, %v1480
    %v1883 = vpack.c.b16 %v1487, %v1481
    %v1884 = vpack.c.b16 %v1488, %v1482
    %v1885 = vpack.c.b16 %v1495, %v1489
    %v1886 = vpack.c.b16 %v1496, %v1490
    %v1887 = vpack.c.b16 %v1497, %v1491
    %v1888 = vpack.c.b16 %v1498, %v1492
    %v1889 = vpack.c.b16 %v1499, %v1493
    %v1890 = vpack.c.b16 %v1500, %v1494
    %v1891 = vpack.c.b16 %v1507, %v1501
    %v1892 = vpack.c.b16 %v1508, %v1502
    %v1893 = vpack.c.b16 %v1509, %v1503
    %v1894 = vpack.c.b16 %v1510, %v1504
    %v1895 = vpack.c.b16 %v1511, %v1505
    %v1896 = vpack.c.b16 %v1512, %v1506
    %v1897 = vpack.c.b16 %v1519, %v1513
    %v1898 = vpack.c.b16 %v1520, %v1514
    %v1899 = vpack.c.b16 %v1521, %v1515
    %v1900 = vpack.c.b16 %v1522, %v1516
    %v1901 = vpack.c.b16 %v1523, %v1517
    %v1902 = vpack.c.b16 %v1524, %v1518
    %v1903 = vpack.c.b16 %v1531, %v1525
    %v1904 = vpack.c.b16 %v1532, %v1526
    %v1905 = vpack.c.b16 %v1533, %v1527
    %v1906 = vpack.c.b16 %v1534, %v1528
    %v1907 = vpack.c.b16 %v1535, %v1529
    %v1908 = vpack.c.b16 %v1536, %v1530
    %v1909 = vpack.c.b16 %v1543, %v1537
    %v1910 = vpack.c.b16 %v1544, %v1538
    %v1911 = vpack.c.b16 %v1545, %v1539
    %v1912 = vpack.c.b16 %v1546, %v1540
    %v1913 = vpack.c.b16 %v1547, %v1541
    %v1914 = vpack.c.b16 %v1548, %v1542
    %v1915 = vpack.c.b16 %v1555, %v1549
    %v1916 = vpack.c.b16 %v1556, %v1550
    %v1917 = vpack.c.b16 %v1557, %v1551
    %v1918 = vpack.c.b16 %v1558, %v1552
    %v1919 = vpack.c.b16 %v1559, %v1553
    %v1920 = vpack.c.b16 %v1560, %v1554
    %v1921 = vpack.c.b16 %v1567, %v1561
    %v1922 = vpack.c.b16 %v1568, %v1562
    %v1923 = vpack.c.b16 %v1569, %v1563
    %v1924 = vpack.c.b16 %v1570, %v1564
    %v1925 = vpack.c.b16 %v1571, %v1565
    %v1926 = vpack.c.b16 %v1572, %v1566
    %v1927 = vpack.c.b16 %v1579, %v1573
    %v1928 = vpack.c.b16 %v1580, %v1574
    %v1929 = vpack.c.b16 %v1581, %v1575
    %v1930 = vpack.c.b16 %v1582, %v1576
    %v1931 = vpack.c.b16 %v1583, %v1577
    %v1932 = vpack.c.b16 %v1584, %v1578
    %v1933 = vpack.c.b16 %v1591, %v1585
    %v1934 = vpack.c.b16 %v1592, %v1586
    %v1935 = vpack.c.b16 %v1593, %v1587
    %v1936 = vpack.c.b16 %v1594, %v1588
    %v1937 = vpack.c.b16 %v1595, %v1589
    %v1938 = vpack.c.b16 %v1596, %v1590
    %v1939 = vpack.c.b16 %v1603, %v1597
    %v1940 = vpack.c.b16 %v1604, %v1598
    %v1941 = vpack.c.b16 %v1605, %v1599
    %v1942 = vpack.c.b16 %v1606, %v1600
    %v1943 = vpack.c.b16 %v1607, %v1601
    %v1944 = vpack.c.b16 %v1608, %v1602
    %2281 = vmatprep.subr.bf16.mxu0 %v1652
    %2282 = vmatpush1.bf16.msra.mxu0 %v1651
    %2283 = vmatprep.subr.bf16.mxu0 %v1646
    %2284 = vmatpush1.bf16.msra.mxu0 %v1645
    %2285 = vmatprep.subr.bf16.mxu0 %v1640
    %2286 = vmatpush1.bf16.msra.mxu0 %v1639
    %2287 = vmatprep.subr.bf16.mxu0 %v1634
    %2288 = vmatpush1.bf16.msra.mxu0 %v1633
    %2289 = vmatprep.subr.bf16.mxu0 %v1628
    %2290 = vmatpush1.bf16.msra.mxu0 %v1627
    %2291 = vmatprep.subr.bf16.mxu0 %v1622
    %2292 = vmatpush1.bf16.msra.mxu0 %v1621
    %2293 = vmatprep.subr.bf16.mxu0 %v1616
    %2294 = vmatpush1.bf16.msra.mxu0 %v1615
    %2295 = vmatprep.subr.bf16.mxu0 %v1610
    %2296 = vmatpush1.bf16.msra.mxu0 %v1609
    %2297 = vmatprep.subr.bf16.mxu0 %v1700
    %2298 = vmatpush2.bf16.msra.mxu0 %v1699
    %2299 = vmatprep.subr.bf16.mxu0 %v1694
    %2300 = vmatpush2.bf16.msra.mxu0 %v1693
    %2301 = vmatprep.subr.bf16.mxu0 %v1688
    %2302 = vmatpush2.bf16.msra.mxu0 %v1687
    %2303 = vmatprep.subr.bf16.mxu0 %v1682
    %2304 = vmatpush2.bf16.msra.mxu0 %v1681
    %2305 = vmatprep.subr.bf16.mxu0 %v1676
    %2306 = vmatpush2.bf16.msra.mxu0 %v1675
    %2307 = vmatprep.subr.bf16.mxu0 %v1670
    %2308 = vmatpush2.bf16.msra.mxu0 %v1669
    %2309 = vmatprep.subr.bf16.mxu0 %v1664
    %2310 = vmatpush2.bf16.msra.mxu0 %v1663
    %2311 = vmatprep.subr.bf16.mxu0 %v1658
    %2312 = vmatpush2.bf16.msra.mxu0 %v1657
    %2313 = vmatprep.mubr.bf16.mxu0 %v588
    %2314 = vmatmul.mubr.bf16.gmra.mxu0 %v587
    %v2315 = vpop.f32.mrf.mxu0
    %v2316 = vadd.f32 %v555, %v2315
    %v2317 = vpop.f32.mrf.mxu0
    %v2318 = vadd.f32 %v559, %v2317
    %v2319 = vpop.f32.mrf.mxu0
    %v2320 = vpop.f32.mrf.mxu0
    %2321 = vdwg.mxu0
    %2322 = vmatprep.subr.bf16.mxu0 %v1748
    %2323 = vmatpush1.bf16.msra.mxu0 %v1747
    %2324 = vmatprep.subr.bf16.mxu0 %v1742
    %2325 = vmatpush1.bf16.msra.mxu0 %v1741
    %2326 = vmatprep.subr.bf16.mxu0 %v1736
    %2327 = vmatpush1.bf16.msra.mxu0 %v1735
    %2328 = vmatprep.subr.bf16.mxu0 %v1730
    %2329 = vmatpush1.bf16.msra.mxu0 %v1729
    %2330 = vmatprep.subr.bf16.mxu0 %v1724
    %2331 = vmatpush1.bf16.msra.mxu0 %v1723
    %2332 = vmatprep.subr.bf16.mxu0 %v1718
    %2333 = vmatpush1.bf16.msra.mxu0 %v1717
    %2334 = vmatprep.subr.bf16.mxu0 %v1712
    %2335 = vmatpush1.bf16.msra.mxu0 %v1711
    %2336 = vmatprep.subr.bf16.mxu0 %v1706
    %2337 = vmatpush1.bf16.msra.mxu0 %v1705
    %2338 = vmatprep.subr.bf16.mxu0 %v1796
    %2339 = vmatpush2.bf16.msra.mxu0 %v1795
    %2340 = vmatprep.subr.bf16.mxu0 %v1790
    %2341 = vmatpush2.bf16.msra.mxu0 %v1789
    %2342 = vmatprep.subr.bf16.mxu0 %v1784
    %2343 = vmatpush2.bf16.msra.mxu0 %v1783
    %2344 = vmatprep.subr.bf16.mxu0 %v1778
    %2345 = vmatpush2.bf16.msra.mxu0 %v1777
    %2346 = vmatprep.subr.bf16.mxu0 %v1772
    %2347 = vmatpush2.bf16.msra.mxu0 %v1771
    %2348 = vmatprep.subr.bf16.mxu0 %v1766
    %2349 = vmatpush2.bf16.msra.mxu0 %v1765
    %2350 = vmatprep.subr.bf16.mxu0 %v1760
    %2351 = vmatpush2.bf16.msra.mxu0 %v1759
    %2352 = vmatprep.subr.bf16.mxu0 %v1754
    %2353 = vmatpush2.bf16.msra.mxu0 %v1753
    %2354 = vmatprep.mubr.bf16.mxu0 %v590
    %2355 = vmatmul.mubr.bf16.gmra.mxu0 %v589
    %v2356 = vpop.f32.mrf.mxu0
    %v2357 = vadd.f32 %v2316, %v2356
    %v2358 = vpop.f32.mrf.mxu0
    %v2359 = vadd.f32 %v2318, %v2358
    %v2360 = vpop.f32.mrf.mxu0
    %v2361 = vpop.f32.mrf.mxu0
    %2362 = vdwg.mxu0
    %2363 = vmatprep.subr.bf16.mxu0 %v1844
    %2364 = vmatpush1.bf16.msra.mxu0 %v1843
    %2365 = vmatprep.subr.bf16.mxu0 %v1838
    %2366 = vmatpush1.bf16.msra.mxu0 %v1837
    %2367 = vmatprep.subr.bf16.mxu0 %v1832
    %2368 = vmatpush1.bf16.msra.mxu0 %v1831
    %2369 = vmatprep.subr.bf16.mxu0 %v1826
    %2370 = vmatpush1.bf16.msra.mxu0 %v1825
    %2371 = vmatprep.subr.bf16.mxu0 %v1820
    %2372 = vmatpush1.bf16.msra.mxu0 %v1819
    %2373 = vmatprep.subr.bf16.mxu0 %v1814
    %2374 = vmatpush1.bf16.msra.mxu0 %v1813
    %2375 = vmatprep.subr.bf16.mxu0 %v1808
    %2376 = vmatpush1.bf16.msra.mxu0 %v1807
    %2377 = vmatprep.subr.bf16.mxu0 %v1802
    %2378 = vmatpush1.bf16.msra.mxu0 %v1801
    %2379 = vmatprep.subr.bf16.mxu0 %v1892
    %2380 = vmatpush2.bf16.msra.mxu0 %v1891
    %2381 = vmatprep.subr.bf16.mxu0 %v1886
    %2382 = vmatpush2.bf16.msra.mxu0 %v1885
    %2383 = vmatprep.subr.bf16.mxu0 %v1880
    %2384 = vmatpush2.bf16.msra.mxu0 %v1879
    %2385 = vmatprep.subr.bf16.mxu0 %v1874
    %2386 = vmatpush2.bf16.msra.mxu0 %v1873
    %2387 = vmatprep.subr.bf16.mxu0 %v1868
    %2388 = vmatpush2.bf16.msra.mxu0 %v1867
    %2389 = vmatprep.subr.bf16.mxu0 %v1862
    %2390 = vmatpush2.bf16.msra.mxu0 %v1861
    %2391 = vmatprep.subr.bf16.mxu0 %v1856
    %2392 = vmatpush2.bf16.msra.mxu0 %v1855
    %2393 = vmatprep.subr.bf16.mxu0 %v1850
    %2394 = vmatpush2.bf16.msra.mxu0 %v1849
    %2395 = vmatprep.mubr.bf16.mxu0 %v592
    %2396 = vmatmul.mubr.bf16.gmra.mxu0 %v591
    %v2397 = vpop.f32.mrf.mxu0
    %v2398 = vadd.f32 %v2357, %v2397
    %v2399 = vpop.f32.mrf.mxu0
    %v2400 = vadd.f32 %v2359, %v2399
    %v2401 = vpop.f32.mrf.mxu0
    %v2402 = vpop.f32.mrf.mxu0
    %2403 = vdwg.mxu0
    %2404 = vmatprep.subr.bf16.mxu0 %v1940
    %2405 = vmatpush1.bf16.msra.mxu0 %v1939
    %2406 = vmatprep.subr.bf16.mxu0 %v1934
    %2407 = vmatpush1.bf16.msra.mxu0 %v1933
    %2408 = vmatprep.subr.bf16.mxu0 %v1928
    %2409 = vmatpush1.bf16.msra.mxu0 %v1927
    %2410 = vmatprep.subr.bf16.mxu0 %v1922
    %2411 = vmatpush1.bf16.msra.mxu0 %v1921
    %2412 = vmatprep.subr.bf16.mxu0 %v1916
    %2413 = vmatpush1.bf16.msra.mxu0 %v1915
    %2414 = vmatprep.subr.bf16.mxu0 %v1910
    %2415 = vmatpush1.bf16.msra.mxu0 %v1909
    %2416 = vmatprep.subr.bf16.mxu0 %v1904
    %2417 = vmatpush1.bf16.msra.mxu0 %v1903
    %2418 = vmatprep.subr.bf16.mxu0 %v1898
    %2419 = vmatpush1.bf16.msra.mxu0 %v1897
    %2420 = vmatprep.subr.bf16.mxu0 0
    %2421 = vmatpush2.bf16.msra.mxu0 0
    %2422 = vmatprep.subr.bf16.mxu0 0
    %2423 = vmatpush2.bf16.msra.mxu0 0
    %2424 = vmatprep.subr.bf16.mxu0 0
    %2425 = vmatpush2.bf16.msra.mxu0 0
    %2426 = vmatprep.subr.bf16.mxu0 0
    %2427 = vmatpush2.bf16.msra.mxu0 0
    %2428 = vmatprep.subr.bf16.mxu0 0
    %2429 = vmatpush2.bf16.msra.mxu0 0
    %2430 = vmatprep.subr.bf16.mxu0 0
    %2431 = vmatpush2.bf16.msra.mxu0 0
    %2432 = vmatprep.subr.bf16.mxu0 0
    %2433 = vmatpush2.bf16.msra.mxu0 0
    %2434 = vmatprep.subr.bf16.mxu0 0
    %2435 = vmatpush2.bf16.msra.mxu0 0
    %2436 = vmatprep.mubr.bf16.mxu0 0
    %2437 = vmatmul.mubr.bf16.gmra.mxu0 %v593
    %v2438 = vpop.f32.mrf.mxu0
    %v2439 = vadd.f32 %v2398, %v2438
    %v2440 = vpop.f32.mrf.mxu0
    %v2441 = vadd.f32 %v2400, %v2440
    %v2442 = vpop.f32.mrf.mxu0
    %v2443 = vpop.f32.mrf.mxu0
    %2444 = vdwg.mxu0
    %2445 = vmatprep.subr.bf16.mxu0 %v1654
    %2446 = vmatpush1.bf16.msra.mxu0 %v1653
    %2447 = vmatprep.subr.bf16.mxu0 %v1648
    %2448 = vmatpush1.bf16.msra.mxu0 %v1647
    %2449 = vmatprep.subr.bf16.mxu0 %v1642
    %2450 = vmatpush1.bf16.msra.mxu0 %v1641
    %2451 = vmatprep.subr.bf16.mxu0 %v1636
    %2452 = vmatpush1.bf16.msra.mxu0 %v1635
    %2453 = vmatprep.subr.bf16.mxu0 %v1630
    %2454 = vmatpush1.bf16.msra.mxu0 %v1629
    %2455 = vmatprep.subr.bf16.mxu0 %v1624
    %2456 = vmatpush1.bf16.msra.mxu0 %v1623
    %2457 = vmatprep.subr.bf16.mxu0 %v1618
    %2458 = vmatpush1.bf16.msra.mxu0 %v1617
    %2459 = vmatprep.subr.bf16.mxu0 %v1612
    %2460 = vmatpush1.bf16.msra.mxu0 %v1611
    %2461 = vmatprep.subr.bf16.mxu0 %v1702
    %2462 = vmatpush2.bf16.msra.mxu0 %v1701
    %2463 = vmatprep.subr.bf16.mxu0 %v1696
    %2464 = vmatpush2.bf16.msra.mxu0 %v1695
    %2465 = vmatprep.subr.bf16.mxu0 %v1690
    %2466 = vmatpush2.bf16.msra.mxu0 %v1689
    %2467 = vmatprep.subr.bf16.mxu0 %v1684
    %2468 = vmatpush2.bf16.msra.mxu0 %v1683
    %2469 = vmatprep.subr.bf16.mxu0 %v1678
    %2470 = vmatpush2.bf16.msra.mxu0 %v1677
    %2471 = vmatprep.subr.bf16.mxu0 %v1672
    %2472 = vmatpush2.bf16.msra.mxu0 %v1671
    %2473 = vmatprep.subr.bf16.mxu0 %v1666
    %2474 = vmatpush2.bf16.msra.mxu0 %v1665
    %2475 = vmatprep.subr.bf16.mxu0 %v1660
    %2476 = vmatpush2.bf16.msra.mxu0 %v1659
    %2477 = vmatprep.mubr.bf16.mxu0 %v588
    %2478 = vmatmul.mubr.bf16.gmra.mxu0 %v587
    %v2479 = vpop.f32.mrf.mxu0
    %v2480 = vadd.f32 %v563, %v2479
    %v2481 = vpop.f32.mrf.mxu0
    %v2482 = vadd.f32 %v567, %v2481
    %v2483 = vpop.f32.mrf.mxu0
    %v2484 = vpop.f32.mrf.mxu0
    %2485 = vdwg.mxu0
    %2486 = vmatprep.subr.bf16.mxu0 %v1750
    %2487 = vmatpush1.bf16.msra.mxu0 %v1749
    %2488 = vmatprep.subr.bf16.mxu0 %v1744
    %2489 = vmatpush1.bf16.msra.mxu0 %v1743
    %2490 = vmatprep.subr.bf16.mxu0 %v1738
    %2491 = vmatpush1.bf16.msra.mxu0 %v1737
    %2492 = vmatprep.subr.bf16.mxu0 %v1732
    %2493 = vmatpush1.bf16.msra.mxu0 %v1731
    %2494 = vmatprep.subr.bf16.mxu0 %v1726
    %2495 = vmatpush1.bf16.msra.mxu0 %v1725
    %2496 = vmatprep.subr.bf16.mxu0 %v1720
    %2497 = vmatpush1.bf16.msra.mxu0 %v1719
    %2498 = vmatprep.subr.bf16.mxu0 %v1714
    %2499 = vmatpush1.bf16.msra.mxu0 %v1713
    %2500 = vmatprep.subr.bf16.mxu0 %v1708
    %2501 = vmatpush1.bf16.msra.mxu0 %v1707
    %2502 = vmatprep.subr.bf16.mxu0 %v1798
    %2503 = vmatpush2.bf16.msra.mxu0 %v1797
    %2504 = vmatprep.subr.bf16.mxu0 %v1792
    %2505 = vmatpush2.bf16.msra.mxu0 %v1791
    %2506 = vmatprep.subr.bf16.mxu0 %v1786
    %2507 = vmatpush2.bf16.msra.mxu0 %v1785
    %2508 = vmatprep.subr.bf16.mxu0 %v1780
    %2509 = vmatpush2.bf16.msra.mxu0 %v1779
    %2510 = vmatprep.subr.bf16.mxu0 %v1774
    %2511 = vmatpush2.bf16.msra.mxu0 %v1773
    %2512 = vmatprep.subr.bf16.mxu0 %v1768
    %2513 = vmatpush2.bf16.msra.mxu0 %v1767
    %2514 = vmatprep.subr.bf16.mxu0 %v1762
    %2515 = vmatpush2.bf16.msra.mxu0 %v1761
    %2516 = vmatprep.subr.bf16.mxu0 %v1756
    %2517 = vmatpush2.bf16.msra.mxu0 %v1755
    %2518 = vmatprep.mubr.bf16.mxu0 %v590
    %2519 = vmatmul.mubr.bf16.gmra.mxu0 %v589
    %v2520 = vpop.f32.mrf.mxu0
    %v2521 = vadd.f32 %v2480, %v2520
    %v2522 = vpop.f32.mrf.mxu0
    %v2523 = vadd.f32 %v2482, %v2522
    %v2524 = vpop.f32.mrf.mxu0
    %v2525 = vpop.f32.mrf.mxu0
    %2526 = vdwg.mxu0
    %2527 = vmatprep.subr.bf16.mxu0 %v1846
    %2528 = vmatpush1.bf16.msra.mxu0 %v1845
    %2529 = vmatprep.subr.bf16.mxu0 %v1840
    %2530 = vmatpush1.bf16.msra.mxu0 %v1839
    %2531 = vmatprep.subr.bf16.mxu0 %v1834
    %2532 = vmatpush1.bf16.msra.mxu0 %v1833
    %2533 = vmatprep.subr.bf16.mxu0 %v1828
    %2534 = vmatpush1.bf16.msra.mxu0 %v1827
    %2535 = vmatprep.subr.bf16.mxu0 %v1822
    %2536 = vmatpush1.bf16.msra.mxu0 %v1821
    %2537 = vmatprep.subr.bf16.mxu0 %v1816
    %2538 = vmatpush1.bf16.msra.mxu0 %v1815
    %2539 = vmatprep.subr.bf16.mxu0 %v1810
    %2540 = vmatpush1.bf16.msra.mxu0 %v1809
    %2541 = vmatprep.subr.bf16.mxu0 %v1804
    %2542 = vmatpush1.bf16.msra.mxu0 %v1803
    %2543 = vmatprep.subr.bf16.mxu0 %v1894
    %2544 = vmatpush2.bf16.msra.mxu0 %v1893
    %2545 = vmatprep.subr.bf16.mxu0 %v1888
    %2546 = vmatpush2.bf16.msra.mxu0 %v1887
    %2547 = vmatprep.subr.bf16.mxu0 %v1882
    %2548 = vmatpush2.bf16.msra.mxu0 %v1881
    %2549 = vmatprep.subr.bf16.mxu0 %v1876
    %2550 = vmatpush2.bf16.msra.mxu0 %v1875
    %2551 = vmatprep.subr.bf16.mxu0 %v1870
    %2552 = vmatpush2.bf16.msra.mxu0 %v1869
    %2553 = vmatprep.subr.bf16.mxu0 %v1864
    %2554 = vmatpush2.bf16.msra.mxu0 %v1863
    %2555 = vmatprep.subr.bf16.mxu0 %v1858
    %2556 = vmatpush2.bf16.msra.mxu0 %v1857
    %2557 = vmatprep.subr.bf16.mxu0 %v1852
    %2558 = vmatpush2.bf16.msra.mxu0 %v1851
    %2559 = vmatprep.mubr.bf16.mxu0 %v592
    %2560 = vmatmul.mubr.bf16.gmra.mxu0 %v591
    %v2561 = vpop.f32.mrf.mxu0
    %v2562 = vadd.f32 %v2521, %v2561
    %v2563 = vpop.f32.mrf.mxu0
    %v2564 = vadd.f32 %v2523, %v2563
    %v2565 = vpop.f32.mrf.mxu0
    %v2566 = vpop.f32.mrf.mxu0
    %2567 = vdwg.mxu0
    %2568 = vmatprep.subr.bf16.mxu0 %v1942
    %2569 = vmatpush1.bf16.msra.mxu0 %v1941
    %2570 = vmatprep.subr.bf16.mxu0 %v1936
    %2571 = vmatpush1.bf16.msra.mxu0 %v1935
    %2572 = vmatprep.subr.bf16.mxu0 %v1930
    %2573 = vmatpush1.bf16.msra.mxu0 %v1929
    %2574 = vmatprep.subr.bf16.mxu0 %v1924
    %2575 = vmatpush1.bf16.msra.mxu0 %v1923
    %2576 = vmatprep.subr.bf16.mxu0 %v1918
    %2577 = vmatpush1.bf16.msra.mxu0 %v1917
    %2578 = vmatprep.subr.bf16.mxu0 %v1912
    %2579 = vmatpush1.bf16.msra.mxu0 %v1911
    %2580 = vmatprep.subr.bf16.mxu0 %v1906
    %2581 = vmatpush1.bf16.msra.mxu0 %v1905
    %2582 = vmatprep.subr.bf16.mxu0 %v1900
    %2583 = vmatpush1.bf16.msra.mxu0 %v1899
    %2584 = vmatprep.subr.bf16.mxu0 0
    %2585 = vmatpush2.bf16.msra.mxu0 0
    %2586 = vmatprep.subr.bf16.mxu0 0
    %2587 = vmatpush2.bf16.msra.mxu0 0
    %2588 = vmatprep.subr.bf16.mxu0 0
    %2589 = vmatpush2.bf16.msra.mxu0 0
    %2590 = vmatprep.subr.bf16.mxu0 0
    %2591 = vmatpush2.bf16.msra.mxu0 0
    %2592 = vmatprep.subr.bf16.mxu0 0
    %2593 = vmatpush2.bf16.msra.mxu0 0
    %2594 = vmatprep.subr.bf16.mxu0 0
    %2595 = vmatpush2.bf16.msra.mxu0 0
    %2596 = vmatprep.subr.bf16.mxu0 0
    %2597 = vmatpush2.bf16.msra.mxu0 0
    %2598 = vmatprep.subr.bf16.mxu0 0
    %2599 = vmatpush2.bf16.msra.mxu0 0
    %2600 = vmatprep.mubr.bf16.mxu0 0
    %2601 = vmatmul.mubr.bf16.gmra.mxu0 %v593
    %v2602 = vpop.f32.mrf.mxu0
    %v2603 = vadd.f32 %v2562, %v2602
    %v2604 = vpop.f32.mrf.mxu0
    %v2605 = vadd.f32 %v2564, %v2604
    %v2606 = vpop.f32.mrf.mxu0
    %v2607 = vpop.f32.mrf.mxu0
    %2608 = vdwg.mxu0
    %2609 = vmatprep.subr.bf16.mxu0 %v1656
    %2610 = vmatpush1.bf16.msra.mxu0 %v1655
    %2611 = vmatprep.subr.bf16.mxu0 %v1650
    %2612 = vmatpush1.bf16.msra.mxu0 %v1649
    %2613 = vmatprep.subr.bf16.mxu0 %v1644
    %2614 = vmatpush1.bf16.msra.mxu0 %v1643
    %2615 = vmatprep.subr.bf16.mxu0 %v1638
    %2616 = vmatpush1.bf16.msra.mxu0 %v1637
    %2617 = vmatprep.subr.bf16.mxu0 %v1632
    %2618 = vmatpush1.bf16.msra.mxu0 %v1631
    %2619 = vmatprep.subr.bf16.mxu0 %v1626
    %2620 = vmatpush1.bf16.msra.mxu0 %v1625
    %2621 = vmatprep.subr.bf16.mxu0 %v1620
    %2622 = vmatpush1.bf16.msra.mxu0 %v1619
    %2623 = vmatprep.subr.bf16.mxu0 %v1614
    %2624 = vmatpush1.bf16.msra.mxu0 %v1613
    %2625 = vmatprep.subr.bf16.mxu0 %v1704
    %2626 = vmatpush2.bf16.msra.mxu0 %v1703
    %2627 = vmatprep.subr.bf16.mxu0 %v1698
    %2628 = vmatpush2.bf16.msra.mxu0 %v1697
    %2629 = vmatprep.subr.bf16.mxu0 %v1692
    %2630 = vmatpush2.bf16.msra.mxu0 %v1691
    %2631 = vmatprep.subr.bf16.mxu0 %v1686
    %2632 = vmatpush2.bf16.msra.mxu0 %v1685
    %2633 = vmatprep.subr.bf16.mxu0 %v1680
    %2634 = vmatpush2.bf16.msra.mxu0 %v1679
    %2635 = vmatprep.subr.bf16.mxu0 %v1674
    %2636 = vmatpush2.bf16.msra.mxu0 %v1673
    %2637 = vmatprep.subr.bf16.mxu0 %v1668
    %2638 = vmatpush2.bf16.msra.mxu0 %v1667
    %2639 = vmatprep.subr.bf16.mxu0 %v1662
    %2640 = vmatpush2.bf16.msra.mxu0 %v1661
    %2641 = vmatprep.mubr.bf16.mxu0 %v588
    %2642 = vmatmul.mubr.bf16.gmra.mxu0 %v587
    %v2643 = vpop.f32.mrf.mxu0
    %v2644 = vadd.f32 %v571, %v2643
    %v2645 = vpop.f32.mrf.mxu0
    %v2646 = vadd.f32 %v575, %v2645
    %v2647 = vpop.f32.mrf.mxu0
    %v2648 = vpop.f32.mrf.mxu0
    %2649 = vdwg.mxu0
    %2650 = vmatprep.subr.bf16.mxu0 %v1752
    %2651 = vmatpush1.bf16.msra.mxu0 %v1751
    %2652 = vmatprep.subr.bf16.mxu0 %v1746
    %2653 = vmatpush1.bf16.msra.mxu0 %v1745
    %2654 = vmatprep.subr.bf16.mxu0 %v1740
    %2655 = vmatpush1.bf16.msra.mxu0 %v1739
    %2656 = vmatprep.subr.bf16.mxu0 %v1734
    %2657 = vmatpush1.bf16.msra.mxu0 %v1733
    %2658 = vmatprep.subr.bf16.mxu0 %v1728
    %2659 = vmatpush1.bf16.msra.mxu0 %v1727
    %2660 = vmatprep.subr.bf16.mxu0 %v1722
    %2661 = vmatpush1.bf16.msra.mxu0 %v1721
    %2662 = vmatprep.subr.bf16.mxu0 %v1716
    %2663 = vmatpush1.bf16.msra.mxu0 %v1715
    %2664 = vmatprep.subr.bf16.mxu0 %v1710
    %2665 = vmatpush1.bf16.msra.mxu0 %v1709
    %2666 = vmatprep.subr.bf16.mxu0 %v1800
    %2667 = vmatpush2.bf16.msra.mxu0 %v1799
    %2668 = vmatprep.subr.bf16.mxu0 %v1794
    %2669 = vmatpush2.bf16.msra.mxu0 %v1793
    %2670 = vmatprep.subr.bf16.mxu0 %v1788
    %2671 = vmatpush2.bf16.msra.mxu0 %v1787
    %2672 = vmatprep.subr.bf16.mxu0 %v1782
    %2673 = vmatpush2.bf16.msra.mxu0 %v1781
    %2674 = vmatprep.subr.bf16.mxu0 %v1776
    %2675 = vmatpush2.bf16.msra.mxu0 %v1775
    %2676 = vmatprep.subr.bf16.mxu0 %v1770
    %2677 = vmatpush2.bf16.msra.mxu0 %v1769
    %2678 = vmatprep.subr.bf16.mxu0 %v1764
    %2679 = vmatpush2.bf16.msra.mxu0 %v1763
    %2680 = vmatprep.subr.bf16.mxu0 %v1758
    %2681 = vmatpush2.bf16.msra.mxu0 %v1757
    %2682 = vmatprep.mubr.bf16.mxu0 %v590
    %2683 = vmatmul.mubr.bf16.gmra.mxu0 %v589
    %v2684 = vpop.f32.mrf.mxu0
    %v2685 = vadd.f32 %v2644, %v2684
    %v2686 = vpop.f32.mrf.mxu0
    %v2687 = vadd.f32 %v2646, %v2686
    %v2688 = vpop.f32.mrf.mxu0
    %v2689 = vpop.f32.mrf.mxu0
    %2690 = vdwg.mxu0
    %2691 = vmatprep.subr.bf16.mxu0 %v1848
    %2692 = vmatpush1.bf16.msra.mxu0 %v1847
    %2693 = vmatprep.subr.bf16.mxu0 %v1842
    %2694 = vmatpush1.bf16.msra.mxu0 %v1841
    %2695 = vmatprep.subr.bf16.mxu0 %v1836
    %2696 = vmatpush1.bf16.msra.mxu0 %v1835
    %2697 = vmatprep.subr.bf16.mxu0 %v1830
    %2698 = vmatpush1.bf16.msra.mxu0 %v1829
    %2699 = vmatprep.subr.bf16.mxu0 %v1824
    %2700 = vmatpush1.bf16.msra.mxu0 %v1823
    %2701 = vmatprep.subr.bf16.mxu0 %v1818
    %2702 = vmatpush1.bf16.msra.mxu0 %v1817
    %2703 = vmatprep.subr.bf16.mxu0 %v1812
    %2704 = vmatpush1.bf16.msra.mxu0 %v1811
    %2705 = vmatprep.subr.bf16.mxu0 %v1806
    %2706 = vmatpush1.bf16.msra.mxu0 %v1805
    %2707 = vmatprep.subr.bf16.mxu0 %v1896
    %2708 = vmatpush2.bf16.msra.mxu0 %v1895
    %2709 = vmatprep.subr.bf16.mxu0 %v1890
    %2710 = vmatpush2.bf16.msra.mxu0 %v1889
    %2711 = vmatprep.subr.bf16.mxu0 %v1884
    %2712 = vmatpush2.bf16.msra.mxu0 %v1883
    %2713 = vmatprep.subr.bf16.mxu0 %v1878
    %2714 = vmatpush2.bf16.msra.mxu0 %v1877
    %2715 = vmatprep.subr.bf16.mxu0 %v1872
    %2716 = vmatpush2.bf16.msra.mxu0 %v1871
    %2717 = vmatprep.subr.bf16.mxu0 %v1866
    %2718 = vmatpush2.bf16.msra.mxu0 %v1865
    %2719 = vmatprep.subr.bf16.mxu0 %v1860
    %2720 = vmatpush2.bf16.msra.mxu0 %v1859
    %2721 = vmatprep.subr.bf16.mxu0 %v1854
    %2722 = vmatpush2.bf16.msra.mxu0 %v1853
    %2723 = vmatprep.mubr.bf16.mxu0 %v592
    %2724 = vmatmul.mubr.bf16.gmra.mxu0 %v591
    %v2725 = vpop.f32.mrf.mxu0
    %v2726 = vadd.f32 %v2685, %v2725
    %v2727 = vpop.f32.mrf.mxu0
    %v2728 = vadd.f32 %v2687, %v2727
    %v2729 = vpop.f32.mrf.mxu0
    %v2730 = vpop.f32.mrf.mxu0
    %2731 = vdwg.mxu0
    %2732 = vmatprep.subr.bf16.mxu0 %v1944
    %2733 = vmatpush1.bf16.msra.mxu0 %v1943
    %2734 = vmatprep.subr.bf16.mxu0 %v1938
    %2735 = vmatpush1.bf16.msra.mxu0 %v1937
    %2736 = vmatprep.subr.bf16.mxu0 %v1932
    %2737 = vmatpush1.bf16.msra.mxu0 %v1931
    %2738 = vmatprep.subr.bf16.mxu0 %v1926
    %2739 = vmatpush1.bf16.msra.mxu0 %v1925
    %2740 = vmatprep.subr.bf16.mxu0 %v1920
    %2741 = vmatpush1.bf16.msra.mxu0 %v1919
    %2742 = vmatprep.subr.bf16.mxu0 %v1914
    %2743 = vmatpush1.bf16.msra.mxu0 %v1913
    %2744 = vmatprep.subr.bf16.mxu0 %v1908
    %2745 = vmatpush1.bf16.msra.mxu0 %v1907
    %2746 = vmatprep.subr.bf16.mxu0 %v1902
    %2747 = vmatpush1.bf16.msra.mxu0 %v1901
    %2748 = vmatprep.subr.bf16.mxu0 0
    %2749 = vmatpush2.bf16.msra.mxu0 0
    %2750 = vmatprep.subr.bf16.mxu0 0
    %2751 = vmatpush2.bf16.msra.mxu0 0
    %2752 = vmatprep.subr.bf16.mxu0 0
    %2753 = vmatpush2.bf16.msra.mxu0 0
    %2754 = vmatprep.subr.bf16.mxu0 0
    %2755 = vmatpush2.bf16.msra.mxu0 0
    %2756 = vmatprep.subr.bf16.mxu0 0
    %2757 = vmatpush2.bf16.msra.mxu0 0
    %2758 = vmatprep.subr.bf16.mxu0 0
    %2759 = vmatpush2.bf16.msra.mxu0 0
    %2760 = vmatprep.subr.bf16.mxu0 0
    %2761 = vmatpush2.bf16.msra.mxu0 0
    %2762 = vmatprep.subr.bf16.mxu0 0
    %2763 = vmatpush2.bf16.msra.mxu0 0
    %2764 = vmatprep.mubr.bf16.mxu0 0
    %2765 = vmatmul.mubr.bf16.gmra.mxu0 %v593
    %v2766 = vpop.f32.mrf.mxu0
    %v2767 = vadd.f32 %v2726, %v2766
    %v2768 = vpop.f32.mrf.mxu0
    %v2769 = vadd.f32 %v2728, %v2768
    %v2770 = vpop.f32.mrf.mxu0
    %v2771 = vpop.f32.mrf.mxu0
    %2772 = vdwg.mxu0
    %v2773 = vmax.f32 %v2439, 0.0
    %v2774 = vmax.f32 %v2441, 0.0
    %v2775 = vmax.f32 %v2603, 0.0
    %v2776 = vmax.f32 %v2605, 0.0
    %v2777 = vmax.f32 %v2767, 0.0
    %v2778 = vmax.f32 %v2769, 0.0
    %v2779 = vpack.c.bf16 %v2773, %v2773
    %v2780 = vpack.c.bf16 %v2774, %v2774
    %v2781 = vpack.c.bf16 %v2775, %v2775
    %v2782 = vpack.c.bf16 %v2776, %v2776
    %v2783 = vpack.c.bf16 %v2777, %v2777
    %v2784 = vpack.c.bf16 %v2778, %v2778
    %v2785 = vld [vmem:[#allocation8] sm:$0xff]
    %v2786 = vld [vmem:[#allocation8 + $0x8] sm:$0xff]
    %v2787 = vld [vmem:[#allocation8 + $0x10] sm:$0xff]
    %v2788 = vld [vmem:[#allocation8 + $0x18] sm:$0xff]
    %v2789 = vld [vmem:[#allocation8 + $0x20] sm:$0xff]
    %v2790 = vld [vmem:[#allocation8 + $0x28] sm:$0xff]
    %v2791 = vld [vmem:[#allocation8 + $0x30] sm:$0xff]
    %v2792 = vld [vmem:[#allocation8 + $0x38] sm:$0xff]
    %v2793 = vld [vmem:[#allocation8 + $0x40] sm:$0xff]
    %v2794 = vld [vmem:[#allocation8 + $0x48] sm:$0xff]
    %v2795 = vld [vmem:[#allocation8 + $0x50] sm:$0xff]
    %v2796 = vld [vmem:[#allocation8 + $0x58] sm:$0xff]
    %v2797 = vld [vmem:[#allocation8 + $0x60] sm:$0xff]
    %v2798 = vld [vmem:[#allocation8 + $0x68] sm:$0xff]
    %v2799 = vld [vmem:[#allocation8 + $0x70] sm:$0xff]
    %v2800 = vld [vmem:[#allocation8 + $0x78] sm:$0xff]
    %v2801 = vld [vmem:[#allocation8 + $0x80] sm:$0xff]
    %v2802 = vld [vmem:[#allocation8 + $0x88] sm:$0xff]
    %v2803 = vld [vmem:[#allocation8 + $0x90] sm:$0xff]
    %v2804 = vld [vmem:[#allocation8 + $0x98] sm:$0xff]
    %v2805 = vld [vmem:[#allocation8 + $0xa0] sm:$0xff]
    %v2806 = vld [vmem:[#allocation8 + $0xa8] sm:$0xff]
    %v2807 = vld [vmem:[#allocation8 + $0xb0] sm:$0xff]
    %v2808 = vld [vmem:[#allocation8 + $0xb8] sm:$0xff]
    %v2809 = vld [vmem:[#allocation8 + $0xc0] sm:$0xff]
    %v2810 = vld [vmem:[#allocation8 + $0xc8] sm:$0xff]
    %v2811 = vld [vmem:[#allocation8 + $0xd0] sm:$0xff]
    %v2812 = vld [vmem:[#allocation8 + $0xd8] sm:$0xff]
    %v2813 = vld [vmem:[#allocation8 + $0xe0] sm:$0xff]
    %v2814 = vld [vmem:[#allocation8 + $0xe8] sm:$0xff]
    %v2815 = vld [vmem:[#allocation8 + $0xf0] sm:$0xff]
    %v2816 = vld [vmem:[#allocation8 + $0xf8] sm:$0xff]
    %v2817 = vld [vmem:[#allocation8 + $0x100] sm:$0xff]
    %v2818 = vld [vmem:[#allocation8 + $0x108] sm:$0xff]
    %v2819 = vld [vmem:[#allocation8 + $0x110] sm:$0xff]
    %v2820 = vld [vmem:[#allocation8 + $0x118] sm:$0xff]
    %v2821 = vld [vmem:[#allocation8 + $0x120] sm:$0xff]
    %v2822 = vld [vmem:[#allocation8 + $0x128] sm:$0xff]
    %v2823 = vld [vmem:[#allocation8 + $0x130] sm:$0xff]
    %v2824 = vld [vmem:[#allocation8 + $0x138] sm:$0xff]
    %v2825 = vld [vmem:[#allocation8 + $0x140] sm:$0xff]
    %v2826 = vld [vmem:[#allocation8 + $0x148] sm:$0xff]
    %v2827 = vld [vmem:[#allocation8 + $0x150] sm:$0xff]
    %v2828 = vld [vmem:[#allocation8 + $0x158] sm:$0xff]
    %v2829 = vld [vmem:[#allocation8 + $0x160] sm:$0xff]
    %v2830 = vld [vmem:[#allocation8 + $0x168] sm:$0xff]
    %v2831 = vld [vmem:[#allocation8 + $0x170] sm:$0xff]
    %v2832 = vld [vmem:[#allocation8 + $0x178] sm:$0xff]
    %v2833 = vld [vmem:[#allocation8 + $0x180] sm:$0xff]
    %v2834 = vld [vmem:[#allocation8 + $0x188] sm:$0xff]
    %v2835 = vld [vmem:[#allocation8 + $0x190] sm:$0xff]
    %v2836 = vld [vmem:[#allocation8 + $0x198] sm:$0xff]
    %v2837 = vld [vmem:[#allocation8 + $0x1a0] sm:$0xff]
    %v2838 = vld [vmem:[#allocation8 + $0x1a8] sm:$0xff]
    %v2839 = vld [vmem:[#allocation8 + $0x1b0] sm:$0xff]
    %v2840 = vld [vmem:[#allocation8 + $0x1b8] sm:$0xff]
    %v2841 = vld [vmem:[#allocation8 + $0x1c0] sm:$0xff]
    %v2842 = vld [vmem:[#allocation8 + $0x1c8] sm:$0xff]
    %v2843 = vld [vmem:[#allocation8 + $0x1d0] sm:$0xff]
    %v2844 = vld [vmem:[#allocation8 + $0x1d8] sm:$0xff]
    %v2845 = vld [vmem:[#allocation8 + $0x1e0] sm:$0xff]
    %v2846 = vld [vmem:[#allocation8 + $0x1e8] sm:$0xff]
    %v2847 = vld [vmem:[#allocation8 + $0x1f0] sm:$0xff]
    %v2848 = vld [vmem:[#allocation8 + $0x1f8] sm:$0xff]
    %v2849 = vld [vmem:[#allocation8 + $0x200] sm:$0xff]
    %v2850 = vld [vmem:[#allocation8 + $0x208] sm:$0xff]
    %v2851 = vld [vmem:[#allocation8 + $0x210] sm:$0xff]
    %v2852 = vld [vmem:[#allocation8 + $0x218] sm:$0xff]
    %v2853 = vld [vmem:[#allocation8 + $0x220] sm:$0xff]
    %v2854 = vld [vmem:[#allocation8 + $0x228] sm:$0xff]
    %v2855 = vld [vmem:[#allocation8 + $0x230] sm:$0xff]
    %v2856 = vld [vmem:[#allocation8 + $0x238] sm:$0xff]
    %v2857 = vld [vmem:[#allocation8 + $0x240] sm:$0xff]
    %v2858 = vld [vmem:[#allocation8 + $0x248] sm:$0xff]
    %v2859 = vld [vmem:[#allocation8 + $0x250] sm:$0xff]
    %v2860 = vld [vmem:[#allocation8 + $0x258] sm:$0xff]
    %v2861 = vld [vmem:[#allocation8 + $0x260] sm:$0xff]
    %v2862 = vld [vmem:[#allocation8 + $0x268] sm:$0xff]
    %v2863 = vld [vmem:[#allocation8 + $0x270] sm:$0xff]
    %v2864 = vld [vmem:[#allocation8 + $0x278] sm:$0xff]
    %v2865 = vld [vmem:[#allocation8 + $0x280] sm:$0xff]
    %v2866 = vld [vmem:[#allocation8 + $0x288] sm:$0xff]
    %v2867 = vld [vmem:[#allocation8 + $0x290] sm:$0xff]
    %v2868 = vld [vmem:[#allocation8 + $0x298] sm:$0xff]
    %v2869 = vld [vmem:[#allocation8 + $0x2a0] sm:$0xff]
    %v2870 = vld [vmem:[#allocation8 + $0x2a8] sm:$0xff]
    %v2871 = vld [vmem:[#allocation8 + $0x2b0] sm:$0xff]
    %v2872 = vld [vmem:[#allocation8 + $0x2b8] sm:$0xff]
    %v2873 = vld [vmem:[#allocation8 + $0x2c0] sm:$0xff]
    %v2874 = vld [vmem:[#allocation8 + $0x2c8] sm:$0xff]
    %v2875 = vld [vmem:[#allocation8 + $0x2d0] sm:$0xff]
    %v2876 = vld [vmem:[#allocation8 + $0x2d8] sm:$0xff]
    %v2877 = vld [vmem:[#allocation8 + $0x2e0] sm:$0xff]
    %v2878 = vld [vmem:[#allocation8 + $0x2e8] sm:$0xff]
    %v2879 = vld [vmem:[#allocation8 + $0x2f0] sm:$0xff]
    %v2880 = vld [vmem:[#allocation8 + $0x2f8] sm:$0xff]
    %v2881 = vld [vmem:[#allocation8 + $0x300] sm:$0xff]
    %v2882 = vld [vmem:[#allocation8 + $0x308] sm:$0xff]
    %v2883 = vld [vmem:[#allocation8 + $0x310] sm:$0xff]
    %v2884 = vld [vmem:[#allocation8 + $0x318] sm:$0xff]
    %v2885 = vld [vmem:[#allocation8 + $0x320] sm:$0xff]
    %v2886 = vld [vmem:[#allocation8 + $0x328] sm:$0xff]
    %v2887 = vld [vmem:[#allocation8 + $0x330] sm:$0xff]
    %v2888 = vld [vmem:[#allocation8 + $0x338] sm:$0xff]
    %v2889 = vld [vmem:[#allocation8 + $0x340] sm:$0xff]
    %v2890 = vld [vmem:[#allocation8 + $0x348] sm:$0xff]
    %v2891 = vld [vmem:[#allocation8 + $0x350] sm:$0xff]
    %v2892 = vld [vmem:[#allocation8 + $0x358] sm:$0xff]
    %v2893 = vld [vmem:[#allocation8 + $0x360] sm:$0xff]
    %v2894 = vld [vmem:[#allocation8 + $0x368] sm:$0xff]
    %v2895 = vld [vmem:[#allocation8 + $0x370] sm:$0xff]
    %v2896 = vld [vmem:[#allocation8 + $0x378] sm:$0xff]
    %v2897 = vld [vmem:[#allocation8 + $0x380] sm:$0xff]
    %v2898 = vld [vmem:[#allocation8 + $0x388] sm:$0xff]
    %v2899 = vld [vmem:[#allocation8 + $0x390] sm:$0xff]
    %v2900 = vld [vmem:[#allocation8 + $0x398] sm:$0xff]
    %v2901 = vld [vmem:[#allocation8 + $0x3a0] sm:$0xff]
    %v2902 = vld [vmem:[#allocation8 + $0x3a8] sm:$0xff]
    %v2903 = vld [vmem:[#allocation8 + $0x3b0] sm:$0xff]
    %v2904 = vld [vmem:[#allocation8 + $0x3b8] sm:$0xff]
    %v2905 = vld [vmem:[#allocation8 + $0x3c0] sm:$0xff]
    %v2906 = vld [vmem:[#allocation8 + $0x3c8] sm:$0xff]
    %v2907 = vld [vmem:[#allocation8 + $0x3d0] sm:$0xff]
    %v2908 = vld [vmem:[#allocation8 + $0x3d8] sm:$0xff]
    %v2909 = vld [vmem:[#allocation8 + $0x3e0] sm:$0xff]
    %v2910 = vld [vmem:[#allocation8 + $0x3e8] sm:$0xff]
    %v2911 = vld [vmem:[#allocation8 + $0x3f0] sm:$0xff]
    %v2912 = vld [vmem:[#allocation8 + $0x3f8] sm:$0xff]
    %v2913 = vld [vmem:[#allocation8 + $0x400] sm:$0xff]
    %v2914 = vld [vmem:[#allocation8 + $0x408] sm:$0xff]
    %v2915 = vld [vmem:[#allocation8 + $0x410] sm:$0xff]
    %v2916 = vld [vmem:[#allocation8 + $0x418] sm:$0xff]
    %v2917 = vld [vmem:[#allocation8 + $0x420] sm:$0xff]
    %v2918 = vld [vmem:[#allocation8 + $0x428] sm:$0xff]
    %v2919 = vld [vmem:[#allocation8 + $0x430] sm:$0xff]
    %v2920 = vld [vmem:[#allocation8 + $0x438] sm:$0xff]
    %v2921 = vld [vmem:[#allocation8 + $0x440] sm:$0xff]
    %v2922 = vld [vmem:[#allocation8 + $0x448] sm:$0xff]
    %v2923 = vld [vmem:[#allocation8 + $0x450] sm:$0xff]
    %v2924 = vld [vmem:[#allocation8 + $0x458] sm:$0xff]
    %v2925 = vld [vmem:[#allocation8 + $0x460] sm:$0xff]
    %v2926 = vld [vmem:[#allocation8 + $0x468] sm:$0xff]
    %v2927 = vld [vmem:[#allocation8 + $0x470] sm:$0xff]
    %v2928 = vld [vmem:[#allocation8 + $0x478] sm:$0xff]
    %v2929 = vld [vmem:[#allocation8 + $0x480] sm:$0xff]
    %v2930 = vld [vmem:[#allocation8 + $0x488] sm:$0xff]
    %v2931 = vld [vmem:[#allocation8 + $0x490] sm:$0xff]
    %v2932 = vld [vmem:[#allocation8 + $0x498] sm:$0xff]
    %v2933 = vld [vmem:[#allocation8 + $0x4a0] sm:$0xff]
    %v2934 = vld [vmem:[#allocation8 + $0x4a8] sm:$0xff]
    %v2935 = vld [vmem:[#allocation8 + $0x4b0] sm:$0xff]
    %v2936 = vld [vmem:[#allocation8 + $0x4b8] sm:$0xff]
    %v2937 = vld [vmem:[#allocation8 + $0x4c0] sm:$0xff]
    %v2938 = vld [vmem:[#allocation8 + $0x4c8] sm:$0xff]
    %v2939 = vld [vmem:[#allocation8 + $0x4d0] sm:$0xff]
    %v2940 = vld [vmem:[#allocation8 + $0x4d8] sm:$0xff]
    %v2941 = vld [vmem:[#allocation8 + $0x4e0] sm:$0xff]
    %v2942 = vld [vmem:[#allocation8 + $0x4e8] sm:$0xff]
    %v2943 = vld [vmem:[#allocation8 + $0x4f0] sm:$0xff]
    %v2944 = vld [vmem:[#allocation8 + $0x4f8] sm:$0xff]
    %v2945 = vld [vmem:[#allocation8 + $0x500] sm:$0xff]
    %v2946 = vld [vmem:[#allocation8 + $0x508] sm:$0xff]
    %v2947 = vld [vmem:[#allocation8 + $0x510] sm:$0xff]
    %v2948 = vld [vmem:[#allocation8 + $0x518] sm:$0xff]
    %v2949 = vld [vmem:[#allocation8 + $0x520] sm:$0xff]
    %v2950 = vld [vmem:[#allocation8 + $0x528] sm:$0xff]
    %v2951 = vld [vmem:[#allocation8 + $0x530] sm:$0xff]
    %v2952 = vld [vmem:[#allocation8 + $0x538] sm:$0xff]
    %v2953 = vld [vmem:[#allocation8 + $0x540] sm:$0xff]
    %v2954 = vld [vmem:[#allocation8 + $0x548] sm:$0xff]
    %v2955 = vld [vmem:[#allocation8 + $0x550] sm:$0xff]
    %v2956 = vld [vmem:[#allocation8 + $0x558] sm:$0xff]
    %v2957 = vld [vmem:[#allocation8 + $0x560] sm:$0xff]
    %v2958 = vld [vmem:[#allocation8 + $0x568] sm:$0xff]
    %v2959 = vld [vmem:[#allocation8 + $0x570] sm:$0xff]
    %v2960 = vld [vmem:[#allocation8 + $0x578] sm:$0xff]
    %v2961 = vld [vmem:[#allocation8 + $0x580] sm:$0xff]
    %v2962 = vld [vmem:[#allocation8 + $0x588] sm:$0xff]
    %v2963 = vld [vmem:[#allocation8 + $0x590] sm:$0xff]
    %v2964 = vld [vmem:[#allocation8 + $0x598] sm:$0xff]
    %v2965 = vld [vmem:[#allocation8 + $0x5a0] sm:$0xff]
    %v2966 = vld [vmem:[#allocation8 + $0x5a8] sm:$0xff]
    %v2967 = vld [vmem:[#allocation8 + $0x5b0] sm:$0xff]
    %v2968 = vld [vmem:[#allocation8 + $0x5b8] sm:$0xff]
    %v2969 = vld [vmem:[#allocation8 + $0x5c0] sm:$0xff]
    %v2970 = vld [vmem:[#allocation8 + $0x5c8] sm:$0xff]
    %v2971 = vld [vmem:[#allocation8 + $0x5d0] sm:$0xff]
    %v2972 = vld [vmem:[#allocation8 + $0x5d8] sm:$0xff]
    %v2973 = vld [vmem:[#allocation8 + $0x5e0] sm:$0xff]
    %v2974 = vld [vmem:[#allocation8 + $0x5e8] sm:$0xff]
    %v2975 = vld [vmem:[#allocation8 + $0x5f0] sm:$0xff]
    %v2976 = vld [vmem:[#allocation8 + $0x5f8] sm:$0xff]
    %v2977 = vld [vmem:[#allocation10] sm:$0xf]
    %v2978 = vunpack.c.l.bf16 %v2977
    %v2980 = vlaneseq
    %v2981 = vshrl.u32 %v2980, 7
    %v2982 = vsub.s32 0, %v2981
    %v2983 = vrot.slane %v2978, %v2982
    %v2984 = vlaneseq
    %v2985 = vshrl.u32 %v2984, 7
    %v2986 = vsub.s32 2, %v2985
    %v2987 = vrot.slane %v2978, %v2986
    %v2988 = vlaneseq
    %v2989 = vshrl.u32 %v2988, 7
    %v2990 = vsub.s32 4, %v2989
    %v2991 = vrot.slane %v2978, %v2990
    %v2992 = vlaneseq
    %v2993 = vshrl.u32 %v2992, 7
    %v2994 = vsub.s32 6, %v2993
    %v2995 = vrot.slane %v2978, %v2994
    %v3000 = vlaneseq
    %v3001 = vshrl.u32 %v3000, 7
    %v3002 = vsub.s32 0, %v3001
    %v3003 = vrot.slane %v2983, %v3002
    %v3004 = vlaneseq
    %v3005 = vshrl.u32 %v3004, 7
    %v3006 = vsub.s32 0, %v3005
    %v3007 = vrot.slane %v2987, %v3006
    %v3008 = vlaneseq
    %v3009 = vshrl.u32 %v3008, 7
    %v3010 = vsub.s32 0, %v3009
    %v3011 = vrot.slane %v2991, %v3010
    %v3012 = vlaneseq
    %v3013 = vshrl.u32 %v3012, 7
    %v3014 = vsub.s32 0, %v3013
    %v3015 = vrot.slane %v2995, %v3014
    %v3208 = vunpack.c.l.b16 %v2785
    %v3209 = vunpack.c.h.b16 %v2785
    %v3210 = vunpack.c.l.b16 %v2786
    %v3211 = vunpack.c.h.b16 %v2786
    %v3212 = vunpack.c.l.b16 %v2787
    %v3213 = vunpack.c.h.b16 %v2787
    %v3214 = vunpack.c.l.b16 %v2788
    %v3215 = vunpack.c.h.b16 %v2788
    %v3216 = vunpack.c.l.b16 %v2789
    %v3217 = vunpack.c.h.b16 %v2789
    %v3218 = vunpack.c.l.b16 %v2790
    %v3219 = vunpack.c.h.b16 %v2790
    %v3220 = vunpack.c.l.b16 %v2791
    %v3221 = vunpack.c.h.b16 %v2791
    %v3222 = vunpack.c.l.b16 %v2792
    %v3223 = vunpack.c.h.b16 %v2792
    %v3224 = vunpack.c.l.b16 %v2793
    %v3225 = vunpack.c.h.b16 %v2793
    %v3226 = vunpack.c.l.b16 %v2794
    %v3227 = vunpack.c.h.b16 %v2794
    %v3228 = vunpack.c.l.b16 %v2795
    %v3229 = vunpack.c.h.b16 %v2795
    %v3230 = vunpack.c.l.b16 %v2796
    %v3231 = vunpack.c.h.b16 %v2796
    %v3232 = vunpack.c.l.b16 %v2797
    %v3233 = vunpack.c.h.b16 %v2797
    %v3234 = vunpack.c.l.b16 %v2798
    %v3235 = vunpack.c.h.b16 %v2798
    %v3236 = vunpack.c.l.b16 %v2799
    %v3237 = vunpack.c.h.b16 %v2799
    %v3238 = vunpack.c.l.b16 %v2800
    %v3239 = vunpack.c.h.b16 %v2800
    %v3240 = vunpack.c.l.b16 %v2801
    %v3241 = vunpack.c.h.b16 %v2801
    %v3242 = vunpack.c.l.b16 %v2802
    %v3243 = vunpack.c.h.b16 %v2802
    %v3244 = vunpack.c.l.b16 %v2803
    %v3245 = vunpack.c.h.b16 %v2803
    %v3246 = vunpack.c.l.b16 %v2804
    %v3247 = vunpack.c.h.b16 %v2804
    %v3248 = vunpack.c.l.b16 %v2805
    %v3249 = vunpack.c.h.b16 %v2805
    %v3250 = vunpack.c.l.b16 %v2806
    %v3251 = vunpack.c.h.b16 %v2806
    %v3252 = vunpack.c.l.b16 %v2807
    %v3253 = vunpack.c.h.b16 %v2807
    %v3254 = vunpack.c.l.b16 %v2808
    %v3255 = vunpack.c.h.b16 %v2808
    %v3256 = vunpack.c.l.b16 %v2809
    %v3257 = vunpack.c.h.b16 %v2809
    %v3258 = vunpack.c.l.b16 %v2810
    %v3259 = vunpack.c.h.b16 %v2810
    %v3260 = vunpack.c.l.b16 %v2811
    %v3261 = vunpack.c.h.b16 %v2811
    %v3262 = vunpack.c.l.b16 %v2812
    %v3263 = vunpack.c.h.b16 %v2812
    %v3264 = vunpack.c.l.b16 %v2813
    %v3265 = vunpack.c.h.b16 %v2813
    %v3266 = vunpack.c.l.b16 %v2814
    %v3267 = vunpack.c.h.b16 %v2814
    %v3268 = vunpack.c.l.b16 %v2815
    %v3269 = vunpack.c.h.b16 %v2815
    %v3270 = vunpack.c.l.b16 %v2816
    %v3271 = vunpack.c.h.b16 %v2816
    %v3272 = vunpack.c.l.b16 %v2817
    %v3273 = vunpack.c.h.b16 %v2817
    %v3274 = vunpack.c.l.b16 %v2818
    %v3275 = vunpack.c.h.b16 %v2818
    %v3276 = vunpack.c.l.b16 %v2819
    %v3277 = vunpack.c.h.b16 %v2819
    %v3278 = vunpack.c.l.b16 %v2820
    %v3279 = vunpack.c.h.b16 %v2820
    %v3280 = vunpack.c.l.b16 %v2821
    %v3281 = vunpack.c.h.b16 %v2821
    %v3282 = vunpack.c.l.b16 %v2822
    %v3283 = vunpack.c.h.b16 %v2822
    %v3284 = vunpack.c.l.b16 %v2823
    %v3285 = vunpack.c.h.b16 %v2823
    %v3286 = vunpack.c.l.b16 %v2824
    %v3287 = vunpack.c.h.b16 %v2824
    %v3288 = vunpack.c.l.b16 %v2825
    %v3289 = vunpack.c.h.b16 %v2825
    %v3290 = vunpack.c.l.b16 %v2826
    %v3291 = vunpack.c.h.b16 %v2826
    %v3292 = vunpack.c.l.b16 %v2827
    %v3293 = vunpack.c.h.b16 %v2827
    %v3294 = vunpack.c.l.b16 %v2828
    %v3295 = vunpack.c.h.b16 %v2828
    %v3296 = vunpack.c.l.b16 %v2829
    %v3297 = vunpack.c.h.b16 %v2829
    %v3298 = vunpack.c.l.b16 %v2830
    %v3299 = vunpack.c.h.b16 %v2830
    %v3300 = vunpack.c.l.b16 %v2831
    %v3301 = vunpack.c.h.b16 %v2831
    %v3302 = vunpack.c.l.b16 %v2832
    %v3303 = vunpack.c.h.b16 %v2832
    %v3304 = vunpack.c.l.b16 %v2833
    %v3305 = vunpack.c.h.b16 %v2833
    %v3306 = vunpack.c.l.b16 %v2834
    %v3307 = vunpack.c.h.b16 %v2834
    %v3308 = vunpack.c.l.b16 %v2835
    %v3309 = vunpack.c.h.b16 %v2835
    %v3310 = vunpack.c.l.b16 %v2836
    %v3311 = vunpack.c.h.b16 %v2836
    %v3312 = vunpack.c.l.b16 %v2837
    %v3313 = vunpack.c.h.b16 %v2837
    %v3314 = vunpack.c.l.b16 %v2838
    %v3315 = vunpack.c.h.b16 %v2838
    %v3316 = vunpack.c.l.b16 %v2839
    %v3317 = vunpack.c.h.b16 %v2839
    %v3318 = vunpack.c.l.b16 %v2840
    %v3319 = vunpack.c.h.b16 %v2840
    %v3320 = vunpack.c.l.b16 %v2841
    %v3321 = vunpack.c.h.b16 %v2841
    %v3322 = vunpack.c.l.b16 %v2842
    %v3323 = vunpack.c.h.b16 %v2842
    %v3324 = vunpack.c.l.b16 %v2843
    %v3325 = vunpack.c.h.b16 %v2843
    %v3326 = vunpack.c.l.b16 %v2844
    %v3327 = vunpack.c.h.b16 %v2844
    %v3328 = vunpack.c.l.b16 %v2845
    %v3329 = vunpack.c.h.b16 %v2845
    %v3330 = vunpack.c.l.b16 %v2846
    %v3331 = vunpack.c.h.b16 %v2846
    %v3332 = vunpack.c.l.b16 %v2847
    %v3333 = vunpack.c.h.b16 %v2847
    %v3334 = vunpack.c.l.b16 %v2848
    %v3335 = vunpack.c.h.b16 %v2848
    %v3336 = vunpack.c.l.b16 %v2849
    %v3337 = vunpack.c.h.b16 %v2849
    %v3338 = vunpack.c.l.b16 %v2850
    %v3339 = vunpack.c.h.b16 %v2850
    %v3340 = vunpack.c.l.b16 %v2851
    %v3341 = vunpack.c.h.b16 %v2851
    %v3342 = vunpack.c.l.b16 %v2852
    %v3343 = vunpack.c.h.b16 %v2852
    %v3344 = vunpack.c.l.b16 %v2853
    %v3345 = vunpack.c.h.b16 %v2853
    %v3346 = vunpack.c.l.b16 %v2854
    %v3347 = vunpack.c.h.b16 %v2854
    %v3348 = vunpack.c.l.b16 %v2855
    %v3349 = vunpack.c.h.b16 %v2855
    %v3350 = vunpack.c.l.b16 %v2856
    %v3351 = vunpack.c.h.b16 %v2856
    %v3352 = vunpack.c.l.b16 %v2857
    %v3353 = vunpack.c.h.b16 %v2857
    %v3354 = vunpack.c.l.b16 %v2858
    %v3355 = vunpack.c.h.b16 %v2858
    %v3356 = vunpack.c.l.b16 %v2859
    %v3357 = vunpack.c.h.b16 %v2859
    %v3358 = vunpack.c.l.b16 %v2860
    %v3359 = vunpack.c.h.b16 %v2860
    %v3360 = vunpack.c.l.b16 %v2861
    %v3361 = vunpack.c.h.b16 %v2861
    %v3362 = vunpack.c.l.b16 %v2862
    %v3363 = vunpack.c.h.b16 %v2862
    %v3364 = vunpack.c.l.b16 %v2863
    %v3365 = vunpack.c.h.b16 %v2863
    %v3366 = vunpack.c.l.b16 %v2864
    %v3367 = vunpack.c.h.b16 %v2864
    %v3368 = vunpack.c.l.b16 %v2865
    %v3369 = vunpack.c.h.b16 %v2865
    %v3370 = vunpack.c.l.b16 %v2866
    %v3371 = vunpack.c.h.b16 %v2866
    %v3372 = vunpack.c.l.b16 %v2867
    %v3373 = vunpack.c.h.b16 %v2867
    %v3374 = vunpack.c.l.b16 %v2868
    %v3375 = vunpack.c.h.b16 %v2868
    %v3376 = vunpack.c.l.b16 %v2869
    %v3377 = vunpack.c.h.b16 %v2869
    %v3378 = vunpack.c.l.b16 %v2870
    %v3379 = vunpack.c.h.b16 %v2870
    %v3380 = vunpack.c.l.b16 %v2871
    %v3381 = vunpack.c.h.b16 %v2871
    %v3382 = vunpack.c.l.b16 %v2872
    %v3383 = vunpack.c.h.b16 %v2872
    %v3384 = vunpack.c.l.b16 %v2873
    %v3385 = vunpack.c.h.b16 %v2873
    %v3386 = vunpack.c.l.b16 %v2874
    %v3387 = vunpack.c.h.b16 %v2874
    %v3388 = vunpack.c.l.b16 %v2875
    %v3389 = vunpack.c.h.b16 %v2875
    %v3390 = vunpack.c.l.b16 %v2876
    %v3391 = vunpack.c.h.b16 %v2876
    %v3392 = vunpack.c.l.b16 %v2877
    %v3393 = vunpack.c.h.b16 %v2877
    %v3394 = vunpack.c.l.b16 %v2878
    %v3395 = vunpack.c.h.b16 %v2878
    %v3396 = vunpack.c.l.b16 %v2879
    %v3397 = vunpack.c.h.b16 %v2879
    %v3398 = vunpack.c.l.b16 %v2880
    %v3399 = vunpack.c.h.b16 %v2880
    %v3400 = vunpack.c.l.b16 %v2881
    %v3401 = vunpack.c.h.b16 %v2881
    %v3402 = vunpack.c.l.b16 %v2882
    %v3403 = vunpack.c.h.b16 %v2882
    %v3404 = vunpack.c.l.b16 %v2883
    %v3405 = vunpack.c.h.b16 %v2883
    %v3406 = vunpack.c.l.b16 %v2884
    %v3407 = vunpack.c.h.b16 %v2884
    %v3408 = vunpack.c.l.b16 %v2885
    %v3409 = vunpack.c.h.b16 %v2885
    %v3410 = vunpack.c.l.b16 %v2886
    %v3411 = vunpack.c.h.b16 %v2886
    %v3412 = vunpack.c.l.b16 %v2887
    %v3413 = vunpack.c.h.b16 %v2887
    %v3414 = vunpack.c.l.b16 %v2888
    %v3415 = vunpack.c.h.b16 %v2888
    %v3416 = vunpack.c.l.b16 %v2889
    %v3417 = vunpack.c.h.b16 %v2889
    %v3418 = vunpack.c.l.b16 %v2890
    %v3419 = vunpack.c.h.b16 %v2890
    %v3420 = vunpack.c.l.b16 %v2891
    %v3421 = vunpack.c.h.b16 %v2891
    %v3422 = vunpack.c.l.b16 %v2892
    %v3423 = vunpack.c.h.b16 %v2892
    %v3424 = vunpack.c.l.b16 %v2893
    %v3425 = vunpack.c.h.b16 %v2893
    %v3426 = vunpack.c.l.b16 %v2894
    %v3427 = vunpack.c.h.b16 %v2894
    %v3428 = vunpack.c.l.b16 %v2895
    %v3429 = vunpack.c.h.b16 %v2895
    %v3430 = vunpack.c.l.b16 %v2896
    %v3431 = vunpack.c.h.b16 %v2896
    %v3432 = vunpack.c.l.b16 %v2897
    %v3433 = vunpack.c.h.b16 %v2897
    %v3434 = vunpack.c.l.b16 %v2898
    %v3435 = vunpack.c.h.b16 %v2898
    %v3436 = vunpack.c.l.b16 %v2899
    %v3437 = vunpack.c.h.b16 %v2899
    %v3438 = vunpack.c.l.b16 %v2900
    %v3439 = vunpack.c.h.b16 %v2900
    %v3440 = vunpack.c.l.b16 %v2901
    %v3441 = vunpack.c.h.b16 %v2901
    %v3442 = vunpack.c.l.b16 %v2902
    %v3443 = vunpack.c.h.b16 %v2902
    %v3444 = vunpack.c.l.b16 %v2903
    %v3445 = vunpack.c.h.b16 %v2903
    %v3446 = vunpack.c.l.b16 %v2904
    %v3447 = vunpack.c.h.b16 %v2904
    %v3448 = vunpack.c.l.b16 %v2905
    %v3449 = vunpack.c.h.b16 %v2905
    %v3450 = vunpack.c.l.b16 %v2906
    %v3451 = vunpack.c.h.b16 %v2906
    %v3452 = vunpack.c.l.b16 %v2907
    %v3453 = vunpack.c.h.b16 %v2907
    %v3454 = vunpack.c.l.b16 %v2908
    %v3455 = vunpack.c.h.b16 %v2908
    %v3456 = vunpack.c.l.b16 %v2909
    %v3457 = vunpack.c.h.b16 %v2909
    %v3458 = vunpack.c.l.b16 %v2910
    %v3459 = vunpack.c.h.b16 %v2910
    %v3460 = vunpack.c.l.b16 %v2911
    %v3461 = vunpack.c.h.b16 %v2911
    %v3462 = vunpack.c.l.b16 %v2912
    %v3463 = vunpack.c.h.b16 %v2912
    %v3464 = vunpack.c.l.b16 %v2913
    %v3465 = vunpack.c.h.b16 %v2913
    %v3466 = vunpack.c.l.b16 %v2914
    %v3467 = vunpack.c.h.b16 %v2914
    %v3468 = vunpack.c.l.b16 %v2915
    %v3469 = vunpack.c.h.b16 %v2915
    %v3470 = vunpack.c.l.b16 %v2916
    %v3471 = vunpack.c.h.b16 %v2916
    %v3472 = vunpack.c.l.b16 %v2917
    %v3473 = vunpack.c.h.b16 %v2917
    %v3474 = vunpack.c.l.b16 %v2918
    %v3475 = vunpack.c.h.b16 %v2918
    %v3476 = vunpack.c.l.b16 %v2919
    %v3477 = vunpack.c.h.b16 %v2919
    %v3478 = vunpack.c.l.b16 %v2920
    %v3479 = vunpack.c.h.b16 %v2920
    %v3480 = vunpack.c.l.b16 %v2921
    %v3481 = vunpack.c.h.b16 %v2921
    %v3482 = vunpack.c.l.b16 %v2922
    %v3483 = vunpack.c.h.b16 %v2922
    %v3484 = vunpack.c.l.b16 %v2923
    %v3485 = vunpack.c.h.b16 %v2923
    %v3486 = vunpack.c.l.b16 %v2924
    %v3487 = vunpack.c.h.b16 %v2924
    %v3488 = vunpack.c.l.b16 %v2925
    %v3489 = vunpack.c.h.b16 %v2925
    %v3490 = vunpack.c.l.b16 %v2926
    %v3491 = vunpack.c.h.b16 %v2926
    %v3492 = vunpack.c.l.b16 %v2927
    %v3493 = vunpack.c.h.b16 %v2927
    %v3494 = vunpack.c.l.b16 %v2928
    %v3495 = vunpack.c.h.b16 %v2928
    %v3496 = vunpack.c.l.b16 %v2929
    %v3497 = vunpack.c.h.b16 %v2929
    %v3498 = vunpack.c.l.b16 %v2930
    %v3499 = vunpack.c.h.b16 %v2930
    %v3500 = vunpack.c.l.b16 %v2931
    %v3501 = vunpack.c.h.b16 %v2931
    %v3502 = vunpack.c.l.b16 %v2932
    %v3503 = vunpack.c.h.b16 %v2932
    %v3504 = vunpack.c.l.b16 %v2933
    %v3505 = vunpack.c.h.b16 %v2933
    %v3506 = vunpack.c.l.b16 %v2934
    %v3507 = vunpack.c.h.b16 %v2934
    %v3508 = vunpack.c.l.b16 %v2935
    %v3509 = vunpack.c.h.b16 %v2935
    %v3510 = vunpack.c.l.b16 %v2936
    %v3511 = vunpack.c.h.b16 %v2936
    %v3512 = vunpack.c.l.b16 %v2937
    %v3513 = vunpack.c.h.b16 %v2937
    %v3514 = vunpack.c.l.b16 %v2938
    %v3515 = vunpack.c.h.b16 %v2938
    %v3516 = vunpack.c.l.b16 %v2939
    %v3517 = vunpack.c.h.b16 %v2939
    %v3518 = vunpack.c.l.b16 %v2940
    %v3519 = vunpack.c.h.b16 %v2940
    %v3520 = vunpack.c.l.b16 %v2941
    %v3521 = vunpack.c.h.b16 %v2941
    %v3522 = vunpack.c.l.b16 %v2942
    %v3523 = vunpack.c.h.b16 %v2942
    %v3524 = vunpack.c.l.b16 %v2943
    %v3525 = vunpack.c.h.b16 %v2943
    %v3526 = vunpack.c.l.b16 %v2944
    %v3527 = vunpack.c.h.b16 %v2944
    %v3528 = vunpack.c.l.b16 %v2945
    %v3529 = vunpack.c.h.b16 %v2945
    %v3530 = vunpack.c.l.b16 %v2946
    %v3531 = vunpack.c.h.b16 %v2946
    %v3532 = vunpack.c.l.b16 %v2947
    %v3533 = vunpack.c.h.b16 %v2947
    %v3534 = vunpack.c.l.b16 %v2948
    %v3535 = vunpack.c.h.b16 %v2948
    %v3536 = vunpack.c.l.b16 %v2949
    %v3537 = vunpack.c.h.b16 %v2949
    %v3538 = vunpack.c.l.b16 %v2950
    %v3539 = vunpack.c.h.b16 %v2950
    %v3540 = vunpack.c.l.b16 %v2951
    %v3541 = vunpack.c.h.b16 %v2951
    %v3542 = vunpack.c.l.b16 %v2952
    %v3543 = vunpack.c.h.b16 %v2952
    %v3544 = vunpack.c.l.b16 %v2953
    %v3545 = vunpack.c.h.b16 %v2953
    %v3546 = vunpack.c.l.b16 %v2954
    %v3547 = vunpack.c.h.b16 %v2954
    %v3548 = vunpack.c.l.b16 %v2955
    %v3549 = vunpack.c.h.b16 %v2955
    %v3550 = vunpack.c.l.b16 %v2956
    %v3551 = vunpack.c.h.b16 %v2956
    %v3552 = vunpack.c.l.b16 %v2957
    %v3553 = vunpack.c.h.b16 %v2957
    %v3554 = vunpack.c.l.b16 %v2958
    %v3555 = vunpack.c.h.b16 %v2958
    %v3556 = vunpack.c.l.b16 %v2959
    %v3557 = vunpack.c.h.b16 %v2959
    %v3558 = vunpack.c.l.b16 %v2960
    %v3559 = vunpack.c.h.b16 %v2960
    %v3560 = vunpack.c.l.b16 %v2961
    %v3561 = vunpack.c.h.b16 %v2961
    %v3562 = vunpack.c.l.b16 %v2962
    %v3563 = vunpack.c.h.b16 %v2962
    %v3564 = vunpack.c.l.b16 %v2963
    %v3565 = vunpack.c.h.b16 %v2963
    %v3566 = vunpack.c.l.b16 %v2964
    %v3567 = vunpack.c.h.b16 %v2964
    %v3568 = vunpack.c.l.b16 %v2965
    %v3569 = vunpack.c.h.b16 %v2965
    %v3570 = vunpack.c.l.b16 %v2966
    %v3571 = vunpack.c.h.b16 %v2966
    %v3572 = vunpack.c.l.b16 %v2967
    %v3573 = vunpack.c.h.b16 %v2967
    %v3574 = vunpack.c.l.b16 %v2968
    %v3575 = vunpack.c.h.b16 %v2968
    %v3576 = vunpack.c.l.b16 %v2969
    %v3577 = vunpack.c.h.b16 %v2969
    %v3578 = vunpack.c.l.b16 %v2970
    %v3579 = vunpack.c.h.b16 %v2970
    %v3580 = vunpack.c.l.b16 %v2971
    %v3581 = vunpack.c.h.b16 %v2971
    %v3582 = vunpack.c.l.b16 %v2972
    %v3583 = vunpack.c.h.b16 %v2972
    %v3584 = vunpack.c.l.b16 %v2973
    %v3585 = vunpack.c.h.b16 %v2973
    %v3586 = vunpack.c.l.b16 %v2974
    %v3587 = vunpack.c.h.b16 %v2974
    %v3588 = vunpack.c.l.b16 %v2975
    %v3589 = vunpack.c.h.b16 %v2975
    %v3590 = vunpack.c.l.b16 %v2976
    %v3591 = vunpack.c.h.b16 %v2976
    %v3592 = vpack.c.b16 %v3212, %v3208
    %v3593 = vpack.c.b16 %v3213, %v3209
    %v3594 = vpack.c.b16 %v3214, %v3210
    %v3595 = vpack.c.b16 %v3215, %v3211
    %v3596 = vpack.c.b16 %v3220, %v3216
    %v3597 = vpack.c.b16 %v3221, %v3217
    %v3598 = vpack.c.b16 %v3222, %v3218
    %v3599 = vpack.c.b16 %v3223, %v3219
    %v3600 = vpack.c.b16 %v3228, %v3224
    %v3601 = vpack.c.b16 %v3229, %v3225
    %v3602 = vpack.c.b16 %v3230, %v3226
    %v3603 = vpack.c.b16 %v3231, %v3227
    %v3604 = vpack.c.b16 %v3236, %v3232
    %v3605 = vpack.c.b16 %v3237, %v3233
    %v3606 = vpack.c.b16 %v3238, %v3234
    %v3607 = vpack.c.b16 %v3239, %v3235
    %v3608 = vpack.c.b16 %v3244, %v3240
    %v3609 = vpack.c.b16 %v3245, %v3241
    %v3610 = vpack.c.b16 %v3246, %v3242
    %v3611 = vpack.c.b16 %v3247, %v3243
    %v3612 = vpack.c.b16 %v3252, %v3248
    %v3613 = vpack.c.b16 %v3253, %v3249
    %v3614 = vpack.c.b16 %v3254, %v3250
    %v3615 = vpack.c.b16 %v3255, %v3251
    %v3616 = vpack.c.b16 %v3260, %v3256
    %v3617 = vpack.c.b16 %v3261, %v3257
    %v3618 = vpack.c.b16 %v3262, %v3258
    %v3619 = vpack.c.b16 %v3263, %v3259
    %v3620 = vpack.c.b16 %v3268, %v3264
    %v3621 = vpack.c.b16 %v3269, %v3265
    %v3622 = vpack.c.b16 %v3270, %v3266
    %v3623 = vpack.c.b16 %v3271, %v3267
    %v3624 = vpack.c.b16 %v3276, %v3272
    %v3625 = vpack.c.b16 %v3277, %v3273
    %v3626 = vpack.c.b16 %v3278, %v3274
    %v3627 = vpack.c.b16 %v3279, %v3275
    %v3628 = vpack.c.b16 %v3284, %v3280
    %v3629 = vpack.c.b16 %v3285, %v3281
    %v3630 = vpack.c.b16 %v3286, %v3282
    %v3631 = vpack.c.b16 %v3287, %v3283
    %v3632 = vpack.c.b16 %v3292, %v3288
    %v3633 = vpack.c.b16 %v3293, %v3289
    %v3634 = vpack.c.b16 %v3294, %v3290
    %v3635 = vpack.c.b16 %v3295, %v3291
    %v3636 = vpack.c.b16 %v3300, %v3296
    %v3637 = vpack.c.b16 %v3301, %v3297
    %v3638 = vpack.c.b16 %v3302, %v3298
    %v3639 = vpack.c.b16 %v3303, %v3299
    %v3640 = vpack.c.b16 %v3308, %v3304
    %v3641 = vpack.c.b16 %v3309, %v3305
    %v3642 = vpack.c.b16 %v3310, %v3306
    %v3643 = vpack.c.b16 %v3311, %v3307
    %v3644 = vpack.c.b16 %v3316, %v3312
    %v3645 = vpack.c.b16 %v3317, %v3313
    %v3646 = vpack.c.b16 %v3318, %v3314
    %v3647 = vpack.c.b16 %v3319, %v3315
    %v3648 = vpack.c.b16 %v3324, %v3320
    %v3649 = vpack.c.b16 %v3325, %v3321
    %v3650 = vpack.c.b16 %v3326, %v3322
    %v3651 = vpack.c.b16 %v3327, %v3323
    %v3652 = vpack.c.b16 %v3332, %v3328
    %v3653 = vpack.c.b16 %v3333, %v3329
    %v3654 = vpack.c.b16 %v3334, %v3330
    %v3655 = vpack.c.b16 %v3335, %v3331
    %v3656 = vpack.c.b16 %v3340, %v3336
    %v3657 = vpack.c.b16 %v3341, %v3337
    %v3658 = vpack.c.b16 %v3342, %v3338
    %v3659 = vpack.c.b16 %v3343, %v3339
    %v3660 = vpack.c.b16 %v3348, %v3344
    %v3661 = vpack.c.b16 %v3349, %v3345
    %v3662 = vpack.c.b16 %v3350, %v3346
    %v3663 = vpack.c.b16 %v3351, %v3347
    %v3664 = vpack.c.b16 %v3356, %v3352
    %v3665 = vpack.c.b16 %v3357, %v3353
    %v3666 = vpack.c.b16 %v3358, %v3354
    %v3667 = vpack.c.b16 %v3359, %v3355
    %v3668 = vpack.c.b16 %v3364, %v3360
    %v3669 = vpack.c.b16 %v3365, %v3361
    %v3670 = vpack.c.b16 %v3366, %v3362
    %v3671 = vpack.c.b16 %v3367, %v3363
    %v3672 = vpack.c.b16 %v3372, %v3368
    %v3673 = vpack.c.b16 %v3373, %v3369
    %v3674 = vpack.c.b16 %v3374, %v3370
    %v3675 = vpack.c.b16 %v3375, %v3371
    %v3676 = vpack.c.b16 %v3380, %v3376
    %v3677 = vpack.c.b16 %v3381, %v3377
    %v3678 = vpack.c.b16 %v3382, %v3378
    %v3679 = vpack.c.b16 %v3383, %v3379
    %v3680 = vpack.c.b16 %v3388, %v3384
    %v3681 = vpack.c.b16 %v3389, %v3385
    %v3682 = vpack.c.b16 %v3390, %v3386
    %v3683 = vpack.c.b16 %v3391, %v3387
    %v3684 = vpack.c.b16 %v3396, %v3392
    %v3685 = vpack.c.b16 %v3397, %v3393
    %v3686 = vpack.c.b16 %v3398, %v3394
    %v3687 = vpack.c.b16 %v3399, %v3395
    %v3688 = vpack.c.b16 %v3404, %v3400
    %v3689 = vpack.c.b16 %v3405, %v3401
    %v3690 = vpack.c.b16 %v3406, %v3402
    %v3691 = vpack.c.b16 %v3407, %v3403
    %v3692 = vpack.c.b16 %v3412, %v3408
    %v3693 = vpack.c.b16 %v3413, %v3409
    %v3694 = vpack.c.b16 %v3414, %v3410
    %v3695 = vpack.c.b16 %v3415, %v3411
    %v3696 = vpack.c.b16 %v3420, %v3416
    %v3697 = vpack.c.b16 %v3421, %v3417
    %v3698 = vpack.c.b16 %v3422, %v3418
    %v3699 = vpack.c.b16 %v3423, %v3419
    %v3700 = vpack.c.b16 %v3428, %v3424
    %v3701 = vpack.c.b16 %v3429, %v3425
    %v3702 = vpack.c.b16 %v3430, %v3426
    %v3703 = vpack.c.b16 %v3431, %v3427
    %v3704 = vpack.c.b16 %v3436, %v3432
    %v3705 = vpack.c.b16 %v3437, %v3433
    %v3706 = vpack.c.b16 %v3438, %v3434
    %v3707 = vpack.c.b16 %v3439, %v3435
    %v3708 = vpack.c.b16 %v3444, %v3440
    %v3709 = vpack.c.b16 %v3445, %v3441
    %v3710 = vpack.c.b16 %v3446, %v3442
    %v3711 = vpack.c.b16 %v3447, %v3443
    %v3712 = vpack.c.b16 %v3452, %v3448
    %v3713 = vpack.c.b16 %v3453, %v3449
    %v3714 = vpack.c.b16 %v3454, %v3450
    %v3715 = vpack.c.b16 %v3455, %v3451
    %v3716 = vpack.c.b16 %v3460, %v3456
    %v3717 = vpack.c.b16 %v3461, %v3457
    %v3718 = vpack.c.b16 %v3462, %v3458
    %v3719 = vpack.c.b16 %v3463, %v3459
    %v3720 = vpack.c.b16 %v3468, %v3464
    %v3721 = vpack.c.b16 %v3469, %v3465
    %v3722 = vpack.c.b16 %v3470, %v3466
    %v3723 = vpack.c.b16 %v3471, %v3467
    %v3724 = vpack.c.b16 %v3476, %v3472
    %v3725 = vpack.c.b16 %v3477, %v3473
    %v3726 = vpack.c.b16 %v3478, %v3474
    %v3727 = vpack.c.b16 %v3479, %v3475
    %v3728 = vpack.c.b16 %v3484, %v3480
    %v3729 = vpack.c.b16 %v3485, %v3481
    %v3730 = vpack.c.b16 %v3486, %v3482
    %v3731 = vpack.c.b16 %v3487, %v3483
    %v3732 = vpack.c.b16 %v3492, %v3488
    %v3733 = vpack.c.b16 %v3493, %v3489
    %v3734 = vpack.c.b16 %v3494, %v3490
    %v3735 = vpack.c.b16 %v3495, %v3491
    %v3736 = vpack.c.b16 %v3500, %v3496
    %v3737 = vpack.c.b16 %v3501, %v3497
    %v3738 = vpack.c.b16 %v3502, %v3498
    %v3739 = vpack.c.b16 %v3503, %v3499
    %v3740 = vpack.c.b16 %v3508, %v3504
    %v3741 = vpack.c.b16 %v3509, %v3505
    %v3742 = vpack.c.b16 %v3510, %v3506
    %v3743 = vpack.c.b16 %v3511, %v3507
    %v3744 = vpack.c.b16 %v3516, %v3512
    %v3745 = vpack.c.b16 %v3517, %v3513
    %v3746 = vpack.c.b16 %v3518, %v3514
    %v3747 = vpack.c.b16 %v3519, %v3515
    %v3748 = vpack.c.b16 %v3524, %v3520
    %v3749 = vpack.c.b16 %v3525, %v3521
    %v3750 = vpack.c.b16 %v3526, %v3522
    %v3751 = vpack.c.b16 %v3527, %v3523
    %v3752 = vpack.c.b16 %v3532, %v3528
    %v3753 = vpack.c.b16 %v3533, %v3529
    %v3754 = vpack.c.b16 %v3534, %v3530
    %v3755 = vpack.c.b16 %v3535, %v3531
    %v3756 = vpack.c.b16 %v3540, %v3536
    %v3757 = vpack.c.b16 %v3541, %v3537
    %v3758 = vpack.c.b16 %v3542, %v3538
    %v3759 = vpack.c.b16 %v3543, %v3539
    %v3760 = vpack.c.b16 %v3548, %v3544
    %v3761 = vpack.c.b16 %v3549, %v3545
    %v3762 = vpack.c.b16 %v3550, %v3546
    %v3763 = vpack.c.b16 %v3551, %v3547
    %v3764 = vpack.c.b16 %v3556, %v3552
    %v3765 = vpack.c.b16 %v3557, %v3553
    %v3766 = vpack.c.b16 %v3558, %v3554
    %v3767 = vpack.c.b16 %v3559, %v3555
    %v3768 = vpack.c.b16 %v3564, %v3560
    %v3769 = vpack.c.b16 %v3565, %v3561
    %v3770 = vpack.c.b16 %v3566, %v3562
    %v3771 = vpack.c.b16 %v3567, %v3563
    %v3772 = vpack.c.b16 %v3572, %v3568
    %v3773 = vpack.c.b16 %v3573, %v3569
    %v3774 = vpack.c.b16 %v3574, %v3570
    %v3775 = vpack.c.b16 %v3575, %v3571
    %v3776 = vpack.c.b16 %v3580, %v3576
    %v3777 = vpack.c.b16 %v3581, %v3577
    %v3778 = vpack.c.b16 %v3582, %v3578
    %v3779 = vpack.c.b16 %v3583, %v3579
    %v3780 = vpack.c.b16 %v3588, %v3584
    %v3781 = vpack.c.b16 %v3589, %v3585
    %v3782 = vpack.c.b16 %v3590, %v3586
    %v3783 = vpack.c.b16 %v3591, %v3587
    %3976 = vmatprep.subr.bf16.mxu0 %v3621
    %3977 = vmatpush1.bf16.msra.mxu0 %v3620
    %3978 = vmatprep.subr.bf16.mxu0 %v3617
    %3979 = vmatpush1.bf16.msra.mxu0 %v3616
    %3980 = vmatprep.subr.bf16.mxu0 %v3613
    %3981 = vmatpush1.bf16.msra.mxu0 %v3612
    %3982 = vmatprep.subr.bf16.mxu0 %v3609
    %3983 = vmatpush1.bf16.msra.mxu0 %v3608
    %3984 = vmatprep.subr.bf16.mxu0 %v3605
    %3985 = vmatpush1.bf16.msra.mxu0 %v3604
    %3986 = vmatprep.subr.bf16.mxu0 %v3601
    %3987 = vmatpush1.bf16.msra.mxu0 %v3600
    %3988 = vmatprep.subr.bf16.mxu0 %v3597
    %3989 = vmatpush1.bf16.msra.mxu0 %v3596
    %3990 = vmatprep.subr.bf16.mxu0 %v3593
    %3991 = vmatpush1.bf16.msra.mxu0 %v3592
    %3992 = vmatprep.subr.bf16.mxu0 %v3653
    %3993 = vmatpush2.bf16.msra.mxu0 %v3652
    %3994 = vmatprep.subr.bf16.mxu0 %v3649
    %3995 = vmatpush2.bf16.msra.mxu0 %v3648
    %3996 = vmatprep.subr.bf16.mxu0 %v3645
    %3997 = vmatpush2.bf16.msra.mxu0 %v3644
    %3998 = vmatprep.subr.bf16.mxu0 %v3641
    %3999 = vmatpush2.bf16.msra.mxu0 %v3640
    %4000 = vmatprep.subr.bf16.mxu0 %v3637
    %4001 = vmatpush2.bf16.msra.mxu0 %v3636
    %4002 = vmatprep.subr.bf16.mxu0 %v3633
    %4003 = vmatpush2.bf16.msra.mxu0 %v3632
    %4004 = vmatprep.subr.bf16.mxu0 %v3629
    %4005 = vmatpush2.bf16.msra.mxu0 %v3628
    %4006 = vmatprep.subr.bf16.mxu0 %v3625
    %4007 = vmatpush2.bf16.msra.mxu0 %v3624
    %4008 = vmatprep.mubr.bf16.mxu0 %v2780
    %4009 = vmatmul.mubr.bf16.gmra.mxu0 %v2779
    %v4010 = vpop.f32.mrf.mxu0
    %v4011 = vadd.f32 %v3003, %v4010
    %v4012 = vpop.f32.mrf.mxu0
    %v4013 = vadd.f32 %v3007, %v4012
    %v4014 = vpop.f32.mrf.mxu0
    %v4015 = vpop.f32.mrf.mxu0
    %4016 = vdwg.mxu0
    %4017 = vmatprep.subr.bf16.mxu0 %v3685
    %4018 = vmatpush1.bf16.msra.mxu0 %v3684
    %4019 = vmatprep.subr.bf16.mxu0 %v3681
    %4020 = vmatpush1.bf16.msra.mxu0 %v3680
    %4021 = vmatprep.subr.bf16.mxu0 %v3677
    %4022 = vmatpush1.bf16.msra.mxu0 %v3676
    %4023 = vmatprep.subr.bf16.mxu0 %v3673
    %4024 = vmatpush1.bf16.msra.mxu0 %v3672
    %4025 = vmatprep.subr.bf16.mxu0 %v3669
    %4026 = vmatpush1.bf16.msra.mxu0 %v3668
    %4027 = vmatprep.subr.bf16.mxu0 %v3665
    %4028 = vmatpush1.bf16.msra.mxu0 %v3664
    %4029 = vmatprep.subr.bf16.mxu0 %v3661
    %4030 = vmatpush1.bf16.msra.mxu0 %v3660
    %4031 = vmatprep.subr.bf16.mxu0 %v3657
    %4032 = vmatpush1.bf16.msra.mxu0 %v3656
    %4033 = vmatprep.subr.bf16.mxu0 %v3717
    %4034 = vmatpush2.bf16.msra.mxu0 %v3716
    %4035 = vmatprep.subr.bf16.mxu0 %v3713
    %4036 = vmatpush2.bf16.msra.mxu0 %v3712
    %4037 = vmatprep.subr.bf16.mxu0 %v3709
    %4038 = vmatpush2.bf16.msra.mxu0 %v3708
    %4039 = vmatprep.subr.bf16.mxu0 %v3705
    %4040 = vmatpush2.bf16.msra.mxu0 %v3704
    %4041 = vmatprep.subr.bf16.mxu0 %v3701
    %4042 = vmatpush2.bf16.msra.mxu0 %v3700
    %4043 = vmatprep.subr.bf16.mxu0 %v3697
    %4044 = vmatpush2.bf16.msra.mxu0 %v3696
    %4045 = vmatprep.subr.bf16.mxu0 %v3693
    %4046 = vmatpush2.bf16.msra.mxu0 %v3692
    %4047 = vmatprep.subr.bf16.mxu0 %v3689
    %4048 = vmatpush2.bf16.msra.mxu0 %v3688
    %4049 = vmatprep.mubr.bf16.mxu0 %v2782
    %4050 = vmatmul.mubr.bf16.gmra.mxu0 %v2781
    %v4051 = vpop.f32.mrf.mxu0
    %v4052 = vadd.f32 %v4011, %v4051
    %v4053 = vpop.f32.mrf.mxu0
    %v4054 = vadd.f32 %v4013, %v4053
    %v4055 = vpop.f32.mrf.mxu0
    %v4056 = vpop.f32.mrf.mxu0
    %4057 = vdwg.mxu0
    %4058 = vmatprep.subr.bf16.mxu0 %v3749
    %4059 = vmatpush1.bf16.msra.mxu0 %v3748
    %4060 = vmatprep.subr.bf16.mxu0 %v3745
    %4061 = vmatpush1.bf16.msra.mxu0 %v3744
    %4062 = vmatprep.subr.bf16.mxu0 %v3741
    %4063 = vmatpush1.bf16.msra.mxu0 %v3740
    %4064 = vmatprep.subr.bf16.mxu0 %v3737
    %4065 = vmatpush1.bf16.msra.mxu0 %v3736
    %4066 = vmatprep.subr.bf16.mxu0 %v3733
    %4067 = vmatpush1.bf16.msra.mxu0 %v3732
    %4068 = vmatprep.subr.bf16.mxu0 %v3729
    %4069 = vmatpush1.bf16.msra.mxu0 %v3728
    %4070 = vmatprep.subr.bf16.mxu0 %v3725
    %4071 = vmatpush1.bf16.msra.mxu0 %v3724
    %4072 = vmatprep.subr.bf16.mxu0 %v3721
    %4073 = vmatpush1.bf16.msra.mxu0 %v3720
    %4074 = vmatprep.subr.bf16.mxu0 %v3781
    %4075 = vmatpush2.bf16.msra.mxu0 %v3780
    %4076 = vmatprep.subr.bf16.mxu0 %v3777
    %4077 = vmatpush2.bf16.msra.mxu0 %v3776
    %4078 = vmatprep.subr.bf16.mxu0 %v3773
    %4079 = vmatpush2.bf16.msra.mxu0 %v3772
    %4080 = vmatprep.subr.bf16.mxu0 %v3769
    %4081 = vmatpush2.bf16.msra.mxu0 %v3768
    %4082 = vmatprep.subr.bf16.mxu0 %v3765
    %4083 = vmatpush2.bf16.msra.mxu0 %v3764
    %4084 = vmatprep.subr.bf16.mxu0 %v3761
    %4085 = vmatpush2.bf16.msra.mxu0 %v3760
    %4086 = vmatprep.subr.bf16.mxu0 %v3757
    %4087 = vmatpush2.bf16.msra.mxu0 %v3756
    %4088 = vmatprep.subr.bf16.mxu0 %v3753
    %4089 = vmatpush2.bf16.msra.mxu0 %v3752
    %4090 = vmatprep.mubr.bf16.mxu0 %v2784
    %4091 = vmatmul.mubr.bf16.gmra.mxu0 %v2783
    %v4092 = vpop.f32.mrf.mxu0
    %v4093 = vadd.f32 %v4052, %v4092
    %v4094 = vpop.f32.mrf.mxu0
    %v4095 = vadd.f32 %v4054, %v4094
    %v4096 = vpop.f32.mrf.mxu0
    %v4097 = vpop.f32.mrf.mxu0
    %4098 = vdwg.mxu0
    %4099 = vmatprep.subr.bf16.mxu0 %v3623
    %4100 = vmatpush1.bf16.msra.mxu0 %v3622
    %4101 = vmatprep.subr.bf16.mxu0 %v3619
    %4102 = vmatpush1.bf16.msra.mxu0 %v3618
    %4103 = vmatprep.subr.bf16.mxu0 %v3615
    %4104 = vmatpush1.bf16.msra.mxu0 %v3614
    %4105 = vmatprep.subr.bf16.mxu0 %v3611
    %4106 = vmatpush1.bf16.msra.mxu0 %v3610
    %4107 = vmatprep.subr.bf16.mxu0 %v3607
    %4108 = vmatpush1.bf16.msra.mxu0 %v3606
    %4109 = vmatprep.subr.bf16.mxu0 %v3603
    %4110 = vmatpush1.bf16.msra.mxu0 %v3602
    %4111 = vmatprep.subr.bf16.mxu0 %v3599
    %4112 = vmatpush1.bf16.msra.mxu0 %v3598
    %4113 = vmatprep.subr.bf16.mxu0 %v3595
    %4114 = vmatpush1.bf16.msra.mxu0 %v3594
    %4115 = vmatprep.subr.bf16.mxu0 %v3655
    %4116 = vmatpush2.bf16.msra.mxu0 %v3654
    %4117 = vmatprep.subr.bf16.mxu0 %v3651
    %4118 = vmatpush2.bf16.msra.mxu0 %v3650
    %4119 = vmatprep.subr.bf16.mxu0 %v3647
    %4120 = vmatpush2.bf16.msra.mxu0 %v3646
    %4121 = vmatprep.subr.bf16.mxu0 %v3643
    %4122 = vmatpush2.bf16.msra.mxu0 %v3642
    %4123 = vmatprep.subr.bf16.mxu0 %v3639
    %4124 = vmatpush2.bf16.msra.mxu0 %v3638
    %4125 = vmatprep.subr.bf16.mxu0 %v3635
    %4126 = vmatpush2.bf16.msra.mxu0 %v3634
    %4127 = vmatprep.subr.bf16.mxu0 %v3631
    %4128 = vmatpush2.bf16.msra.mxu0 %v3630
    %4129 = vmatprep.subr.bf16.mxu0 %v3627
    %4130 = vmatpush2.bf16.msra.mxu0 %v3626
    %4131 = vmatprep.mubr.bf16.mxu0 %v2780
    %4132 = vmatmul.mubr.bf16.gmra.mxu0 %v2779
    %v4133 = vpop.f32.mrf.mxu0
    %v4134 = vadd.f32 %v3011, %v4133
    %v4135 = vpop.f32.mrf.mxu0
    %v4136 = vadd.f32 %v3015, %v4135
    %v4137 = vpop.f32.mrf.mxu0
    %v4138 = vpop.f32.mrf.mxu0
    %4139 = vdwg.mxu0
    %4140 = vmatprep.subr.bf16.mxu0 %v3687
    %4141 = vmatpush1.bf16.msra.mxu0 %v3686
    %4142 = vmatprep.subr.bf16.mxu0 %v3683
    %4143 = vmatpush1.bf16.msra.mxu0 %v3682
    %4144 = vmatprep.subr.bf16.mxu0 %v3679
    %4145 = vmatpush1.bf16.msra.mxu0 %v3678
    %4146 = vmatprep.subr.bf16.mxu0 %v3675
    %4147 = vmatpush1.bf16.msra.mxu0 %v3674
    %4148 = vmatprep.subr.bf16.mxu0 %v3671
    %4149 = vmatpush1.bf16.msra.mxu0 %v3670
    %4150 = vmatprep.subr.bf16.mxu0 %v3667
    %4151 = vmatpush1.bf16.msra.mxu0 %v3666
    %4152 = vmatprep.subr.bf16.mxu0 %v3663
    %4153 = vmatpush1.bf16.msra.mxu0 %v3662
    %4154 = vmatprep.subr.bf16.mxu0 %v3659
    %4155 = vmatpush1.bf16.msra.mxu0 %v3658
    %4156 = vmatprep.subr.bf16.mxu0 %v3719
    %4157 = vmatpush2.bf16.msra.mxu0 %v3718
    %4158 = vmatprep.subr.bf16.mxu0 %v3715
    %4159 = vmatpush2.bf16.msra.mxu0 %v3714
    %4160 = vmatprep.subr.bf16.mxu0 %v3711
    %4161 = vmatpush2.bf16.msra.mxu0 %v3710
    %4162 = vmatprep.subr.bf16.mxu0 %v3707
    %4163 = vmatpush2.bf16.msra.mxu0 %v3706
    %4164 = vmatprep.subr.bf16.mxu0 %v3703
    %4165 = vmatpush2.bf16.msra.mxu0 %v3702
    %4166 = vmatprep.subr.bf16.mxu0 %v3699
    %4167 = vmatpush2.bf16.msra.mxu0 %v3698
    %4168 = vmatprep.subr.bf16.mxu0 %v3695
    %4169 = vmatpush2.bf16.msra.mxu0 %v3694
    %4170 = vmatprep.subr.bf16.mxu0 %v3691
    %4171 = vmatpush2.bf16.msra.mxu0 %v3690
    %4172 = vmatprep.mubr.bf16.mxu0 %v2782
    %4173 = vmatmul.mubr.bf16.gmra.mxu0 %v2781
    %v4174 = vpop.f32.mrf.mxu0
    %v4175 = vadd.f32 %v4134, %v4174
    %v4176 = vpop.f32.mrf.mxu0
    %v4177 = vadd.f32 %v4136, %v4176
    %v4178 = vpop.f32.mrf.mxu0
    %v4179 = vpop.f32.mrf.mxu0
    %4180 = vdwg.mxu0
    %4181 = vmatprep.subr.bf16.mxu0 %v3751
    %4182 = vmatpush1.bf16.msra.mxu0 %v3750
    %4183 = vmatprep.subr.bf16.mxu0 %v3747
    %4184 = vmatpush1.bf16.msra.mxu0 %v3746
    %4185 = vmatprep.subr.bf16.mxu0 %v3743
    %4186 = vmatpush1.bf16.msra.mxu0 %v3742
    %4187 = vmatprep.subr.bf16.mxu0 %v3739
    %4188 = vmatpush1.bf16.msra.mxu0 %v3738
    %4189 = vmatprep.subr.bf16.mxu0 %v3735
    %4190 = vmatpush1.bf16.msra.mxu0 %v3734
    %4191 = vmatprep.subr.bf16.mxu0 %v3731
    %4192 = vmatpush1.bf16.msra.mxu0 %v3730
    %4193 = vmatprep.subr.bf16.mxu0 %v3727
    %4194 = vmatpush1.bf16.msra.mxu0 %v3726
    %4195 = vmatprep.subr.bf16.mxu0 %v3723
    %4196 = vmatpush1.bf16.msra.mxu0 %v3722
    %4197 = vmatprep.subr.bf16.mxu0 %v3783
    %4198 = vmatpush2.bf16.msra.mxu0 %v3782
    %4199 = vmatprep.subr.bf16.mxu0 %v3779
    %4200 = vmatpush2.bf16.msra.mxu0 %v3778
    %4201 = vmatprep.subr.bf16.mxu0 %v3775
    %4202 = vmatpush2.bf16.msra.mxu0 %v3774
    %4203 = vmatprep.subr.bf16.mxu0 %v3771
    %4204 = vmatpush2.bf16.msra.mxu0 %v3770
    %4205 = vmatprep.subr.bf16.mxu0 %v3767
    %4206 = vmatpush2.bf16.msra.mxu0 %v3766
    %4207 = vmatprep.subr.bf16.mxu0 %v3763
    %4208 = vmatpush2.bf16.msra.mxu0 %v3762
    %4209 = vmatprep.subr.bf16.mxu0 %v3759
    %4210 = vmatpush2.bf16.msra.mxu0 %v3758
    %4211 = vmatprep.subr.bf16.mxu0 %v3755
    %4212 = vmatpush2.bf16.msra.mxu0 %v3754
    %4213 = vmatprep.mubr.bf16.mxu0 %v2784
    %4214 = vmatmul.mubr.bf16.gmra.mxu0 %v2783
    %v4215 = vpop.f32.mrf.mxu0
    %v4216 = vadd.f32 %v4175, %v4215
    %v4217 = vpop.f32.mrf.mxu0
    %v4218 = vadd.f32 %v4177, %v4217
    %v4219 = vpop.f32.mrf.mxu0
    %v4220 = vpop.f32.mrf.mxu0
    %4221 = vdwg.mxu0
    %v4222 = vmax.f32 %v4093, 0.0
    %v4223 = vmax.f32 %v4095, 0.0
    %v4224 = vmax.f32 %v4216, 0.0
    %v4225 = vmax.f32 %v4218, 0.0
    %v4226 = vpack.c.bf16 %v4222, %v4222
    %v4227 = vpack.c.bf16 %v4223, %v4223
    %v4228 = vpack.c.bf16 %v4224, %v4224
    %v4229 = vpack.c.bf16 %v4225, %v4225
    %v4230 = vld [vmem:[#allocation11] sm:$0xff]
    %v4231 = vld [vmem:[#allocation11 + $0x8] sm:$0xf]
    %v4232 = vld [vmem:[#allocation11 + $0xc] sm:$0xff]
    %v4233 = vld [vmem:[#allocation11 + $0x14] sm:$0xf]
    %v4234 = vld [vmem:[#allocation11 + $0x18] sm:$0xff]
    %v4235 = vld [vmem:[#allocation11 + $0x20] sm:$0xf]
    %v4236 = vld [vmem:[#allocation11 + $0x24] sm:$0xff]
    %v4237 = vld [vmem:[#allocation11 + $0x2c] sm:$0xf]
    %v4238 = vld [vmem:[#allocation11 + $0x30] sm:$0xff]
    %v4239 = vld [vmem:[#allocation11 + $0x38] sm:$0xf]
    %v4240 = vld [vmem:[#allocation11 + $0x3c] sm:$0xff]
    %v4241 = vld [vmem:[#allocation11 + $0x44] sm:$0xf]
    %v4242 = vld [vmem:[#allocation11 + $0x48] sm:$0xff]
    %v4243 = vld [vmem:[#allocation11 + $0x50] sm:$0xf]
    %v4244 = vld [vmem:[#allocation11 + $0x54] sm:$0xff]
    %v4245 = vld [vmem:[#allocation11 + $0x5c] sm:$0xf]
    %v4246 = vld [vmem:[#allocation11 + $0x60] sm:$0xff]
    %v4247 = vld [vmem:[#allocation11 + $0x68] sm:$0xf]
    %v4248 = vld [vmem:[#allocation11 + $0x6c] sm:$0xff]
    %v4249 = vld [vmem:[#allocation11 + $0x74] sm:$0xf]
    %v4250 = vld [vmem:[#allocation11 + $0x78] sm:$0xff]
    %v4251 = vld [vmem:[#allocation11 + $0x80] sm:$0xf]
    %v4252 = vld [vmem:[#allocation11 + $0x84] sm:$0xff]
    %v4253 = vld [vmem:[#allocation11 + $0x8c] sm:$0xf]
    %v4254 = vld [vmem:[#allocation11 + $0x90] sm:$0xff]
    %v4255 = vld [vmem:[#allocation11 + $0x98] sm:$0xf]
    %v4256 = vld [vmem:[#allocation11 + $0x9c] sm:$0xff]
    %v4257 = vld [vmem:[#allocation11 + $0xa4] sm:$0xf]
    %v4258 = vld [vmem:[#allocation11 + $0xa8] sm:$0xff]
    %v4259 = vld [vmem:[#allocation11 + $0xb0] sm:$0xf]
    %v4260 = vld [vmem:[#allocation11 + $0xb4] sm:$0xff]
    %v4261 = vld [vmem:[#allocation11 + $0xbc] sm:$0xf]
    %v4262 = vld [vmem:[#allocation11 + $0xc0] sm:$0xff]
    %v4263 = vld [vmem:[#allocation11 + $0xc8] sm:$0xf]
    %v4264 = vld [vmem:[#allocation11 + $0xcc] sm:$0xff]
    %v4265 = vld [vmem:[#allocation11 + $0xd4] sm:$0xf]
    %v4266 = vld [vmem:[#allocation11 + $0xd8] sm:$0xff]
    %v4267 = vld [vmem:[#allocation11 + $0xe0] sm:$0xf]
    %v4268 = vld [vmem:[#allocation11 + $0xe4] sm:$0xff]
    %v4269 = vld [vmem:[#allocation11 + $0xec] sm:$0xf]
    %v4270 = vld [vmem:[#allocation11 + $0xf0] sm:$0xff]
    %v4271 = vld [vmem:[#allocation11 + $0xf8] sm:$0xf]
    %v4272 = vld [vmem:[#allocation11 + $0xfc] sm:$0xff]
    %v4273 = vld [vmem:[#allocation11 + $0x104] sm:$0xf]
    %v4274 = vld [vmem:[#allocation11 + $0x108] sm:$0xff]
    %v4275 = vld [vmem:[#allocation11 + $0x110] sm:$0xf]
    %v4276 = vld [vmem:[#allocation11 + $0x114] sm:$0xff]
    %v4277 = vld [vmem:[#allocation11 + $0x11c] sm:$0xf]
    %v4278 = vld [vmem:[#allocation11 + $0x120] sm:$0xff]
    %v4279 = vld [vmem:[#allocation11 + $0x128] sm:$0xf]
    %v4280 = vld [vmem:[#allocation11 + $0x12c] sm:$0xff]
    %v4281 = vld [vmem:[#allocation11 + $0x134] sm:$0xf]
    %v4282 = vld [vmem:[#allocation11 + $0x138] sm:$0xff]
    %v4283 = vld [vmem:[#allocation11 + $0x140] sm:$0xf]
    %v4284 = vld [vmem:[#allocation11 + $0x144] sm:$0xff]
    %v4285 = vld [vmem:[#allocation11 + $0x14c] sm:$0xf]
    %v4286 = vld [vmem:[#allocation11 + $0x150] sm:$0xff]
    %v4287 = vld [vmem:[#allocation11 + $0x158] sm:$0xf]
    %v4288 = vld [vmem:[#allocation11 + $0x15c] sm:$0xff]
    %v4289 = vld [vmem:[#allocation11 + $0x164] sm:$0xf]
    %v4290 = vld [vmem:[#allocation11 + $0x168] sm:$0xff]
    %v4291 = vld [vmem:[#allocation11 + $0x170] sm:$0xf]
    %v4292 = vld [vmem:[#allocation11 + $0x174] sm:$0xff]
    %v4293 = vld [vmem:[#allocation11 + $0x17c] sm:$0xf]
    %v4294 = vld [vmem:[#allocation11 + $0x180] sm:$0xff]
    %v4295 = vld [vmem:[#allocation11 + $0x188] sm:$0xf]
    %v4296 = vld [vmem:[#allocation11 + $0x18c] sm:$0xff]
    %v4297 = vld [vmem:[#allocation11 + $0x194] sm:$0xf]
    %v4298 = vld [vmem:[#allocation11 + $0x198] sm:$0xff]
    %v4299 = vld [vmem:[#allocation11 + $0x1a0] sm:$0xf]
    %v4300 = vld [vmem:[#allocation11 + $0x1a4] sm:$0xff]
    %v4301 = vld [vmem:[#allocation11 + $0x1ac] sm:$0xf]
    %v4302 = vld [vmem:[#allocation11 + $0x1b0] sm:$0xff]
    %v4303 = vld [vmem:[#allocation11 + $0x1b8] sm:$0xf]
    %v4304 = vld [vmem:[#allocation11 + $0x1bc] sm:$0xff]
    %v4305 = vld [vmem:[#allocation11 + $0x1c4] sm:$0xf]
    %v4306 = vld [vmem:[#allocation11 + $0x1c8] sm:$0xff]
    %v4307 = vld [vmem:[#allocation11 + $0x1d0] sm:$0xf]
    %v4308 = vld [vmem:[#allocation11 + $0x1d4] sm:$0xff]
    %v4309 = vld [vmem:[#allocation11 + $0x1dc] sm:$0xf]
    %v4310 = vld [vmem:[#allocation11 + $0x1e0] sm:$0xff]
    %v4311 = vld [vmem:[#allocation11 + $0x1e8] sm:$0xf]
    %v4312 = vld [vmem:[#allocation11 + $0x1ec] sm:$0xff]
    %v4313 = vld [vmem:[#allocation11 + $0x1f4] sm:$0xf]
    %v4314 = vld [vmem:[#allocation11 + $0x1f8] sm:$0xff]
    %v4315 = vld [vmem:[#allocation11 + $0x200] sm:$0xf]
    %v4316 = vld [vmem:[#allocation11 + $0x204] sm:$0xff]
    %v4317 = vld [vmem:[#allocation11 + $0x20c] sm:$0xf]
    %v4318 = vld [vmem:[#allocation11 + $0x210] sm:$0xff]
    %v4319 = vld [vmem:[#allocation11 + $0x218] sm:$0xf]
    %v4320 = vld [vmem:[#allocation11 + $0x21c] sm:$0xff]
    %v4321 = vld [vmem:[#allocation11 + $0x224] sm:$0xf]
    %v4322 = vld [vmem:[#allocation11 + $0x228] sm:$0xff]
    %v4323 = vld [vmem:[#allocation11 + $0x230] sm:$0xf]
    %v4324 = vld [vmem:[#allocation11 + $0x234] sm:$0xff]
    %v4325 = vld [vmem:[#allocation11 + $0x23c] sm:$0xf]
    %v4326 = vld [vmem:[#allocation11 + $0x240] sm:$0xff]
    %v4327 = vld [vmem:[#allocation11 + $0x248] sm:$0xf]
    %v4328 = vld [vmem:[#allocation11 + $0x24c] sm:$0xff]
    %v4329 = vld [vmem:[#allocation11 + $0x254] sm:$0xf]
    %v4330 = vld [vmem:[#allocation11 + $0x258] sm:$0xff]
    %v4331 = vld [vmem:[#allocation11 + $0x260] sm:$0xf]
    %v4332 = vld [vmem:[#allocation11 + $0x264] sm:$0xff]
    %v4333 = vld [vmem:[#allocation11 + $0x26c] sm:$0xf]
    %v4334 = vld [vmem:[#allocation11 + $0x270] sm:$0xff]
    %v4335 = vld [vmem:[#allocation11 + $0x278] sm:$0xf]
    %v4336 = vld [vmem:[#allocation11 + $0x27c] sm:$0xff]
    %v4337 = vld [vmem:[#allocation11 + $0x284] sm:$0xf]
    %v4338 = vld [vmem:[#allocation11 + $0x288] sm:$0xff]
    %v4339 = vld [vmem:[#allocation11 + $0x290] sm:$0xf]
    %v4340 = vld [vmem:[#allocation11 + $0x294] sm:$0xff]
    %v4341 = vld [vmem:[#allocation11 + $0x29c] sm:$0xf]
    %v4342 = vld [vmem:[#allocation11 + $0x2a0] sm:$0xff]
    %v4343 = vld [vmem:[#allocation11 + $0x2a8] sm:$0xf]
    %v4344 = vld [vmem:[#allocation11 + $0x2ac] sm:$0xff]
    %v4345 = vld [vmem:[#allocation11 + $0x2b4] sm:$0xf]
    %v4346 = vld [vmem:[#allocation11 + $0x2b8] sm:$0xff]
    %v4347 = vld [vmem:[#allocation11 + $0x2c0] sm:$0xf]
    %v4348 = vld [vmem:[#allocation11 + $0x2c4] sm:$0xff]
    %v4349 = vld [vmem:[#allocation11 + $0x2cc] sm:$0xf]
    %v4350 = vld [vmem:[#allocation11 + $0x2d0] sm:$0xff]
    %v4351 = vld [vmem:[#allocation11 + $0x2d8] sm:$0xf]
    %v4352 = vld [vmem:[#allocation11 + $0x2dc] sm:$0xff]
    %v4353 = vld [vmem:[#allocation11 + $0x2e4] sm:$0xf]
    %v4354 = vld [vmem:[#allocation11 + $0x2e8] sm:$0xff]
    %v4355 = vld [vmem:[#allocation11 + $0x2f0] sm:$0xf]
    %v4356 = vld [vmem:[#allocation11 + $0x2f4] sm:$0xff]
    %v4357 = vld [vmem:[#allocation11 + $0x2fc] sm:$0xf]
    %v4358 = vld [vmem:[#allocation13] sm:$0x7]
    %v4359 = vunpack.c.l.bf16 %v4358
    %v4361 = vlaneseq
    %v4362 = vshrl.u32 %v4361, 7
    %v4363 = vsub.s32 0, %v4362
    %v4364 = vrot.slane %v4359, %v4363
    %v4365 = vlaneseq
    %v4366 = vshrl.u32 %v4365, 7
    %v4367 = vsub.s32 2, %v4366
    %v4368 = vrot.slane %v4359, %v4367
    %v4369 = vlaneseq
    %v4370 = vshrl.u32 %v4369, 7
    %v4371 = vsub.s32 4, %v4370
    %v4372 = vrot.slane %v4359, %v4371
    %v4376 = vlaneseq
    %v4377 = vshrl.u32 %v4376, 7
    %v4378 = vsub.s32 0, %v4377
    %v4379 = vrot.slane %v4364, %v4378
    %v4380 = vlaneseq
    %v4381 = vshrl.u32 %v4380, 7
    %v4382 = vsub.s32 0, %v4381
    %v4383 = vrot.slane %v4368, %v4382
    %v4384 = vlaneseq
    %v4385 = vshrl.u32 %v4384, 7
    %v4386 = vsub.s32 0, %v4385
    %v4387 = vrot.slane %v4372, %v4386
    %v4516 = vunpack.c.l.b16 %v4230
    %v4517 = vunpack.c.h.b16 %v4230
    %v4518 = vunpack.c.l.b16 %v4231
    %v4519 = vunpack.c.l.b16 %v4232
    %v4520 = vunpack.c.h.b16 %v4232
    %v4521 = vunpack.c.l.b16 %v4233
    %v4522 = vunpack.c.l.b16 %v4234
    %v4523 = vunpack.c.h.b16 %v4234
    %v4524 = vunpack.c.l.b16 %v4235
    %v4525 = vunpack.c.l.b16 %v4236
    %v4526 = vunpack.c.h.b16 %v4236
    %v4527 = vunpack.c.l.b16 %v4237
    %v4528 = vunpack.c.l.b16 %v4238
    %v4529 = vunpack.c.h.b16 %v4238
    %v4530 = vunpack.c.l.b16 %v4239
    %v4531 = vunpack.c.l.b16 %v4240
    %v4532 = vunpack.c.h.b16 %v4240
    %v4533 = vunpack.c.l.b16 %v4241
    %v4534 = vunpack.c.l.b16 %v4242
    %v4535 = vunpack.c.h.b16 %v4242
    %v4536 = vunpack.c.l.b16 %v4243
    %v4537 = vunpack.c.l.b16 %v4244
    %v4538 = vunpack.c.h.b16 %v4244
    %v4539 = vunpack.c.l.b16 %v4245
    %v4540 = vunpack.c.l.b16 %v4246
    %v4541 = vunpack.c.h.b16 %v4246
    %v4542 = vunpack.c.l.b16 %v4247
    %v4543 = vunpack.c.l.b16 %v4248
    %v4544 = vunpack.c.h.b16 %v4248
    %v4545 = vunpack.c.l.b16 %v4249
    %v4546 = vunpack.c.l.b16 %v4250
    %v4547 = vunpack.c.h.b16 %v4250
    %v4548 = vunpack.c.l.b16 %v4251
    %v4549 = vunpack.c.l.b16 %v4252
    %v4550 = vunpack.c.h.b16 %v4252
    %v4551 = vunpack.c.l.b16 %v4253
    %v4552 = vunpack.c.l.b16 %v4254
    %v4553 = vunpack.c.h.b16 %v4254
    %v4554 = vunpack.c.l.b16 %v4255
    %v4555 = vunpack.c.l.b16 %v4256
    %v4556 = vunpack.c.h.b16 %v4256
    %v4557 = vunpack.c.l.b16 %v4257
    %v4558 = vunpack.c.l.b16 %v4258
    %v4559 = vunpack.c.h.b16 %v4258
    %v4560 = vunpack.c.l.b16 %v4259
    %v4561 = vunpack.c.l.b16 %v4260
    %v4562 = vunpack.c.h.b16 %v4260
    %v4563 = vunpack.c.l.b16 %v4261
    %v4564 = vunpack.c.l.b16 %v4262
    %v4565 = vunpack.c.h.b16 %v4262
    %v4566 = vunpack.c.l.b16 %v4263
    %v4567 = vunpack.c.l.b16 %v4264
    %v4568 = vunpack.c.h.b16 %v4264
    %v4569 = vunpack.c.l.b16 %v4265
    %v4570 = vunpack.c.l.b16 %v4266
    %v4571 = vunpack.c.h.b16 %v4266
    %v4572 = vunpack.c.l.b16 %v4267
    %v4573 = vunpack.c.l.b16 %v4268
    %v4574 = vunpack.c.h.b16 %v4268
    %v4575 = vunpack.c.l.b16 %v4269
    %v4576 = vunpack.c.l.b16 %v4270
    %v4577 = vunpack.c.h.b16 %v4270
    %v4578 = vunpack.c.l.b16 %v4271
    %v4579 = vunpack.c.l.b16 %v4272
    %v4580 = vunpack.c.h.b16 %v4272
    %v4581 = vunpack.c.l.b16 %v4273
    %v4582 = vunpack.c.l.b16 %v4274
    %v4583 = vunpack.c.h.b16 %v4274
    %v4584 = vunpack.c.l.b16 %v4275
    %v4585 = vunpack.c.l.b16 %v4276
    %v4586 = vunpack.c.h.b16 %v4276
    %v4587 = vunpack.c.l.b16 %v4277
    %v4588 = vunpack.c.l.b16 %v4278
    %v4589 = vunpack.c.h.b16 %v4278
    %v4590 = vunpack.c.l.b16 %v4279
    %v4591 = vunpack.c.l.b16 %v4280
    %v4592 = vunpack.c.h.b16 %v4280
    %v4593 = vunpack.c.l.b16 %v4281
    %v4594 = vunpack.c.l.b16 %v4282
    %v4595 = vunpack.c.h.b16 %v4282
    %v4596 = vunpack.c.l.b16 %v4283
    %v4597 = vunpack.c.l.b16 %v4284
    %v4598 = vunpack.c.h.b16 %v4284
    %v4599 = vunpack.c.l.b16 %v4285
    %v4600 = vunpack.c.l.b16 %v4286
    %v4601 = vunpack.c.h.b16 %v4286
    %v4602 = vunpack.c.l.b16 %v4287
    %v4603 = vunpack.c.l.b16 %v4288
    %v4604 = vunpack.c.h.b16 %v4288
    %v4605 = vunpack.c.l.b16 %v4289
    %v4606 = vunpack.c.l.b16 %v4290
    %v4607 = vunpack.c.h.b16 %v4290
    %v4608 = vunpack.c.l.b16 %v4291
    %v4609 = vunpack.c.l.b16 %v4292
    %v4610 = vunpack.c.h.b16 %v4292
    %v4611 = vunpack.c.l.b16 %v4293
    %v4612 = vunpack.c.l.b16 %v4294
    %v4613 = vunpack.c.h.b16 %v4294
    %v4614 = vunpack.c.l.b16 %v4295
    %v4615 = vunpack.c.l.b16 %v4296
    %v4616 = vunpack.c.h.b16 %v4296
    %v4617 = vunpack.c.l.b16 %v4297
    %v4618 = vunpack.c.l.b16 %v4298
    %v4619 = vunpack.c.h.b16 %v4298
    %v4620 = vunpack.c.l.b16 %v4299
    %v4621 = vunpack.c.l.b16 %v4300
    %v4622 = vunpack.c.h.b16 %v4300
    %v4623 = vunpack.c.l.b16 %v4301
    %v4624 = vunpack.c.l.b16 %v4302
    %v4625 = vunpack.c.h.b16 %v4302
    %v4626 = vunpack.c.l.b16 %v4303
    %v4627 = vunpack.c.l.b16 %v4304
    %v4628 = vunpack.c.h.b16 %v4304
    %v4629 = vunpack.c.l.b16 %v4305
    %v4630 = vunpack.c.l.b16 %v4306
    %v4631 = vunpack.c.h.b16 %v4306
    %v4632 = vunpack.c.l.b16 %v4307
    %v4633 = vunpack.c.l.b16 %v4308
    %v4634 = vunpack.c.h.b16 %v4308
    %v4635 = vunpack.c.l.b16 %v4309
    %v4636 = vunpack.c.l.b16 %v4310
    %v4637 = vunpack.c.h.b16 %v4310
    %v4638 = vunpack.c.l.b16 %v4311
    %v4639 = vunpack.c.l.b16 %v4312
    %v4640 = vunpack.c.h.b16 %v4312
    %v4641 = vunpack.c.l.b16 %v4313
    %v4642 = vunpack.c.l.b16 %v4314
    %v4643 = vunpack.c.h.b16 %v4314
    %v4644 = vunpack.c.l.b16 %v4315
    %v4645 = vunpack.c.l.b16 %v4316
    %v4646 = vunpack.c.h.b16 %v4316
    %v4647 = vunpack.c.l.b16 %v4317
    %v4648 = vunpack.c.l.b16 %v4318
    %v4649 = vunpack.c.h.b16 %v4318
    %v4650 = vunpack.c.l.b16 %v4319
    %v4651 = vunpack.c.l.b16 %v4320
    %v4652 = vunpack.c.h.b16 %v4320
    %v4653 = vunpack.c.l.b16 %v4321
    %v4654 = vunpack.c.l.b16 %v4322
    %v4655 = vunpack.c.h.b16 %v4322
    %v4656 = vunpack.c.l.b16 %v4323
    %v4657 = vunpack.c.l.b16 %v4324
    %v4658 = vunpack.c.h.b16 %v4324
    %v4659 = vunpack.c.l.b16 %v4325
    %v4660 = vunpack.c.l.b16 %v4326
    %v4661 = vunpack.c.h.b16 %v4326
    %v4662 = vunpack.c.l.b16 %v4327
    %v4663 = vunpack.c.l.b16 %v4328
    %v4664 = vunpack.c.h.b16 %v4328
    %v4665 = vunpack.c.l.b16 %v4329
    %v4666 = vunpack.c.l.b16 %v4330
    %v4667 = vunpack.c.h.b16 %v4330
    %v4668 = vunpack.c.l.b16 %v4331
    %v4669 = vunpack.c.l.b16 %v4332
    %v4670 = vunpack.c.h.b16 %v4332
    %v4671 = vunpack.c.l.b16 %v4333
    %v4672 = vunpack.c.l.b16 %v4334
    %v4673 = vunpack.c.h.b16 %v4334
    %v4674 = vunpack.c.l.b16 %v4335
    %v4675 = vunpack.c.l.b16 %v4336
    %v4676 = vunpack.c.h.b16 %v4336
    %v4677 = vunpack.c.l.b16 %v4337
    %v4678 = vunpack.c.l.b16 %v4338
    %v4679 = vunpack.c.h.b16 %v4338
    %v4680 = vunpack.c.l.b16 %v4339
    %v4681 = vunpack.c.l.b16 %v4340
    %v4682 = vunpack.c.h.b16 %v4340
    %v4683 = vunpack.c.l.b16 %v4341
    %v4684 = vunpack.c.l.b16 %v4342
    %v4685 = vunpack.c.h.b16 %v4342
    %v4686 = vunpack.c.l.b16 %v4343
    %v4687 = vunpack.c.l.b16 %v4344
    %v4688 = vunpack.c.h.b16 %v4344
    %v4689 = vunpack.c.l.b16 %v4345
    %v4690 = vunpack.c.l.b16 %v4346
    %v4691 = vunpack.c.h.b16 %v4346
    %v4692 = vunpack.c.l.b16 %v4347
    %v4693 = vunpack.c.l.b16 %v4348
    %v4694 = vunpack.c.h.b16 %v4348
    %v4695 = vunpack.c.l.b16 %v4349
    %v4696 = vunpack.c.l.b16 %v4350
    %v4697 = vunpack.c.h.b16 %v4350
    %v4698 = vunpack.c.l.b16 %v4351
    %v4699 = vunpack.c.l.b16 %v4352
    %v4700 = vunpack.c.h.b16 %v4352
    %v4701 = vunpack.c.l.b16 %v4353
    %v4702 = vunpack.c.l.b16 %v4354
    %v4703 = vunpack.c.h.b16 %v4354
    %v4704 = vunpack.c.l.b16 %v4355
    %v4705 = vunpack.c.l.b16 %v4356
    %v4706 = vunpack.c.h.b16 %v4356
    %v4707 = vunpack.c.l.b16 %v4357
    %v4708 = vpack.c.b16 %v4519, %v4516
    %v4709 = vpack.c.b16 %v4520, %v4517
    %v4710 = vpack.c.b16 %v4521, %v4518
    %v4711 = vpack.c.b16 %v4525, %v4522
    %v4712 = vpack.c.b16 %v4526, %v4523
    %v4713 = vpack.c.b16 %v4527, %v4524
    %v4714 = vpack.c.b16 %v4531, %v4528
    %v4715 = vpack.c.b16 %v4532, %v4529
    %v4716 = vpack.c.b16 %v4533, %v4530
    %v4717 = vpack.c.b16 %v4537, %v4534
    %v4718 = vpack.c.b16 %v4538, %v4535
    %v4719 = vpack.c.b16 %v4539, %v4536
    %v4720 = vpack.c.b16 %v4543, %v4540
    %v4721 = vpack.c.b16 %v4544, %v4541
    %v4722 = vpack.c.b16 %v4545, %v4542
    %v4723 = vpack.c.b16 %v4549, %v4546
    %v4724 = vpack.c.b16 %v4550, %v4547
    %v4725 = vpack.c.b16 %v4551, %v4548
    %v4726 = vpack.c.b16 %v4555, %v4552
    %v4727 = vpack.c.b16 %v4556, %v4553
    %v4728 = vpack.c.b16 %v4557, %v4554
    %v4729 = vpack.c.b16 %v4561, %v4558
    %v4730 = vpack.c.b16 %v4562, %v4559
    %v4731 = vpack.c.b16 %v4563, %v4560
    %v4732 = vpack.c.b16 %v4567, %v4564
    %v4733 = vpack.c.b16 %v4568, %v4565
    %v4734 = vpack.c.b16 %v4569, %v4566
    %v4735 = vpack.c.b16 %v4573, %v4570
    %v4736 = vpack.c.b16 %v4574, %v4571
    %v4737 = vpack.c.b16 %v4575, %v4572
    %v4738 = vpack.c.b16 %v4579, %v4576
    %v4739 = vpack.c.b16 %v4580, %v4577
    %v4740 = vpack.c.b16 %v4581, %v4578
    %v4741 = vpack.c.b16 %v4585, %v4582
    %v4742 = vpack.c.b16 %v4586, %v4583
    %v4743 = vpack.c.b16 %v4587, %v4584
    %v4744 = vpack.c.b16 %v4591, %v4588
    %v4745 = vpack.c.b16 %v4592, %v4589
    %v4746 = vpack.c.b16 %v4593, %v4590
    %v4747 = vpack.c.b16 %v4597, %v4594
    %v4748 = vpack.c.b16 %v4598, %v4595
    %v4749 = vpack.c.b16 %v4599, %v4596
    %v4750 = vpack.c.b16 %v4603, %v4600
    %v4751 = vpack.c.b16 %v4604, %v4601
    %v4752 = vpack.c.b16 %v4605, %v4602
    %v4753 = vpack.c.b16 %v4609, %v4606
    %v4754 = vpack.c.b16 %v4610, %v4607
    %v4755 = vpack.c.b16 %v4611, %v4608
    %v4756 = vpack.c.b16 %v4615, %v4612
    %v4757 = vpack.c.b16 %v4616, %v4613
    %v4758 = vpack.c.b16 %v4617, %v4614
    %v4759 = vpack.c.b16 %v4621, %v4618
    %v4760 = vpack.c.b16 %v4622, %v4619
    %v4761 = vpack.c.b16 %v4623, %v4620
    %v4762 = vpack.c.b16 %v4627, %v4624
    %v4763 = vpack.c.b16 %v4628, %v4625
    %v4764 = vpack.c.b16 %v4629, %v4626
    %v4765 = vpack.c.b16 %v4633, %v4630
    %v4766 = vpack.c.b16 %v4634, %v4631
    %v4767 = vpack.c.b16 %v4635, %v4632
    %v4768 = vpack.c.b16 %v4639, %v4636
    %v4769 = vpack.c.b16 %v4640, %v4637
    %v4770 = vpack.c.b16 %v4641, %v4638
    %v4771 = vpack.c.b16 %v4645, %v4642
    %v4772 = vpack.c.b16 %v4646, %v4643
    %v4773 = vpack.c.b16 %v4647, %v4644
    %v4774 = vpack.c.b16 %v4651, %v4648
    %v4775 = vpack.c.b16 %v4652, %v4649
    %v4776 = vpack.c.b16 %v4653, %v4650
    %v4777 = vpack.c.b16 %v4657, %v4654
    %v4778 = vpack.c.b16 %v4658, %v4655
    %v4779 = vpack.c.b16 %v4659, %v4656
    %v4780 = vpack.c.b16 %v4663, %v4660
    %v4781 = vpack.c.b16 %v4664, %v4661
    %v4782 = vpack.c.b16 %v4665, %v4662
    %v4783 = vpack.c.b16 %v4669, %v4666
    %v4784 = vpack.c.b16 %v4670, %v4667
    %v4785 = vpack.c.b16 %v4671, %v4668
    %v4786 = vpack.c.b16 %v4675, %v4672
    %v4787 = vpack.c.b16 %v4676, %v4673
    %v4788 = vpack.c.b16 %v4677, %v4674
    %v4789 = vpack.c.b16 %v4681, %v4678
    %v4790 = vpack.c.b16 %v4682, %v4679
    %v4791 = vpack.c.b16 %v4683, %v4680
    %v4792 = vpack.c.b16 %v4687, %v4684
    %v4793 = vpack.c.b16 %v4688, %v4685
    %v4794 = vpack.c.b16 %v4689, %v4686
    %v4795 = vpack.c.b16 %v4693, %v4690
    %v4796 = vpack.c.b16 %v4694, %v4691
    %v4797 = vpack.c.b16 %v4695, %v4692
    %v4798 = vpack.c.b16 %v4699, %v4696
    %v4799 = vpack.c.b16 %v4700, %v4697
    %v4800 = vpack.c.b16 %v4701, %v4698
    %v4801 = vpack.c.b16 %v4705, %v4702
    %v4802 = vpack.c.b16 %v4706, %v4703
    %v4803 = vpack.c.b16 %v4707, %v4704
    %4900 = vmatprep.subr.bf16.mxu0 %v4730
    %4901 = vmatpush1.bf16.msra.mxu0 %v4729
    %4902 = vmatprep.subr.bf16.mxu0 %v4727
    %4903 = vmatpush1.bf16.msra.mxu0 %v4726
    %4904 = vmatprep.subr.bf16.mxu0 %v4724
    %4905 = vmatpush1.bf16.msra.mxu0 %v4723
    %4906 = vmatprep.subr.bf16.mxu0 %v4721
    %4907 = vmatpush1.bf16.msra.mxu0 %v4720
    %4908 = vmatprep.subr.bf16.mxu0 %v4718
    %4909 = vmatpush1.bf16.msra.mxu0 %v4717
    %4910 = vmatprep.subr.bf16.mxu0 %v4715
    %4911 = vmatpush1.bf16.msra.mxu0 %v4714
    %4912 = vmatprep.subr.bf16.mxu0 %v4712
    %4913 = vmatpush1.bf16.msra.mxu0 %v4711
    %4914 = vmatprep.subr.bf16.mxu0 %v4709
    %4915 = vmatpush1.bf16.msra.mxu0 %v4708
    %4916 = vmatprep.subr.bf16.mxu0 %v4754
    %4917 = vmatpush2.bf16.msra.mxu0 %v4753
    %4918 = vmatprep.subr.bf16.mxu0 %v4751
    %4919 = vmatpush2.bf16.msra.mxu0 %v4750
    %4920 = vmatprep.subr.bf16.mxu0 %v4748
    %4921 = vmatpush2.bf16.msra.mxu0 %v4747
    %4922 = vmatprep.subr.bf16.mxu0 %v4745
    %4923 = vmatpush2.bf16.msra.mxu0 %v4744
    %4924 = vmatprep.subr.bf16.mxu0 %v4742
    %4925 = vmatpush2.bf16.msra.mxu0 %v4741
    %4926 = vmatprep.subr.bf16.mxu0 %v4739
    %4927 = vmatpush2.bf16.msra.mxu0 %v4738
    %4928 = vmatprep.subr.bf16.mxu0 %v4736
    %4929 = vmatpush2.bf16.msra.mxu0 %v4735
    %4930 = vmatprep.subr.bf16.mxu0 %v4733
    %4931 = vmatpush2.bf16.msra.mxu0 %v4732
    %4932 = vmatprep.mubr.bf16.mxu0 %v4227
    %4933 = vmatmul.mubr.bf16.gmra.mxu0 %v4226
    %v4934 = vpop.f32.mrf.mxu0
    %v4935 = vadd.f32 %v4379, %v4934
    %v4936 = vpop.f32.mrf.mxu0
    %v4937 = vadd.f32 %v4383, %v4936
    %v4938 = vpop.f32.mrf.mxu0
    %v4939 = vpop.f32.mrf.mxu0
    %4940 = vdwg.mxu0
    %4941 = vmatprep.subr.bf16.mxu0 %v4778
    %4942 = vmatpush1.bf16.msra.mxu0 %v4777
    %4943 = vmatprep.subr.bf16.mxu0 %v4775
    %4944 = vmatpush1.bf16.msra.mxu0 %v4774
    %4945 = vmatprep.subr.bf16.mxu0 %v4772
    %4946 = vmatpush1.bf16.msra.mxu0 %v4771
    %4947 = vmatprep.subr.bf16.mxu0 %v4769
    %4948 = vmatpush1.bf16.msra.mxu0 %v4768
    %4949 = vmatprep.subr.bf16.mxu0 %v4766
    %4950 = vmatpush1.bf16.msra.mxu0 %v4765
    %4951 = vmatprep.subr.bf16.mxu0 %v4763
    %4952 = vmatpush1.bf16.msra.mxu0 %v4762
    %4953 = vmatprep.subr.bf16.mxu0 %v4760
    %4954 = vmatpush1.bf16.msra.mxu0 %v4759
    %4955 = vmatprep.subr.bf16.mxu0 %v4757
    %4956 = vmatpush1.bf16.msra.mxu0 %v4756
    %4957 = vmatprep.subr.bf16.mxu0 %v4802
    %4958 = vmatpush2.bf16.msra.mxu0 %v4801
    %4959 = vmatprep.subr.bf16.mxu0 %v4799
    %4960 = vmatpush2.bf16.msra.mxu0 %v4798
    %4961 = vmatprep.subr.bf16.mxu0 %v4796
    %4962 = vmatpush2.bf16.msra.mxu0 %v4795
    %4963 = vmatprep.subr.bf16.mxu0 %v4793
    %4964 = vmatpush2.bf16.msra.mxu0 %v4792
    %4965 = vmatprep.subr.bf16.mxu0 %v4790
    %4966 = vmatpush2.bf16.msra.mxu0 %v4789
    %4967 = vmatprep.subr.bf16.mxu0 %v4787
    %4968 = vmatpush2.bf16.msra.mxu0 %v4786
    %4969 = vmatprep.subr.bf16.mxu0 %v4784
    %4970 = vmatpush2.bf16.msra.mxu0 %v4783
    %4971 = vmatprep.subr.bf16.mxu0 %v4781
    %4972 = vmatpush2.bf16.msra.mxu0 %v4780
    %4973 = vmatprep.mubr.bf16.mxu0 %v4229
    %4974 = vmatmul.mubr.bf16.gmra.mxu0 %v4228
    %v4975 = vpop.f32.mrf.mxu0
    %v4976 = vadd.f32 %v4935, %v4975
    %v4977 = vpop.f32.mrf.mxu0
    %v4978 = vadd.f32 %v4937, %v4977
    %v4979 = vpop.f32.mrf.mxu0
    %v4980 = vpop.f32.mrf.mxu0
    %4981 = vdwg.mxu0
    %4982 = vmatprep.subr.bf16.mxu0 0
    %4983 = vmatpush1.bf16.msra.mxu0 %v4731
    %4984 = vmatprep.subr.bf16.mxu0 0
    %4985 = vmatpush1.bf16.msra.mxu0 %v4728
    %4986 = vmatprep.subr.bf16.mxu0 0
    %4987 = vmatpush1.bf16.msra.mxu0 %v4725
    %4988 = vmatprep.subr.bf16.mxu0 0
    %4989 = vmatpush1.bf16.msra.mxu0 %v4722
    %4990 = vmatprep.subr.bf16.mxu0 0
    %4991 = vmatpush1.bf16.msra.mxu0 %v4719
    %4992 = vmatprep.subr.bf16.mxu0 0
    %4993 = vmatpush1.bf16.msra.mxu0 %v4716
    %4994 = vmatprep.subr.bf16.mxu0 0
    %4995 = vmatpush1.bf16.msra.mxu0 %v4713
    %4996 = vmatprep.subr.bf16.mxu0 0
    %4997 = vmatpush1.bf16.msra.mxu0 %v4710
    %4998 = vmatprep.subr.bf16.mxu0 0
    %4999 = vmatpush2.bf16.msra.mxu0 %v4755
    %5000 = vmatprep.subr.bf16.mxu0 0
    %5001 = vmatpush2.bf16.msra.mxu0 %v4752
    %5002 = vmatprep.subr.bf16.mxu0 0
    %5003 = vmatpush2.bf16.msra.mxu0 %v4749
    %5004 = vmatprep.subr.bf16.mxu0 0
    %5005 = vmatpush2.bf16.msra.mxu0 %v4746
    %5006 = vmatprep.subr.bf16.mxu0 0
    %5007 = vmatpush2.bf16.msra.mxu0 %v4743
    %5008 = vmatprep.subr.bf16.mxu0 0
    %5009 = vmatpush2.bf16.msra.mxu0 %v4740
    %5010 = vmatprep.subr.bf16.mxu0 0
    %5011 = vmatpush2.bf16.msra.mxu0 %v4737
    %5012 = vmatprep.subr.bf16.mxu0 0
    %5013 = vmatpush2.bf16.msra.mxu0 %v4734
    %5014 = vmatprep.mubr.bf16.mxu0 %v4227
    %5015 = vmatmul.mubr.bf16.gmra.mxu0 %v4226
    %v5016 = vpop.f32.mrf.mxu0
    %v5017 = vadd.f32 %v4387, %v5016
    %v5018 = vpop.f32.mrf.mxu0
    %v5019 = vpop.f32.mrf.mxu0
    %v5020 = vpop.f32.mrf.mxu0
    %5021 = vdwg.mxu0
    %5022 = vmatprep.subr.bf16.mxu0 0
    %5023 = vmatpush1.bf16.msra.mxu0 %v4779
    %5024 = vmatprep.subr.bf16.mxu0 0
    %5025 = vmatpush1.bf16.msra.mxu0 %v4776
    %5026 = vmatprep.subr.bf16.mxu0 0
    %5027 = vmatpush1.bf16.msra.mxu0 %v4773
    %5028 = vmatprep.subr.bf16.mxu0 0
    %5029 = vmatpush1.bf16.msra.mxu0 %v4770
    %5030 = vmatprep.subr.bf16.mxu0 0
    %5031 = vmatpush1.bf16.msra.mxu0 %v4767
    %5032 = vmatprep.subr.bf16.mxu0 0
    %5033 = vmatpush1.bf16.msra.mxu0 %v4764
    %5034 = vmatprep.subr.bf16.mxu0 0
    %5035 = vmatpush1.bf16.msra.mxu0 %v4761
    %5036 = vmatprep.subr.bf16.mxu0 0
    %5037 = vmatpush1.bf16.msra.mxu0 %v4758
    %5038 = vmatprep.subr.bf16.mxu0 0
    %5039 = vmatpush2.bf16.msra.mxu0 %v4803
    %5040 = vmatprep.subr.bf16.mxu0 0
    %5041 = vmatpush2.bf16.msra.mxu0 %v4800
    %5042 = vmatprep.subr.bf16.mxu0 0
    %5043 = vmatpush2.bf16.msra.mxu0 %v4797
    %5044 = vmatprep.subr.bf16.mxu0 0
    %5045 = vmatpush2.bf16.msra.mxu0 %v4794
    %5046 = vmatprep.subr.bf16.mxu0 0
    %5047 = vmatpush2.bf16.msra.mxu0 %v4791
    %5048 = vmatprep.subr.bf16.mxu0 0
    %5049 = vmatpush2.bf16.msra.mxu0 %v4788
    %5050 = vmatprep.subr.bf16.mxu0 0
    %5051 = vmatpush2.bf16.msra.mxu0 %v4785
    %5052 = vmatprep.subr.bf16.mxu0 0
    %5053 = vmatpush2.bf16.msra.mxu0 %v4782
    %5054 = vmatprep.mubr.bf16.mxu0 %v4229
    %5055 = vmatmul.mubr.bf16.gmra.mxu0 %v4228
    %v5056 = vpop.f32.mrf.mxu0
    %v5057 = vadd.f32 %v5017, %v5056
    %v5058 = vpop.f32.mrf.mxu0
    %v5059 = vpop.f32.mrf.mxu0
    %v5060 = vpop.f32.mrf.mxu0
    %5061 = vdwg.mxu0
    %v5062 = vmax.f32 %v4976, 0.0
    %v5063 = vmax.f32 %v4978, 0.0
    %v5064 = vmax.f32 %v5057, 0.0
    %v5065 = vpack.c.bf16 %v5062, %v5062
    %v5066 = vpack.c.bf16 %v5063, %v5063
    %v5067 = vpack.c.bf16 %v5064, %v5064
    %v5068 = vld [vmem:[#allocation14] sm:$0xf]
    %v5069 = vld [vmem:[#allocation14 + $0x4] sm:$0xf]
    %v5070 = vld [vmem:[#allocation14 + $0x8] sm:$0xf]
    %v5071 = vld [vmem:[#allocation14 + $0xc] sm:$0xf]
    %v5072 = vld [vmem:[#allocation14 + $0x10] sm:$0xf]
    %v5073 = vld [vmem:[#allocation14 + $0x14] sm:$0xf]
    %v5074 = vld [vmem:[#allocation14 + $0x18] sm:$0xf]
    %v5075 = vld [vmem:[#allocation14 + $0x1c] sm:$0xf]
    %v5076 = vld [vmem:[#allocation14 + $0x20] sm:$0xf]
    %v5077 = vld [vmem:[#allocation14 + $0x24] sm:$0xf]
    %v5078 = vld [vmem:[#allocation14 + $0x28] sm:$0xf]
    %v5079 = vld [vmem:[#allocation14 + $0x2c] sm:$0xf]
    %v5080 = vld [vmem:[#allocation14 + $0x30] sm:$0xf]
    %v5081 = vld [vmem:[#allocation14 + $0x34] sm:$0xf]
    %v5082 = vld [vmem:[#allocation14 + $0x38] sm:$0xf]
    %v5083 = vld [vmem:[#allocation14 + $0x3c] sm:$0xf]
    %v5084 = vld [vmem:[#allocation14 + $0x40] sm:$0xf]
    %v5085 = vld [vmem:[#allocation14 + $0x44] sm:$0xf]
    %v5086 = vld [vmem:[#allocation14 + $0x48] sm:$0xf]
    %v5087 = vld [vmem:[#allocation14 + $0x4c] sm:$0xf]
    %v5088 = vld [vmem:[#allocation14 + $0x50] sm:$0xf]
    %v5089 = vld [vmem:[#allocation14 + $0x54] sm:$0xf]
    %v5090 = vld [vmem:[#allocation14 + $0x58] sm:$0xf]
    %v5091 = vld [vmem:[#allocation14 + $0x5c] sm:$0xf]
    %v5092 = vld [vmem:[#allocation14 + $0x60] sm:$0xf]
    %v5093 = vld [vmem:[#allocation14 + $0x64] sm:$0xf]
    %v5094 = vld [vmem:[#allocation14 + $0x68] sm:$0xf]
    %v5095 = vld [vmem:[#allocation14 + $0x6c] sm:$0xf]
    %v5096 = vld [vmem:[#allocation14 + $0x70] sm:$0xf]
    %v5097 = vld [vmem:[#allocation14 + $0x74] sm:$0xf]
    %v5098 = vld [vmem:[#allocation14 + $0x78] sm:$0xf]
    %v5099 = vld [vmem:[#allocation14 + $0x7c] sm:$0xf]
    %v5100 = vld [vmem:[#allocation14 + $0x80] sm:$0xf]
    %v5101 = vld [vmem:[#allocation14 + $0x84] sm:$0xf]
    %v5102 = vld [vmem:[#allocation14 + $0x88] sm:$0xf]
    %v5103 = vld [vmem:[#allocation14 + $0x8c] sm:$0xf]
    %v5104 = vld [vmem:[#allocation14 + $0x90] sm:$0xf]
    %v5105 = vld [vmem:[#allocation14 + $0x94] sm:$0xf]
    %v5106 = vld [vmem:[#allocation14 + $0x98] sm:$0xf]
    %v5107 = vld [vmem:[#allocation14 + $0x9c] sm:$0xf]
    %v5108 = vld [vmem:[#allocation14 + $0xa0] sm:$0xf]
    %v5109 = vld [vmem:[#allocation14 + $0xa4] sm:$0xf]
    %v5110 = vld [vmem:[#allocation14 + $0xa8] sm:$0xf]
    %v5111 = vld [vmem:[#allocation14 + $0xac] sm:$0xf]
    %v5112 = vld [vmem:[#allocation14 + $0xb0] sm:$0xf]
    %v5113 = vld [vmem:[#allocation14 + $0xb4] sm:$0xf]
    %v5114 = vld [vmem:[#allocation14 + $0xb8] sm:$0xf]
    %v5115 = vld [vmem:[#allocation14 + $0xbc] sm:$0xf]
    %v5116 = vld [vmem:[#allocation16] sm:$0x1]
    %v5117 = vunpack.c.l.bf16 %v5116
    %v5118 = vlaneseq
    %v5119 = vshrl.u32 %v5118, 7
    %v5120 = vsub.s32 0, %v5119
    %v5121 = vrot.slane %v5117, %v5120
    %v5170 = vunpack.c.l.b16 %v5068
    %v5171 = vunpack.c.l.b16 %v5069
    %v5172 = vunpack.c.l.b16 %v5070
    %v5173 = vunpack.c.l.b16 %v5071
    %v5174 = vunpack.c.l.b16 %v5072
    %v5175 = vunpack.c.l.b16 %v5073
    %v5176 = vunpack.c.l.b16 %v5074
    %v5177 = vunpack.c.l.b16 %v5075
    %v5178 = vunpack.c.l.b16 %v5076
    %v5179 = vunpack.c.l.b16 %v5077
    %v5180 = vunpack.c.l.b16 %v5078
    %v5181 = vunpack.c.l.b16 %v5079
    %v5182 = vunpack.c.l.b16 %v5080
    %v5183 = vunpack.c.l.b16 %v5081
    %v5184 = vunpack.c.l.b16 %v5082
    %v5185 = vunpack.c.l.b16 %v5083
    %v5186 = vunpack.c.l.b16 %v5084
    %v5187 = vunpack.c.l.b16 %v5085
    %v5188 = vunpack.c.l.b16 %v5086
    %v5189 = vunpack.c.l.b16 %v5087
    %v5190 = vunpack.c.l.b16 %v5088
    %v5191 = vunpack.c.l.b16 %v5089
    %v5192 = vunpack.c.l.b16 %v5090
    %v5193 = vunpack.c.l.b16 %v5091
    %v5194 = vunpack.c.l.b16 %v5092
    %v5195 = vunpack.c.l.b16 %v5093
    %v5196 = vunpack.c.l.b16 %v5094
    %v5197 = vunpack.c.l.b16 %v5095
    %v5198 = vunpack.c.l.b16 %v5096
    %v5199 = vunpack.c.l.b16 %v5097
    %v5200 = vunpack.c.l.b16 %v5098
    %v5201 = vunpack.c.l.b16 %v5099
    %v5202 = vunpack.c.l.b16 %v5100
    %v5203 = vunpack.c.l.b16 %v5101
    %v5204 = vunpack.c.l.b16 %v5102
    %v5205 = vunpack.c.l.b16 %v5103
    %v5206 = vunpack.c.l.b16 %v5104
    %v5207 = vunpack.c.l.b16 %v5105
    %v5208 = vunpack.c.l.b16 %v5106
    %v5209 = vunpack.c.l.b16 %v5107
    %v5210 = vunpack.c.l.b16 %v5108
    %v5211 = vunpack.c.l.b16 %v5109
    %v5212 = vunpack.c.l.b16 %v5110
    %v5213 = vunpack.c.l.b16 %v5111
    %v5214 = vunpack.c.l.b16 %v5112
    %v5215 = vunpack.c.l.b16 %v5113
    %v5216 = vunpack.c.l.b16 %v5114
    %v5217 = vunpack.c.l.b16 %v5115
    %v5218 = vpack.c.b16 %v5171, %v5170
    %v5219 = vpack.c.b16 %v5173, %v5172
    %v5220 = vpack.c.b16 %v5175, %v5174
    %v5221 = vpack.c.b16 %v5177, %v5176
    %v5222 = vpack.c.b16 %v5179, %v5178
    %v5223 = vpack.c.b16 %v5181, %v5180
    %v5224 = vpack.c.b16 %v5183, %v5182
    %v5225 = vpack.c.b16 %v5185, %v5184
    %v5226 = vpack.c.b16 %v5187, %v5186
    %v5227 = vpack.c.b16 %v5189, %v5188
    %v5228 = vpack.c.b16 %v5191, %v5190
    %v5229 = vpack.c.b16 %v5193, %v5192
    %v5230 = vpack.c.b16 %v5195, %v5194
    %v5231 = vpack.c.b16 %v5197, %v5196
    %v5232 = vpack.c.b16 %v5199, %v5198
    %v5233 = vpack.c.b16 %v5201, %v5200
    %v5234 = vpack.c.b16 %v5203, %v5202
    %v5235 = vpack.c.b16 %v5205, %v5204
    %v5236 = vpack.c.b16 %v5207, %v5206
    %v5237 = vpack.c.b16 %v5209, %v5208
    %v5238 = vpack.c.b16 %v5211, %v5210
    %v5239 = vpack.c.b16 %v5213, %v5212
    %v5240 = vpack.c.b16 %v5215, %v5214
    %v5241 = vpack.c.b16 %v5217, %v5216
    %5266 = vmatprep.subr.bf16.mxu0 0
    %5267 = vmatpush1.bf16.msra.mxu0 %v5225
    %5268 = vmatprep.subr.bf16.mxu0 0
    %5269 = vmatpush1.bf16.msra.mxu0 %v5224
    %5270 = vmatprep.subr.bf16.mxu0 0
    %5271 = vmatpush1.bf16.msra.mxu0 %v5223
    %5272 = vmatprep.subr.bf16.mxu0 0
    %5273 = vmatpush1.bf16.msra.mxu0 %v5222
    %5274 = vmatprep.subr.bf16.mxu0 0
    %5275 = vmatpush1.bf16.msra.mxu0 %v5221
    %5276 = vmatprep.subr.bf16.mxu0 0
    %5277 = vmatpush1.bf16.msra.mxu0 %v5220
    %5278 = vmatprep.subr.bf16.mxu0 0
    %5279 = vmatpush1.bf16.msra.mxu0 %v5219
    %5280 = vmatprep.subr.bf16.mxu0 0
    %5281 = vmatpush1.bf16.msra.mxu0 %v5218
    %5282 = vmatprep.subr.bf16.mxu0 0
    %5283 = vmatpush2.bf16.msra.mxu0 %v5233
    %5284 = vmatprep.subr.bf16.mxu0 0
    %5285 = vmatpush2.bf16.msra.mxu0 %v5232
    %5286 = vmatprep.subr.bf16.mxu0 0
    %5287 = vmatpush2.bf16.msra.mxu0 %v5231
    %5288 = vmatprep.subr.bf16.mxu0 0
    %5289 = vmatpush2.bf16.msra.mxu0 %v5230
    %5290 = vmatprep.subr.bf16.mxu0 0
    %5291 = vmatpush2.bf16.msra.mxu0 %v5229
    %5292 = vmatprep.subr.bf16.mxu0 0
    %5293 = vmatpush2.bf16.msra.mxu0 %v5228
    %5294 = vmatprep.subr.bf16.mxu0 0
    %5295 = vmatpush2.bf16.msra.mxu0 %v5227
    %5296 = vmatprep.subr.bf16.mxu0 0
    %5297 = vmatpush2.bf16.msra.mxu0 %v5226
    %5298 = vmatprep.mubr.bf16.mxu0 %v5066
    %5299 = vmatmul.mubr.bf16.gmra.mxu0 %v5065
    %v5300 = vpop.f32.mrf.mxu0
    %v5301 = vadd.f32 %v5121, %v5300
    %v5302 = vpop.f32.mrf.mxu0
    %v5303 = vpop.f32.mrf.mxu0
    %v5304 = vpop.f32.mrf.mxu0
    %5305 = vdwg.mxu0
    %5306 = vmatprep.subr.bf16.mxu0 0
    %5307 = vmatpush1.bf16.msra.mxu0 %v5241
    %5308 = vmatprep.subr.bf16.mxu0 0
    %5309 = vmatpush1.bf16.msra.mxu0 %v5240
    %5310 = vmatprep.subr.bf16.mxu0 0
    %5311 = vmatpush1.bf16.msra.mxu0 %v5239
    %5312 = vmatprep.subr.bf16.mxu0 0
    %5313 = vmatpush1.bf16.msra.mxu0 %v5238
    %5314 = vmatprep.subr.bf16.mxu0 0
    %5315 = vmatpush1.bf16.msra.mxu0 %v5237
    %5316 = vmatprep.subr.bf16.mxu0 0
    %5317 = vmatpush1.bf16.msra.mxu0 %v5236
    %5318 = vmatprep.subr.bf16.mxu0 0
    %5319 = vmatpush1.bf16.msra.mxu0 %v5235
    %5320 = vmatprep.subr.bf16.mxu0 0
    %5321 = vmatpush1.bf16.msra.mxu0 %v5234
    %5322 = vmatprep.subr.bf16.mxu0 0
    %5323 = vmatpush2.bf16.msra.mxu0 0
    %5324 = vmatprep.subr.bf16.mxu0 0
    %5325 = vmatpush2.bf16.msra.mxu0 0
    %5326 = vmatprep.subr.bf16.mxu0 0
    %5327 = vmatpush2.bf16.msra.mxu0 0
    %5328 = vmatprep.subr.bf16.mxu0 0
    %5329 = vmatpush2.bf16.msra.mxu0 0
    %5330 = vmatprep.subr.bf16.mxu0 0
    %5331 = vmatpush2.bf16.msra.mxu0 0
    %5332 = vmatprep.subr.bf16.mxu0 0
    %5333 = vmatpush2.bf16.msra.mxu0 0
    %5334 = vmatprep.subr.bf16.mxu0 0
    %5335 = vmatpush2.bf16.msra.mxu0 0
    %5336 = vmatprep.subr.bf16.mxu0 0
    %5337 = vmatpush2.bf16.msra.mxu0 0
    %5338 = vmatprep.mubr.bf16.mxu0 0
    %5339 = vmatmul.mubr.bf16.gmra.mxu0 %v5067
    %v5340 = vpop.f32.mrf.mxu0
    %v5341 = vadd.f32 %v5301, %v5340
    %v5342 = vpop.f32.mrf.mxu0
    %v5343 = vpop.f32.mrf.mxu0
    %v5344 = vpop.f32.mrf.mxu0
    %5345 = vdwg.mxu0
    %v5346 = vmax.f32 %v5341, 0.0
    %v5347 = vpack.c.bf16 %v5346, %v5346
    %v5348 = vld [vmem:[#allocation17] sm:$0xf]
    %v5349 = vld [vmem:[#allocation17 + $0x4] sm:$0xf]
    %v5350 = vld [vmem:[#allocation17 + $0x8] sm:$0xf]
    %v5351 = vld [vmem:[#allocation17 + $0xc] sm:$0xf]
    %v5352 = vld [vmem:[#allocation17 + $0x10] sm:$0xf]
    %v5353 = vld [vmem:[#allocation17 + $0x14] sm:$0xf]
    %v5354 = vld [vmem:[#allocation17 + $0x18] sm:$0xf]
    %v5355 = vld [vmem:[#allocation17 + $0x1c] sm:$0xf]
    %v5356 = vld [vmem:[#allocation17 + $0x20] sm:$0xf]
    %v5357 = vld [vmem:[#allocation17 + $0x24] sm:$0xf]
    %v5358 = vld [vmem:[#allocation17 + $0x28] sm:$0xf]
    %v5359 = vld [vmem:[#allocation17 + $0x2c] sm:$0xf]
    %v5360 = vld [vmem:[#allocation17 + $0x30] sm:$0xf]
    %v5361 = vld [vmem:[#allocation17 + $0x34] sm:$0xf]
    %v5362 = vld [vmem:[#allocation17 + $0x38] sm:$0xf]
    %v5363 = vld [vmem:[#allocation17 + $0x3c] sm:$0xf]
    %v5364 = vld [vmem:[#allocation19] sm:$0x1]
    %v5365 = vunpack.c.l.bf16 %v5364
    %v5366 = vlaneseq
    %v5367 = vshrl.u32 %v5366, 7
    %v5368 = vsub.s32 0, %v5367
    %v5369 = vrot.slane %v5365, %v5368
    %v5386 = vunpack.c.l.b16 %v5348
    %v5387 = vunpack.c.l.b16 %v5349
    %v5388 = vunpack.c.l.b16 %v5350
    %v5389 = vunpack.c.l.b16 %v5351
    %v5390 = vunpack.c.l.b16 %v5352
    %v5391 = vunpack.c.l.b16 %v5353
    %v5392 = vunpack.c.l.b16 %v5354
    %v5393 = vunpack.c.l.b16 %v5355
    %v5394 = vunpack.c.l.b16 %v5356
    %v5395 = vunpack.c.l.b16 %v5357
    %v5396 = vunpack.c.l.b16 %v5358
    %v5397 = vunpack.c.l.b16 %v5359
    %v5398 = vunpack.c.l.b16 %v5360
    %v5399 = vunpack.c.l.b16 %v5361
    %v5400 = vunpack.c.l.b16 %v5362
    %v5401 = vunpack.c.l.b16 %v5363
    %v5402 = vpack.c.b16 %v5387, %v5386
    %v5403 = vpack.c.b16 %v5389, %v5388
    %v5404 = vpack.c.b16 %v5391, %v5390
    %v5405 = vpack.c.b16 %v5393, %v5392
    %v5406 = vpack.c.b16 %v5395, %v5394
    %v5407 = vpack.c.b16 %v5397, %v5396
    %v5408 = vpack.c.b16 %v5399, %v5398
    %v5409 = vpack.c.b16 %v5401, %v5400
    %5418 = vmatprep.subr.bf16.mxu0 0
    %5419 = vmatpush1.bf16.msra.mxu0 %v5409
    %5420 = vmatprep.subr.bf16.mxu0 0
    %5421 = vmatpush1.bf16.msra.mxu0 %v5408
    %5422 = vmatprep.subr.bf16.mxu0 0
    %5423 = vmatpush1.bf16.msra.mxu0 %v5407
    %5424 = vmatprep.subr.bf16.mxu0 0
    %5425 = vmatpush1.bf16.msra.mxu0 %v5406
    %5426 = vmatprep.subr.bf16.mxu0 0
    %5427 = vmatpush1.bf16.msra.mxu0 %v5405
    %5428 = vmatprep.subr.bf16.mxu0 0
    %5429 = vmatpush1.bf16.msra.mxu0 %v5404
    %5430 = vmatprep.subr.bf16.mxu0 0
    %5431 = vmatpush1.bf16.msra.mxu0 %v5403
    %5432 = vmatprep.subr.bf16.mxu0 0
    %5433 = vmatpush1.bf16.msra.mxu0 %v5402
    %5434 = vmatprep.subr.bf16.mxu0 0
    %5435 = vmatpush2.bf16.msra.mxu0 0
    %5436 = vmatprep.subr.bf16.mxu0 0
    %5437 = vmatpush2.bf16.msra.mxu0 0
    %5438 = vmatprep.subr.bf16.mxu0 0
    %5439 = vmatpush2.bf16.msra.mxu0 0
    %5440 = vmatprep.subr.bf16.mxu0 0
    %5441 = vmatpush2.bf16.msra.mxu0 0
    %5442 = vmatprep.subr.bf16.mxu0 0
    %5443 = vmatpush2.bf16.msra.mxu0 0
    %5444 = vmatprep.subr.bf16.mxu0 0
    %5445 = vmatpush2.bf16.msra.mxu0 0
    %5446 = vmatprep.subr.bf16.mxu0 0
    %5447 = vmatpush2.bf16.msra.mxu0 0
    %5448 = vmatprep.subr.bf16.mxu0 0
    %5449 = vmatpush2.bf16.msra.mxu0 0
    %5450 = vmatprep.mubr.bf16.mxu0 0
    %5451 = vmatmul.mubr.bf16.gmra.mxu0 %v5347
    %v5452 = vpop.f32.mrf.mxu0
    %v5453 = vadd.f32 %v5369, %v5452
    %v5454 = vpop.f32.mrf.mxu0
    %v5455 = vpop.f32.mrf.mxu0
    %v5456 = vpop.f32.mrf.mxu0
    %5457 = vdwg.mxu0
    %5458 = vst [vmem:[#allocation20] sm:$0xff] %v5453
    // Predicated region
    $region90: #{tpu_custom_call.1} parent=1 // pred_check
      _
    $region91: #{tpu_custom_call.1} parent=1 // pred_check_branch
      %5460 = sbr.rel (0) target = $region93
    $region92: #{tpu_custom_call.1} parent=1 // pred_region
      %s5462 = ssub.s32 128, 128
      %5463 = vsyncadd [#allocation4], %s5462
      %s5465 = sshll.u32 [#allocation20], 4
      %s5466 = int_to_ptr.vmem [resolvable:$true] %s5465
      %5468 = dma.vmem_to_hbm [thread:$0]  %s5466, 128, %s11, [#allocation4]
    $region93: #{tpu_custom_call.1} parent=1 // pred_fallthru
      _
    // Predicated region
    $region94: #{tpu_custom_call.1} parent=1 // pred_check
      _
    $region95: #{tpu_custom_call.1} parent=1 // pred_check_branch
      %5470 = sbr.rel (0) target = $region97
    $region96: #{tpu_custom_call.1} parent=1 // pred_region
      %5471 = dma.done [#allocation4], 128
    $region97: #{tpu_custom_call.1} parent=1 // pred_fallthru
      _
    %5472 = vsyncpa [#allocation3], 1
    %5473 = vsyncpa [#allocation6], 1
    %5474 = vsyncpa [#allocation9], 1
    %5475 = vsyncpa [#allocation12], 1
    %5476 = vsyncpa [#allocation15], 1
    %5477 = vsyncpa [#allocation18], 1
    %5478 = vsyncpa [#allocation4], 1

// kernel: tpu_custom_call.1
$region0: #{tpu_custom_call.1}
  #allocation0 [shape = 'u32[]', space=smem, size = 0x4, offset = 0x4, fixed_abs, tag = 'smem constant byte address 0x4 - core index']
  #allocation1 [shape = 'u32[144,128]{1,0:T(1,128)}', space=vmem, size = 0x12000, scoped, tag = 'internal scratch']
  %s0 = inlined_call_operand.hbm [shape: bf16[8,896], index: 0, kind: input, shape index: {}]
  %s1 = inlined_call_operand.hbm [shape: bf16[896,768], index: 1, kind: input, shape index: {}]
  %s2 = inlined_call_operand.hbm [shape: bf16[1,768], index: 2, kind: input, shape index: {}]
  %s3 = inlined_call_operand.hbm [shape: bf16[768,512], index: 3, kind: input, shape index: {}]
  %s4 = inlined_call_operand.hbm [shape: bf16[1,512], index: 4, kind: input, shape index: {}]
  %s5 = inlined_call_operand.hbm [shape: bf16[512,384], index: 5, kind: input, shape index: {}]
  %s6 = inlined_call_operand.hbm [shape: bf16[1,384], index: 6, kind: input, shape index: {}]
  %s7 = inlined_call_operand.hbm [shape: bf16[384,128], index: 7, kind: input, shape index: {}]
  %s8 = inlined_call_operand.hbm [shape: bf16[1,128], index: 8, kind: input, shape index: {}]
  %s9 = inlined_call_operand.hbm [shape: bf16[128,128], index: 9, kind: input, shape index: {}]
  %s10 = inlined_call_operand.hbm [shape: bf16[1,128], index: 10, kind: input, shape index: {}]
  %s11 = inlined_call_operand.hbm [shape: f32[8,128], index: 11, kind: output, shape index: {}]
  %s12 = sld [smem:[#allocation0]]
  $region98: #{tpu_custom_call.1} parent=0
    _
  %s14 = ssub.s32 1, %s12
  %s15 = scalar_select 0, %s14, %s12
  $region1: #{tpu_custom_call.1} parent=0
    #allocation2 [shape = 'u8[14336]{0}', space=vmem, size = 0x3800, scoped, tag = 'input window, operand 0, single buffered']
    #allocation3 [shape = 's32[1]{0}', space=sflag, size = 0x4, scoped, tag = 'scoped memory for tpu_custom_call.1']
    #allocation4 [shape = 's32[1]{0}', space=sflag, size = 0x4, scoped, tag = 'scoped memory for tpu_custom_call.1']
    #allocation5 [shape = 'u8[1376256]{0}', space=vmem, size = 0x150000, scoped, tag = 'input window, operand 1, single buffered']
    #allocation6 [shape = 's32[1]{0}', space=sflag, size = 0x4, scoped, tag = 'scoped memory for tpu_custom_call.1']
    #allocation7 [shape = 'u8[3072]{0}', space=vmem, size = 0xc00, scoped, tag = 'input window, operand 2, single buffered']
    #allocation8 [shape = 'u8[786432]{0}', space=vmem, size = 0xc0000, scoped, tag = 'input window, operand 3, single buffered']
    #allocation9 [shape = 's32[1]{0}', space=sflag, size = 0x4, scoped, tag = 'scoped memory for tpu_custom_call.1']
    #allocation10 [shape = 'u8[2048]{0}', space=vmem, size = 0x800, scoped, tag = 'input window, operand 4, single buffered']
    #allocation11 [shape = 'u8[393216]{0}', space=vmem, size = 0x60000, scoped, tag = 'input window, operand 5, single buffered']
    #allocation12 [shape = 's32[1]{0}', space=sflag, size = 0x4, scoped, tag = 'scoped memory for tpu_custom_call.1']
    #allocation13 [shape = 'u8[1536]{0}', space=vmem, size = 0x800, scoped, tag = 'input window, operand 6, single buffered']
    #allocation14 [shape = 'u8[98304]{0}', space=vmem, size = 0x18000, scoped, tag = 'input window, operand 7, single buffered']
    #allocation15 [shape = 's32[1]{0}', space=sflag, size = 0x4, scoped, tag = 'scoped memory for tpu_custom_call.1']
    #allocation16 [shape = 'u8[512]{0}', space=vmem, size = 0x400, scoped, tag = 'input window, operand 8, single buffered']
    #allocation17 [shape = 'u8[32768]{0}', space=vmem, size = 0x8000, scoped, tag = 'input window, operand 9, single buffered']
    #allocation18 [shape = 's32[1]{0}', space=sflag, size = 0x4, scoped, tag = 'scoped memory for tpu_custom_call.1']
    #allocation19 [shape = 'u8[512]{0}', space=vmem, size = 0x400, scoped, tag = 'input window, operand 10, single buffered']
    #allocation20 [shape = 'u8[4096]{0}', space=vmem, size = 0x1000, scoped, tag = 'output window, operand 0, single buffered']
    %16 = vsyncpa [#allocation3], 0
    %17 = vsyncpa [#allocation6], 0
    %18 = vsyncpa [#allocation9], 0
    %19 = vsyncpa [#allocation12], 0
    %20 = vsyncpa [#allocation15], 0
    %21 = vsyncpa [#allocation18], 0
    %22 = vsyncpa [#allocation4], 0
    // Predicated region
    $region2: #{tpu_custom_call.1} parent=1 // pred_check
      _
    $region3: #{tpu_custom_call.1} parent=1 // pred_check_branch
      %24 = sbr.rel (0) target = $region5
    $region4: #{tpu_custom_call.1} parent=1 // pred_region
      %s26 = ssub.s32 448, 448
      %27 = vsyncadd [#allocation3], %s26
      %s29 = sshll.u32 [#allocation2], 4
      %s30 = int_to_ptr.vmem [resolvable:$true] %s29
      %32 = dma.hbm_to_vmem [thread:$0]  %s0, 448, %s30, [#allocation3]
    $region5: #{tpu_custom_call.1} parent=1 // pred_fallthru
      _
    // Predicated region
    $region6: #{tpu_custom_call.1} parent=1 // pred_check
      _
    $region7: #{tpu_custom_call.1} parent=1 // pred_check_branch
      %34 = sbr.rel (0) target = $region9
    $region8: #{tpu_custom_call.1} parent=1 // pred_region
      %s36 = ssub.s32 43008, 43008
      %37 = vsyncadd [#allocation6], %s36
      %s38 = sshll.u32 [#allocation5], 4
      %s39 = int_to_ptr.vmem [resolvable:$true] %s38
      %44 = dma.hbm_to_vmem [thread:$0]  %s1, 43008, %s39, [#allocation6], 384, 384, 24
    $region9: #{tpu_custom_call.1} parent=1 // pred_fallthru
      _
    // Predicated region
    $region10: #{tpu_custom_call.1} parent=1 // pred_check
      _
    $region11: #{tpu_custom_call.1} parent=1 // pred_check_branch
      %46 = sbr.rel (0) target = $region13
    $region12: #{tpu_custom_call.1} parent=1 // pred_region
      %s48 = ssub.s32 96, 96
      %49 = vsyncadd [#allocation6], %s48
      %s51 = sshll.u32 [#allocation7], 4
      %s52 = int_to_ptr.vmem [resolvable:$true] %s51
      %54 = dma.hbm_to_vmem [thread:$0]  %s2, 96, %s52, [#allocation6]
    $region13: #{tpu_custom_call.1} parent=1 // pred_fallthru
      _
    // Predicated region
    $region14: #{tpu_custom_call.1} parent=1 // pred_check
      _
    $region15: #{tpu_custom_call.1} parent=1 // pred_check_branch
      %56 = sbr.rel (0) target = $region17
    $region16: #{tpu_custom_call.1} parent=1 // pred_region
      %s58 = ssub.s32 24576, 24576
      %59 = vsyncadd [#allocation9], %s58
      %s60 = sshll.u32 [#allocation8], 4
      %s61 = int_to_ptr.vmem [resolvable:$true] %s60
      %66 = dma.hbm_to_vmem [thread:$0]  %s3, 24576, %s61, [#allocation9], 256, 256, 16
    $region17: #{tpu_custom_call.1} parent=1 // pred_fallthru
      _
    // Predicated region
    $region18: #{tpu_custom_call.1} parent=1 // pred_check
      _
    $region19: #{tpu_custom_call.1} parent=1 // pred_check_branch
      %68 = sbr.rel (0) target = $region21
    $region20: #{tpu_custom_call.1} parent=1 // pred_region
      %s70 = ssub.s32 64, 64
      %71 = vsyncadd [#allocation9], %s70
      %s73 = sshll.u32 [#allocation10], 4
      %s74 = int_to_ptr.vmem [resolvable:$true] %s73
      %76 = dma.hbm_to_vmem [thread:$0]  %s4, 64, %s74, [#allocation9]
    $region21: #{tpu_custom_call.1} parent=1 // pred_fallthru
      _
    // Predicated region
    $region22: #{tpu_custom_call.1} parent=1 // pred_check
      _
    $region23: #{tpu_custom_call.1} parent=1 // pred_check_branch
      %78 = sbr.rel (0) target = $region25
    $region24: #{tpu_custom_call.1} parent=1 // pred_region
      %s80 = ssub.s32 12288, 12288
      %81 = vsyncadd [#allocation12], %s80
      %s82 = sshll.u32 [#allocation11], 4
      %s83 = int_to_ptr.vmem [resolvable:$true] %s82
      %88 = dma.hbm_to_vmem [thread:$0]  %s5, 12288, %s83, [#allocation12], 192, 192, 12
    $region25: #{tpu_custom_call.1} parent=1 // pred_fallthru
      _
    // Predicated region
    $region26: #{tpu_custom_call.1} parent=1 // pred_check
      _
    $region27: #{tpu_custom_call.1} parent=1 // pred_check_branch
      %90 = sbr.rel (0) target = $region29
    $region28: #{tpu_custom_call.1} parent=1 // pred_region
      %s92 = ssub.s32 48, 48
      %93 = vsyncadd [#allocation12], %s92
      %s95 = sshll.u32 [#allocation13], 4
      %s96 = int_to_ptr.vmem [resolvable:$true] %s95
      %98 = dma.hbm_to_vmem [thread:$0]  %s6, 48, %s96, [#allocation12]
    $region29: #{tpu_custom_call.1} parent=1 // pred_fallthru
      _
    // Predicated region
    $region30: #{tpu_custom_call.1} parent=1 // pred_check
      _
    $region31: #{tpu_custom_call.1} parent=1 // pred_check_branch
      %100 = sbr.rel (0) target = $region33
    $region32: #{tpu_custom_call.1} parent=1 // pred_region
      %s102 = ssub.s32 3072, 3072
      %103 = vsyncadd [#allocation15], %s102
      %s104 = sshll.u32 [#allocation14], 4
      %s105 = int_to_ptr.vmem [resolvable:$true] %s104
      %110 = dma.hbm_to_vmem [thread:$0]  %s7, 3072, %s105, [#allocation15], 64, 64, 4
    $region33: #{tpu_custom_call.1} parent=1 // pred_fallthru
      _
    // Predicated region
    $region34: #{tpu_custom_call.1} parent=1 // pred_check
      _
    $region35: #{tpu_custom_call.1} parent=1 // pred_check_branch
      %112 = sbr.rel (0) target = $region37
    $region36: #{tpu_custom_call.1} parent=1 // pred_region
      %s114 = ssub.s32 16, 16
      %115 = vsyncadd [#allocation15], %s114
      %s117 = sshll.u32 [#allocation16], 4
      %s118 = int_to_ptr.vmem [resolvable:$true] %s117
      %120 = dma.hbm_to_vmem [thread:$0]  %s8, 16, %s118, [#allocation15]
    $region37: #{tpu_custom_call.1} parent=1 // pred_fallthru
      _
    // Predicated region
    $region38: #{tpu_custom_call.1} parent=1 // pred_check
      _
    $region39: #{tpu_custom_call.1} parent=1 // pred_check_branch
      %122 = sbr.rel (0) target = $region41
    $region40: #{tpu_custom_call.1} parent=1 // pred_region
      %s124 = ssub.s32 1024, 1024
      %125 = vsyncadd [#allocation18], %s124
      %s126 = sshll.u32 [#allocation17], 4
      %s127 = int_to_ptr.vmem [resolvable:$true] %s126
      %132 = dma.hbm_to_vmem [thread:$0]  %s9, 1024, %s127, [#allocation18], 64, 64, 4
    $region41: #{tpu_custom_call.1} parent=1 // pred_fallthru
      _
    // Predicated region
    $region42: #{tpu_custom_call.1} parent=1 // pred_check
      _
    $region43: #{tpu_custom_call.1} parent=1 // pred_check_branch
      %134 = sbr.rel (0) target = $region45
    $region44: #{tpu_custom_call.1} parent=1 // pred_region
      %s136 = ssub.s32 16, 16
      %137 = vsyncadd [#allocation18], %s136
      %s139 = sshll.u32 [#allocation19], 4
      %s140 = int_to_ptr.vmem [resolvable:$true] %s139
      %142 = dma.hbm_to_vmem [thread:$0]  %s10, 16, %s140, [#allocation18]
    $region45: #{tpu_custom_call.1} parent=1 // pred_fallthru
      _
    // Predicated region
    $region46: #{tpu_custom_call.1} parent=1 // pred_check
      _
    $region47: #{tpu_custom_call.1} parent=1 // pred_check_branch
      %144 = sbr.rel (0) target = $region49
    $region48: #{tpu_custom_call.1} parent=1 // pred_region
      %145 = dma.done [#allocation3], 448
    $region49: #{tpu_custom_call.1} parent=1 // pred_fallthru
      _
    // Predicated region
    $region50: #{tpu_custom_call.1} parent=1 // pred_check
      _
    $region51: #{tpu_custom_call.1} parent=1 // pred_check_branch
      %147 = sbr.rel (0) target = $region53
    $region52: #{tpu_custom_call.1} parent=1 // pred_region
      %148 = dma.done [#allocation6], 43008
    $region53: #{tpu_custom_call.1} parent=1 // pred_fallthru
      _
    // Predicated region
    $region54: #{tpu_custom_call.1} parent=1 // pred_check
      _
    $region55: #{tpu_custom_call.1} parent=1 // pred_check_branch
      %150 = sbr.rel (0) target = $region57
    $region56: #{tpu_custom_call.1} parent=1 // pred_region
      %151 = dma.done [#allocation6], 96
    $region57: #{tpu_custom_call.1} parent=1 // pred_fallthru
      _
    // Predicated region
    $region58: #{tpu_custom_call.1} parent=1 // pred_check
      _
    $region59: #{tpu_custom_call.1} parent=1 // pred_check_branch
      %153 = sbr.rel (0) target = $region61
    $region60: #{tpu_custom_call.1} parent=1 // pred_region
      %154 = dma.done [#allocation9], 24576
    $region61: #{tpu_custom_call.1} parent=1 // pred_fallthru
      _
    // Predicated region
    $region62: #{tpu_custom_call.1} parent=1 // pred_check
      _
    $region63: #{tpu_custom_call.1} parent=1 // pred_check_branch
      %156 = sbr.rel (0) target = $region65
    $region64: #{tpu_custom_call.1} parent=1 // pred_region
      %157 = dma.done [#allocation9], 64
    $region65: #{tpu_custom_call.1} parent=1 // pred_fallthru
      _
    // Predicated region
    $region66: #{tpu_custom_call.1} parent=1 // pred_check
      _
    $region67: #{tpu_custom_call.1} parent=1 // pred_check_branch
      %159 = sbr.rel (0) target = $region69
    $region68: #{tpu_custom_call.1} parent=1 // pred_region
      %160 = dma.done [#allocation12], 12288
    $region69: #{tpu_custom_call.1} parent=1 // pred_fallthru
      _
    // Predicated region
    $region70: #{tpu_custom_call.1} parent=1 // pred_check
      _
    $region71: #{tpu_custom_call.1} parent=1 // pred_check_branch
      %162 = sbr.rel (0) target = $region73
    $region72: #{tpu_custom_call.1} parent=1 // pred_region
      %163 = dma.done [#allocation12], 48
    $region73: #{tpu_custom_call.1} parent=1 // pred_fallthru
      _
    // Predicated region
    $region74: #{tpu_custom_call.1} parent=1 // pred_check
      _
    $region75: #{tpu_custom_call.1} parent=1 // pred_check_branch
      %165 = sbr.rel (0) target = $region77
    $region76: #{tpu_custom_call.1} parent=1 // pred_region
      %166 = dma.done [#allocation15], 3072
    $region77: #{tpu_custom_call.1} parent=1 // pred_fallthru
      _
    // Predicated region
    $region78: #{tpu_custom_call.1} parent=1 // pred_check
      _
    $region79: #{tpu_custom_call.1} parent=1 // pred_check_branch
      %168 = sbr.rel (0) target = $region81
    $region80: #{tpu_custom_call.1} parent=1 // pred_region
      %169 = dma.done [#allocation15], 16
    $region81: #{tpu_custom_call.1} parent=1 // pred_fallthru
      _
    // Predicated region
    $region82: #{tpu_custom_call.1} parent=1 // pred_check
      _
    $region83: #{tpu_custom_call.1} parent=1 // pred_check_branch
      %171 = sbr.rel (0) target = $region85
    $region84: #{tpu_custom_call.1} parent=1 // pred_region
      %172 = dma.done [#allocation18], 1024
    $region85: #{tpu_custom_call.1} parent=1 // pred_fallthru
      _
    // Predicated region
    $region86: #{tpu_custom_call.1} parent=1 // pred_check
      _
    $region87: #{tpu_custom_call.1} parent=1 // pred_check_branch
      %174 = sbr.rel (0) target = $region89
    $region88: #{tpu_custom_call.1} parent=1 // pred_region
      %175 = dma.done [#allocation18], 16
    $region89: #{tpu_custom_call.1} parent=1 // pred_fallthru
      _
    %v177 = vld [vmem:[#allocation2] sm:$0xff]
    %v178 = vld [vmem:[#allocation2 + $0x8] sm:$0xff]
    %v179 = vld [vmem:[#allocation2 + $0x10] sm:$0xff]
    %v180 = vld [vmem:[#allocation2 + $0x18] sm:$0xf]
    %v181 = vld [vmem:[#allocation5] sm:$0xff]
    %v182 = vld [vmem:[#allocation5 + $0x8] sm:$0xff]
    %v183 = vld [vmem:[#allocation5 + $0x10] sm:$0xff]
    %v184 = vld [vmem:[#allocation5 + $0x18] sm:$0xff]
    %v185 = vld [vmem:[#allocation5 + $0x20] sm:$0xff]
    %v186 = vld [vmem:[#allocation5 + $0x28] sm:$0xff]
    %v187 = vld [vmem:[#allocation5 + $0x30] sm:$0xff]
    %v188 = vld [vmem:[#allocation5 + $0x38] sm:$0xff]
    %v189 = vld [vmem:[#allocation5 + $0x40] sm:$0xff]
    %v190 = vld [vmem:[#allocation5 + $0x48] sm:$0xff]
    %v191 = vld [vmem:[#allocation5 + $0x50] sm:$0xff]
    %v192 = vld [vmem:[#allocation5 + $0x58] sm:$0xff]
    %v193 = vld [vmem:[#allocation5 + $0x60] sm:$0xff]
    %v194 = vld [vmem:[#allocation5 + $0x68] sm:$0xff]
    %v195 = vld [vmem:[#allocation5 + $0x70] sm:$0xff]
    %v196 = vld [vmem:[#allocation5 + $0x78] sm:$0xff]
    %v197 = vld [vmem:[#allocation5 + $0x80] sm:$0xff]
    %v198 = vld [vmem:[#allocation5 + $0x88] sm:$0xff]
    %v199 = vld [vmem:[#allocation5 + $0x90] sm:$0xff]
    %v200 = vld [vmem:[#allocation5 + $0x98] sm:$0xff]
    %v201 = vld [vmem:[#allocation5 + $0xa0] sm:$0xff]
    %v202 = vld [vmem:[#allocation5 + $0xa8] sm:$0xff]
    %v203 = vld [vmem:[#allocation5 + $0xb0] sm:$0xff]
    %v204 = vld [vmem:[#allocation5 + $0xb8] sm:$0xff]
    %v205 = vld [vmem:[#allocation5 + $0xc0] sm:$0xff]
    %v206 = vld [vmem:[#allocation5 + $0xc8] sm:$0xff]
    %v207 = vld [vmem:[#allocation5 + $0xd0] sm:$0xff]
    %v208 = vld [vmem:[#allocation5 + $0xd8] sm:$0xff]
    %v209 = vld [vmem:[#allocation5 + $0xe0] sm:$0xff]
    %v210 = vld [vmem:[#allocation5 + $0xe8] sm:$0xff]
    %v211 = vld [vmem:[#allocation5 + $0xf0] sm:$0xff]
    %v212 = vld [vmem:[#allocation5 + $0xf8] sm:$0xff]
    %v213 = vld [vmem:[#allocation5 + $0x100] sm:$0xff]
    %v214 = vld [vmem:[#allocation5 + $0x108] sm:$0xff]
    %v215 = vld [vmem:[#allocation5 + $0x110] sm:$0xff]
    %v216 = vld [vmem:[#allocation5 + $0x118] sm:$0xff]
    %v217 = vld [vmem:[#allocation5 + $0x120] sm:$0xff]
    %v218 = vld [vmem:[#allocation5 + $0x128] sm:$0xff]
    %v219 = vld [vmem:[#allocation5 + $0x130] sm:$0xff]
    %v220 = vld [vmem:[#allocation5 + $0x138] sm:$0xff]
    %v221 = vld [vmem:[#allocation5 + $0x140] sm:$0xff]
    %v222 = vld [vmem:[#allocation5 + $0x148] sm:$0xff]
    %v223 = vld [vmem:[#allocation5 + $0x150] sm:$0xff]
    %v224 = vld [vmem:[#allocation5 + $0x158] sm:$0xff]
    %v225 = vld [vmem:[#allocation5 + $0x160] sm:$0xff]
    %v226 = vld [vmem:[#allocation5 + $0x168] sm:$0xff]
    %v227 = vld [vmem:[#allocation5 + $0x170] sm:$0xff]
    %v228 = vld [vmem:[#allocation5 + $0x178] sm:$0xff]
    %v229 = vld [vmem:[#allocation5 + $0x180] sm:$0xff]
    %v230 = vld [vmem:[#allocation5 + $0x188] sm:$0xff]
    %v231 = vld [vmem:[#allocation5 + $0x190] sm:$0xff]
    %v232 = vld [vmem:[#allocation5 + $0x198] sm:$0xff]
    %v233 = vld [vmem:[#allocation5 + $0x1a0] sm:$0xff]
    %v234 = vld [vmem:[#allocation5 + $0x1a8] sm:$0xff]
    %v235 = vld [vmem:[#allocation5 + $0x1b0] sm:$0xff]
    %v236 = vld [vmem:[#allocation5 + $0x1b8] sm:$0xff]
    %v237 = vld [vmem:[#allocation5 + $0x1c0] sm:$0xff]
    %v238 = vld [vmem:[#allocation5 + $0x1c8] sm:$0xff]
    %v239 = vld [vmem:[#allocation5 + $0x1d0] sm:$0xff]
    %v240 = vld [vmem:[#allocation5 + $0x1d8] sm:$0xff]
    %v241 = vld [vmem:[#allocation5 + $0x1e0] sm:$0xff]
    %v242 = vld [vmem:[#allocation5 + $0x1e8] sm:$0xff]
    %v243 = vld [vmem:[#allocation5 + $0x1f0] sm:$0xff]
    %v244 = vld [vmem:[#allocation5 + $0x1f8] sm:$0xff]
    %v245 = vld [vmem:[#allocation5 + $0x200] sm:$0xff]
    %v246 = vld [vmem:[#allocation5 + $0x208] sm:$0xff]
    %v247 = vld [vmem:[#allocation5 + $0x210] sm:$0xff]
    %v248 = vld [vmem:[#allocation5 + $0x218] sm:$0xff]
    %v249 = vld [vmem:[#allocation5 + $0x220] sm:$0xff]
    %v250 = vld [vmem:[#allocation5 + $0x228] sm:$0xff]
    %v251 = vld [vmem:[#allocation5 + $0x230] sm:$0xff]
    %v252 = vld [vmem:[#allocation5 + $0x238] sm:$0xff]
    %v253 = vld [vmem:[#allocation5 + $0x240] sm:$0xff]
    %v254 = vld [vmem:[#allocation5 + $0x248] sm:$0xff]
    %v255 = vld [vmem:[#allocation5 + $0x250] sm:$0xff]
    %v256 = vld [vmem:[#allocation5 + $0x258] sm:$0xff]
    %v257 = vld [vmem:[#allocation5 + $0x260] sm:$0xff]
    %v258 = vld [vmem:[#allocation5 + $0x268] sm:$0xff]
    %v259 = vld [vmem:[#allocation5 + $0x270] sm:$0xff]
    %v260 = vld [vmem:[#allocation5 + $0x278] sm:$0xff]
    %v261 = vld [vmem:[#allocation5 + $0x280] sm:$0xff]
    %v262 = vld [vmem:[#allocation5 + $0x288] sm:$0xff]
    %v263 = vld [vmem:[#allocation5 + $0x290] sm:$0xff]
    %v264 = vld [vmem:[#allocation5 + $0x298] sm:$0xff]
    %v265 = vld [vmem:[#allocation5 + $0x2a0] sm:$0xff]
    %v266 = vld [vmem:[#allocation5 + $0x2a8] sm:$0xff]
    %v267 = vld [vmem:[#allocation5 + $0x2b0] sm:$0xff]
    %v268 = vld [vmem:[#allocation5 + $0x2b8] sm:$0xff]
    %v269 = vld [vmem:[#allocation5 + $0x2c0] sm:$0xff]
    %v270 = vld [vmem:[#allocation5 + $0x2c8] sm:$0xff]
    %v271 = vld [vmem:[#allocation5 + $0x2d0] sm:$0xff]
    %v272 = vld [vmem:[#allocation5 + $0x2d8] sm:$0xff]
    %v273 = vld [vmem:[#allocation5 + $0x2e0] sm:$0xff]
    %v274 = vld [vmem:[#allocation5 + $0x2e8] sm:$0xff]
    %v275 = vld [vmem:[#allocation5 + $0x2f0] sm:$0xff]
    %v276 = vld [vmem:[#allocation5 + $0x2f8] sm:$0xff]
    %v277 = vld [vmem:[#allocation5 + $0x300] sm:$0xff]
    %v278 = vld [vmem:[#allocation5 + $0x308] sm:$0xff]
    %v279 = vld [vmem:[#allocation5 + $0x310] sm:$0xff]
    %v280 = vld [vmem:[#allocation5 + $0x318] sm:$0xff]
    %v281 = vld [vmem:[#allocation5 + $0x320] sm:$0xff]
    %v282 = vld [vmem:[#allocation5 + $0x328] sm:$0xff]
    %v283 = vld [vmem:[#allocation5 + $0x330] sm:$0xff]
    %v284 = vld [vmem:[#allocation5 + $0x338] sm:$0xff]
    %v285 = vld [vmem:[#allocation5 + $0x340] sm:$0xff]
    %v286 = vld [vmem:[#allocation5 + $0x348] sm:$0xff]
    %v287 = vld [vmem:[#allocation5 + $0x350] sm:$0xff]
    %v288 = vld [vmem:[#allocation5 + $0x358] sm:$0xff]
    %v289 = vld [vmem:[#allocation5 + $0x360] sm:$0xff]
    %v290 = vld [vmem:[#allocation5 + $0x368] sm:$0xff]
    %v291 = vld [vmem:[#allocation5 + $0x370] sm:$0xff]
    %v292 = vld [vmem:[#allocation5 + $0x378] sm:$0xff]
    %v293 = vld [vmem:[#allocation5 + $0x380] sm:$0xff]
    %v294 = vld [vmem:[#allocation5 + $0x388] sm:$0xff]
    %v295 = vld [vmem:[#allocation5 + $0x390] sm:$0xff]
    %v296 = vld [vmem:[#allocation5 + $0x398] sm:$0xff]
    %v297 = vld [vmem:[#allocation5 + $0x3a0] sm:$0xff]
    %v298 = vld [vmem:[#allocation5 + $0x3a8] sm:$0xff]
    %v299 = vld [vmem:[#allocation5 + $0x3b0] sm:$0xff]
    %v300 = vld [vmem:[#allocation5 + $0x3b8] sm:$0xff]
    %v301 = vld [vmem:[#allocation5 + $0x3c0] sm:$0xff]
    %v302 = vld [vmem:[#allocation5 + $0x3c8] sm:$0xff]
    %v303 = vld [vmem:[#allocation5 + $0x3d0] sm:$0xff]
    %v304 = vld [vmem:[#allocation5 + $0x3d8] sm:$0xff]
    %v305 = vld [vmem:[#allocation5 + $0x3e0] sm:$0xff]
    %v306 = vld [vmem:[#allocation5 + $0x3e8] sm:$0xff]
    %v307 = vld [vmem:[#allocation5 + $0x3f0] sm:$0xff]
    %v308 = vld [vmem:[#allocation5 + $0x3f8] sm:$0xff]
    %v309 = vld [vmem:[#allocation5 + $0x400] sm:$0xff]
    %v310 = vld [vmem:[#allocation5 + $0x408] sm:$0xff]
    %v311 = vld [vmem:[#allocation5 + $0x410] sm:$0xff]
    %v312 = vld [vmem:[#allocation5 + $0x418] sm:$0xff]
    %v313 = vld [vmem:[#allocation5 + $0x420] sm:$0xff]
    %v314 = vld [vmem:[#allocation5 + $0x428] sm:$0xff]
    %v315 = vld [vmem:[#allocation5 + $0x430] sm:$0xff]
    %v316 = vld [vmem:[#allocation5 + $0x438] sm:$0xff]
    %v317 = vld [vmem:[#allocation5 + $0x440] sm:$0xff]
    %v318 = vld [vmem:[#allocation5 + $0x448] sm:$0xff]
    %v319 = vld [vmem:[#allocation5 + $0x450] sm:$0xff]
    %v320 = vld [vmem:[#allocation5 + $0x458] sm:$0xff]
    %v321 = vld [vmem:[#allocation5 + $0x460] sm:$0xff]
    %v322 = vld [vmem:[#allocation5 + $0x468] sm:$0xff]
    %v323 = vld [vmem:[#allocation5 + $0x470] sm:$0xff]
    %v324 = vld [vmem:[#allocation5 + $0x478] sm:$0xff]
    %v325 = vld [vmem:[#allocation5 + $0x480] sm:$0xff]
    %v326 = vld [vmem:[#allocation5 + $0x488] sm:$0xff]
    %v327 = vld [vmem:[#allocation5 + $0x490] sm:$0xff]
    %v328 = vld [vmem:[#allocation5 + $0x498] sm:$0xff]
    %v329 = vld [vmem:[#allocation5 + $0x4a0] sm:$0xff]
    %v330 = vld [vmem:[#allocation5 + $0x4a8] sm:$0xff]
    %v331 = vld [vmem:[#allocation5 + $0x4b0] sm:$0xff]
    %v332 = vld [vmem:[#allocation5 + $0x4b8] sm:$0xff]
    %v333 = vld [vmem:[#allocation5 + $0x4c0] sm:$0xff]
    %v334 = vld [vmem:[#allocation5 + $0x4c8] sm:$0xff]
    %v335 = vld [vmem:[#allocation5 + $0x4d0] sm:$0xff]
    %v336 = vld [vmem:[#allocation5 + $0x4d8] sm:$0xff]
    %v337 = vld [vmem:[#allocation5 + $0x4e0] sm:$0xff]
    %v338 = vld [vmem:[#allocation5 + $0x4e8] sm:$0xff]
    %v339 = vld [vmem:[#allocation5 + $0x4f0] sm:$0xff]
    %v340 = vld [vmem:[#allocation5 + $0x4f8] sm:$0xff]
    %v341 = vld [vmem:[#allocation5 + $0x500] sm:$0xff]
    %v342 = vld [vmem:[#allocation5 + $0x508] sm:$0xff]
    %v343 = vld [vmem:[#allocation5 + $0x510] sm:$0xff]
    %v344 = vld [vmem:[#allocation5 + $0x518] sm:$0xff]
    %v345 = vld [vmem:[#allocation5 + $0x520] sm:$0xff]
    %v346 = vld [vmem:[#allocation5 + $0x528] sm:$0xff]
    %v347 = vld [vmem:[#allocation5 + $0x530] sm:$0xff]
    %v348 = vld [vmem:[#allocation5 + $0x538] sm:$0xff]
    %v349 = vld [vmem:[#allocation5 + $0x540] sm:$0xff]
    %v350 = vld [vmem:[#allocation5 + $0x548] sm:$0xff]
    %v351 = vld [vmem:[#allocation5 + $0x550] sm:$0xff]
    %v352 = vld [vmem:[#allocation5 + $0x558] sm:$0xff]
    %v353 = vld [vmem:[#allocation5 + $0x560] sm:$0xff]
    %v354 = vld [vmem:[#allocation5 + $0x568] sm:$0xff]
    %v355 = vld [vmem:[#allocation5 + $0x570] sm:$0xff]
    %v356 = vld [vmem:[#allocation5 + $0x578] sm:$0xff]
    %v357 = vld [vmem:[#allocation5 + $0x580] sm:$0xff]
    %v358 = vld [vmem:[#allocation5 + $0x588] sm:$0xff]
    %v359 = vld [vmem:[#allocation5 + $0x590] sm:$0xff]
    %v360 = vld [vmem:[#allocation5 + $0x598] sm:$0xff]
    %v361 = vld [vmem:[#allocation5 + $0x5a0] sm:$0xff]
    %v362 = vld [vmem:[#allocation5 + $0x5a8] sm:$0xff]
    %v363 = vld [vmem:[#allocation5 + $0x5b0] sm:$0xff]
    %v364 = vld [vmem:[#allocation5 + $0x5b8] sm:$0xff]
    %v365 = vld [vmem:[#allocation5 + $0x5c0] sm:$0xff]
    %v366 = vld [vmem:[#allocation5 + $0x5c8] sm:$0xff]
    %v367 = vld [vmem:[#allocation5 + $0x5d0] sm:$0xff]
    %v368 = vld [vmem:[#allocation5 + $0x5d8] sm:$0xff]
    %v369 = vld [vmem:[#allocation5 + $0x5e0] sm:$0xff]
    %v370 = vld [vmem:[#allocation5 + $0x5e8] sm:$0xff]
    %v371 = vld [vmem:[#allocation5 + $0x5f0] sm:$0xff]
    %v372 = vld [vmem:[#allocation5 + $0x5f8] sm:$0xff]
    %v373 = vld [vmem:[#allocation5 + $0x600] sm:$0xff]
    %v374 = vld [vmem:[#allocation5 + $0x608] sm:$0xff]
    %v375 = vld [vmem:[#allocation5 + $0x610] sm:$0xff]
    %v376 = vld [vmem:[#allocation5 + $0x618] sm:$0xff]
    %v377 = vld [vmem:[#allocation5 + $0x620] sm:$0xff]
    %v378 = vld [vmem:[#allocation5 + $0x628] sm:$0xff]
    %v379 = vld [vmem:[#allocation5 + $0x630] sm:$0xff]
    %v380 = vld [vmem:[#allocation5 + $0x638] sm:$0xff]
    %v381 = vld [vmem:[#allocation5 + $0x640] sm:$0xff]
    %v382 = vld [vmem:[#allocation5 + $0x648] sm:$0xff]
    %v383 = vld [vmem:[#allocation5 + $0x650] sm:$0xff]
    %v384 = vld [vmem:[#allocation5 + $0x658] sm:$0xff]
    %v385 = vld [vmem:[#allocation5 + $0x660] sm:$0xff]
    %v386 = vld [vmem:[#allocation5 + $0x668] sm:$0xff]
    %v387 = vld [vmem:[#allocation5 + $0x670] sm:$0xff]
    %v388 = vld [vmem:[#allocation5 + $0x678] sm:$0xff]
    %v389 = vld [vmem:[#allocation5 + $0x680] sm:$0xff]
    %v390 = vld [vmem:[#allocation5 + $0x688] sm:$0xff]
    %v391 = vld [vmem:[#allocation5 + $0x690] sm:$0xff]
    %v392 = vld [vmem:[#allocation5 + $0x698] sm:$0xff]
    %v393 = vld [vmem:[#allocation5 + $0x6a0] sm:$0xff]
    %v394 = vld [vmem:[#allocation5 + $0x6a8] sm:$0xff]
    %v395 = vld [vmem:[#allocation5 + $0x6b0] sm:$0xff]
    %v396 = vld [vmem:[#allocation5 + $0x6b8] sm:$0xff]
    %v397 = vld [vmem:[#allocation5 + $0x6c0] sm:$0xff]
    %v398 = vld [vmem:[#allocation5 + $0x6c8] sm:$0xff]
    %v399 = vld [vmem:[#allocation5 + $0x6d0] sm:$0xff]
    %v400 = vld [vmem:[#allocation5 + $0x6d8] sm:$0xff]
    %v401 = vld [vmem:[#allocation5 + $0x6e0] sm:$0xff]
    %v402 = vld [vmem:[#allocation5 + $0x6e8] sm:$0xff]
    %v403 = vld [vmem:[#allocation5 + $0x6f0] sm:$0xff]
    %v404 = vld [vmem:[#allocation5 + $0x6f8] sm:$0xff]
    %v405 = vld [vmem:[#allocation5 + $0x700] sm:$0xff]
    %v406 = vld [vmem:[#allocation5 + $0x708] sm:$0xff]
    %v407 = vld [vmem:[#allocation5 + $0x710] sm:$0xff]
    %v408 = vld [vmem:[#allocation5 + $0x718] sm:$0xff]
    %v409 = vld [vmem:[#allocation5 + $0x720] sm:$0xff]
    %v410 = vld [vmem:[#allocation5 + $0x728] sm:$0xff]
    %v411 = vld [vmem:[#allocation5 + $0x730] sm:$0xff]
    %v412 = vld [vmem:[#allocation5 + $0x738] sm:$0xff]
    %v413 = vld [vmem:[#allocation5 + $0x740] sm:$0xff]
    %v414 = vld [vmem:[#allocation5 + $0x748] sm:$0xff]
    %v415 = vld [vmem:[#allocation5 + $0x750] sm:$0xff]
    %v416 = vld [vmem:[#allocation5 + $0x758] sm:$0xff]
    %v417 = vld [vmem:[#allocation5 + $0x760] sm:$0xff]
    %v418 = vld [vmem:[#allocation5 + $0x768] sm:$0xff]
    %v419 = vld [vmem:[#allocation5 + $0x770] sm:$0xff]
    %v420 = vld [vmem:[#allocation5 + $0x778] sm:$0xff]
    %v421 = vld [vmem:[#allocation5 + $0x780] sm:$0xff]
    %v422 = vld [vmem:[#allocation5 + $0x788] sm:$0xff]
    %v423 = vld [vmem:[#allocation5 + $0x790] sm:$0xff]
    %v424 = vld [vmem:[#allocation5 + $0x798] sm:$0xff]
    %v425 = vld [vmem:[#allocation5 + $0x7a0] sm:$0xff]
    %v426 = vld [vmem:[#allocation5 + $0x7a8] sm:$0xff]
    %v427 = vld [vmem:[#allocation5 + $0x7b0] sm:$0xff]
    %v428 = vld [vmem:[#allocation5 + $0x7b8] sm:$0xff]
    %v429 = vld [vmem:[#allocation5 + $0x7c0] sm:$0xff]
    %v430 = vld [vmem:[#allocation5 + $0x7c8] sm:$0xff]
    %v431 = vld [vmem:[#allocation5 + $0x7d0] sm:$0xff]
    %v432 = vld [vmem:[#allocation5 + $0x7d8] sm:$0xff]
    %v433 = vld [vmem:[#allocation5 + $0x7e0] sm:$0xff]
    %v434 = vld [vmem:[#allocation5 + $0x7e8] sm:$0xff]
    %v435 = vld [vmem:[#allocation5 + $0x7f0] sm:$0xff]
    %v436 = vld [vmem:[#allocation5 + $0x7f8] sm:$0xff]
    %v437 = vld [vmem:[#allocation5 + $0x800] sm:$0xff]
    %v438 = vld [vmem:[#allocation5 + $0x808] sm:$0xff]
    %v439 = vld [vmem:[#allocation5 + $0x810] sm:$0xff]
    %v440 = vld [vmem:[#allocation5 + $0x818] sm:$0xff]
    %v441 = vld [vmem:[#allocation5 + $0x820] sm:$0xff]
    %v442 = vld [vmem:[#allocation5 + $0x828] sm:$0xff]
    %v443 = vld [vmem:[#allocation5 + $0x830] sm:$0xff]
    %v444 = vld [vmem:[#allocation5 + $0x838] sm:$0xff]
    %v445 = vld [vmem:[#allocation5 + $0x840] sm:$0xff]
    %v446 = vld [vmem:[#allocation5 + $0x848] sm:$0xff]
    %v447 = vld [vmem:[#allocation5 + $0x850] sm:$0xff]
    %v448 = vld [vmem:[#allocation5 + $0x858] sm:$0xff]
    %v449 = vld [vmem:[#allocation5 + $0x860] sm:$0xff]
    %v450 = vld [vmem:[#allocation5 + $0x868] sm:$0xff]
    %v451 = vld [vmem:[#allocation5 + $0x870] sm:$0xff]
    %v452 = vld [vmem:[#allocation5 + $0x878] sm:$0xff]
    %v453 = vld [vmem:[#allocation5 + $0x880] sm:$0xff]
    %v454 = vld [vmem:[#allocation5 + $0x888] sm:$0xff]
    %v455 = vld [vmem:[#allocation5 + $0x890] sm:$0xff]
    %v456 = vld [vmem:[#allocation5 + $0x898] sm:$0xff]
    %v457 = vld [vmem:[#allocation5 + $0x8a0] sm:$0xff]
    %v458 = vld [vmem:[#allocation5 + $0x8a8] sm:$0xff]
    %v459 = vld [vmem:[#allocation5 + $0x8b0] sm:$0xff]
    %v460 = vld [vmem:[#allocation5 + $0x8b8] sm:$0xff]
    %v461 = vld [vmem:[#allocation5 + $0x8c0] sm:$0xff]
    %v462 = vld [vmem:[#allocation5 + $0x8c8] sm:$0xff]
    %v463 = vld [vmem:[#allocation5 + $0x8d0] sm:$0xff]
    %v464 = vld [vmem:[#allocation5 + $0x8d8] sm:$0xff]
    %v465 = vld [vmem:[#allocation5 + $0x8e0] sm:$0xff]
    %v466 = vld [vmem:[#allocation5 + $0x8e8] sm:$0xff]
    %v467 = vld [vmem:[#allocation5 + $0x8f0] sm:$0xff]
    %v468 = vld [vmem:[#allocation5 + $0x8f8] sm:$0xff]
    %v469 = vld [vmem:[#allocation5 + $0x900] sm:$0xff]
    %v470 = vld [vmem:[#allocation5 + $0x908] sm:$0xff]
    %v471 = vld [vmem:[#allocation5 + $0x910] sm:$0xff]
    %v472 = vld [vmem:[#allocation5 + $0x918] sm:$0xff]
    %v473 = vld [vmem:[#allocation5 + $0x920] sm:$0xff]
    %v474 = vld [vmem:[#allocation5 + $0x928] sm:$0xff]
    %v475 = vld [vmem:[#allocation5 + $0x930] sm:$0xff]
    %v476 = vld [vmem:[#allocation5 + $0x938] sm:$0xff]
    %v477 = vld [vmem:[#allocation5 + $0x940] sm:$0xff]
    %v478 = vld [vmem:[#allocation5 + $0x948] sm:$0xff]
    %v479 = vld [vmem:[#allocation5 + $0x950] sm:$0xff]
    %v480 = vld [vmem:[#allocation5 + $0x958] sm:$0xff]
    %v481 = vld [vmem:[#allocation5 + $0x960] sm:$0xff]
    %v482 = vld [vmem:[#allocation5 + $0x968] sm:$0xff]
    %v483 = vld [vmem:[#allocation5 + $0x970] sm:$0xff]
    %v484 = vld [vmem:[#allocation5 + $0x978] sm:$0xff]
    %v485 = vld [vmem:[#allocation5 + $0x980] sm:$0xff]
    %v486 = vld [vmem:[#allocation5 + $0x988] sm:$0xff]
    %v487 = vld [vmem:[#allocation5 + $0x990] sm:$0xff]
    %v488 = vld [vmem:[#allocation5 + $0x998] sm:$0xff]
    %v489 = vld [vmem:[#allocation5 + $0x9a0] sm:$0xff]
    %v490 = vld [vmem:[#allocation5 + $0x9a8] sm:$0xff]
    %v491 = vld [vmem:[#allocation5 + $0x9b0] sm:$0xff]
    %v492 = vld [vmem:[#allocation5 + $0x9b8] sm:$0xff]
    %v493 = vld [vmem:[#allocation5 + $0x9c0] sm:$0xff]
    %v494 = vld [vmem:[#allocation5 + $0x9c8] sm:$0xff]
    %v495 = vld [vmem:[#allocation5 + $0x9d0] sm:$0xff]
    %v496 = vld [vmem:[#allocation5 + $0x9d8] sm:$0xff]
    %v497 = vld [vmem:[#allocation5 + $0x9e0] sm:$0xff]
    %v498 = vld [vmem:[#allocation5 + $0x9e8] sm:$0xff]
    %v499 = vld [vmem:[#allocation5 + $0x9f0] sm:$0xff]
    %v500 = vld [vmem:[#allocation5 + $0x9f8] sm:$0xff]
    %v501 = vld [vmem:[#allocation5 + $0xa00] sm:$0xff]
    %v502 = vld [vmem:[#allocation5 + $0xa08] sm:$0xff]
    %v503 = vld [vmem:[#allocation5 + $0xa10] sm:$0xff]
    %v504 = vld [vmem:[#allocation5 + $0xa18] sm:$0xff]
    %v505 = vld [vmem:[#allocation5 + $0xa20] sm:$0xff]
    %v506 = vld [vmem:[#allocation5 + $0xa28] sm:$0xff]
    %v507 = vld [vmem:[#allocation5 + $0xa30] sm:$0xff]
    %v508 = vld [vmem:[#allocation5 + $0xa38] sm:$0xff]
    %v509 = vld [vmem:[#allocation5 + $0xa40] sm:$0xff]
    %v510 = vld [vmem:[#allocation5 + $0xa48] sm:$0xff]
    %v511 = vld [vmem:[#allocation5 + $0xa50] sm:$0xff]
    %v512 = vld [vmem:[#allocation5 + $0xa58] sm:$0xff]
    %v513 = vld [vmem:[#allocation5 + $0xa60] sm:$0xff]
    %v514 = vld [vmem:[#allocation5 + $0xa68] sm:$0xff]
    %v515 = vld [vmem:[#allocation5 + $0xa70] sm:$0xff]
    %v516 = vld [vmem:[#allocation5 + $0xa78] sm:$0xff]
    %v517 = vld [vmem:[#allocation7] sm:$0x3f]
    %v518 = vunpack.c.l.bf16 %v517
    %v519 = vunpack.c.h.bf16 %v517
    %v522 = vlaneseq
    %v523 = vshrl.u32 %v522, 7
    %v524 = vsub.s32 0, %v523
    %v525 = vrot.slane %v518, %v524
    %v526 = vlaneseq
    %v527 = vshrl.u32 %v526, 7
    %v528 = vsub.s32 2, %v527
    %v529 = vrot.slane %v518, %v528
    %v530 = vlaneseq
    %v531 = vshrl.u32 %v530, 7
    %v532 = vsub.s32 4, %v531
    %v533 = vrot.slane %v518, %v532
    %v534 = vlaneseq
    %v535 = vshrl.u32 %v534, 7
    %v536 = vsub.s32 6, %v535
    %v537 = vrot.slane %v518, %v536
    %v538 = vlaneseq
    %v539 = vshrl.u32 %v538, 7
    %v540 = vsub.s32 0, %v539
    %v541 = vrot.slane %v519, %v540
    %v542 = vlaneseq
    %v543 = vshrl.u32 %v542, 7
    %v544 = vsub.s32 2, %v543
    %v545 = vrot.slane %v519, %v544
    %v552 = vlaneseq
    %v553 = vshrl.u32 %v552, 7
    %v554 = vsub.s32 0, %v553
    %v555 = vrot.slane %v525, %v554
    %v556 = vlaneseq
    %v557 = vshrl.u32 %v556, 7
    %v558 = vsub.s32 0, %v557
    %v559 = vrot.slane %v529, %v558
    %v560 = vlaneseq
    %v561 = vshrl.u32 %v560, 7
    %v562 = vsub.s32 0, %v561
    %v563 = vrot.slane %v533, %v562
    %v564 = vlaneseq
    %v565 = vshrl.u32 %v564, 7
    %v566 = vsub.s32 0, %v565
    %v567 = vrot.slane %v537, %v566
    %v568 = vlaneseq
    %v569 = vshrl.u32 %v568, 7
    %v570 = vsub.s32 0, %v569
    %v571 = vrot.slane %v541, %v570
    %v572 = vlaneseq
    %v573 = vshrl.u32 %v572, 7
    %v574 = vsub.s32 0, %v573
    %v575 = vrot.slane %v545, %v574
    %v580 = vunpack.c.l.b16 %v177
    %v581 = vunpack.c.h.b16 %v177
    %v582 = vunpack.c.l.b16 %v178
    %v583 = vunpack.c.h.b16 %v178
    %v584 = vunpack.c.l.b16 %v179
    %v585 = vunpack.c.h.b16 %v179
    %v586 = vunpack.c.l.b16 %v180
    %v587 = vpack.c.b16 %v580, %v580
    %v588 = vpack.c.b16 %v581, %v581
    %v589 = vpack.c.b16 %v582, %v582
    %v590 = vpack.c.b16 %v583, %v583
    %v591 = vpack.c.b16 %v584, %v584
    %v592 = vpack.c.b16 %v585, %v585
    %v593 = vpack.c.b16 %v586, %v586
    %v937 = vunpack.c.l.b16 %v181
    %v938 = vunpack.c.h.b16 %v181
    %v939 = vunpack.c.l.b16 %v182
    %v940 = vunpack.c.h.b16 %v182
    %v941 = vunpack.c.l.b16 %v183
    %v942 = vunpack.c.h.b16 %v183
    %v943 = vunpack.c.l.b16 %v184
    %v944 = vunpack.c.h.b16 %v184
    %v945 = vunpack.c.l.b16 %v185
    %v946 = vunpack.c.h.b16 %v185
    %v947 = vunpack.c.l.b16 %v186
    %v948 = vunpack.c.h.b16 %v186
    %v949 = vunpack.c.l.b16 %v187
    %v950 = vunpack.c.h.b16 %v187
    %v951 = vunpack.c.l.b16 %v188
    %v952 = vunpack.c.h.b16 %v188
    %v953 = vunpack.c.l.b16 %v189
    %v954 = vunpack.c.h.b16 %v189
    %v955 = vunpack.c.l.b16 %v190
    %v956 = vunpack.c.h.b16 %v190
    %v957 = vunpack.c.l.b16 %v191
    %v958 = vunpack.c.h.b16 %v191
    %v959 = vunpack.c.l.b16 %v192
    %v960 = vunpack.c.h.b16 %v192
    %v961 = vunpack.c.l.b16 %v193
    %v962 = vunpack.c.h.b16 %v193
    %v963 = vunpack.c.l.b16 %v194
    %v964 = vunpack.c.h.b16 %v194
    %v965 = vunpack.c.l.b16 %v195
    %v966 = vunpack.c.h.b16 %v195
    %v967 = vunpack.c.l.b16 %v196
    %v968 = vunpack.c.h.b16 %v196
    %v969 = vunpack.c.l.b16 %v197
    %v970 = vunpack.c.h.b16 %v197
    %v971 = vunpack.c.l.b16 %v198
    %v972 = vunpack.c.h.b16 %v198
    %v973 = vunpack.c.l.b16 %v199
    %v974 = vunpack.c.h.b16 %v199
    %v975 = vunpack.c.l.b16 %v200
    %v976 = vunpack.c.h.b16 %v200
    %v977 = vunpack.c.l.b16 %v201
    %v978 = vunpack.c.h.b16 %v201
    %v979 = vunpack.c.l.b16 %v202
    %v980 = vunpack.c.h.b16 %v202
    %v981 = vunpack.c.l.b16 %v203
    %v982 = vunpack.c.h.b16 %v203
    %v983 = vunpack.c.l.b16 %v204
    %v984 = vunpack.c.h.b16 %v204
    %v985 = vunpack.c.l.b16 %v205
    %v986 = vunpack.c.h.b16 %v205
    %v987 = vunpack.c.l.b16 %v206
    %v988 = vunpack.c.h.b16 %v206
    %v989 = vunpack.c.l.b16 %v207
    %v990 = vunpack.c.h.b16 %v207
    %v991 = vunpack.c.l.b16 %v208
    %v992 = vunpack.c.h.b16 %v208
    %v993 = vunpack.c.l.b16 %v209
    %v994 = vunpack.c.h.b16 %v209
    %v995 = vunpack.c.l.b16 %v210
    %v996 = vunpack.c.h.b16 %v210
    %v997 = vunpack.c.l.b16 %v211
    %v998 = vunpack.c.h.b16 %v211
    %v999 = vunpack.c.l.b16 %v212
    %v1000 = vunpack.c.h.b16 %v212
    %v1001 = vunpack.c.l.b16 %v213
    %v1002 = vunpack.c.h.b16 %v213
    %v1003 = vunpack.c.l.b16 %v214
    %v1004 = vunpack.c.h.b16 %v214
    %v1005 = vunpack.c.l.b16 %v215
    %v1006 = vunpack.c.h.b16 %v215
    %v1007 = vunpack.c.l.b16 %v216
    %v1008 = vunpack.c.h.b16 %v216
    %v1009 = vunpack.c.l.b16 %v217
    %v1010 = vunpack.c.h.b16 %v217
    %v1011 = vunpack.c.l.b16 %v218
    %v1012 = vunpack.c.h.b16 %v218
    %v1013 = vunpack.c.l.b16 %v219
    %v1014 = vunpack.c.h.b16 %v219
    %v1015 = vunpack.c.l.b16 %v220
    %v1016 = vunpack.c.h.b16 %v220
    %v1017 = vunpack.c.l.b16 %v221
    %v1018 = vunpack.c.h.b16 %v221
    %v1019 = vunpack.c.l.b16 %v222
    %v1020 = vunpack.c.h.b16 %v222
    %v1021 = vunpack.c.l.b16 %v223
    %v1022 = vunpack.c.h.b16 %v223
    %v1023 = vunpack.c.l.b16 %v224
    %v1024 = vunpack.c.h.b16 %v224
    %v1025 = vunpack.c.l.b16 %v225
    %v1026 = vunpack.c.h.b16 %v225
    %v1027 = vunpack.c.l.b16 %v226
    %v1028 = vunpack.c.h.b16 %v226
    %v1029 = vunpack.c.l.b16 %v227
    %v1030 = vunpack.c.h.b16 %v227
    %v1031 = vunpack.c.l.b16 %v228
    %v1032 = vunpack.c.h.b16 %v228
    %v1033 = vunpack.c.l.b16 %v229
    %v1034 = vunpack.c.h.b16 %v229
    %v1035 = vunpack.c.l.b16 %v230
    %v1036 = vunpack.c.h.b16 %v230
    %v1037 = vunpack.c.l.b16 %v231
    %v1038 = vunpack.c.h.b16 %v231
    %v1039 = vunpack.c.l.b16 %v232
    %v1040 = vunpack.c.h.b16 %v232
    %v1041 = vunpack.c.l.b16 %v233
    %v1042 = vunpack.c.h.b16 %v233
    %v1043 = vunpack.c.l.b16 %v234
    %v1044 = vunpack.c.h.b16 %v234
    %v1045 = vunpack.c.l.b16 %v235
    %v1046 = vunpack.c.h.b16 %v235
    %v1047 = vunpack.c.l.b16 %v236
    %v1048 = vunpack.c.h.b16 %v236
    %v1049 = vunpack.c.l.b16 %v237
    %v1050 = vunpack.c.h.b16 %v237
    %v1051 = vunpack.c.l.b16 %v238
    %v1052 = vunpack.c.h.b16 %v238
    %v1053 = vunpack.c.l.b16 %v239
    %v1054 = vunpack.c.h.b16 %v239
    %v1055 = vunpack.c.l.b16 %v240
    %v1056 = vunpack.c.h.b16 %v240
    %v1057 = vunpack.c.l.b16 %v241
    %v1058 = vunpack.c.h.b16 %v241
    %v1059 = vunpack.c.l.b16 %v242
    %v1060 = vunpack.c.h.b16 %v242
    %v1061 = vunpack.c.l.b16 %v243
    %v1062 = vunpack.c.h.b16 %v243
    %v1063 = vunpack.c.l.b16 %v244
    %v1064 = vunpack.c.h.b16 %v244
    %v1065 = vunpack.c.l.b16 %v245
    %v1066 = vunpack.c.h.b16 %v245
    %v1067 = vunpack.c.l.b16 %v246
    %v1068 = vunpack.c.h.b16 %v246
    %v1069 = vunpack.c.l.b16 %v247
    %v1070 = vunpack.c.h.b16 %v247
    %v1071 = vunpack.c.l.b16 %v248
    %v1072 = vunpack.c.h.b16 %v248
    %v1073 = vunpack.c.l.b16 %v249
    %v1074 = vunpack.c.h.b16 %v249
    %v1075 = vunpack.c.l.b16 %v250
    %v1076 = vunpack.c.h.b16 %v250
    %v1077 = vunpack.c.l.b16 %v251
    %v1078 = vunpack.c.h.b16 %v251
    %v1079 = vunpack.c.l.b16 %v252
    %v1080 = vunpack.c.h.b16 %v252
    %v1081 = vunpack.c.l.b16 %v253
    %v1082 = vunpack.c.h.b16 %v253
    %v1083 = vunpack.c.l.b16 %v254
    %v1084 = vunpack.c.h.b16 %v254
    %v1085 = vunpack.c.l.b16 %v255
    %v1086 = vunpack.c.h.b16 %v255
    %v1087 = vunpack.c.l.b16 %v256
    %v1088 = vunpack.c.h.b16 %v256
    %v1089 = vunpack.c.l.b16 %v257
    %v1090 = vunpack.c.h.b16 %v257
    %v1091 = vunpack.c.l.b16 %v258
    %v1092 = vunpack.c.h.b16 %v258
    %v1093 = vunpack.c.l.b16 %v259
    %v1094 = vunpack.c.h.b16 %v259
    %v1095 = vunpack.c.l.b16 %v260
    %v1096 = vunpack.c.h.b16 %v260
    %v1097 = vunpack.c.l.b16 %v261
    %v1098 = vunpack.c.h.b16 %v261
    %v1099 = vunpack.c.l.b16 %v262
    %v1100 = vunpack.c.h.b16 %v262
    %v1101 = vunpack.c.l.b16 %v263
    %v1102 = vunpack.c.h.b16 %v263
    %v1103 = vunpack.c.l.b16 %v264
    %v1104 = vunpack.c.h.b16 %v264
    %v1105 = vunpack.c.l.b16 %v265
    %v1106 = vunpack.c.h.b16 %v265
    %v1107 = vunpack.c.l.b16 %v266
    %v1108 = vunpack.c.h.b16 %v266
    %v1109 = vunpack.c.l.b16 %v267
    %v1110 = vunpack.c.h.b16 %v267
    %v1111 = vunpack.c.l.b16 %v268
    %v1112 = vunpack.c.h.b16 %v268
    %v1113 = vunpack.c.l.b16 %v269
    %v1114 = vunpack.c.h.b16 %v269
    %v1115 = vunpack.c.l.b16 %v270
    %v1116 = vunpack.c.h.b16 %v270
    %v1117 = vunpack.c.l.b16 %v271
    %v1118 = vunpack.c.h.b16 %v271
    %v1119 = vunpack.c.l.b16 %v272
    %v1120 = vunpack.c.h.b16 %v272
    %v1121 = vunpack.c.l.b16 %v273
    %v1122 = vunpack.c.h.b16 %v273
    %v1123 = vunpack.c.l.b16 %v274
    %v1124 = vunpack.c.h.b16 %v274
    %v1125 = vunpack.c.l.b16 %v275
    %v1126 = vunpack.c.h.b16 %v275
    %v1127 = vunpack.c.l.b16 %v276
    %v1128 = vunpack.c.h.b16 %v276
    %v1129 = vunpack.c.l.b16 %v277
    %v1130 = vunpack.c.h.b16 %v277
    %v1131 = vunpack.c.l.b16 %v278
    %v1132 = vunpack.c.h.b16 %v278
    %v1133 = vunpack.c.l.b16 %v279
    %v1134 = vunpack.c.h.b16 %v279
    %v1135 = vunpack.c.l.b16 %v280
    %v1136 = vunpack.c.h.b16 %v280
    %v1137 = vunpack.c.l.b16 %v281
    %v1138 = vunpack.c.h.b16 %v281
    %v1139 = vunpack.c.l.b16 %v282
    %v1140 = vunpack.c.h.b16 %v282
    %v1141 = vunpack.c.l.b16 %v283
    %v1142 = vunpack.c.h.b16 %v283
    %v1143 = vunpack.c.l.b16 %v284
    %v1144 = vunpack.c.h.b16 %v284
    %v1145 = vunpack.c.l.b16 %v285
    %v1146 = vunpack.c.h.b16 %v285
    %v1147 = vunpack.c.l.b16 %v286
    %v1148 = vunpack.c.h.b16 %v286
    %v1149 = vunpack.c.l.b16 %v287
    %v1150 = vunpack.c.h.b16 %v287
    %v1151 = vunpack.c.l.b16 %v288
    %v1152 = vunpack.c.h.b16 %v288
    %v1153 = vunpack.c.l.b16 %v289
    %v1154 = vunpack.c.h.b16 %v289
    %v1155 = vunpack.c.l.b16 %v290
    %v1156 = vunpack.c.h.b16 %v290
    %v1157 = vunpack.c.l.b16 %v291
    %v1158 = vunpack.c.h.b16 %v291
    %v1159 = vunpack.c.l.b16 %v292
    %v1160 = vunpack.c.h.b16 %v292
    %v1161 = vunpack.c.l.b16 %v293
    %v1162 = vunpack.c.h.b16 %v293
    %v1163 = vunpack.c.l.b16 %v294
    %v1164 = vunpack.c.h.b16 %v294
    %v1165 = vunpack.c.l.b16 %v295
    %v1166 = vunpack.c.h.b16 %v295
    %v1167 = vunpack.c.l.b16 %v296
    %v1168 = vunpack.c.h.b16 %v296
    %v1169 = vunpack.c.l.b16 %v297
    %v1170 = vunpack.c.h.b16 %v297
    %v1171 = vunpack.c.l.b16 %v298
    %v1172 = vunpack.c.h.b16 %v298
    %v1173 = vunpack.c.l.b16 %v299
    %v1174 = vunpack.c.h.b16 %v299
    %v1175 = vunpack.c.l.b16 %v300
    %v1176 = vunpack.c.h.b16 %v300
    %v1177 = vunpack.c.l.b16 %v301
    %v1178 = vunpack.c.h.b16 %v301
    %v1179 = vunpack.c.l.b16 %v302
    %v1180 = vunpack.c.h.b16 %v302
    %v1181 = vunpack.c.l.b16 %v303
    %v1182 = vunpack.c.h.b16 %v303
    %v1183 = vunpack.c.l.b16 %v304
    %v1184 = vunpack.c.h.b16 %v304
    %v1185 = vunpack.c.l.b16 %v305
    %v1186 = vunpack.c.h.b16 %v305
    %v1187 = vunpack.c.l.b16 %v306
    %v1188 = vunpack.c.h.b16 %v306
    %v1189 = vunpack.c.l.b16 %v307
    %v1190 = vunpack.c.h.b16 %v307
    %v1191 = vunpack.c.l.b16 %v308
    %v1192 = vunpack.c.h.b16 %v308
    %v1193 = vunpack.c.l.b16 %v309
    %v1194 = vunpack.c.h.b16 %v309
    %v1195 = vunpack.c.l.b16 %v310
    %v1196 = vunpack.c.h.b16 %v310
    %v1197 = vunpack.c.l.b16 %v311
    %v1198 = vunpack.c.h.b16 %v311
    %v1199 = vunpack.c.l.b16 %v312
    %v1200 = vunpack.c.h.b16 %v312
    %v1201 = vunpack.c.l.b16 %v313
    %v1202 = vunpack.c.h.b16 %v313
    %v1203 = vunpack.c.l.b16 %v314
    %v1204 = vunpack.c.h.b16 %v314
    %v1205 = vunpack.c.l.b16 %v315
    %v1206 = vunpack.c.h.b16 %v315
    %v1207 = vunpack.c.l.b16 %v316
    %v1208 = vunpack.c.h.b16 %v316
    %v1209 = vunpack.c.l.b16 %v317
    %v1210 = vunpack.c.h.b16 %v317
    %v1211 = vunpack.c.l.b16 %v318
    %v1212 = vunpack.c.h.b16 %v318
    %v1213 = vunpack.c.l.b16 %v319
    %v1214 = vunpack.c.h.b16 %v319
    %v1215 = vunpack.c.l.b16 %v320
    %v1216 = vunpack.c.h.b16 %v320
    %v1217 = vunpack.c.l.b16 %v321
    %v1218 = vunpack.c.h.b16 %v321
    %v1219 = vunpack.c.l.b16 %v322
    %v1220 = vunpack.c.h.b16 %v322
    %v1221 = vunpack.c.l.b16 %v323
    %v1222 = vunpack.c.h.b16 %v323
    %v1223 = vunpack.c.l.b16 %v324
    %v1224 = vunpack.c.h.b16 %v324
    %v1225 = vunpack.c.l.b16 %v325
    %v1226 = vunpack.c.h.b16 %v325
    %v1227 = vunpack.c.l.b16 %v326
    %v1228 = vunpack.c.h.b16 %v326
    %v1229 = vunpack.c.l.b16 %v327
    %v1230 = vunpack.c.h.b16 %v327
    %v1231 = vunpack.c.l.b16 %v328
    %v1232 = vunpack.c.h.b16 %v328
    %v1233 = vunpack.c.l.b16 %v329
    %v1234 = vunpack.c.h.b16 %v329
    %v1235 = vunpack.c.l.b16 %v330
    %v1236 = vunpack.c.h.b16 %v330
    %v1237 = vunpack.c.l.b16 %v331
    %v1238 = vunpack.c.h.b16 %v331
    %v1239 = vunpack.c.l.b16 %v332
    %v1240 = vunpack.c.h.b16 %v332
    %v1241 = vunpack.c.l.b16 %v333
    %v1242 = vunpack.c.h.b16 %v333
    %v1243 = vunpack.c.l.b16 %v334
    %v1244 = vunpack.c.h.b16 %v334
    %v1245 = vunpack.c.l.b16 %v335
    %v1246 = vunpack.c.h.b16 %v335
    %v1247 = vunpack.c.l.b16 %v336
    %v1248 = vunpack.c.h.b16 %v336
    %v1249 = vunpack.c.l.b16 %v337
    %v1250 = vunpack.c.h.b16 %v337
    %v1251 = vunpack.c.l.b16 %v338
    %v1252 = vunpack.c.h.b16 %v338
    %v1253 = vunpack.c.l.b16 %v339
    %v1254 = vunpack.c.h.b16 %v339
    %v1255 = vunpack.c.l.b16 %v340
    %v1256 = vunpack.c.h.b16 %v340
    %v1257 = vunpack.c.l.b16 %v341
    %v1258 = vunpack.c.h.b16 %v341
    %v1259 = vunpack.c.l.b16 %v342
    %v1260 = vunpack.c.h.b16 %v342
    %v1261 = vunpack.c.l.b16 %v343
    %v1262 = vunpack.c.h.b16 %v343
    %v1263 = vunpack.c.l.b16 %v344
    %v1264 = vunpack.c.h.b16 %v344
    %v1265 = vunpack.c.l.b16 %v345
    %v1266 = vunpack.c.h.b16 %v345
    %v1267 = vunpack.c.l.b16 %v346
    %v1268 = vunpack.c.h.b16 %v346
    %v1269 = vunpack.c.l.b16 %v347
    %v1270 = vunpack.c.h.b16 %v347
    %v1271 = vunpack.c.l.b16 %v348
    %v1272 = vunpack.c.h.b16 %v348
    %v1273 = vunpack.c.l.b16 %v349
    %v1274 = vunpack.c.h.b16 %v349
    %v1275 = vunpack.c.l.b16 %v350
    %v1276 = vunpack.c.h.b16 %v350
    %v1277 = vunpack.c.l.b16 %v351
    %v1278 = vunpack.c.h.b16 %v351
    %v1279 = vunpack.c.l.b16 %v352
    %v1280 = vunpack.c.h.b16 %v352
    %v1281 = vunpack.c.l.b16 %v353
    %v1282 = vunpack.c.h.b16 %v353
    %v1283 = vunpack.c.l.b16 %v354
    %v1284 = vunpack.c.h.b16 %v354
    %v1285 = vunpack.c.l.b16 %v355
    %v1286 = vunpack.c.h.b16 %v355
    %v1287 = vunpack.c.l.b16 %v356
    %v1288 = vunpack.c.h.b16 %v356
    %v1289 = vunpack.c.l.b16 %v357
    %v1290 = vunpack.c.h.b16 %v357
    %v1291 = vunpack.c.l.b16 %v358
    %v1292 = vunpack.c.h.b16 %v358
    %v1293 = vunpack.c.l.b16 %v359
    %v1294 = vunpack.c.h.b16 %v359
    %v1295 = vunpack.c.l.b16 %v360
    %v1296 = vunpack.c.h.b16 %v360
    %v1297 = vunpack.c.l.b16 %v361
    %v1298 = vunpack.c.h.b16 %v361
    %v1299 = vunpack.c.l.b16 %v362
    %v1300 = vunpack.c.h.b16 %v362
    %v1301 = vunpack.c.l.b16 %v363
    %v1302 = vunpack.c.h.b16 %v363
    %v1303 = vunpack.c.l.b16 %v364
    %v1304 = vunpack.c.h.b16 %v364
    %v1305 = vunpack.c.l.b16 %v365
    %v1306 = vunpack.c.h.b16 %v365
    %v1307 = vunpack.c.l.b16 %v366
    %v1308 = vunpack.c.h.b16 %v366
    %v1309 = vunpack.c.l.b16 %v367
    %v1310 = vunpack.c.h.b16 %v367
    %v1311 = vunpack.c.l.b16 %v368
    %v1312 = vunpack.c.h.b16 %v368
    %v1313 = vunpack.c.l.b16 %v369
    %v1314 = vunpack.c.h.b16 %v369
    %v1315 = vunpack.c.l.b16 %v370
    %v1316 = vunpack.c.h.b16 %v370
    %v1317 = vunpack.c.l.b16 %v371
    %v1318 = vunpack.c.h.b16 %v371
    %v1319 = vunpack.c.l.b16 %v372
    %v1320 = vunpack.c.h.b16 %v372
    %v1321 = vunpack.c.l.b16 %v373
    %v1322 = vunpack.c.h.b16 %v373
    %v1323 = vunpack.c.l.b16 %v374
    %v1324 = vunpack.c.h.b16 %v374
    %v1325 = vunpack.c.l.b16 %v375
    %v1326 = vunpack.c.h.b16 %v375
    %v1327 = vunpack.c.l.b16 %v376
    %v1328 = vunpack.c.h.b16 %v376
    %v1329 = vunpack.c.l.b16 %v377
    %v1330 = vunpack.c.h.b16 %v377
    %v1331 = vunpack.c.l.b16 %v378
    %v1332 = vunpack.c.h.b16 %v378
    %v1333 = vunpack.c.l.b16 %v379
    %v1334 = vunpack.c.h.b16 %v379
    %v1335 = vunpack.c.l.b16 %v380
    %v1336 = vunpack.c.h.b16 %v380
    %v1337 = vunpack.c.l.b16 %v381
    %v1338 = vunpack.c.h.b16 %v381
    %v1339 = vunpack.c.l.b16 %v382
    %v1340 = vunpack.c.h.b16 %v382
    %v1341 = vunpack.c.l.b16 %v383
    %v1342 = vunpack.c.h.b16 %v383
    %v1343 = vunpack.c.l.b16 %v384
    %v1344 = vunpack.c.h.b16 %v384
    %v1345 = vunpack.c.l.b16 %v385
    %v1346 = vunpack.c.h.b16 %v385
    %v1347 = vunpack.c.l.b16 %v386
    %v1348 = vunpack.c.h.b16 %v386
    %v1349 = vunpack.c.l.b16 %v387
    %v1350 = vunpack.c.h.b16 %v387
    %v1351 = vunpack.c.l.b16 %v388
    %v1352 = vunpack.c.h.b16 %v388
    %v1353 = vunpack.c.l.b16 %v389
    %v1354 = vunpack.c.h.b16 %v389
    %v1355 = vunpack.c.l.b16 %v390
    %v1356 = vunpack.c.h.b16 %v390
    %v1357 = vunpack.c.l.b16 %v391
    %v1358 = vunpack.c.h.b16 %v391
    %v1359 = vunpack.c.l.b16 %v392
    %v1360 = vunpack.c.h.b16 %v392
    %v1361 = vunpack.c.l.b16 %v393
    %v1362 = vunpack.c.h.b16 %v393
    %v1363 = vunpack.c.l.b16 %v394
    %v1364 = vunpack.c.h.b16 %v394
    %v1365 = vunpack.c.l.b16 %v395
    %v1366 = vunpack.c.h.b16 %v395
    %v1367 = vunpack.c.l.b16 %v396
    %v1368 = vunpack.c.h.b16 %v396
    %v1369 = vunpack.c.l.b16 %v397
    %v1370 = vunpack.c.h.b16 %v397
    %v1371 = vunpack.c.l.b16 %v398
    %v1372 = vunpack.c.h.b16 %v398
    %v1373 = vunpack.c.l.b16 %v399
    %v1374 = vunpack.c.h.b16 %v399
    %v1375 = vunpack.c.l.b16 %v400
    %v1376 = vunpack.c.h.b16 %v400
    %v1377 = vunpack.c.l.b16 %v401
    %v1378 = vunpack.c.h.b16 %v401
    %v1379 = vunpack.c.l.b16 %v402
    %v1380 = vunpack.c.h.b16 %v402
    %v1381 = vunpack.c.l.b16 %v403
    %v1382 = vunpack.c.h.b16 %v403
    %v1383 = vunpack.c.l.b16 %v404
    %v1384 = vunpack.c.h.b16 %v404
    %v1385 = vunpack.c.l.b16 %v405
    %v1386 = vunpack.c.h.b16 %v405
    %v1387 = vunpack.c.l.b16 %v406
    %v1388 = vunpack.c.h.b16 %v406
    %v1389 = vunpack.c.l.b16 %v407
    %v1390 = vunpack.c.h.b16 %v407
    %v1391 = vunpack.c.l.b16 %v408
    %v1392 = vunpack.c.h.b16 %v408
    %v1393 = vunpack.c.l.b16 %v409
    %v1394 = vunpack.c.h.b16 %v409
    %v1395 = vunpack.c.l.b16 %v410
    %v1396 = vunpack.c.h.b16 %v410
    %v1397 = vunpack.c.l.b16 %v411
    %v1398 = vunpack.c.h.b16 %v411
    %v1399 = vunpack.c.l.b16 %v412
    %v1400 = vunpack.c.h.b16 %v412
    %v1401 = vunpack.c.l.b16 %v413
    %v1402 = vunpack.c.h.b16 %v413
    %v1403 = vunpack.c.l.b16 %v414
    %v1404 = vunpack.c.h.b16 %v414
    %v1405 = vunpack.c.l.b16 %v415
    %v1406 = vunpack.c.h.b16 %v415
    %v1407 = vunpack.c.l.b16 %v416
    %v1408 = vunpack.c.h.b16 %v416
    %v1409 = vunpack.c.l.b16 %v417
    %v1410 = vunpack.c.h.b16 %v417
    %v1411 = vunpack.c.l.b16 %v418
    %v1412 = vunpack.c.h.b16 %v418
    %v1413 = vunpack.c.l.b16 %v419
    %v1414 = vunpack.c.h.b16 %v419
    %v1415 = vunpack.c.l.b16 %v420
    %v1416 = vunpack.c.h.b16 %v420
    %v1417 = vunpack.c.l.b16 %v421
    %v1418 = vunpack.c.h.b16 %v421
    %v1419 = vunpack.c.l.b16 %v422
    %v1420 = vunpack.c.h.b16 %v422
    %v1421 = vunpack.c.l.b16 %v423
    %v1422 = vunpack.c.h.b16 %v423
    %v1423 = vunpack.c.l.b16 %v424
    %v1424 = vunpack.c.h.b16 %v424
    %v1425 = vunpack.c.l.b16 %v425
    %v1426 = vunpack.c.h.b16 %v425
    %v1427 = vunpack.c.l.b16 %v426
    %v1428 = vunpack.c.h.b16 %v426
    %v1429 = vunpack.c.l.b16 %v427
    %v1430 = vunpack.c.h.b16 %v427
    %v1431 = vunpack.c.l.b16 %v428
    %v1432 = vunpack.c.h.b16 %v428
    %v1433 = vunpack.c.l.b16 %v429
    %v1434 = vunpack.c.h.b16 %v429
    %v1435 = vunpack.c.l.b16 %v430
    %v1436 = vunpack.c.h.b16 %v430
    %v1437 = vunpack.c.l.b16 %v431
    %v1438 = vunpack.c.h.b16 %v431
    %v1439 = vunpack.c.l.b16 %v432
    %v1440 = vunpack.c.h.b16 %v432
    %v1441 = vunpack.c.l.b16 %v433
    %v1442 = vunpack.c.h.b16 %v433
    %v1443 = vunpack.c.l.b16 %v434
    %v1444 = vunpack.c.h.b16 %v434
    %v1445 = vunpack.c.l.b16 %v435
    %v1446 = vunpack.c.h.b16 %v435
    %v1447 = vunpack.c.l.b16 %v436
    %v1448 = vunpack.c.h.b16 %v436
    %v1449 = vunpack.c.l.b16 %v437
    %v1450 = vunpack.c.h.b16 %v437
    %v1451 = vunpack.c.l.b16 %v438
    %v1452 = vunpack.c.h.b16 %v438
    %v1453 = vunpack.c.l.b16 %v439
    %v1454 = vunpack.c.h.b16 %v439
    %v1455 = vunpack.c.l.b16 %v440
    %v1456 = vunpack.c.h.b16 %v440
    %v1457 = vunpack.c.l.b16 %v441
    %v1458 = vunpack.c.h.b16 %v441
    %v1459 = vunpack.c.l.b16 %v442
    %v1460 = vunpack.c.h.b16 %v442
    %v1461 = vunpack.c.l.b16 %v443
    %v1462 = vunpack.c.h.b16 %v443
    %v1463 = vunpack.c.l.b16 %v444
    %v1464 = vunpack.c.h.b16 %v444
    %v1465 = vunpack.c.l.b16 %v445
    %v1466 = vunpack.c.h.b16 %v445
    %v1467 = vunpack.c.l.b16 %v446
    %v1468 = vunpack.c.h.b16 %v446
    %v1469 = vunpack.c.l.b16 %v447
    %v1470 = vunpack.c.h.b16 %v447
    %v1471 = vunpack.c.l.b16 %v448
    %v1472 = vunpack.c.h.b16 %v448
    %v1473 = vunpack.c.l.b16 %v449
    %v1474 = vunpack.c.h.b16 %v449
    %v1475 = vunpack.c.l.b16 %v450
    %v1476 = vunpack.c.h.b16 %v450
    %v1477 = vunpack.c.l.b16 %v451
    %v1478 = vunpack.c.h.b16 %v451
    %v1479 = vunpack.c.l.b16 %v452
    %v1480 = vunpack.c.h.b16 %v452
    %v1481 = vunpack.c.l.b16 %v453
    %v1482 = vunpack.c.h.b16 %v453
    %v1483 = vunpack.c.l.b16 %v454
    %v1484 = vunpack.c.h.b16 %v454
    %v1485 = vunpack.c.l.b16 %v455
    %v1486 = vunpack.c.h.b16 %v455
    %v1487 = vunpack.c.l.b16 %v456
    %v1488 = vunpack.c.h.b16 %v456
    %v1489 = vunpack.c.l.b16 %v457
    %v1490 = vunpack.c.h.b16 %v457
    %v1491 = vunpack.c.l.b16 %v458
    %v1492 = vunpack.c.h.b16 %v458
    %v1493 = vunpack.c.l.b16 %v459
    %v1494 = vunpack.c.h.b16 %v459
    %v1495 = vunpack.c.l.b16 %v460
    %v1496 = vunpack.c.h.b16 %v460
    %v1497 = vunpack.c.l.b16 %v461
    %v1498 = vunpack.c.h.b16 %v461
    %v1499 = vunpack.c.l.b16 %v462
    %v1500 = vunpack.c.h.b16 %v462
    %v1501 = vunpack.c.l.b16 %v463
    %v1502 = vunpack.c.h.b16 %v463
    %v1503 = vunpack.c.l.b16 %v464
    %v1504 = vunpack.c.h.b16 %v464
    %v1505 = vunpack.c.l.b16 %v465
    %v1506 = vunpack.c.h.b16 %v465
    %v1507 = vunpack.c.l.b16 %v466
    %v1508 = vunpack.c.h.b16 %v466
    %v1509 = vunpack.c.l.b16 %v467
    %v1510 = vunpack.c.h.b16 %v467
    %v1511 = vunpack.c.l.b16 %v468
    %v1512 = vunpack.c.h.b16 %v468
    %v1513 = vunpack.c.l.b16 %v469
    %v1514 = vunpack.c.h.b16 %v469
    %v1515 = vunpack.c.l.b16 %v470
    %v1516 = vunpack.c.h.b16 %v470
    %v1517 = vunpack.c.l.b16 %v471
    %v1518 = vunpack.c.h.b16 %v471
    %v1519 = vunpack.c.l.b16 %v472
    %v1520 = vunpack.c.h.b16 %v472
    %v1521 = vunpack.c.l.b16 %v473
    %v1522 = vunpack.c.h.b16 %v473
    %v1523 = vunpack.c.l.b16 %v474
    %v1524 = vunpack.c.h.b16 %v474
    %v1525 = vunpack.c.l.b16 %v475
    %v1526 = vunpack.c.h.b16 %v475
    %v1527 = vunpack.c.l.b16 %v476
    %v1528 = vunpack.c.h.b16 %v476
    %v1529 = vunpack.c.l.b16 %v477
    %v1530 = vunpack.c.h.b16 %v477
    %v1531 = vunpack.c.l.b16 %v478
    %v1532 = vunpack.c.h.b16 %v478
    %v1533 = vunpack.c.l.b16 %v479
    %v1534 = vunpack.c.h.b16 %v479
    %v1535 = vunpack.c.l.b16 %v480
    %v1536 = vunpack.c.h.b16 %v480
    %v1537 = vunpack.c.l.b16 %v481
    %v1538 = vunpack.c.h.b16 %v481
    %v1539 = vunpack.c.l.b16 %v482
    %v1540 = vunpack.c.h.b16 %v482
    %v1541 = vunpack.c.l.b16 %v483
    %v1542 = vunpack.c.h.b16 %v483
    %v1543 = vunpack.c.l.b16 %v484
    %v1544 = vunpack.c.h.b16 %v484
    %v1545 = vunpack.c.l.b16 %v485
    %v1546 = vunpack.c.h.b16 %v485
    %v1547 = vunpack.c.l.b16 %v486
    %v1548 = vunpack.c.h.b16 %v486
    %v1549 = vunpack.c.l.b16 %v487
    %v1550 = vunpack.c.h.b16 %v487
    %v1551 = vunpack.c.l.b16 %v488
    %v1552 = vunpack.c.h.b16 %v488
    %v1553 = vunpack.c.l.b16 %v489
    %v1554 = vunpack.c.h.b16 %v489
    %v1555 = vunpack.c.l.b16 %v490
    %v1556 = vunpack.c.h.b16 %v490
    %v1557 = vunpack.c.l.b16 %v491
    %v1558 = vunpack.c.h.b16 %v491
    %v1559 = vunpack.c.l.b16 %v492
    %v1560 = vunpack.c.h.b16 %v492
    %v1561 = vunpack.c.l.b16 %v493
    %v1562 = vunpack.c.h.b16 %v493
    %v1563 = vunpack.c.l.b16 %v494
    %v1564 = vunpack.c.h.b16 %v494
    %v1565 = vunpack.c.l.b16 %v495
    %v1566 = vunpack.c.h.b16 %v495
    %v1567 = vunpack.c.l.b16 %v496
    %v1568 = vunpack.c.h.b16 %v496
    %v1569 = vunpack.c.l.b16 %v497
    %v1570 = vunpack.c.h.b16 %v497
    %v1571 = vunpack.c.l.b16 %v498
    %v1572 = vunpack.c.h.b16 %v498
    %v1573 = vunpack.c.l.b16 %v499
    %v1574 = vunpack.c.h.b16 %v499
    %v1575 = vunpack.c.l.b16 %v500
    %v1576 = vunpack.c.h.b16 %v500
    %v1577 = vunpack.c.l.b16 %v501
    %v1578 = vunpack.c.h.b16 %v501
    %v1579 = vunpack.c.l.b16 %v502
    %v1580 = vunpack.c.h.b16 %v502
    %v1581 = vunpack.c.l.b16 %v503
    %v1582 = vunpack.c.h.b16 %v503
    %v1583 = vunpack.c.l.b16 %v504
    %v1584 = vunpack.c.h.b16 %v504
    %v1585 = vunpack.c.l.b16 %v505
    %v1586 = vunpack.c.h.b16 %v505
    %v1587 = vunpack.c.l.b16 %v506
    %v1588 = vunpack.c.h.b16 %v506
    %v1589 = vunpack.c.l.b16 %v507
    %v1590 = vunpack.c.h.b16 %v507
    %v1591 = vunpack.c.l.b16 %v508
    %v1592 = vunpack.c.h.b16 %v508
    %v1593 = vunpack.c.l.b16 %v509
    %v1594 = vunpack.c.h.b16 %v509
    %v1595 = vunpack.c.l.b16 %v510
    %v1596 = vunpack.c.h.b16 %v510
    %v1597 = vunpack.c.l.b16 %v511
    %v1598 = vunpack.c.h.b16 %v511
    %v1599 = vunpack.c.l.b16 %v512
    %v1600 = vunpack.c.h.b16 %v512
    %v1601 = vunpack.c.l.b16 %v513
    %v1602 = vunpack.c.h.b16 %v513
    %v1603 = vunpack.c.l.b16 %v514
    %v1604 = vunpack.c.h.b16 %v514
    %v1605 = vunpack.c.l.b16 %v515
    %v1606 = vunpack.c.h.b16 %v515
    %v1607 = vunpack.c.l.b16 %v516
    %v1608 = vunpack.c.h.b16 %v516
    %v1609 = vpack.c.b16 %v943, %v937
    %v1610 = vpack.c.b16 %v944, %v938
    %v1611 = vpack.c.b16 %v945, %v939
    %v1612 = vpack.c.b16 %v946, %v940
    %v1613 = vpack.c.b16 %v947, %v941
    %v1614 = vpack.c.b16 %v948, %v942
    %v1615 = vpack.c.b16 %v955, %v949
    %v1616 = vpack.c.b16 %v956, %v950
    %v1617 = vpack.c.b16 %v957, %v951
    %v1618 = vpack.c.b16 %v958, %v952
    %v1619 = vpack.c.b16 %v959, %v953
    %v1620 = vpack.c.b16 %v960, %v954
    %v1621 = vpack.c.b16 %v967, %v961
    %v1622 = vpack.c.b16 %v968, %v962
    %v1623 = vpack.c.b16 %v969, %v963
    %v1624 = vpack.c.b16 %v970, %v964
    %v1625 = vpack.c.b16 %v971, %v965
    %v1626 = vpack.c.b16 %v972, %v966
    %v1627 = vpack.c.b16 %v979, %v973
    %v1628 = vpack.c.b16 %v980, %v974
    %v1629 = vpack.c.b16 %v981, %v975
    %v1630 = vpack.c.b16 %v982, %v976
    %v1631 = vpack.c.b16 %v983, %v977
    %v1632 = vpack.c.b16 %v984, %v978
    %v1633 = vpack.c.b16 %v991, %v985
    %v1634 = vpack.c.b16 %v992, %v986
    %v1635 = vpack.c.b16 %v993, %v987
    %v1636 = vpack.c.b16 %v994, %v988
    %v1637 = vpack.c.b16 %v995, %v989
    %v1638 = vpack.c.b16 %v996, %v990
    %v1639 = vpack.c.b16 %v1003, %v997
    %v1640 = vpack.c.b16 %v1004, %v998
    %v1641 = vpack.c.b16 %v1005, %v999
    %v1642 = vpack.c.b16 %v1006, %v1000
    %v1643 = vpack.c.b16 %v1007, %v1001
    %v1644 = vpack.c.b16 %v1008, %v1002
    %v1645 = vpack.c.b16 %v1015, %v1009
    %v1646 = vpack.c.b16 %v1016, %v1010
    %v1647 = vpack.c.b16 %v1017, %v1011
    %v1648 = vpack.c.b16 %v1018, %v1012
    %v1649 = vpack.c.b16 %v1019, %v1013
    %v1650 = vpack.c.b16 %v1020, %v1014
    %v1651 = vpack.c.b16 %v1027, %v1021
    %v1652 = vpack.c.b16 %v1028, %v1022
    %v1653 = vpack.c.b16 %v1029, %v1023
    %v1654 = vpack.c.b16 %v1030, %v1024
    %v1655 = vpack.c.b16 %v1031, %v1025
    %v1656 = vpack.c.b16 %v1032, %v1026
    %v1657 = vpack.c.b16 %v1039, %v1033
    %v1658 = vpack.c.b16 %v1040, %v1034
    %v1659 = vpack.c.b16 %v1041, %v1035
    %v1660 = vpack.c.b16 %v1042, %v1036
    %v1661 = vpack.c.b16 %v1043, %v1037
    %v1662 = vpack.c.b16 %v1044, %v1038
    %v1663 = vpack.c.b16 %v1051, %v1045
    %v1664 = vpack.c.b16 %v1052, %v1046
    %v1665 = vpack.c.b16 %v1053, %v1047
    %v1666 = vpack.c.b16 %v1054, %v1048
    %v1667 = vpack.c.b16 %v1055, %v1049
    %v1668 = vpack.c.b16 %v1056, %v1050
    %v1669 = vpack.c.b16 %v1063, %v1057
    %v1670 = vpack.c.b16 %v1064, %v1058
    %v1671 = vpack.c.b16 %v1065, %v1059
    %v1672 = vpack.c.b16 %v1066, %v1060
    %v1673 = vpack.c.b16 %v1067, %v1061
    %v1674 = vpack.c.b16 %v1068, %v1062
    %v1675 = vpack.c.b16 %v1075, %v1069
    %v1676 = vpack.c.b16 %v1076, %v1070
    %v1677 = vpack.c.b16 %v1077, %v1071
    %v1678 = vpack.c.b16 %v1078, %v1072
    %v1679 = vpack.c.b16 %v1079, %v1073
    %v1680 = vpack.c.b16 %v1080, %v1074
    %v1681 = vpack.c.b16 %v1087, %v1081
    %v1682 = vpack.c.b16 %v1088, %v1082
    %v1683 = vpack.c.b16 %v1089, %v1083
    %v1684 = vpack.c.b16 %v1090, %v1084
    %v1685 = vpack.c.b16 %v1091, %v1085
    %v1686 = vpack.c.b16 %v1092, %v1086
    %v1687 = vpack.c.b16 %v1099, %v1093
    %v1688 = vpack.c.b16 %v1100, %v1094
    %v1689 = vpack.c.b16 %v1101, %v1095
    %v1690 = vpack.c.b16 %v1102, %v1096
    %v1691 = vpack.c.b16 %v1103, %v1097
    %v1692 = vpack.c.b16 %v1104, %v1098
    %v1693 = vpack.c.b16 %v1111, %v1105
    %v1694 = vpack.c.b16 %v1112, %v1106
    %v1695 = vpack.c.b16 %v1113, %v1107
    %v1696 = vpack.c.b16 %v1114, %v1108
    %v1697 = vpack.c.b16 %v1115, %v1109
    %v1698 = vpack.c.b16 %v1116, %v1110
    %v1699 = vpack.c.b16 %v1123, %v1117
    %v1700 = vpack.c.b16 %v1124, %v1118
    %v1701 = vpack.c.b16 %v1125, %v1119
    %v1702 = vpack.c.b16 %v1126, %v1120
    %v1703 = vpack.c.b16 %v1127, %v1121
    %v1704 = vpack.c.b16 %v1128, %v1122
    %v1705 = vpack.c.b16 %v1135, %v1129
    %v1706 = vpack.c.b16 %v1136, %v1130
    %v1707 = vpack.c.b16 %v1137, %v1131
    %v1708 = vpack.c.b16 %v1138, %v1132
    %v1709 = vpack.c.b16 %v1139, %v1133
    %v1710 = vpack.c.b16 %v1140, %v1134
    %v1711 = vpack.c.b16 %v1147, %v1141
    %v1712 = vpack.c.b16 %v1148, %v1142
    %v1713 = vpack.c.b16 %v1149, %v1143
    %v1714 = vpack.c.b16 %v1150, %v1144
    %v1715 = vpack.c.b16 %v1151, %v1145
    %v1716 = vpack.c.b16 %v1152, %v1146
    %v1717 = vpack.c.b16 %v1159, %v1153
    %v1718 = vpack.c.b16 %v1160, %v1154
    %v1719 = vpack.c.b16 %v1161, %v1155
    %v1720 = vpack.c.b16 %v1162, %v1156
    %v1721 = vpack.c.b16 %v1163, %v1157
    %v1722 = vpack.c.b16 %v1164, %v1158
    %v1723 = vpack.c.b16 %v1171, %v1165
    %v1724 = vpack.c.b16 %v1172, %v1166
    %v1725 = vpack.c.b16 %v1173, %v1167
    %v1726 = vpack.c.b16 %v1174, %v1168
    %v1727 = vpack.c.b16 %v1175, %v1169
    %v1728 = vpack.c.b16 %v1176, %v1170
    %v1729 = vpack.c.b16 %v1183, %v1177
    %v1730 = vpack.c.b16 %v1184, %v1178
    %v1731 = vpack.c.b16 %v1185, %v1179
    %v1732 = vpack.c.b16 %v1186, %v1180
    %v1733 = vpack.c.b16 %v1187, %v1181
    %v1734 = vpack.c.b16 %v1188, %v1182
    %v1735 = vpack.c.b16 %v1195, %v1189
    %v1736 = vpack.c.b16 %v1196, %v1190
    %v1737 = vpack.c.b16 %v1197, %v1191
    %v1738 = vpack.c.b16 %v1198, %v1192
    %v1739 = vpack.c.b16 %v1199, %v1193
    %v1740 = vpack.c.b16 %v1200, %v1194
    %v1741 = vpack.c.b16 %v1207, %v1201
    %v1742 = vpack.c.b16 %v1208, %v1202
    %v1743 = vpack.c.b16 %v1209, %v1203
    %v1744 = vpack.c.b16 %v1210, %v1204
    %v1745 = vpack.c.b16 %v1211, %v1205
    %v1746 = vpack.c.b16 %v1212, %v1206
    %v1747 = vpack.c.b16 %v1219, %v1213
    %v1748 = vpack.c.b16 %v1220, %v1214
    %v1749 = vpack.c.b16 %v1221, %v1215
    %v1750 = vpack.c.b16 %v1222, %v1216
    %v1751 = vpack.c.b16 %v1223, %v1217
    %v1752 = vpack.c.b16 %v1224, %v1218
    %v1753 = vpack.c.b16 %v1231, %v1225
    %v1754 = vpack.c.b16 %v1232, %v1226
    %v1755 = vpack.c.b16 %v1233, %v1227
    %v1756 = vpack.c.b16 %v1234, %v1228
    %v1757 = vpack.c.b16 %v1235, %v1229
    %v1758 = vpack.c.b16 %v1236, %v1230
    %v1759 = vpack.c.b16 %v1243, %v1237
    %v1760 = vpack.c.b16 %v1244, %v1238
    %v1761 = vpack.c.b16 %v1245, %v1239
    %v1762 = vpack.c.b16 %v1246, %v1240
    %v1763 = vpack.c.b16 %v1247, %v1241
    %v1764 = vpack.c.b16 %v1248, %v1242
    %v1765 = vpack.c.b16 %v1255, %v1249
    %v1766 = vpack.c.b16 %v1256, %v1250
    %v1767 = vpack.c.b16 %v1257, %v1251
    %v1768 = vpack.c.b16 %v1258, %v1252
    %v1769 = vpack.c.b16 %v1259, %v1253
    %v1770 = vpack.c.b16 %v1260, %v1254
    %v1771 = vpack.c.b16 %v1267, %v1261
    %v1772 = vpack.c.b16 %v1268, %v1262
    %v1773 = vpack.c.b16 %v1269, %v1263
    %v1774 = vpack.c.b16 %v1270, %v1264
    %v1775 = vpack.c.b16 %v1271, %v1265
    %v1776 = vpack.c.b16 %v1272, %v1266
    %v1777 = vpack.c.b16 %v1279, %v1273
    %v1778 = vpack.c.b16 %v1280, %v1274
    %v1779 = vpack.c.b16 %v1281, %v1275
    %v1780 = vpack.c.b16 %v1282, %v1276
    %v1781 = vpack.c.b16 %v1283, %v1277
    %v1782 = vpack.c.b16 %v1284, %v1278
    %v1783 = vpack.c.b16 %v1291, %v1285
    %v1784 = vpack.c.b16 %v1292, %v1286
    %v1785 = vpack.c.b16 %v1293, %v1287
    %v1786 = vpack.c.b16 %v1294, %v1288
    %v1787 = vpack.c.b16 %v1295, %v1289
    %v1788 = vpack.c.b16 %v1296, %v1290
    %v1789 = vpack.c.b16 %v1303, %v1297
    %v1790 = vpack.c.b16 %v1304, %v1298
    %v1791 = vpack.c.b16 %v1305, %v1299
    %v1792 = vpack.c.b16 %v1306, %v1300
    %v1793 = vpack.c.b16 %v1307, %v1301
    %v1794 = vpack.c.b16 %v1308, %v1302
    %v1795 = vpack.c.b16 %v1315, %v1309
    %v1796 = vpack.c.b16 %v1316, %v1310
    %v1797 = vpack.c.b16 %v1317, %v1311
    %v1798 = vpack.c.b16 %v1318, %v1312
    %v1799 = vpack.c.b16 %v1319, %v1313
    %v1800 = vpack.c.b16 %v1320, %v1314
    %v1801 = vpack.c.b16 %v1327, %v1321
    %v1802 = vpack.c.b16 %v1328, %v1322
    %v1803 = vpack.c.b16 %v1329, %v1323
    %v1804 = vpack.c.b16 %v1330, %v1324
    %v1805 = vpack.c.b16 %v1331, %v1325
    %v1806 = vpack.c.b16 %v1332, %v1326
    %v1807 = vpack.c.b16 %v1339, %v1333
    %v1808 = vpack.c.b16 %v1340, %v1334
    %v1809 = vpack.c.b16 %v1341, %v1335
    %v1810 = vpack.c.b16 %v1342, %v1336
    %v1811 = vpack.c.b16 %v1343, %v1337
    %v1812 = vpack.c.b16 %v1344, %v1338
    %v1813 = vpack.c.b16 %v1351, %v1345
    %v1814 = vpack.c.b16 %v1352, %v1346
    %v1815 = vpack.c.b16 %v1353, %v1347
    %v1816 = vpack.c.b16 %v1354, %v1348
    %v1817 = vpack.c.b16 %v1355, %v1349
    %v1818 = vpack.c.b16 %v1356, %v1350
    %v1819 = vpack.c.b16 %v1363, %v1357
    %v1820 = vpack.c.b16 %v1364, %v1358
    %v1821 = vpack.c.b16 %v1365, %v1359
    %v1822 = vpack.c.b16 %v1366, %v1360
    %v1823 = vpack.c.b16 %v1367, %v1361
    %v1824 = vpack.c.b16 %v1368, %v1362
    %v1825 = vpack.c.b16 %v1375, %v1369
    %v1826 = vpack.c.b16 %v1376, %v1370
    %v1827 = vpack.c.b16 %v1377, %v1371
    %v1828 = vpack.c.b16 %v1378, %v1372
    %v1829 = vpack.c.b16 %v1379, %v1373
    %v1830 = vpack.c.b16 %v1380, %v1374
    %v1831 = vpack.c.b16 %v1387, %v1381
    %v1832 = vpack.c.b16 %v1388, %v1382
    %v1833 = vpack.c.b16 %v1389, %v1383
    %v1834 = vpack.c.b16 %v1390, %v1384
    %v1835 = vpack.c.b16 %v1391, %v1385
    %v1836 = vpack.c.b16 %v1392, %v1386
    %v1837 = vpack.c.b16 %v1399, %v1393
    %v1838 = vpack.c.b16 %v1400, %v1394
    %v1839 = vpack.c.b16 %v1401, %v1395
    %v1840 = vpack.c.b16 %v1402, %v1396
    %v1841 = vpack.c.b16 %v1403, %v1397
    %v1842 = vpack.c.b16 %v1404, %v1398
    %v1843 = vpack.c.b16 %v1411, %v1405
    %v1844 = vpack.c.b16 %v1412, %v1406
    %v1845 = vpack.c.b16 %v1413, %v1407
    %v1846 = vpack.c.b16 %v1414, %v1408
    %v1847 = vpack.c.b16 %v1415, %v1409
    %v1848 = vpack.c.b16 %v1416, %v1410
    %v1849 = vpack.c.b16 %v1423, %v1417
    %v1850 = vpack.c.b16 %v1424, %v1418
    %v1851 = vpack.c.b16 %v1425, %v1419
    %v1852 = vpack.c.b16 %v1426, %v1420
    %v1853 = vpack.c.b16 %v1427, %v1421
    %v1854 = vpack.c.b16 %v1428, %v1422
    %v1855 = vpack.c.b16 %v1435, %v1429
    %v1856 = vpack.c.b16 %v1436, %v1430
    %v1857 = vpack.c.b16 %v1437, %v1431
    %v1858 = vpack.c.b16 %v1438, %v1432
    %v1859 = vpack.c.b16 %v1439, %v1433
    %v1860 = vpack.c.b16 %v1440, %v1434
    %v1861 = vpack.c.b16 %v1447, %v1441
    %v1862 = vpack.c.b16 %v1448, %v1442
    %v1863 = vpack.c.b16 %v1449, %v1443
    %v1864 = vpack.c.b16 %v1450, %v1444
    %v1865 = vpack.c.b16 %v1451, %v1445
    %v1866 = vpack.c.b16 %v1452, %v1446
    %v1867 = vpack.c.b16 %v1459, %v1453
    %v1868 = vpack.c.b16 %v1460, %v1454
    %v1869 = vpack.c.b16 %v1461, %v1455
    %v1870 = vpack.c.b16 %v1462, %v1456
    %v1871 = vpack.c.b16 %v1463, %v1457
    %v1872 = vpack.c.b16 %v1464, %v1458
    %v1873 = vpack.c.b16 %v1471, %v1465
    %v1874 = vpack.c.b16 %v1472, %v1466
    %v1875 = vpack.c.b16 %v1473, %v1467
    %v1876 = vpack.c.b16 %v1474, %v1468
    %v1877 = vpack.c.b16 %v1475, %v1469
    %v1878 = vpack.c.b16 %v1476, %v1470
    %v1879 = vpack.c.b16 %v1483, %v1477
    %v1880 = vpack.c.b16 %v1484, %v1478
    %v1881 = vpack.c.b16 %v1485, %v1479
    %v1882 = vpack.c.b16 %v1486, %v1480
    %v1883 = vpack.c.b16 %v1487, %v1481
    %v1884 = vpack.c.b16 %v1488, %v1482
    %v1885 = vpack.c.b16 %v1495, %v1489
    %v1886 = vpack.c.b16 %v1496, %v1490
    %v1887 = vpack.c.b16 %v1497, %v1491
    %v1888 = vpack.c.b16 %v1498, %v1492
    %v1889 = vpack.c.b16 %v1499, %v1493
    %v1890 = vpack.c.b16 %v1500, %v1494
    %v1891 = vpack.c.b16 %v1507, %v1501
    %v1892 = vpack.c.b16 %v1508, %v1502
    %v1893 = vpack.c.b16 %v1509, %v1503
    %v1894 = vpack.c.b16 %v1510, %v1504
    %v1895 = vpack.c.b16 %v1511, %v1505
    %v1896 = vpack.c.b16 %v1512, %v1506
    %v1897 = vpack.c.b16 %v1519, %v1513
    %v1898 = vpack.c.b16 %v1520, %v1514
    %v1899 = vpack.c.b16 %v1521, %v1515
    %v1900 = vpack.c.b16 %v1522, %v1516
    %v1901 = vpack.c.b16 %v1523, %v1517
    %v1902 = vpack.c.b16 %v1524, %v1518
    %v1903 = vpack.c.b16 %v1531, %v1525
    %v1904 = vpack.c.b16 %v1532, %v1526
    %v1905 = vpack.c.b16 %v1533, %v1527
    %v1906 = vpack.c.b16 %v1534, %v1528
    %v1907 = vpack.c.b16 %v1535, %v1529
    %v1908 = vpack.c.b16 %v1536, %v1530
    %v1909 = vpack.c.b16 %v1543, %v1537
    %v1910 = vpack.c.b16 %v1544, %v1538
    %v1911 = vpack.c.b16 %v1545, %v1539
    %v1912 = vpack.c.b16 %v1546, %v1540
    %v1913 = vpack.c.b16 %v1547, %v1541
    %v1914 = vpack.c.b16 %v1548, %v1542
    %v1915 = vpack.c.b16 %v1555, %v1549
    %v1916 = vpack.c.b16 %v1556, %v1550
    %v1917 = vpack.c.b16 %v1557, %v1551
    %v1918 = vpack.c.b16 %v1558, %v1552
    %v1919 = vpack.c.b16 %v1559, %v1553
    %v1920 = vpack.c.b16 %v1560, %v1554
    %v1921 = vpack.c.b16 %v1567, %v1561
    %v1922 = vpack.c.b16 %v1568, %v1562
    %v1923 = vpack.c.b16 %v1569, %v1563
    %v1924 = vpack.c.b16 %v1570, %v1564
    %v1925 = vpack.c.b16 %v1571, %v1565
    %v1926 = vpack.c.b16 %v1572, %v1566
    %v1927 = vpack.c.b16 %v1579, %v1573
    %v1928 = vpack.c.b16 %v1580, %v1574
    %v1929 = vpack.c.b16 %v1581, %v1575
    %v1930 = vpack.c.b16 %v1582, %v1576
    %v1931 = vpack.c.b16 %v1583, %v1577
    %v1932 = vpack.c.b16 %v1584, %v1578
    %v1933 = vpack.c.b16 %v1591, %v1585
    %v1934 = vpack.c.b16 %v1592, %v1586
    %v1935 = vpack.c.b16 %v1593, %v1587
    %v1936 = vpack.c.b16 %v1594, %v1588
    %v1937 = vpack.c.b16 %v1595, %v1589
    %v1938 = vpack.c.b16 %v1596, %v1590
    %v1939 = vpack.c.b16 %v1603, %v1597
    %v1940 = vpack.c.b16 %v1604, %v1598
    %v1941 = vpack.c.b16 %v1605, %v1599
    %v1942 = vpack.c.b16 %v1606, %v1600
    %v1943 = vpack.c.b16 %v1607, %v1601
    %v1944 = vpack.c.b16 %v1608, %v1602
    %2281 = vmatprep.subr.bf16.mxu0 %v1652
    %2282 = vmatpush1.bf16.msra.mxu0 %v1651
    %2283 = vmatprep.subr.bf16.mxu0 %v1646
    %2284 = vmatpush1.bf16.msra.mxu0 %v1645
    %2285 = vmatprep.subr.bf16.mxu0 %v1640
    %2286 = vmatpush1.bf16.msra.mxu0 %v1639
    %2287 = vmatprep.subr.bf16.mxu0 %v1634
    %2288 = vmatpush1.bf16.msra.mxu0 %v1633
    %2289 = vmatprep.subr.bf16.mxu0 %v1628
    %2290 = vmatpush1.bf16.msra.mxu0 %v1627
    %2291 = vmatprep.subr.bf16.mxu0 %v1622
    %2292 = vmatpush1.bf16.msra.mxu0 %v1621
    %2293 = vmatprep.subr.bf16.mxu0 %v1616
    %2294 = vmatpush1.bf16.msra.mxu0 %v1615
    %2295 = vmatprep.subr.bf16.mxu0 %v1610
    %2296 = vmatpush1.bf16.msra.mxu0 %v1609
    %2297 = vmatprep.subr.bf16.mxu0 %v1700
    %2298 = vmatpush2.bf16.msra.mxu0 %v1699
    %2299 = vmatprep.subr.bf16.mxu0 %v1694
    %2300 = vmatpush2.bf16.msra.mxu0 %v1693
    %2301 = vmatprep.subr.bf16.mxu0 %v1688
    %2302 = vmatpush2.bf16.msra.mxu0 %v1687
    %2303 = vmatprep.subr.bf16.mxu0 %v1682
    %2304 = vmatpush2.bf16.msra.mxu0 %v1681
    %2305 = vmatprep.subr.bf16.mxu0 %v1676
    %2306 = vmatpush2.bf16.msra.mxu0 %v1675
    %2307 = vmatprep.subr.bf16.mxu0 %v1670
    %2308 = vmatpush2.bf16.msra.mxu0 %v1669
    %2309 = vmatprep.subr.bf16.mxu0 %v1664
    %2310 = vmatpush2.bf16.msra.mxu0 %v1663
    %2311 = vmatprep.subr.bf16.mxu0 %v1658
    %2312 = vmatpush2.bf16.msra.mxu0 %v1657
    %2313 = vmatprep.mubr.bf16.mxu0 %v588
    %2314 = vmatmul.mubr.bf16.gmra.mxu0 %v587
    %v2315 = vpop.f32.mrf.mxu0
    %v2316 = vadd.f32 %v555, %v2315
    %v2317 = vpop.f32.mrf.mxu0
    %v2318 = vadd.f32 %v559, %v2317
    %v2319 = vpop.f32.mrf.mxu0
    %v2320 = vpop.f32.mrf.mxu0
    %2321 = vdwg.mxu0
    %2322 = vmatprep.subr.bf16.mxu0 %v1748
    %2323 = vmatpush1.bf16.msra.mxu0 %v1747
    %2324 = vmatprep.subr.bf16.mxu0 %v1742
    %2325 = vmatpush1.bf16.msra.mxu0 %v1741
    %2326 = vmatprep.subr.bf16.mxu0 %v1736
    %2327 = vmatpush1.bf16.msra.mxu0 %v1735
    %2328 = vmatprep.subr.bf16.mxu0 %v1730
    %2329 = vmatpush1.bf16.msra.mxu0 %v1729
    %2330 = vmatprep.subr.bf16.mxu0 %v1724
    %2331 = vmatpush1.bf16.msra.mxu0 %v1723
    %2332 = vmatprep.subr.bf16.mxu0 %v1718
    %2333 = vmatpush1.bf16.msra.mxu0 %v1717
    %2334 = vmatprep.subr.bf16.mxu0 %v1712
    %2335 = vmatpush1.bf16.msra.mxu0 %v1711
    %2336 = vmatprep.subr.bf16.mxu0 %v1706
    %2337 = vmatpush1.bf16.msra.mxu0 %v1705
    %2338 = vmatprep.subr.bf16.mxu0 %v1796
    %2339 = vmatpush2.bf16.msra.mxu0 %v1795
    %2340 = vmatprep.subr.bf16.mxu0 %v1790
    %2341 = vmatpush2.bf16.msra.mxu0 %v1789
    %2342 = vmatprep.subr.bf16.mxu0 %v1784
    %2343 = vmatpush2.bf16.msra.mxu0 %v1783
    %2344 = vmatprep.subr.bf16.mxu0 %v1778
    %2345 = vmatpush2.bf16.msra.mxu0 %v1777
    %2346 = vmatprep.subr.bf16.mxu0 %v1772
    %2347 = vmatpush2.bf16.msra.mxu0 %v1771
    %2348 = vmatprep.subr.bf16.mxu0 %v1766
    %2349 = vmatpush2.bf16.msra.mxu0 %v1765
    %2350 = vmatprep.subr.bf16.mxu0 %v1760
    %2351 = vmatpush2.bf16.msra.mxu0 %v1759
    %2352 = vmatprep.subr.bf16.mxu0 %v1754
    %2353 = vmatpush2.bf16.msra.mxu0 %v1753
    %2354 = vmatprep.mubr.bf16.mxu0 %v590
    %2355 = vmatmul.mubr.bf16.gmra.mxu0 %v589
    %v2356 = vpop.f32.mrf.mxu0
    %v2357 = vadd.f32 %v2316, %v2356
    %v2358 = vpop.f32.mrf.mxu0
    %v2359 = vadd.f32 %v2318, %v2358
    %v2360 = vpop.f32.mrf.mxu0
    %v2361 = vpop.f32.mrf.mxu0
    %2362 = vdwg.mxu0
    %2363 = vmatprep.subr.bf16.mxu0 %v1844
    %2364 = vmatpush1.bf16.msra.mxu0 %v1843
    %2365 = vmatprep.subr.bf16.mxu0 %v1838
    %2366 = vmatpush1.bf16.msra.mxu0 %v1837
    %2367 = vmatprep.subr.bf16.mxu0 %v1832
    %2368 = vmatpush1.bf16.msra.mxu0 %v1831
    %2369 = vmatprep.subr.bf16.mxu0 %v1826
    %2370 = vmatpush1.bf16.msra.mxu0 %v1825
    %2371 = vmatprep.subr.bf16.mxu0 %v1820
    %2372 = vmatpush1.bf16.msra.mxu0 %v1819
    %2373 = vmatprep.subr.bf16.mxu0 %v1814
    %2374 = vmatpush1.bf16.msra.mxu0 %v1813
    %2375 = vmatprep.subr.bf16.mxu0 %v1808
    %2376 = vmatpush1.bf16.msra.mxu0 %v1807
    %2377 = vmatprep.subr.bf16.mxu0 %v1802
    %2378 = vmatpush1.bf16.msra.mxu0 %v1801
    %2379 = vmatprep.subr.bf16.mxu0 %v1892
    %2380 = vmatpush2.bf16.msra.mxu0 %v1891
    %2381 = vmatprep.subr.bf16.mxu0 %v1886
    %2382 = vmatpush2.bf16.msra.mxu0 %v1885
    %2383 = vmatprep.subr.bf16.mxu0 %v1880
    %2384 = vmatpush2.bf16.msra.mxu0 %v1879
    %2385 = vmatprep.subr.bf16.mxu0 %v1874
    %2386 = vmatpush2.bf16.msra.mxu0 %v1873
    %2387 = vmatprep.subr.bf16.mxu0 %v1868
    %2388 = vmatpush2.bf16.msra.mxu0 %v1867
    %2389 = vmatprep.subr.bf16.mxu0 %v1862
    %2390 = vmatpush2.bf16.msra.mxu0 %v1861
    %2391 = vmatprep.subr.bf16.mxu0 %v1856
    %2392 = vmatpush2.bf16.msra.mxu0 %v1855
    %2393 = vmatprep.subr.bf16.mxu0 %v1850
    %2394 = vmatpush2.bf16.msra.mxu0 %v1849
    %2395 = vmatprep.mubr.bf16.mxu0 %v592
    %2396 = vmatmul.mubr.bf16.gmra.mxu0 %v591
    %v2397 = vpop.f32.mrf.mxu0
    %v2398 = vadd.f32 %v2357, %v2397
    %v2399 = vpop.f32.mrf.mxu0
    %v2400 = vadd.f32 %v2359, %v2399
    %v2401 = vpop.f32.mrf.mxu0
    %v2402 = vpop.f32.mrf.mxu0
    %2403 = vdwg.mxu0
    %2404 = vmatprep.subr.bf16.mxu0 %v1940
    %2405 = vmatpush1.bf16.msra.mxu0 %v1939
    %2406 = vmatprep.subr.bf16.mxu0 %v1934
    %2407 = vmatpush1.bf16.msra.mxu0 %v1933
    %2408 = vmatprep.subr.bf16.mxu0 %v1928
    %2409 = vmatpush1.bf16.msra.mxu0 %v1927
    %2410 = vmatprep.subr.bf16.mxu0 %v1922
    %2411 = vmatpush1.bf16.msra.mxu0 %v1921
    %2412 = vmatprep.subr.bf16.mxu0 %v1916
    %2413 = vmatpush1.bf16.msra.mxu0 %v1915
    %2414 = vmatprep.subr.bf16.mxu0 %v1910
    %2415 = vmatpush1.bf16.msra.mxu0 %v1909
    %2416 = vmatprep.subr.bf16.mxu0 %v1904
    %2417 = vmatpush1.bf16.msra.mxu0 %v1903
    %2418 = vmatprep.subr.bf16.mxu0 %v1898
    %2419 = vmatpush1.bf16.msra.mxu0 %v1897
    %2420 = vmatprep.subr.bf16.mxu0 0
    %2421 = vmatpush2.bf16.msra.mxu0 0
    %2422 = vmatprep.subr.bf16.mxu0 0
    %2423 = vmatpush2.bf16.msra.mxu0 0
    %2424 = vmatprep.subr.bf16.mxu0 0
    %2425 = vmatpush2.bf16.msra.mxu0 0
    %2426 = vmatprep.subr.bf16.mxu0 0
    %2427 = vmatpush2.bf16.msra.mxu0 0
    %2428 = vmatprep.subr.bf16.mxu0 0
    %2429 = vmatpush2.bf16.msra.mxu0 0
    %2430 = vmatprep.subr.bf16.mxu0 0
    %2431 = vmatpush2.bf16.msra.mxu0 0
    %2432 = vmatprep.subr.bf16.mxu0 0
    %2433 = vmatpush2.bf16.msra.mxu0 0
    %2434 = vmatprep.subr.bf16.mxu0 0
    %2435 = vmatpush2.bf16.msra.mxu0 0
    %2436 = vmatprep.mubr.bf16.mxu0 0
    %2437 = vmatmul.mubr.bf16.gmra.mxu0 %v593
    %v2438 = vpop.f32.mrf.mxu0
    %v2439 = vadd.f32 %v2398, %v2438
    %v2440 = vpop.f32.mrf.mxu0
    %v2441 = vadd.f32 %v2400, %v2440
    %v2442 = vpop.f32.mrf.mxu0
    %v2443 = vpop.f32.mrf.mxu0
    %2444 = vdwg.mxu0
    %2445 = vmatprep.subr.bf16.mxu0 %v1654
    %2446 = vmatpush1.bf16.msra.mxu0 %v1653
    %2447 = vmatprep.subr.bf16.mxu0 %v1648
    %2448 = vmatpush1.bf16.msra.mxu0 %v1647
    %2449 = vmatprep.subr.bf16.mxu0 %v1642
    %2450 = vmatpush1.bf16.msra.mxu0 %v1641
    %2451 = vmatprep.subr.bf16.mxu0 %v1636
    %2452 = vmatpush1.bf16.msra.mxu0 %v1635
    %2453 = vmatprep.subr.bf16.mxu0 %v1630
    %2454 = vmatpush1.bf16.msra.mxu0 %v1629
    %2455 = vmatprep.subr.bf16.mxu0 %v1624
    %2456 = vmatpush1.bf16.msra.mxu0 %v1623
    %2457 = vmatprep.subr.bf16.mxu0 %v1618
    %2458 = vmatpush1.bf16.msra.mxu0 %v1617
    %2459 = vmatprep.subr.bf16.mxu0 %v1612
    %2460 = vmatpush1.bf16.msra.mxu0 %v1611
    %2461 = vmatprep.subr.bf16.mxu0 %v1702
    %2462 = vmatpush2.bf16.msra.mxu0 %v1701
    %2463 = vmatprep.subr.bf16.mxu0 %v1696
    %2464 = vmatpush2.bf16.msra.mxu0 %v1695
    %2465 = vmatprep.subr.bf16.mxu0 %v1690
    %2466 = vmatpush2.bf16.msra.mxu0 %v1689
    %2467 = vmatprep.subr.bf16.mxu0 %v1684
    %2468 = vmatpush2.bf16.msra.mxu0 %v1683
    %2469 = vmatprep.subr.bf16.mxu0 %v1678
    %2470 = vmatpush2.bf16.msra.mxu0 %v1677
    %2471 = vmatprep.subr.bf16.mxu0 %v1672
    %2472 = vmatpush2.bf16.msra.mxu0 %v1671
    %2473 = vmatprep.subr.bf16.mxu0 %v1666
    %2474 = vmatpush2.bf16.msra.mxu0 %v1665
    %2475 = vmatprep.subr.bf16.mxu0 %v1660
    %2476 = vmatpush2.bf16.msra.mxu0 %v1659
    %2477 = vmatprep.mubr.bf16.mxu0 %v588
    %2478 = vmatmul.mubr.bf16.gmra.mxu0 %v587
    %v2479 = vpop.f32.mrf.mxu0
    %v2480 = vadd.f32 %v563, %v2479
    %v2481 = vpop.f32.mrf.mxu0
    %v2482 = vadd.f32 %v567, %v2481
    %v2483 = vpop.f32.mrf.mxu0
    %v2484 = vpop.f32.mrf.mxu0
    %2485 = vdwg.mxu0
    %2486 = vmatprep.subr.bf16.mxu0 %v1750
    %2487 = vmatpush1.bf16.msra.mxu0 %v1749
    %2488 = vmatprep.subr.bf16.mxu0 %v1744
    %2489 = vmatpush1.bf16.msra.mxu0 %v1743
    %2490 = vmatprep.subr.bf16.mxu0 %v1738
    %2491 = vmatpush1.bf16.msra.mxu0 %v1737
    %2492 = vmatprep.subr.bf16.mxu0 %v1732
    %2493 = vmatpush1.bf16.msra.mxu0 %v1731
    %2494 = vmatprep.subr.bf16.mxu0 %v1726
    %2495 = vmatpush1.bf16.msra.mxu0 %v1725
    %2496 = vmatprep.subr.bf16.mxu0 %v1720
    %2497 = vmatpush1.bf16.msra.mxu0 %v1719
    %2498 = vmatprep.subr.bf16.mxu0 %v1714
    %2499 = vmatpush1.bf16.msra.mxu0 %v1713
    %2500 = vmatprep.subr.bf16.mxu0 %v1708
    %2501 = vmatpush1.bf16.msra.mxu0 %v1707
    %2502 = vmatprep.subr.bf16.mxu0 %v1798
    %2503 = vmatpush2.bf16.msra.mxu0 %v1797
    %2504 = vmatprep.subr.bf16.mxu0 %v1792
    %2505 = vmatpush2.bf16.msra.mxu0 %v1791
    %2506 = vmatprep.subr.bf16.mxu0 %v1786
    %2507 = vmatpush2.bf16.msra.mxu0 %v1785
    %2508 = vmatprep.subr.bf16.mxu0 %v1780
    %2509 = vmatpush2.bf16.msra.mxu0 %v1779
    %2510 = vmatprep.subr.bf16.mxu0 %v1774
    %2511 = vmatpush2.bf16.msra.mxu0 %v1773
    %2512 = vmatprep.subr.bf16.mxu0 %v1768
    %2513 = vmatpush2.bf16.msra.mxu0 %v1767
    %2514 = vmatprep.subr.bf16.mxu0 %v1762
    %2515 = vmatpush2.bf16.msra.mxu0 %v1761
    %2516 = vmatprep.subr.bf16.mxu0 %v1756
    %2517 = vmatpush2.bf16.msra.mxu0 %v1755
    %2518 = vmatprep.mubr.bf16.mxu0 %v590
    %2519 = vmatmul.mubr.bf16.gmra.mxu0 %v589
    %v2520 = vpop.f32.mrf.mxu0
    %v2521 = vadd.f32 %v2480, %v2520
    %v2522 = vpop.f32.mrf.mxu0
    %v2523 = vadd.f32 %v2482, %v2522
    %v2524 = vpop.f32.mrf.mxu0
    %v2525 = vpop.f32.mrf.mxu0
    %2526 = vdwg.mxu0
    %2527 = vmatprep.subr.bf16.mxu0 %v1846
    %2528 = vmatpush1.bf16.msra.mxu0 %v1845
    %2529 = vmatprep.subr.bf16.mxu0 %v1840
    %2530 = vmatpush1.bf16.msra.mxu0 %v1839
    %2531 = vmatprep.subr.bf16.mxu0 %v1834
    %2532 = vmatpush1.bf16.msra.mxu0 %v1833
    %2533 = vmatprep.subr.bf16.mxu0 %v1828
    %2534 = vmatpush1.bf16.msra.mxu0 %v1827
    %2535 = vmatprep.subr.bf16.mxu0 %v1822
    %2536 = vmatpush1.bf16.msra.mxu0 %v1821
    %2537 = vmatprep.subr.bf16.mxu0 %v1816
    %2538 = vmatpush1.bf16.msra.mxu0 %v1815
    %2539 = vmatprep.subr.bf16.mxu0 %v1810
    %2540 = vmatpush1.bf16.msra.mxu0 %v1809
    %2541 = vmatprep.subr.bf16.mxu0 %v1804
    %2542 = vmatpush1.bf16.msra.mxu0 %v1803
    %2543 = vmatprep.subr.bf16.mxu0 %v1894
    %2544 = vmatpush2.bf16.msra.mxu0 %v1893
    %2545 = vmatprep.subr.bf16.mxu0 %v1888
    %2546 = vmatpush2.bf16.msra.mxu0 %v1887
    %2547 = vmatprep.subr.bf16.mxu0 %v1882
    %2548 = vmatpush2.bf16.msra.mxu0 %v1881
    %2549 = vmatprep.subr.bf16.mxu0 %v1876
    %2550 = vmatpush2.bf16.msra.mxu0 %v1875
    %2551 = vmatprep.subr.bf16.mxu0 %v1870
    %2552 = vmatpush2.bf16.msra.mxu0 %v1869
    %2553 = vmatprep.subr.bf16.mxu0 %v1864
    %2554 = vmatpush2.bf16.msra.mxu0 %v1863
    %2555 = vmatprep.subr.bf16.mxu0 %v1858
    %2556 = vmatpush2.bf16.msra.mxu0 %v1857
    %2557 = vmatprep.subr.bf16.mxu0 %v1852
    %2558 = vmatpush2.bf16.msra.mxu0 %v1851
    %2559 = vmatprep.mubr.bf16.mxu0 %v592
    %2560 = vmatmul.mubr.bf16.gmra.mxu0 %v591
    %v2561 = vpop.f32.mrf.mxu0
    %v2562 = vadd.f32 %v2521, %v2561
    %v2563 = vpop.f32.mrf.mxu0
    %v2564 = vadd.f32 %v2523, %v2563
    %v2565 = vpop.f32.mrf.mxu0
    %v2566 = vpop.f32.mrf.mxu0
    %2567 = vdwg.mxu0
    %2568 = vmatprep.subr.bf16.mxu0 %v1942
    %2569 = vmatpush1.bf16.msra.mxu0 %v1941
    %2570 = vmatprep.subr.bf16.mxu0 %v1936
    %2571 = vmatpush1.bf16.msra.mxu0 %v1935
    %2572 = vmatprep.subr.bf16.mxu0 %v1930
    %2573 = vmatpush1.bf16.msra.mxu0 %v1929
    %2574 = vmatprep.subr.bf16.mxu0 %v1924
    %2575 = vmatpush1.bf16.msra.mxu0 %v1923
    %2576 = vmatprep.subr.bf16.mxu0 %v1918
    %2577 = vmatpush1.bf16.msra.mxu0 %v1917
    %2578 = vmatprep.subr.bf16.mxu0 %v1912
    %2579 = vmatpush1.bf16.msra.mxu0 %v1911
    %2580 = vmatprep.subr.bf16.mxu0 %v1906
    %2581 = vmatpush1.bf16.msra.mxu0 %v1905
    %2582 = vmatprep.subr.bf16.mxu0 %v1900
    %2583 = vmatpush1.bf16.msra.mxu0 %v1899
    %2584 = vmatprep.subr.bf16.mxu0 0
    %2585 = vmatpush2.bf16.msra.mxu0 0
    %2586 = vmatprep.subr.bf16.mxu0 0
    %2587 = vmatpush2.bf16.msra.mxu0 0
    %2588 = vmatprep.subr.bf16.mxu0 0
    %2589 = vmatpush2.bf16.msra.mxu0 0
    %2590 = vmatprep.subr.bf16.mxu0 0
    %2591 = vmatpush2.bf16.msra.mxu0 0
    %2592 = vmatprep.subr.bf16.mxu0 0
    %2593 = vmatpush2.bf16.msra.mxu0 0
    %2594 = vmatprep.subr.bf16.mxu0 0
    %2595 = vmatpush2.bf16.msra.mxu0 0
    %2596 = vmatprep.subr.bf16.mxu0 0
    %2597 = vmatpush2.bf16.msra.mxu0 0
    %2598 = vmatprep.subr.bf16.mxu0 0
    %2599 = vmatpush2.bf16.msra.mxu0 0
    %2600 = vmatprep.mubr.bf16.mxu0 0
    %2601 = vmatmul.mubr.bf16.gmra.mxu0 %v593
    %v2602 = vpop.f32.mrf.mxu0
    %v2603 = vadd.f32 %v2562, %v2602
    %v2604 = vpop.f32.mrf.mxu0
    %v2605 = vadd.f32 %v2564, %v2604
    %v2606 = vpop.f32.mrf.mxu0
    %v2607 = vpop.f32.mrf.mxu0
    %2608 = vdwg.mxu0
    %2609 = vmatprep.subr.bf16.mxu0 %v1656
    %2610 = vmatpush1.bf16.msra.mxu0 %v1655
    %2611 = vmatprep.subr.bf16.mxu0 %v1650
    %2612 = vmatpush1.bf16.msra.mxu0 %v1649
    %2613 = vmatprep.subr.bf16.mxu0 %v1644
    %2614 = vmatpush1.bf16.msra.mxu0 %v1643
    %2615 = vmatprep.subr.bf16.mxu0 %v1638
    %2616 = vmatpush1.bf16.msra.mxu0 %v1637
    %2617 = vmatprep.subr.bf16.mxu0 %v1632
    %2618 = vmatpush1.bf16.msra.mxu0 %v1631
    %2619 = vmatprep.subr.bf16.mxu0 %v1626
    %2620 = vmatpush1.bf16.msra.mxu0 %v1625
    %2621 = vmatprep.subr.bf16.mxu0 %v1620
    %2622 = vmatpush1.bf16.msra.mxu0 %v1619
    %2623 = vmatprep.subr.bf16.mxu0 %v1614
    %2624 = vmatpush1.bf16.msra.mxu0 %v1613
    %2625 = vmatprep.subr.bf16.mxu0 %v1704
    %2626 = vmatpush2.bf16.msra.mxu0 %v1703
    %2627 = vmatprep.subr.bf16.mxu0 %v1698
    %2628 = vmatpush2.bf16.msra.mxu0 %v1697
    %2629 = vmatprep.subr.bf16.mxu0 %v1692
    %2630 = vmatpush2.bf16.msra.mxu0 %v1691
    %2631 = vmatprep.subr.bf16.mxu0 %v1686
    %2632 = vmatpush2.bf16.msra.mxu0 %v1685
    %2633 = vmatprep.subr.bf16.mxu0 %v1680
    %2634 = vmatpush2.bf16.msra.mxu0 %v1679
    %2635 = vmatprep.subr.bf16.mxu0 %v1674
    %2636 = vmatpush2.bf16.msra.mxu0 %v1673
    %2637 = vmatprep.subr.bf16.mxu0 %v1668
    %2638 = vmatpush2.bf16.msra.mxu0 %v1667
    %2639 = vmatprep.subr.bf16.mxu0 %v1662
    %2640 = vmatpush2.bf16.msra.mxu0 %v1661
    %2641 = vmatprep.mubr.bf16.mxu0 %v588
    %2642 = vmatmul.mubr.bf16.gmra.mxu0 %v587
    %v2643 = vpop.f32.mrf.mxu0
    %v2644 = vadd.f32 %v571, %v2643
    %v2645 = vpop.f32.mrf.mxu0
    %v2646 = vadd.f32 %v575, %v2645
    %v2647 = vpop.f32.mrf.mxu0
    %v2648 = vpop.f32.mrf.mxu0
    %2649 = vdwg.mxu0
    %2650 = vmatprep.subr.bf16.mxu0 %v1752
    %2651 = vmatpush1.bf16.msra.mxu0 %v1751
    %2652 = vmatprep.subr.bf16.mxu0 %v1746
    %2653 = vmatpush1.bf16.msra.mxu0 %v1745
    %2654 = vmatprep.subr.bf16.mxu0 %v1740
    %2655 = vmatpush1.bf16.msra.mxu0 %v1739
    %2656 = vmatprep.subr.bf16.mxu0 %v1734
    %2657 = vmatpush1.bf16.msra.mxu0 %v1733
    %2658 = vmatprep.subr.bf16.mxu0 %v1728
    %2659 = vmatpush1.bf16.msra.mxu0 %v1727
    %2660 = vmatprep.subr.bf16.mxu0 %v1722
    %2661 = vmatpush1.bf16.msra.mxu0 %v1721
    %2662 = vmatprep.subr.bf16.mxu0 %v1716
    %2663 = vmatpush1.bf16.msra.mxu0 %v1715
    %2664 = vmatprep.subr.bf16.mxu0 %v1710
    %2665 = vmatpush1.bf16.msra.mxu0 %v1709
    %2666 = vmatprep.subr.bf16.mxu0 %v1800
    %2667 = vmatpush2.bf16.msra.mxu0 %v1799
    %2668 = vmatprep.subr.bf16.mxu0 %v1794
    %2669 = vmatpush2.bf16.msra.mxu0 %v1793
    %2670 = vmatprep.subr.bf16.mxu0 %v1788
    %2671 = vmatpush2.bf16.msra.mxu0 %v1787
    %2672 = vmatprep.subr.bf16.mxu0 %v1782
    %2673 = vmatpush2.bf16.msra.mxu0 %v1781
    %2674 = vmatprep.subr.bf16.mxu0 %v1776
    %2675 = vmatpush2.bf16.msra.mxu0 %v1775
    %2676 = vmatprep.subr.bf16.mxu0 %v1770
    %2677 = vmatpush2.bf16.msra.mxu0 %v1769
    %2678 = vmatprep.subr.bf16.mxu0 %v1764
    %2679 = vmatpush2.bf16.msra.mxu0 %v1763
    %2680 = vmatprep.subr.bf16.mxu0 %v1758
    %2681 = vmatpush2.bf16.msra.mxu0 %v1757
    %2682 = vmatprep.mubr.bf16.mxu0 %v590
    %2683 = vmatmul.mubr.bf16.gmra.mxu0 %v589
    %v2684 = vpop.f32.mrf.mxu0
    %v2685 = vadd.f32 %v2644, %v2684
    %v2686 = vpop.f32.mrf.mxu0
    %v2687 = vadd.f32 %v2646, %v2686
    %v2688 = vpop.f32.mrf.mxu0
    %v2689 = vpop.f32.mrf.mxu0
    %2690 = vdwg.mxu0
    %2691 = vmatprep.subr.bf16.mxu0 %v1848
    %2692 = vmatpush1.bf16.msra.mxu0 %v1847
    %2693 = vmatprep.subr.bf16.mxu0 %v1842
    %2694 = vmatpush1.bf16.msra.mxu0 %v1841
    %2695 = vmatprep.subr.bf16.mxu0 %v1836
    %2696 = vmatpush1.bf16.msra.mxu0 %v1835
    %2697 = vmatprep.subr.bf16.mxu0 %v1830
    %2698 = vmatpush1.bf16.msra.mxu0 %v1829
    %2699 = vmatprep.subr.bf16.mxu0 %v1824
    %2700 = vmatpush1.bf16.msra.mxu0 %v1823
    %2701 = vmatprep.subr.bf16.mxu0 %v1818
    %2702 = vmatpush1.bf16.msra.mxu0 %v1817
    %2703 = vmatprep.subr.bf16.mxu0 %v1812
    %2704 = vmatpush1.bf16.msra.mxu0 %v1811
    %2705 = vmatprep.subr.bf16.mxu0 %v1806
    %2706 = vmatpush1.bf16.msra.mxu0 %v1805
    %2707 = vmatprep.subr.bf16.mxu0 %v1896
    %2708 = vmatpush2.bf16.msra.mxu0 %v1895
    %2709 = vmatprep.subr.bf16.mxu0 %v1890
    %2710 = vmatpush2.bf16.msra.mxu0 %v1889
    %2711 = vmatprep.subr.bf16.mxu0 %v1884
    %2712 = vmatpush2.bf16.msra.mxu0 %v1883
    %2713 = vmatprep.subr.bf16.mxu0 %v1878
    %2714 = vmatpush2.bf16.msra.mxu0 %v1877
    %2715 = vmatprep.subr.bf16.mxu0 %v1872
    %2716 = vmatpush2.bf16.msra.mxu0 %v1871
    %2717 = vmatprep.subr.bf16.mxu0 %v1866
    %2718 = vmatpush2.bf16.msra.mxu0 %v1865
    %2719 = vmatprep.subr.bf16.mxu0 %v1860
    %2720 = vmatpush2.bf16.msra.mxu0 %v1859
    %2721 = vmatprep.subr.bf16.mxu0 %v1854
    %2722 = vmatpush2.bf16.msra.mxu0 %v1853
    %2723 = vmatprep.mubr.bf16.mxu0 %v592
    %2724 = vmatmul.mubr.bf16.gmra.mxu0 %v591
    %v2725 = vpop.f32.mrf.mxu0
    %v2726 = vadd.f32 %v2685, %v2725
    %v2727 = vpop.f32.mrf.mxu0
    %v2728 = vadd.f32 %v2687, %v2727
    %v2729 = vpop.f32.mrf.mxu0
    %v2730 = vpop.f32.mrf.mxu0
    %2731 = vdwg.mxu0
    %2732 = vmatprep.subr.bf16.mxu0 %v1944
    %2733 = vmatpush1.bf16.msra.mxu0 %v1943
    %2734 = vmatprep.subr.bf16.mxu0 %v1938
    %2735 = vmatpush1.bf16.msra.mxu0 %v1937
    %2736 = vmatprep.subr.bf16.mxu0 %v1932
    %2737 = vmatpush1.bf16.msra.mxu0 %v1931
    %2738 = vmatprep.subr.bf16.mxu0 %v1926
    %2739 = vmatpush1.bf16.msra.mxu0 %v1925
    %2740 = vmatprep.subr.bf16.mxu0 %v1920
    %2741 = vmatpush1.bf16.msra.mxu0 %v1919
    %2742 = vmatprep.subr.bf16.mxu0 %v1914
    %2743 = vmatpush1.bf16.msra.mxu0 %v1913
    %2744 = vmatprep.subr.bf16.mxu0 %v1908
    %2745 = vmatpush1.bf16.msra.mxu0 %v1907
    %2746 = vmatprep.subr.bf16.mxu0 %v1902
    %2747 = vmatpush1.bf16.msra.mxu0 %v1901
    %2748 = vmatprep.subr.bf16.mxu0 0
    %2749 = vmatpush2.bf16.msra.mxu0 0
    %2750 = vmatprep.subr.bf16.mxu0 0
    %2751 = vmatpush2.bf16.msra.mxu0 0
    %2752 = vmatprep.subr.bf16.mxu0 0
    %2753 = vmatpush2.bf16.msra.mxu0 0
    %2754 = vmatprep.subr.bf16.mxu0 0
    %2755 = vmatpush2.bf16.msra.mxu0 0
    %2756 = vmatprep.subr.bf16.mxu0 0
    %2757 = vmatpush2.bf16.msra.mxu0 0
    %2758 = vmatprep.subr.bf16.mxu0 0
    %2759 = vmatpush2.bf16.msra.mxu0 0
    %2760 = vmatprep.subr.bf16.mxu0 0
    %2761 = vmatpush2.bf16.msra.mxu0 0
    %2762 = vmatprep.subr.bf16.mxu0 0
    %2763 = vmatpush2.bf16.msra.mxu0 0
    %2764 = vmatprep.mubr.bf16.mxu0 0
    %2765 = vmatmul.mubr.bf16.gmra.mxu0 %v593
    %v2766 = vpop.f32.mrf.mxu0
    %v2767 = vadd.f32 %v2726, %v2766
    %v2768 = vpop.f32.mrf.mxu0
    %v2769 = vadd.f32 %v2728, %v2768
    %v2770 = vpop.f32.mrf.mxu0
    %v2771 = vpop.f32.mrf.mxu0
    %2772 = vdwg.mxu0
    %v2773 = vmax.f32 %v2439, 0.0
    %v2774 = vmax.f32 %v2441, 0.0
    %v2775 = vmax.f32 %v2603, 0.0
    %v2776 = vmax.f32 %v2605, 0.0
    %v2777 = vmax.f32 %v2767, 0.0
    %v2778 = vmax.f32 %v2769, 0.0
    %v2779 = vpack.c.bf16 %v2773, %v2773
    %v2780 = vpack.c.bf16 %v2774, %v2774
    %v2781 = vpack.c.bf16 %v2775, %v2775
    %v2782 = vpack.c.bf16 %v2776, %v2776
    %v2783 = vpack.c.bf16 %v2777, %v2777
    %v2784 = vpack.c.bf16 %v2778, %v2778
    %v2785 = vld [vmem:[#allocation8] sm:$0xff]
    %v2786 = vld [vmem:[#allocation8 + $0x8] sm:$0xff]
    %v2787 = vld [vmem:[#allocation8 + $0x10] sm:$0xff]
    %v2788 = vld [vmem:[#allocation8 + $0x18] sm:$0xff]
    %v2789 = vld [vmem:[#allocation8 + $0x20] sm:$0xff]
    %v2790 = vld [vmem:[#allocation8 + $0x28] sm:$0xff]
    %v2791 = vld [vmem:[#allocation8 + $0x30] sm:$0xff]
    %v2792 = vld [vmem:[#allocation8 + $0x38] sm:$0xff]
    %v2793 = vld [vmem:[#allocation8 + $0x40] sm:$0xff]
    %v2794 = vld [vmem:[#allocation8 + $0x48] sm:$0xff]
    %v2795 = vld [vmem:[#allocation8 + $0x50] sm:$0xff]
    %v2796 = vld [vmem:[#allocation8 + $0x58] sm:$0xff]
    %v2797 = vld [vmem:[#allocation8 + $0x60] sm:$0xff]
    %v2798 = vld [vmem:[#allocation8 + $0x68] sm:$0xff]
    %v2799 = vld [vmem:[#allocation8 + $0x70] sm:$0xff]
    %v2800 = vld [vmem:[#allocation8 + $0x78] sm:$0xff]
    %v2801 = vld [vmem:[#allocation8 + $0x80] sm:$0xff]
    %v2802 = vld [vmem:[#allocation8 + $0x88] sm:$0xff]
    %v2803 = vld [vmem:[#allocation8 + $0x90] sm:$0xff]
    %v2804 = vld [vmem:[#allocation8 + $0x98] sm:$0xff]
    %v2805 = vld [vmem:[#allocation8 + $0xa0] sm:$0xff]
    %v2806 = vld [vmem:[#allocation8 + $0xa8] sm:$0xff]
    %v2807 = vld [vmem:[#allocation8 + $0xb0] sm:$0xff]
    %v2808 = vld [vmem:[#allocation8 + $0xb8] sm:$0xff]
    %v2809 = vld [vmem:[#allocation8 + $0xc0] sm:$0xff]
    %v2810 = vld [vmem:[#allocation8 + $0xc8] sm:$0xff]
    %v2811 = vld [vmem:[#allocation8 + $0xd0] sm:$0xff]
    %v2812 = vld [vmem:[#allocation8 + $0xd8] sm:$0xff]
    %v2813 = vld [vmem:[#allocation8 + $0xe0] sm:$0xff]
    %v2814 = vld [vmem:[#allocation8 + $0xe8] sm:$0xff]
    %v2815 = vld [vmem:[#allocation8 + $0xf0] sm:$0xff]
    %v2816 = vld [vmem:[#allocation8 + $0xf8] sm:$0xff]
    %v2817 = vld [vmem:[#allocation8 + $0x100] sm:$0xff]
    %v2818 = vld [vmem:[#allocation8 + $0x108] sm:$0xff]
    %v2819 = vld [vmem:[#allocation8 + $0x110] sm:$0xff]
    %v2820 = vld [vmem:[#allocation8 + $0x118] sm:$0xff]
    %v2821 = vld [vmem:[#allocation8 + $0x120] sm:$0xff]
    %v2822 = vld [vmem:[#allocation8 + $0x128] sm:$0xff]
    %v2823 = vld [vmem:[#allocation8 + $0x130] sm:$0xff]
    %v2824 = vld [vmem:[#allocation8 + $0x138] sm:$0xff]
    %v2825 = vld [vmem:[#allocation8 + $0x140] sm:$0xff]
    %v2826 = vld [vmem:[#allocation8 + $0x148] sm:$0xff]
    %v2827 = vld [vmem:[#allocation8 + $0x150] sm:$0xff]
    %v2828 = vld [vmem:[#allocation8 + $0x158] sm:$0xff]
    %v2829 = vld [vmem:[#allocation8 + $0x160] sm:$0xff]
    %v2830 = vld [vmem:[#allocation8 + $0x168] sm:$0xff]
    %v2831 = vld [vmem:[#allocation8 + $0x170] sm:$0xff]
    %v2832 = vld [vmem:[#allocation8 + $0x178] sm:$0xff]
    %v2833 = vld [vmem:[#allocation8 + $0x180] sm:$0xff]
    %v2834 = vld [vmem:[#allocation8 + $0x188] sm:$0xff]
    %v2835 = vld [vmem:[#allocation8 + $0x190] sm:$0xff]
    %v2836 = vld [vmem:[#allocation8 + $0x198] sm:$0xff]
    %v2837 = vld [vmem:[#allocation8 + $0x1a0] sm:$0xff]
    %v2838 = vld [vmem:[#allocation8 + $0x1a8] sm:$0xff]
    %v2839 = vld [vmem:[#allocation8 + $0x1b0] sm:$0xff]
    %v2840 = vld [vmem:[#allocation8 + $0x1b8] sm:$0xff]
    %v2841 = vld [vmem:[#allocation8 + $0x1c0] sm:$0xff]
    %v2842 = vld [vmem:[#allocation8 + $0x1c8] sm:$0xff]
    %v2843 = vld [vmem:[#allocation8 + $0x1d0] sm:$0xff]
    %v2844 = vld [vmem:[#allocation8 + $0x1d8] sm:$0xff]
    %v2845 = vld [vmem:[#allocation8 + $0x1e0] sm:$0xff]
    %v2846 = vld [vmem:[#allocation8 + $0x1e8] sm:$0xff]
    %v2847 = vld [vmem:[#allocation8 + $0x1f0] sm:$0xff]
    %v2848 = vld [vmem:[#allocation8 + $0x1f8] sm:$0xff]
    %v2849 = vld [vmem:[#allocation8 + $0x200] sm:$0xff]
    %v2850 = vld [vmem:[#allocation8 + $0x208] sm:$0xff]
    %v2851 = vld [vmem:[#allocation8 + $0x210] sm:$0xff]
    %v2852 = vld [vmem:[#allocation8 + $0x218] sm:$0xff]
    %v2853 = vld [vmem:[#allocation8 + $0x220] sm:$0xff]
    %v2854 = vld [vmem:[#allocation8 + $0x228] sm:$0xff]
    %v2855 = vld [vmem:[#allocation8 + $0x230] sm:$0xff]
    %v2856 = vld [vmem:[#allocation8 + $0x238] sm:$0xff]
    %v2857 = vld [vmem:[#allocation8 + $0x240] sm:$0xff]
    %v2858 = vld [vmem:[#allocation8 + $0x248] sm:$0xff]
    %v2859 = vld [vmem:[#allocation8 + $0x250] sm:$0xff]
    %v2860 = vld [vmem:[#allocation8 + $0x258] sm:$0xff]
    %v2861 = vld [vmem:[#allocation8 + $0x260] sm:$0xff]
    %v2862 = vld [vmem:[#allocation8 + $0x268] sm:$0xff]
    %v2863 = vld [vmem:[#allocation8 + $0x270] sm:$0xff]
    %v2864 = vld [vmem:[#allocation8 + $0x278] sm:$0xff]
    %v2865 = vld [vmem:[#allocation8 + $0x280] sm:$0xff]
    %v2866 = vld [vmem:[#allocation8 + $0x288] sm:$0xff]
    %v2867 = vld [vmem:[#allocation8 + $0x290] sm:$0xff]
    %v2868 = vld [vmem:[#allocation8 + $0x298] sm:$0xff]
    %v2869 = vld [vmem:[#allocation8 + $0x2a0] sm:$0xff]
    %v2870 = vld [vmem:[#allocation8 + $0x2a8] sm:$0xff]
    %v2871 = vld [vmem:[#allocation8 + $0x2b0] sm:$0xff]
    %v2872 = vld [vmem:[#allocation8 + $0x2b8] sm:$0xff]
    %v2873 = vld [vmem:[#allocation8 + $0x2c0] sm:$0xff]
    %v2874 = vld [vmem:[#allocation8 + $0x2c8] sm:$0xff]
    %v2875 = vld [vmem:[#allocation8 + $0x2d0] sm:$0xff]
    %v2876 = vld [vmem:[#allocation8 + $0x2d8] sm:$0xff]
    %v2877 = vld [vmem:[#allocation8 + $0x2e0] sm:$0xff]
    %v2878 = vld [vmem:[#allocation8 + $0x2e8] sm:$0xff]
    %v2879 = vld [vmem:[#allocation8 + $0x2f0] sm:$0xff]
    %v2880 = vld [vmem:[#allocation8 + $0x2f8] sm:$0xff]
    %v2881 = vld [vmem:[#allocation8 + $0x300] sm:$0xff]
    %v2882 = vld [vmem:[#allocation8 + $0x308] sm:$0xff]
    %v2883 = vld [vmem:[#allocation8 + $0x310] sm:$0xff]
    %v2884 = vld [vmem:[#allocation8 + $0x318] sm:$0xff]
    %v2885 = vld [vmem:[#allocation8 + $0x320] sm:$0xff]
    %v2886 = vld [vmem:[#allocation8 + $0x328] sm:$0xff]
    %v2887 = vld [vmem:[#allocation8 + $0x330] sm:$0xff]
    %v2888 = vld [vmem:[#allocation8 + $0x338] sm:$0xff]
    %v2889 = vld [vmem:[#allocation8 + $0x340] sm:$0xff]
    %v2890 = vld [vmem:[#allocation8 + $0x348] sm:$0xff]
    %v2891 = vld [vmem:[#allocation8 + $0x350] sm:$0xff]
    %v2892 = vld [vmem:[#allocation8 + $0x358] sm:$0xff]
    %v2893 = vld [vmem:[#allocation8 + $0x360] sm:$0xff]
    %v2894 = vld [vmem:[#allocation8 + $0x368] sm:$0xff]
    %v2895 = vld [vmem:[#allocation8 + $0x370] sm:$0xff]
    %v2896 = vld [vmem:[#allocation8 + $0x378] sm:$0xff]
    %v2897 = vld [vmem:[#allocation8 + $0x380] sm:$0xff]
    %v2898 = vld [vmem:[#allocation8 + $0x388] sm:$0xff]
    %v2899 = vld [vmem:[#allocation8 + $0x390] sm:$0xff]
    %v2900 = vld [vmem:[#allocation8 + $0x398] sm:$0xff]
    %v2901 = vld [vmem:[#allocation8 + $0x3a0] sm:$0xff]
    %v2902 = vld [vmem:[#allocation8 + $0x3a8] sm:$0xff]
    %v2903 = vld [vmem:[#allocation8 + $0x3b0] sm:$0xff]
    %v2904 = vld [vmem:[#allocation8 + $0x3b8] sm:$0xff]
    %v2905 = vld [vmem:[#allocation8 + $0x3c0] sm:$0xff]
    %v2906 = vld [vmem:[#allocation8 + $0x3c8] sm:$0xff]
    %v2907 = vld [vmem:[#allocation8 + $0x3d0] sm:$0xff]
    %v2908 = vld [vmem:[#allocation8 + $0x3d8] sm:$0xff]
    %v2909 = vld [vmem:[#allocation8 + $0x3e0] sm:$0xff]
    %v2910 = vld [vmem:[#allocation8 + $0x3e8] sm:$0xff]
    %v2911 = vld [vmem:[#allocation8 + $0x3f0] sm:$0xff]
    %v2912 = vld [vmem:[#allocation8 + $0x3f8] sm:$0xff]
    %v2913 = vld [vmem:[#allocation8 + $0x400] sm:$0xff]
    %v2914 = vld [vmem:[#allocation8 + $0x408] sm:$0xff]
    %v2915 = vld [vmem:[#allocation8 + $0x410] sm:$0xff]
    %v2916 = vld [vmem:[#allocation8 + $0x418] sm:$0xff]
    %v2917 = vld [vmem:[#allocation8 + $0x420] sm:$0xff]
    %v2918 = vld [vmem:[#allocation8 + $0x428] sm:$0xff]
    %v2919 = vld [vmem:[#allocation8 + $0x430] sm:$0xff]
    %v2920 = vld [vmem:[#allocation8 + $0x438] sm:$0xff]
    %v2921 = vld [vmem:[#allocation8 + $0x440] sm:$0xff]
    %v2922 = vld [vmem:[#allocation8 + $0x448] sm:$0xff]
    %v2923 = vld [vmem:[#allocation8 + $0x450] sm:$0xff]
    %v2924 = vld [vmem:[#allocation8 + $0x458] sm:$0xff]
    %v2925 = vld [vmem:[#allocation8 + $0x460] sm:$0xff]
    %v2926 = vld [vmem:[#allocation8 + $0x468] sm:$0xff]
    %v2927 = vld [vmem:[#allocation8 + $0x470] sm:$0xff]
    %v2928 = vld [vmem:[#allocation8 + $0x478] sm:$0xff]
    %v2929 = vld [vmem:[#allocation8 + $0x480] sm:$0xff]
    %v2930 = vld [vmem:[#allocation8 + $0x488] sm:$0xff]
    %v2931 = vld [vmem:[#allocation8 + $0x490] sm:$0xff]
    %v2932 = vld [vmem:[#allocation8 + $0x498] sm:$0xff]
    %v2933 = vld [vmem:[#allocation8 + $0x4a0] sm:$0xff]
    %v2934 = vld [vmem:[#allocation8 + $0x4a8] sm:$0xff]
    %v2935 = vld [vmem:[#allocation8 + $0x4b0] sm:$0xff]
    %v2936 = vld [vmem:[#allocation8 + $0x4b8] sm:$0xff]
    %v2937 = vld [vmem:[#allocation8 + $0x4c0] sm:$0xff]
    %v2938 = vld [vmem:[#allocation8 + $0x4c8] sm:$0xff]
    %v2939 = vld [vmem:[#allocation8 + $0x4d0] sm:$0xff]
    %v2940 = vld [vmem:[#allocation8 + $0x4d8] sm:$0xff]
    %v2941 = vld [vmem:[#allocation8 + $0x4e0] sm:$0xff]
    %v2942 = vld [vmem:[#allocation8 + $0x4e8] sm:$0xff]
    %v2943 = vld [vmem:[#allocation8 + $0x4f0] sm:$0xff]
    %v2944 = vld [vmem:[#allocation8 + $0x4f8] sm:$0xff]
    %v2945 = vld [vmem:[#allocation8 + $0x500] sm:$0xff]
    %v2946 = vld [vmem:[#allocation8 + $0x508] sm:$0xff]
    %v2947 = vld [vmem:[#allocation8 + $0x510] sm:$0xff]
    %v2948 = vld [vmem:[#allocation8 + $0x518] sm:$0xff]
    %v2949 = vld [vmem:[#allocation8 + $0x520] sm:$0xff]
    %v2950 = vld [vmem:[#allocation8 + $0x528] sm:$0xff]
    %v2951 = vld [vmem:[#allocation8 + $0x530] sm:$0xff]
    %v2952 = vld [vmem:[#allocation8 + $0x538] sm:$0xff]
    %v2953 = vld [vmem:[#allocation8 + $0x540] sm:$0xff]
    %v2954 = vld [vmem:[#allocation8 + $0x548] sm:$0xff]
    %v2955 = vld [vmem:[#allocation8 + $0x550] sm:$0xff]
    %v2956 = vld [vmem:[#allocation8 + $0x558] sm:$0xff]
    %v2957 = vld [vmem:[#allocation8 + $0x560] sm:$0xff]
    %v2958 = vld [vmem:[#allocation8 + $0x568] sm:$0xff]
    %v2959 = vld [vmem:[#allocation8 + $0x570] sm:$0xff]
    %v2960 = vld [vmem:[#allocation8 + $0x578] sm:$0xff]
    %v2961 = vld [vmem:[#allocation8 + $0x580] sm:$0xff]
    %v2962 = vld [vmem:[#allocation8 + $0x588] sm:$0xff]
    %v2963 = vld [vmem:[#allocation8 + $0x590] sm:$0xff]
    %v2964 = vld [vmem:[#allocation8 + $0x598] sm:$0xff]
    %v2965 = vld [vmem:[#allocation8 + $0x5a0] sm:$0xff]
    %v2966 = vld [vmem:[#allocation8 + $0x5a8] sm:$0xff]
    %v2967 = vld [vmem:[#allocation8 + $0x5b0] sm:$0xff]
    %v2968 = vld [vmem:[#allocation8 + $0x5b8] sm:$0xff]
    %v2969 = vld [vmem:[#allocation8 + $0x5c0] sm:$0xff]
    %v2970 = vld [vmem:[#allocation8 + $0x5c8] sm:$0xff]
    %v2971 = vld [vmem:[#allocation8 + $0x5d0] sm:$0xff]
    %v2972 = vld [vmem:[#allocation8 + $0x5d8] sm:$0xff]
    %v2973 = vld [vmem:[#allocation8 + $0x5e0] sm:$0xff]
    %v2974 = vld [vmem:[#allocation8 + $0x5e8] sm:$0xff]
    %v2975 = vld [vmem:[#allocation8 + $0x5f0] sm:$0xff]
    %v2976 = vld [vmem:[#allocation8 + $0x5f8] sm:$0xff]
    %v2977 = vld [vmem:[#allocation10] sm:$0xf]
    %v2978 = vunpack.c.l.bf16 %v2977
    %v2980 = vlaneseq
    %v2981 = vshrl.u32 %v2980, 7
    %v2982 = vsub.s32 0, %v2981
    %v2983 = vrot.slane %v2978, %v2982
    %v2984 = vlaneseq
    %v2985 = vshrl.u32 %v2984, 7
    %v2986 = vsub.s32 2, %v2985
    %v2987 = vrot.slane %v2978, %v2986
    %v2988 = vlaneseq
    %v2989 = vshrl.u32 %v2988, 7
    %v2990 = vsub.s32 4, %v2989
    %v2991 = vrot.slane %v2978, %v2990
    %v2992 = vlaneseq
    %v2993 = vshrl.u32 %v2992, 7
    %v2994 = vsub.s32 6, %v2993
    %v2995 = vrot.slane %v2978, %v2994
    %v3000 = vlaneseq
    %v3001 = vshrl.u32 %v3000, 7
    %v3002 = vsub.s32 0, %v3001
    %v3003 = vrot.slane %v2983, %v3002
    %v3004 = vlaneseq
    %v3005 = vshrl.u32 %v3004, 7
    %v3006 = vsub.s32 0, %v3005
    %v3007 = vrot.slane %v2987, %v3006
    %v3008 = vlaneseq
    %v3009 = vshrl.u32 %v3008, 7
    %v3010 = vsub.s32 0, %v3009
    %v3011 = vrot.slane %v2991, %v3010
    %v3012 = vlaneseq
    %v3013 = vshrl.u32 %v3012, 7
    %v3014 = vsub.s32 0, %v3013
    %v3015 = vrot.slane %v2995, %v3014
    %v3208 = vunpack.c.l.b16 %v2785
    %v3209 = vunpack.c.h.b16 %v2785
    %v3210 = vunpack.c.l.b16 %v2786
    %v3211 = vunpack.c.h.b16 %v2786
    %v3212 = vunpack.c.l.b16 %v2787
    %v3213 = vunpack.c.h.b16 %v2787
    %v3214 = vunpack.c.l.b16 %v2788
    %v3215 = vunpack.c.h.b16 %v2788
    %v3216 = vunpack.c.l.b16 %v2789
    %v3217 = vunpack.c.h.b16 %v2789
    %v3218 = vunpack.c.l.b16 %v2790
    %v3219 = vunpack.c.h.b16 %v2790
    %v3220 = vunpack.c.l.b16 %v2791
    %v3221 = vunpack.c.h.b16 %v2791
    %v3222 = vunpack.c.l.b16 %v2792
    %v3223 = vunpack.c.h.b16 %v2792
    %v3224 = vunpack.c.l.b16 %v2793
    %v3225 = vunpack.c.h.b16 %v2793
    %v3226 = vunpack.c.l.b16 %v2794
    %v3227 = vunpack.c.h.b16 %v2794
    %v3228 = vunpack.c.l.b16 %v2795
    %v3229 = vunpack.c.h.b16 %v2795
    %v3230 = vunpack.c.l.b16 %v2796
    %v3231 = vunpack.c.h.b16 %v2796
    %v3232 = vunpack.c.l.b16 %v2797
    %v3233 = vunpack.c.h.b16 %v2797
    %v3234 = vunpack.c.l.b16 %v2798
    %v3235 = vunpack.c.h.b16 %v2798
    %v3236 = vunpack.c.l.b16 %v2799
    %v3237 = vunpack.c.h.b16 %v2799
    %v3238 = vunpack.c.l.b16 %v2800
    %v3239 = vunpack.c.h.b16 %v2800
    %v3240 = vunpack.c.l.b16 %v2801
    %v3241 = vunpack.c.h.b16 %v2801
    %v3242 = vunpack.c.l.b16 %v2802
    %v3243 = vunpack.c.h.b16 %v2802
    %v3244 = vunpack.c.l.b16 %v2803
    %v3245 = vunpack.c.h.b16 %v2803
    %v3246 = vunpack.c.l.b16 %v2804
    %v3247 = vunpack.c.h.b16 %v2804
    %v3248 = vunpack.c.l.b16 %v2805
    %v3249 = vunpack.c.h.b16 %v2805
    %v3250 = vunpack.c.l.b16 %v2806
    %v3251 = vunpack.c.h.b16 %v2806
    %v3252 = vunpack.c.l.b16 %v2807
    %v3253 = vunpack.c.h.b16 %v2807
    %v3254 = vunpack.c.l.b16 %v2808
    %v3255 = vunpack.c.h.b16 %v2808
    %v3256 = vunpack.c.l.b16 %v2809
    %v3257 = vunpack.c.h.b16 %v2809
    %v3258 = vunpack.c.l.b16 %v2810
    %v3259 = vunpack.c.h.b16 %v2810
    %v3260 = vunpack.c.l.b16 %v2811
    %v3261 = vunpack.c.h.b16 %v2811
    %v3262 = vunpack.c.l.b16 %v2812
    %v3263 = vunpack.c.h.b16 %v2812
    %v3264 = vunpack.c.l.b16 %v2813
    %v3265 = vunpack.c.h.b16 %v2813
    %v3266 = vunpack.c.l.b16 %v2814
    %v3267 = vunpack.c.h.b16 %v2814
    %v3268 = vunpack.c.l.b16 %v2815
    %v3269 = vunpack.c.h.b16 %v2815
    %v3270 = vunpack.c.l.b16 %v2816
    %v3271 = vunpack.c.h.b16 %v2816
    %v3272 = vunpack.c.l.b16 %v2817
    %v3273 = vunpack.c.h.b16 %v2817
    %v3274 = vunpack.c.l.b16 %v2818
    %v3275 = vunpack.c.h.b16 %v2818
    %v3276 = vunpack.c.l.b16 %v2819
    %v3277 = vunpack.c.h.b16 %v2819
    %v3278 = vunpack.c.l.b16 %v2820
    %v3279 = vunpack.c.h.b16 %v2820
    %v3280 = vunpack.c.l.b16 %v2821
    %v3281 = vunpack.c.h.b16 %v2821
    %v3282 = vunpack.c.l.b16 %v2822
    %v3283 = vunpack.c.h.b16 %v2822
    %v3284 = vunpack.c.l.b16 %v2823
    %v3285 = vunpack.c.h.b16 %v2823
    %v3286 = vunpack.c.l.b16 %v2824
    %v3287 = vunpack.c.h.b16 %v2824
    %v3288 = vunpack.c.l.b16 %v2825
    %v3289 = vunpack.c.h.b16 %v2825
    %v3290 = vunpack.c.l.b16 %v2826
    %v3291 = vunpack.c.h.b16 %v2826
    %v3292 = vunpack.c.l.b16 %v2827
    %v3293 = vunpack.c.h.b16 %v2827
    %v3294 = vunpack.c.l.b16 %v2828
    %v3295 = vunpack.c.h.b16 %v2828
    %v3296 = vunpack.c.l.b16 %v2829
    %v3297 = vunpack.c.h.b16 %v2829
    %v3298 = vunpack.c.l.b16 %v2830
    %v3299 = vunpack.c.h.b16 %v2830
    %v3300 = vunpack.c.l.b16 %v2831
    %v3301 = vunpack.c.h.b16 %v2831
    %v3302 = vunpack.c.l.b16 %v2832
    %v3303 = vunpack.c.h.b16 %v2832
    %v3304 = vunpack.c.l.b16 %v2833
    %v3305 = vunpack.c.h.b16 %v2833
    %v3306 = vunpack.c.l.b16 %v2834
    %v3307 = vunpack.c.h.b16 %v2834
    %v3308 = vunpack.c.l.b16 %v2835
    %v3309 = vunpack.c.h.b16 %v2835
    %v3310 = vunpack.c.l.b16 %v2836
    %v3311 = vunpack.c.h.b16 %v2836
    %v3312 = vunpack.c.l.b16 %v2837
    %v3313 = vunpack.c.h.b16 %v2837
    %v3314 = vunpack.c.l.b16 %v2838
    %v3315 = vunpack.c.h.b16 %v2838
    %v3316 = vunpack.c.l.b16 %v2839
    %v3317 = vunpack.c.h.b16 %v2839
    %v3318 = vunpack.c.l.b16 %v2840
    %v3319 = vunpack.c.h.b16 %v2840
    %v3320 = vunpack.c.l.b16 %v2841
    %v3321 = vunpack.c.h.b16 %v2841
    %v3322 = vunpack.c.l.b16 %v2842
    %v3323 = vunpack.c.h.b16 %v2842
    %v3324 = vunpack.c.l.b16 %v2843
    %v3325 = vunpack.c.h.b16 %v2843
    %v3326 = vunpack.c.l.b16 %v2844
    %v3327 = vunpack.c.h.b16 %v2844
    %v3328 = vunpack.c.l.b16 %v2845
    %v3329 = vunpack.c.h.b16 %v2845
    %v3330 = vunpack.c.l.b16 %v2846
    %v3331 = vunpack.c.h.b16 %v2846
    %v3332 = vunpack.c.l.b16 %v2847
    %v3333 = vunpack.c.h.b16 %v2847
    %v3334 = vunpack.c.l.b16 %v2848
    %v3335 = vunpack.c.h.b16 %v2848
    %v3336 = vunpack.c.l.b16 %v2849
    %v3337 = vunpack.c.h.b16 %v2849
    %v3338 = vunpack.c.l.b16 %v2850
    %v3339 = vunpack.c.h.b16 %v2850
    %v3340 = vunpack.c.l.b16 %v2851
    %v3341 = vunpack.c.h.b16 %v2851
    %v3342 = vunpack.c.l.b16 %v2852
    %v3343 = vunpack.c.h.b16 %v2852
    %v3344 = vunpack.c.l.b16 %v2853
    %v3345 = vunpack.c.h.b16 %v2853
    %v3346 = vunpack.c.l.b16 %v2854
    %v3347 = vunpack.c.h.b16 %v2854
    %v3348 = vunpack.c.l.b16 %v2855
    %v3349 = vunpack.c.h.b16 %v2855
    %v3350 = vunpack.c.l.b16 %v2856
    %v3351 = vunpack.c.h.b16 %v2856
    %v3352 = vunpack.c.l.b16 %v2857
    %v3353 = vunpack.c.h.b16 %v2857
    %v3354 = vunpack.c.l.b16 %v2858
    %v3355 = vunpack.c.h.b16 %v2858
    %v3356 = vunpack.c.l.b16 %v2859
    %v3357 = vunpack.c.h.b16 %v2859
    %v3358 = vunpack.c.l.b16 %v2860
    %v3359 = vunpack.c.h.b16 %v2860
    %v3360 = vunpack.c.l.b16 %v2861
    %v3361 = vunpack.c.h.b16 %v2861
    %v3362 = vunpack.c.l.b16 %v2862
    %v3363 = vunpack.c.h.b16 %v2862
    %v3364 = vunpack.c.l.b16 %v2863
    %v3365 = vunpack.c.h.b16 %v2863
    %v3366 = vunpack.c.l.b16 %v2864
    %v3367 = vunpack.c.h.b16 %v2864
    %v3368 = vunpack.c.l.b16 %v2865
    %v3369 = vunpack.c.h.b16 %v2865
    %v3370 = vunpack.c.l.b16 %v2866
    %v3371 = vunpack.c.h.b16 %v2866
    %v3372 = vunpack.c.l.b16 %v2867
    %v3373 = vunpack.c.h.b16 %v2867
    %v3374 = vunpack.c.l.b16 %v2868
    %v3375 = vunpack.c.h.b16 %v2868
    %v3376 = vunpack.c.l.b16 %v2869
    %v3377 = vunpack.c.h.b16 %v2869
    %v3378 = vunpack.c.l.b16 %v2870
    %v3379 = vunpack.c.h.b16 %v2870
    %v3380 = vunpack.c.l.b16 %v2871
    %v3381 = vunpack.c.h.b16 %v2871
    %v3382 = vunpack.c.l.b16 %v2872
    %v3383 = vunpack.c.h.b16 %v2872
    %v3384 = vunpack.c.l.b16 %v2873
    %v3385 = vunpack.c.h.b16 %v2873
    %v3386 = vunpack.c.l.b16 %v2874
    %v3387 = vunpack.c.h.b16 %v2874
    %v3388 = vunpack.c.l.b16 %v2875
    %v3389 = vunpack.c.h.b16 %v2875
    %v3390 = vunpack.c.l.b16 %v2876
    %v3391 = vunpack.c.h.b16 %v2876
    %v3392 = vunpack.c.l.b16 %v2877
    %v3393 = vunpack.c.h.b16 %v2877
    %v3394 = vunpack.c.l.b16 %v2878
    %v3395 = vunpack.c.h.b16 %v2878
    %v3396 = vunpack.c.l.b16 %v2879
    %v3397 = vunpack.c.h.b16 %v2879
    %v3398 = vunpack.c.l.b16 %v2880
    %v3399 = vunpack.c.h.b16 %v2880
    %v3400 = vunpack.c.l.b16 %v2881
    %v3401 = vunpack.c.h.b16 %v2881
    %v3402 = vunpack.c.l.b16 %v2882
    %v3403 = vunpack.c.h.b16 %v2882
    %v3404 = vunpack.c.l.b16 %v2883
    %v3405 = vunpack.c.h.b16 %v2883
    %v3406 = vunpack.c.l.b16 %v2884
    %v3407 = vunpack.c.h.b16 %v2884
    %v3408 = vunpack.c.l.b16 %v2885
    %v3409 = vunpack.c.h.b16 %v2885
    %v3410 = vunpack.c.l.b16 %v2886
    %v3411 = vunpack.c.h.b16 %v2886
    %v3412 = vunpack.c.l.b16 %v2887
    %v3413 = vunpack.c.h.b16 %v2887
    %v3414 = vunpack.c.l.b16 %v2888
    %v3415 = vunpack.c.h.b16 %v2888
    %v3416 = vunpack.c.l.b16 %v2889
    %v3417 = vunpack.c.h.b16 %v2889
    %v3418 = vunpack.c.l.b16 %v2890
    %v3419 = vunpack.c.h.b16 %v2890
    %v3420 = vunpack.c.l.b16 %v2891
    %v3421 = vunpack.c.h.b16 %v2891
    %v3422 = vunpack.c.l.b16 %v2892
    %v3423 = vunpack.c.h.b16 %v2892
    %v3424 = vunpack.c.l.b16 %v2893
    %v3425 = vunpack.c.h.b16 %v2893
    %v3426 = vunpack.c.l.b16 %v2894
    %v3427 = vunpack.c.h.b16 %v2894
    %v3428 = vunpack.c.l.b16 %v2895
    %v3429 = vunpack.c.h.b16 %v2895
    %v3430 = vunpack.c.l.b16 %v2896
    %v3431 = vunpack.c.h.b16 %v2896
    %v3432 = vunpack.c.l.b16 %v2897
    %v3433 = vunpack.c.h.b16 %v2897
    %v3434 = vunpack.c.l.b16 %v2898
    %v3435 = vunpack.c.h.b16 %v2898
    %v3436 = vunpack.c.l.b16 %v2899
    %v3437 = vunpack.c.h.b16 %v2899
    %v3438 = vunpack.c.l.b16 %v2900
    %v3439 = vunpack.c.h.b16 %v2900
    %v3440 = vunpack.c.l.b16 %v2901
    %v3441 = vunpack.c.h.b16 %v2901
    %v3442 = vunpack.c.l.b16 %v2902
    %v3443 = vunpack.c.h.b16 %v2902
    %v3444 = vunpack.c.l.b16 %v2903
    %v3445 = vunpack.c.h.b16 %v2903
    %v3446 = vunpack.c.l.b16 %v2904
    %v3447 = vunpack.c.h.b16 %v2904
    %v3448 = vunpack.c.l.b16 %v2905
    %v3449 = vunpack.c.h.b16 %v2905
    %v3450 = vunpack.c.l.b16 %v2906
    %v3451 = vunpack.c.h.b16 %v2906
    %v3452 = vunpack.c.l.b16 %v2907
    %v3453 = vunpack.c.h.b16 %v2907
    %v3454 = vunpack.c.l.b16 %v2908
    %v3455 = vunpack.c.h.b16 %v2908
    %v3456 = vunpack.c.l.b16 %v2909
    %v3457 = vunpack.c.h.b16 %v2909
    %v3458 = vunpack.c.l.b16 %v2910
    %v3459 = vunpack.c.h.b16 %v2910
    %v3460 = vunpack.c.l.b16 %v2911
    %v3461 = vunpack.c.h.b16 %v2911
    %v3462 = vunpack.c.l.b16 %v2912
    %v3463 = vunpack.c.h.b16 %v2912
    %v3464 = vunpack.c.l.b16 %v2913
    %v3465 = vunpack.c.h.b16 %v2913
    %v3466 = vunpack.c.l.b16 %v2914
    %v3467 = vunpack.c.h.b16 %v2914
    %v3468 = vunpack.c.l.b16 %v2915
    %v3469 = vunpack.c.h.b16 %v2915
    %v3470 = vunpack.c.l.b16 %v2916
    %v3471 = vunpack.c.h.b16 %v2916
    %v3472 = vunpack.c.l.b16 %v2917
    %v3473 = vunpack.c.h.b16 %v2917
    %v3474 = vunpack.c.l.b16 %v2918
    %v3475 = vunpack.c.h.b16 %v2918
    %v3476 = vunpack.c.l.b16 %v2919
    %v3477 = vunpack.c.h.b16 %v2919
    %v3478 = vunpack.c.l.b16 %v2920
    %v3479 = vunpack.c.h.b16 %v2920
    %v3480 = vunpack.c.l.b16 %v2921
    %v3481 = vunpack.c.h.b16 %v2921
    %v3482 = vunpack.c.l.b16 %v2922
    %v3483 = vunpack.c.h.b16 %v2922
    %v3484 = vunpack.c.l.b16 %v2923
    %v3485 = vunpack.c.h.b16 %v2923
    %v3486 = vunpack.c.l.b16 %v2924
    %v3487 = vunpack.c.h.b16 %v2924
    %v3488 = vunpack.c.l.b16 %v2925
    %v3489 = vunpack.c.h.b16 %v2925
    %v3490 = vunpack.c.l.b16 %v2926
    %v3491 = vunpack.c.h.b16 %v2926
    %v3492 = vunpack.c.l.b16 %v2927
    %v3493 = vunpack.c.h.b16 %v2927
    %v3494 = vunpack.c.l.b16 %v2928
    %v3495 = vunpack.c.h.b16 %v2928
    %v3496 = vunpack.c.l.b16 %v2929
    %v3497 = vunpack.c.h.b16 %v2929
    %v3498 = vunpack.c.l.b16 %v2930
    %v3499 = vunpack.c.h.b16 %v2930
    %v3500 = vunpack.c.l.b16 %v2931
    %v3501 = vunpack.c.h.b16 %v2931
    %v3502 = vunpack.c.l.b16 %v2932
    %v3503 = vunpack.c.h.b16 %v2932
    %v3504 = vunpack.c.l.b16 %v2933
    %v3505 = vunpack.c.h.b16 %v2933
    %v3506 = vunpack.c.l.b16 %v2934
    %v3507 = vunpack.c.h.b16 %v2934
    %v3508 = vunpack.c.l.b16 %v2935
    %v3509 = vunpack.c.h.b16 %v2935
    %v3510 = vunpack.c.l.b16 %v2936
    %v3511 = vunpack.c.h.b16 %v2936
    %v3512 = vunpack.c.l.b16 %v2937
    %v3513 = vunpack.c.h.b16 %v2937
    %v3514 = vunpack.c.l.b16 %v2938
    %v3515 = vunpack.c.h.b16 %v2938
    %v3516 = vunpack.c.l.b16 %v2939
    %v3517 = vunpack.c.h.b16 %v2939
    %v3518 = vunpack.c.l.b16 %v2940
    %v3519 = vunpack.c.h.b16 %v2940
    %v3520 = vunpack.c.l.b16 %v2941
    %v3521 = vunpack.c.h.b16 %v2941
    %v3522 = vunpack.c.l.b16 %v2942
    %v3523 = vunpack.c.h.b16 %v2942
    %v3524 = vunpack.c.l.b16 %v2943
    %v3525 = vunpack.c.h.b16 %v2943
    %v3526 = vunpack.c.l.b16 %v2944
    %v3527 = vunpack.c.h.b16 %v2944
    %v3528 = vunpack.c.l.b16 %v2945
    %v3529 = vunpack.c.h.b16 %v2945
    %v3530 = vunpack.c.l.b16 %v2946
    %v3531 = vunpack.c.h.b16 %v2946
    %v3532 = vunpack.c.l.b16 %v2947
    %v3533 = vunpack.c.h.b16 %v2947
    %v3534 = vunpack.c.l.b16 %v2948
    %v3535 = vunpack.c.h.b16 %v2948
    %v3536 = vunpack.c.l.b16 %v2949
    %v3537 = vunpack.c.h.b16 %v2949
    %v3538 = vunpack.c.l.b16 %v2950
    %v3539 = vunpack.c.h.b16 %v2950
    %v3540 = vunpack.c.l.b16 %v2951
    %v3541 = vunpack.c.h.b16 %v2951
    %v3542 = vunpack.c.l.b16 %v2952
    %v3543 = vunpack.c.h.b16 %v2952
    %v3544 = vunpack.c.l.b16 %v2953
    %v3545 = vunpack.c.h.b16 %v2953
    %v3546 = vunpack.c.l.b16 %v2954
    %v3547 = vunpack.c.h.b16 %v2954
    %v3548 = vunpack.c.l.b16 %v2955
    %v3549 = vunpack.c.h.b16 %v2955
    %v3550 = vunpack.c.l.b16 %v2956
    %v3551 = vunpack.c.h.b16 %v2956
    %v3552 = vunpack.c.l.b16 %v2957
    %v3553 = vunpack.c.h.b16 %v2957
    %v3554 = vunpack.c.l.b16 %v2958
    %v3555 = vunpack.c.h.b16 %v2958
    %v3556 = vunpack.c.l.b16 %v2959
    %v3557 = vunpack.c.h.b16 %v2959
    %v3558 = vunpack.c.l.b16 %v2960
    %v3559 = vunpack.c.h.b16 %v2960
    %v3560 = vunpack.c.l.b16 %v2961
    %v3561 = vunpack.c.h.b16 %v2961
    %v3562 = vunpack.c.l.b16 %v2962
    %v3563 = vunpack.c.h.b16 %v2962
    %v3564 = vunpack.c.l.b16 %v2963
    %v3565 = vunpack.c.h.b16 %v2963
    %v3566 = vunpack.c.l.b16 %v2964
    %v3567 = vunpack.c.h.b16 %v2964
    %v3568 = vunpack.c.l.b16 %v2965
    %v3569 = vunpack.c.h.b16 %v2965
    %v3570 = vunpack.c.l.b16 %v2966
    %v3571 = vunpack.c.h.b16 %v2966
    %v3572 = vunpack.c.l.b16 %v2967
    %v3573 = vunpack.c.h.b16 %v2967
    %v3574 = vunpack.c.l.b16 %v2968
    %v3575 = vunpack.c.h.b16 %v2968
    %v3576 = vunpack.c.l.b16 %v2969
    %v3577 = vunpack.c.h.b16 %v2969
    %v3578 = vunpack.c.l.b16 %v2970
    %v3579 = vunpack.c.h.b16 %v2970
    %v3580 = vunpack.c.l.b16 %v2971
    %v3581 = vunpack.c.h.b16 %v2971
    %v3582 = vunpack.c.l.b16 %v2972
    %v3583 = vunpack.c.h.b16 %v2972
    %v3584 = vunpack.c.l.b16 %v2973
    %v3585 = vunpack.c.h.b16 %v2973
    %v3586 = vunpack.c.l.b16 %v2974
    %v3587 = vunpack.c.h.b16 %v2974
    %v3588 = vunpack.c.l.b16 %v2975
    %v3589 = vunpack.c.h.b16 %v2975
    %v3590 = vunpack.c.l.b16 %v2976
    %v3591 = vunpack.c.h.b16 %v2976
    %v3592 = vpack.c.b16 %v3212, %v3208
    %v3593 = vpack.c.b16 %v3213, %v3209
    %v3594 = vpack.c.b16 %v3214, %v3210
    %v3595 = vpack.c.b16 %v3215, %v3211
    %v3596 = vpack.c.b16 %v3220, %v3216
    %v3597 = vpack.c.b16 %v3221, %v3217
    %v3598 = vpack.c.b16 %v3222, %v3218
    %v3599 = vpack.c.b16 %v3223, %v3219
    %v3600 = vpack.c.b16 %v3228, %v3224
    %v3601 = vpack.c.b16 %v3229, %v3225
    %v3602 = vpack.c.b16 %v3230, %v3226
    %v3603 = vpack.c.b16 %v3231, %v3227
    %v3604 = vpack.c.b16 %v3236, %v3232
    %v3605 = vpack.c.b16 %v3237, %v3233
    %v3606 = vpack.c.b16 %v3238, %v3234
    %v3607 = vpack.c.b16 %v3239, %v3235
    %v3608 = vpack.c.b16 %v3244, %v3240
    %v3609 = vpack.c.b16 %v3245, %v3241
    %v3610 = vpack.c.b16 %v3246, %v3242
    %v3611 = vpack.c.b16 %v3247, %v3243
    %v3612 = vpack.c.b16 %v3252, %v3248
    %v3613 = vpack.c.b16 %v3253, %v3249
    %v3614 = vpack.c.b16 %v3254, %v3250
    %v3615 = vpack.c.b16 %v3255, %v3251
    %v3616 = vpack.c.b16 %v3260, %v3256
    %v3617 = vpack.c.b16 %v3261, %v3257
    %v3618 = vpack.c.b16 %v3262, %v3258
    %v3619 = vpack.c.b16 %v3263, %v3259
    %v3620 = vpack.c.b16 %v3268, %v3264
    %v3621 = vpack.c.b16 %v3269, %v3265
    %v3622 = vpack.c.b16 %v3270, %v3266
    %v3623 = vpack.c.b16 %v3271, %v3267
    %v3624 = vpack.c.b16 %v3276, %v3272
    %v3625 = vpack.c.b16 %v3277, %v3273
    %v3626 = vpack.c.b16 %v3278, %v3274
    %v3627 = vpack.c.b16 %v3279, %v3275
    %v3628 = vpack.c.b16 %v3284, %v3280
    %v3629 = vpack.c.b16 %v3285, %v3281
    %v3630 = vpack.c.b16 %v3286, %v3282
    %v3631 = vpack.c.b16 %v3287, %v3283
    %v3632 = vpack.c.b16 %v3292, %v3288
    %v3633 = vpack.c.b16 %v3293, %v3289
    %v3634 = vpack.c.b16 %v3294, %v3290
    %v3635 = vpack.c.b16 %v3295, %v3291
    %v3636 = vpack.c.b16 %v3300, %v3296
    %v3637 = vpack.c.b16 %v3301, %v3297
    %v3638 = vpack.c.b16 %v3302, %v3298
    %v3639 = vpack.c.b16 %v3303, %v3299
    %v3640 = vpack.c.b16 %v3308, %v3304
    %v3641 = vpack.c.b16 %v3309, %v3305
    %v3642 = vpack.c.b16 %v3310, %v3306
    %v3643 = vpack.c.b16 %v3311, %v3307
    %v3644 = vpack.c.b16 %v3316, %v3312
    %v3645 = vpack.c.b16 %v3317, %v3313
    %v3646 = vpack.c.b16 %v3318, %v3314
    %v3647 = vpack.c.b16 %v3319, %v3315
    %v3648 = vpack.c.b16 %v3324, %v3320
    %v3649 = vpack.c.b16 %v3325, %v3321
    %v3650 = vpack.c.b16 %v3326, %v3322
    %v3651 = vpack.c.b16 %v3327, %v3323
    %v3652 = vpack.c.b16 %v3332, %v3328
    %v3653 = vpack.c.b16 %v3333, %v3329
    %v3654 = vpack.c.b16 %v3334, %v3330
    %v3655 = vpack.c.b16 %v3335, %v3331
    %v3656 = vpack.c.b16 %v3340, %v3336
    %v3657 = vpack.c.b16 %v3341, %v3337
    %v3658 = vpack.c.b16 %v3342, %v3338
    %v3659 = vpack.c.b16 %v3343, %v3339
    %v3660 = vpack.c.b16 %v3348, %v3344
    %v3661 = vpack.c.b16 %v3349, %v3345
    %v3662 = vpack.c.b16 %v3350, %v3346
    %v3663 = vpack.c.b16 %v3351, %v3347
    %v3664 = vpack.c.b16 %v3356, %v3352
    %v3665 = vpack.c.b16 %v3357, %v3353
    %v3666 = vpack.c.b16 %v3358, %v3354
    %v3667 = vpack.c.b16 %v3359, %v3355
    %v3668 = vpack.c.b16 %v3364, %v3360
    %v3669 = vpack.c.b16 %v3365, %v3361
    %v3670 = vpack.c.b16 %v3366, %v3362
    %v3671 = vpack.c.b16 %v3367, %v3363
    %v3672 = vpack.c.b16 %v3372, %v3368
    %v3673 = vpack.c.b16 %v3373, %v3369
    %v3674 = vpack.c.b16 %v3374, %v3370
    %v3675 = vpack.c.b16 %v3375, %v3371
    %v3676 = vpack.c.b16 %v3380, %v3376
    %v3677 = vpack.c.b16 %v3381, %v3377
    %v3678 = vpack.c.b16 %v3382, %v3378
    %v3679 = vpack.c.b16 %v3383, %v3379
    %v3680 = vpack.c.b16 %v3388, %v3384
    %v3681 = vpack.c.b16 %v3389, %v3385
    %v3682 = vpack.c.b16 %v3390, %v3386
    %v3683 = vpack.c.b16 %v3391, %v3387
    %v3684 = vpack.c.b16 %v3396, %v3392
    %v3685 = vpack.c.b16 %v3397, %v3393
    %v3686 = vpack.c.b16 %v3398, %v3394
    %v3687 = vpack.c.b16 %v3399, %v3395
    %v3688 = vpack.c.b16 %v3404, %v3400
    %v3689 = vpack.c.b16 %v3405, %v3401
    %v3690 = vpack.c.b16 %v3406, %v3402
    %v3691 = vpack.c.b16 %v3407, %v3403
    %v3692 = vpack.c.b16 %v3412, %v3408
    %v3693 = vpack.c.b16 %v3413, %v3409
    %v3694 = vpack.c.b16 %v3414, %v3410
    %v3695 = vpack.c.b16 %v3415, %v3411
    %v3696 = vpack.c.b16 %v3420, %v3416
    %v3697 = vpack.c.b16 %v3421, %v3417
    %v3698 = vpack.c.b16 %v3422, %v3418
    %v3699 = vpack.c.b16 %v3423, %v3419
    %v3700 = vpack.c.b16 %v3428, %v3424
    %v3701 = vpack.c.b16 %v3429, %v3425
    %v3702 = vpack.c.b16 %v3430, %v3426
    %v3703 = vpack.c.b16 %v3431, %v3427
    %v3704 = vpack.c.b16 %v3436, %v3432
    %v3705 = vpack.c.b16 %v3437, %v3433
    %v3706 = vpack.c.b16 %v3438, %v3434
    %v3707 = vpack.c.b16 %v3439, %v3435
    %v3708 = vpack.c.b16 %v3444, %v3440
    %v3709 = vpack.c.b16 %v3445, %v3441
    %v3710 = vpack.c.b16 %v3446, %v3442
    %v3711 = vpack.c.b16 %v3447, %v3443
    %v3712 = vpack.c.b16 %v3452, %v3448
    %v3713 = vpack.c.b16 %v3453, %v3449
    %v3714 = vpack.c.b16 %v3454, %v3450
    %v3715 = vpack.c.b16 %v3455, %v3451
    %v3716 = vpack.c.b16 %v3460, %v3456
    %v3717 = vpack.c.b16 %v3461, %v3457
    %v3718 = vpack.c.b16 %v3462, %v3458
    %v3719 = vpack.c.b16 %v3463, %v3459
    %v3720 = vpack.c.b16 %v3468, %v3464
    %v3721 = vpack.c.b16 %v3469, %v3465
    %v3722 = vpack.c.b16 %v3470, %v3466
    %v3723 = vpack.c.b16 %v3471, %v3467
    %v3724 = vpack.c.b16 %v3476, %v3472
    %v3725 = vpack.c.b16 %v3477, %v3473
    %v3726 = vpack.c.b16 %v3478, %v3474
    %v3727 = vpack.c.b16 %v3479, %v3475
    %v3728 = vpack.c.b16 %v3484, %v3480
    %v3729 = vpack.c.b16 %v3485, %v3481
    %v3730 = vpack.c.b16 %v3486, %v3482
    %v3731 = vpack.c.b16 %v3487, %v3483
    %v3732 = vpack.c.b16 %v3492, %v3488
    %v3733 = vpack.c.b16 %v3493, %v3489
    %v3734 = vpack.c.b16 %v3494, %v3490
    %v3735 = vpack.c.b16 %v3495, %v3491
    %v3736 = vpack.c.b16 %v3500, %v3496
    %v3737 = vpack.c.b16 %v3501, %v3497
    %v3738 = vpack.c.b16 %v3502, %v3498
    %v3739 = vpack.c.b16 %v3503, %v3499
    %v3740 = vpack.c.b16 %v3508, %v3504
    %v3741 = vpack.c.b16 %v3509, %v3505
    %v3742 = vpack.c.b16 %v3510, %v3506
    %v3743 = vpack.c.b16 %v3511, %v3507
    %v3744 = vpack.c.b16 %v3516, %v3512
    %v3745 = vpack.c.b16 %v3517, %v3513
    %v3746 = vpack.c.b16 %v3518, %v3514
    %v3747 = vpack.c.b16 %v3519, %v3515
    %v3748 = vpack.c.b16 %v3524, %v3520
    %v3749 = vpack.c.b16 %v3525, %v3521
    %v3750 = vpack.c.b16 %v3526, %v3522
    %v3751 = vpack.c.b16 %v3527, %v3523
    %v3752 = vpack.c.b16 %v3532, %v3528
    %v3753 = vpack.c.b16 %v3533, %v3529
    %v3754 = vpack.c.b16 %v3534, %v3530
    %v3755 = vpack.c.b16 %v3535, %v3531
    %v3756 = vpack.c.b16 %v3540, %v3536
    %v3757 = vpack.c.b16 %v3541, %v3537
    %v3758 = vpack.c.b16 %v3542, %v3538
    %v3759 = vpack.c.b16 %v3543, %v3539
    %v3760 = vpack.c.b16 %v3548, %v3544
    %v3761 = vpack.c.b16 %v3549, %v3545
    %v3762 = vpack.c.b16 %v3550, %v3546
    %v3763 = vpack.c.b16 %v3551, %v3547
    %v3764 = vpack.c.b16 %v3556, %v3552
    %v3765 = vpack.c.b16 %v3557, %v3553
    %v3766 = vpack.c.b16 %v3558, %v3554
    %v3767 = vpack.c.b16 %v3559, %v3555
    %v3768 = vpack.c.b16 %v3564, %v3560
    %v3769 = vpack.c.b16 %v3565, %v3561
    %v3770 = vpack.c.b16 %v3566, %v3562
    %v3771 = vpack.c.b16 %v3567, %v3563
    %v3772 = vpack.c.b16 %v3572, %v3568
    %v3773 = vpack.c.b16 %v3573, %v3569
    %v3774 = vpack.c.b16 %v3574, %v3570
    %v3775 = vpack.c.b16 %v3575, %v3571
    %v3776 = vpack.c.b16 %v3580, %v3576
    %v3777 = vpack.c.b16 %v3581, %v3577
    %v3778 = vpack.c.b16 %v3582, %v3578
    %v3779 = vpack.c.b16 %v3583, %v3579
    %v3780 = vpack.c.b16 %v3588, %v3584
    %v3781 = vpack.c.b16 %v3589, %v3585
    %v3782 = vpack.c.b16 %v3590, %v3586
    %v3783 = vpack.c.b16 %v3591, %v3587
    %3976 = vmatprep.subr.bf16.mxu0 %v3621
    %3977 = vmatpush1.bf16.msra.mxu0 %v3620
    %3978 = vmatprep.subr.bf16.mxu0 %v3617
    %3979 = vmatpush1.bf16.msra.mxu0 %v3616
    %3980 = vmatprep.subr.bf16.mxu0 %v3613
    %3981 = vmatpush1.bf16.msra.mxu0 %v3612
    %3982 = vmatprep.subr.bf16.mxu0 %v3609
    %3983 = vmatpush1.bf16.msra.mxu0 %v3608
    %3984 = vmatprep.subr.bf16.mxu0 %v3605
    %3985 = vmatpush1.bf16.msra.mxu0 %v3604
    %3986 = vmatprep.subr.bf16.mxu0 %v3601
    %3987 = vmatpush1.bf16.msra.mxu0 %v3600
    %3988 = vmatprep.subr.bf16.mxu0 %v3597
    %3989 = vmatpush1.bf16.msra.mxu0 %v3596
    %3990 = vmatprep.subr.bf16.mxu0 %v3593
    %3991 = vmatpush1.bf16.msra.mxu0 %v3592
    %3992 = vmatprep.subr.bf16.mxu0 %v3653
    %3993 = vmatpush2.bf16.msra.mxu0 %v3652
    %3994 = vmatprep.subr.bf16.mxu0 %v3649
    %3995 = vmatpush2.bf16.msra.mxu0 %v3648
    %3996 = vmatprep.subr.bf16.mxu0 %v3645
    %3997 = vmatpush2.bf16.msra.mxu0 %v3644
    %3998 = vmatprep.subr.bf16.mxu0 %v3641
    %3999 = vmatpush2.bf16.msra.mxu0 %v3640
    %4000 = vmatprep.subr.bf16.mxu0 %v3637
    %4001 = vmatpush2.bf16.msra.mxu0 %v3636
    %4002 = vmatprep.subr.bf16.mxu0 %v3633
    %4003 = vmatpush2.bf16.msra.mxu0 %v3632
    %4004 = vmatprep.subr.bf16.mxu0 %v3629
    %4005 = vmatpush2.bf16.msra.mxu0 %v3628
    %4006 = vmatprep.subr.bf16.mxu0 %v3625
    %4007 = vmatpush2.bf16.msra.mxu0 %v3624
    %4008 = vmatprep.mubr.bf16.mxu0 %v2780
    %4009 = vmatmul.mubr.bf16.gmra.mxu0 %v2779
    %v4010 = vpop.f32.mrf.mxu0
    %v4011 = vadd.f32 %v3003, %v4010
    %v4012 = vpop.f32.mrf.mxu0
    %v4013 = vadd.f32 %v3007, %v4012
    %v4014 = vpop.f32.mrf.mxu0
    %v4015 = vpop.f32.mrf.mxu0
    %4016 = vdwg.mxu0
    %4017 = vmatprep.subr.bf16.mxu0 %v3685
    %4018 = vmatpush1.bf16.msra.mxu0 %v3684
    %4019 = vmatprep.subr.bf16.mxu0 %v3681
    %4020 = vmatpush1.bf16.msra.mxu0 %v3680
    %4021 = vmatprep.subr.bf16.mxu0 %v3677
    %4022 = vmatpush1.bf16.msra.mxu0 %v3676
    %4023 = vmatprep.subr.bf16.mxu0 %v3673
    %4024 = vmatpush1.bf16.msra.mxu0 %v3672
    %4025 = vmatprep.subr.bf16.mxu0 %v3669
    %4026 = vmatpush1.bf16.msra.mxu0 %v3668
    %4027 = vmatprep.subr.bf16.mxu0 %v3665
    %4028 = vmatpush1.bf16.msra.mxu0 %v3664
    %4029 = vmatprep.subr.bf16.mxu0 %v3661
    %4030 = vmatpush1.bf16.msra.mxu0 %v3660
    %4031 = vmatprep.subr.bf16.mxu0 %v3657
    %4032 = vmatpush1.bf16.msra.mxu0 %v3656
    %4033 = vmatprep.subr.bf16.mxu0 %v3717
    %4034 = vmatpush2.bf16.msra.mxu0 %v3716
    %4035 = vmatprep.subr.bf16.mxu0 %v3713
    %4036 = vmatpush2.bf16.msra.mxu0 %v3712
    %4037 = vmatprep.subr.bf16.mxu0 %v3709
    %4038 = vmatpush2.bf16.msra.mxu0 %v3708
    %4039 = vmatprep.subr.bf16.mxu0 %v3705
    %4040 = vmatpush2.bf16.msra.mxu0 %v3704
    %4041 = vmatprep.subr.bf16.mxu0 %v3701
    %4042 = vmatpush2.bf16.msra.mxu0 %v3700
    %4043 = vmatprep.subr.bf16.mxu0 %v3697
    %4044 = vmatpush2.bf16.msra.mxu0 %v3696
    %4045 = vmatprep.subr.bf16.mxu0 %v3693
    %4046 = vmatpush2.bf16.msra.mxu0 %v3692
    %4047 = vmatprep.subr.bf16.mxu0 %v3689
    %4048 = vmatpush2.bf16.msra.mxu0 %v3688
    %4049 = vmatprep.mubr.bf16.mxu0 %v2782
    %4050 = vmatmul.mubr.bf16.gmra.mxu0 %v2781
    %v4051 = vpop.f32.mrf.mxu0
    %v4052 = vadd.f32 %v4011, %v4051
    %v4053 = vpop.f32.mrf.mxu0
    %v4054 = vadd.f32 %v4013, %v4053
    %v4055 = vpop.f32.mrf.mxu0
    %v4056 = vpop.f32.mrf.mxu0
    %4057 = vdwg.mxu0
    %4058 = vmatprep.subr.bf16.mxu0 %v3749
    %4059 = vmatpush1.bf16.msra.mxu0 %v3748
    %4060 = vmatprep.subr.bf16.mxu0 %v3745
    %4061 = vmatpush1.bf16.msra.mxu0 %v3744
    %4062 = vmatprep.subr.bf16.mxu0 %v3741
    %4063 = vmatpush1.bf16.msra.mxu0 %v3740
    %4064 = vmatprep.subr.bf16.mxu0 %v3737
    %4065 = vmatpush1.bf16.msra.mxu0 %v3736
    %4066 = vmatprep.subr.bf16.mxu0 %v3733
    %4067 = vmatpush1.bf16.msra.mxu0 %v3732
    %4068 = vmatprep.subr.bf16.mxu0 %v3729
    %4069 = vmatpush1.bf16.msra.mxu0 %v3728
    %4070 = vmatprep.subr.bf16.mxu0 %v3725
    %4071 = vmatpush1.bf16.msra.mxu0 %v3724
    %4072 = vmatprep.subr.bf16.mxu0 %v3721
    %4073 = vmatpush1.bf16.msra.mxu0 %v3720
    %4074 = vmatprep.subr.bf16.mxu0 %v3781
    %4075 = vmatpush2.bf16.msra.mxu0 %v3780
    %4076 = vmatprep.subr.bf16.mxu0 %v3777
    %4077 = vmatpush2.bf16.msra.mxu0 %v3776
    %4078 = vmatprep.subr.bf16.mxu0 %v3773
    %4079 = vmatpush2.bf16.msra.mxu0 %v3772
    %4080 = vmatprep.subr.bf16.mxu0 %v3769
    %4081 = vmatpush2.bf16.msra.mxu0 %v3768
    %4082 = vmatprep.subr.bf16.mxu0 %v3765
    %4083 = vmatpush2.bf16.msra.mxu0 %v3764
    %4084 = vmatprep.subr.bf16.mxu0 %v3761
    %4085 = vmatpush2.bf16.msra.mxu0 %v3760
    %4086 = vmatprep.subr.bf16.mxu0 %v3757
    %4087 = vmatpush2.bf16.msra.mxu0 %v3756
    %4088 = vmatprep.subr.bf16.mxu0 %v3753
    %4089 = vmatpush2.bf16.msra.mxu0 %v3752
    %4090 = vmatprep.mubr.bf16.mxu0 %v2784
    %4091 = vmatmul.mubr.bf16.gmra.mxu0 %v2783
    %v4092 = vpop.f32.mrf.mxu0
    %v4093 = vadd.f32 %v4052, %v4092
    %v4094 = vpop.f32.mrf.mxu0
    %v4095 = vadd.f32 %v4054, %v4094
    %v4096 = vpop.f32.mrf.mxu0
    %v4097 = vpop.f32.mrf.mxu0
    %4098 = vdwg.mxu0
    %4099 = vmatprep.subr.bf16.mxu0 %v3623
    %4100 = vmatpush1.bf16.msra.mxu0 %v3622
    %4101 = vmatprep.subr.bf16.mxu0 %v3619
    %4102 = vmatpush1.bf16.msra.mxu0 %v3618
    %4103 = vmatprep.subr.bf16.mxu0 %v3615
    %4104 = vmatpush1.bf16.msra.mxu0 %v3614
    %4105 = vmatprep.subr.bf16.mxu0 %v3611
    %4106 = vmatpush1.bf16.msra.mxu0 %v3610
    %4107 = vmatprep.subr.bf16.mxu0 %v3607
    %4108 = vmatpush1.bf16.msra.mxu0 %v3606
    %4109 = vmatprep.subr.bf16.mxu0 %v3603
    %4110 = vmatpush1.bf16.msra.mxu0 %v3602
    %4111 = vmatprep.subr.bf16.mxu0 %v3599
    %4112 = vmatpush1.bf16.msra.mxu0 %v3598
    %4113 = vmatprep.subr.bf16.mxu0 %v3595
    %4114 = vmatpush1.bf16.msra.mxu0 %v3594
    %4115 = vmatprep.subr.bf16.mxu0 %v3655
    %4116 = vmatpush2.bf16.msra.mxu0 %v3654
    %4117 = vmatprep.subr.bf16.mxu0 %v3651
    %4118 = vmatpush2.bf16.msra.mxu0 %v3650
    %4119 = vmatprep.subr.bf16.mxu0 %v3647
    %4120 = vmatpush2.bf16.msra.mxu0 %v3646
    %4121 = vmatprep.subr.bf16.mxu0 %v3643
    %4122 = vmatpush2.bf16.msra.mxu0 %v3642
    %4123 = vmatprep.subr.bf16.mxu0 %v3639
    %4124 = vmatpush2.bf16.msra.mxu0 %v3638
    %4125 = vmatprep.subr.bf16.mxu0 %v3635
    %4126 = vmatpush2.bf16.msra.mxu0 %v3634
    %4127 = vmatprep.subr.bf16.mxu0 %v3631
    %4128 = vmatpush2.bf16.msra.mxu0 %v3630
    %4129 = vmatprep.subr.bf16.mxu0 %v3627
    %4130 = vmatpush2.bf16.msra.mxu0 %v3626
    %4131 = vmatprep.mubr.bf16.mxu0 %v2780
    %4132 = vmatmul.mubr.bf16.gmra.mxu0 %v2779
    %v4133 = vpop.f32.mrf.mxu0
    %v4134 = vadd.f32 %v3011, %v4133
    %v4135 = vpop.f32.mrf.mxu0
    %v4136 = vadd.f32 %v3015, %v4135
    %v4137 = vpop.f32.mrf.mxu0
    %v4138 = vpop.f32.mrf.mxu0
    %4139 = vdwg.mxu0
    %4140 = vmatprep.subr.bf16.mxu0 %v3687
    %4141 = vmatpush1.bf16.msra.mxu0 %v3686
    %4142 = vmatprep.subr.bf16.mxu0 %v3683
    %4143 = vmatpush1.bf16.msra.mxu0 %v3682
    %4144 = vmatprep.subr.bf16.mxu0 %v3679
    %4145 = vmatpush1.bf16.msra.mxu0 %v3678
    %4146 = vmatprep.subr.bf16.mxu0 %v3675
    %4147 = vmatpush1.bf16.msra.mxu0 %v3674
    %4148 = vmatprep.subr.bf16.mxu0 %v3671
    %4149 = vmatpush1.bf16.msra.mxu0 %v3670
    %4150 = vmatprep.subr.bf16.mxu0 %v3667
    %4151 = vmatpush1.bf16.msra.mxu0 %v3666
    %4152 = vmatprep.subr.bf16.mxu0 %v3663
    %4153 = vmatpush1.bf16.msra.mxu0 %v3662
    %4154 = vmatprep.subr.bf16.mxu0 %v3659
    %4155 = vmatpush1.bf16.msra.mxu0 %v3658
    %4156 = vmatprep.subr.bf16.mxu0 %v3719
    %4157 = vmatpush2.bf16.msra.mxu0 %v3718
    %4158 = vmatprep.subr.bf16.mxu0 %v3715
    %4159 = vmatpush2.bf16.msra.mxu0 %v3714
    %4160 = vmatprep.subr.bf16.mxu0 %v3711
    %4161 = vmatpush2.bf16.msra.mxu0 %v3710
    %4162 = vmatprep.subr.bf16.mxu0 %v3707
    %4163 = vmatpush2.bf16.msra.mxu0 %v3706
    %4164 = vmatprep.subr.bf16.mxu0 %v3703
    %4165 = vmatpush2.bf16.msra.mxu0 %v3702
    %4166 = vmatprep.subr.bf16.mxu0 %v3699
    %4167 = vmatpush2.bf16.msra.mxu0 %v3698
    %4168 = vmatprep.subr.bf16.mxu0 %v3695
    %4169 = vmatpush2.bf16.msra.mxu0 %v3694
    %4170 = vmatprep.subr.bf16.mxu0 %v3691
    %4171 = vmatpush2.bf16.msra.mxu0 %v3690
    %4172 = vmatprep.mubr.bf16.mxu0 %v2782
    %4173 = vmatmul.mubr.bf16.gmra.mxu0 %v2781
    %v4174 = vpop.f32.mrf.mxu0
    %v4175 = vadd.f32 %v4134, %v4174
    %v4176 = vpop.f32.mrf.mxu0
    %v4177 = vadd.f32 %v4136, %v4176
    %v4178 = vpop.f32.mrf.mxu0
    %v4179 = vpop.f32.mrf.mxu0
    %4180 = vdwg.mxu0
    %4181 = vmatprep.subr.bf16.mxu0 %v3751
    %4182 = vmatpush1.bf16.msra.mxu0 %v3750
    %4183 = vmatprep.subr.bf16.mxu0 %v3747
    %4184 = vmatpush1.bf16.msra.mxu0 %v3746
    %4185 = vmatprep.subr.bf16.mxu0 %v3743
    %4186 = vmatpush1.bf16.msra.mxu0 %v3742
    %4187 = vmatprep.subr.bf16.mxu0 %v3739
    %4188 = vmatpush1.bf16.msra.mxu0 %v3738
    %4189 = vmatprep.subr.bf16.mxu0 %v3735
    %4190 = vmatpush1.bf16.msra.mxu0 %v3734
    %4191 = vmatprep.subr.bf16.mxu0 %v3731
    %4192 = vmatpush1.bf16.msra.mxu0 %v3730
    %4193 = vmatprep.subr.bf16.mxu0 %v3727
    %4194 = vmatpush1.bf16.msra.mxu0 %v3726
    %4195 = vmatprep.subr.bf16.mxu0 %v3723
    %4196 = vmatpush1.bf16.msra.mxu0 %v3722
    %4197 = vmatprep.subr.bf16.mxu0 %v3783
    %4198 = vmatpush2.bf16.msra.mxu0 %v3782
    %4199 = vmatprep.subr.bf16.mxu0 %v3779
    %4200 = vmatpush2.bf16.msra.mxu0 %v3778
    %4201 = vmatprep.subr.bf16.mxu0 %v3775
    %4202 = vmatpush2.bf16.msra.mxu0 %v3774
    %4203 = vmatprep.subr.bf16.mxu0 %v3771
    %4204 = vmatpush2.bf16.msra.mxu0 %v3770
    %4205 = vmatprep.subr.bf16.mxu0 %v3767
    %4206 = vmatpush2.bf16.msra.mxu0 %v3766
    %4207 = vmatprep.subr.bf16.mxu0 %v3763
    %4208 = vmatpush2.bf16.msra.mxu0 %v3762
    %4209 = vmatprep.subr.bf16.mxu0 %v3759
    %4210 = vmatpush2.bf16.msra.mxu0 %v3758
    %4211 = vmatprep.subr.bf16.mxu0 %v3755
    %4212 = vmatpush2.bf16.msra.mxu0 %v3754
    %4213 = vmatprep.mubr.bf16.mxu0 %v2784
    %4214 = vmatmul.mubr.bf16.gmra.mxu0 %v2783
    %v4215 = vpop.f32.mrf.mxu0
    %v4216 = vadd.f32 %v4175, %v4215
    %v4217 = vpop.f32.mrf.mxu0
    %v4218 = vadd.f32 %v4177, %v4217
    %v4219 = vpop.f32.mrf.mxu0
    %v4220 = vpop.f32.mrf.mxu0
    %4221 = vdwg.mxu0
    %v4222 = vmax.f32 %v4093, 0.0
    %v4223 = vmax.f32 %v4095, 0.0
    %v4224 = vmax.f32 %v4216, 0.0
    %v4225 = vmax.f32 %v4218, 0.0
    %v4226 = vpack.c.bf16 %v4222, %v4222
    %v4227 = vpack.c.bf16 %v4223, %v4223
    %v4228 = vpack.c.bf16 %v4224, %v4224
    %v4229 = vpack.c.bf16 %v4225, %v4225
    %v4230 = vld [vmem:[#allocation11] sm:$0xff]
    %v4231 = vld [vmem:[#allocation11 + $0x8] sm:$0xf]
    %v4232 = vld [vmem:[#allocation11 + $0xc] sm:$0xff]
    %v4233 = vld [vmem:[#allocation11 + $0x14] sm:$0xf]
    %v4234 = vld [vmem:[#allocation11 + $0x18] sm:$0xff]
    %v4235 = vld [vmem:[#allocation11 + $0x20] sm:$0xf]
    %v4236 = vld [vmem:[#allocation11 + $0x24] sm:$0xff]
    %v4237 = vld [vmem:[#allocation11 + $0x2c] sm:$0xf]
    %v4238 = vld [vmem:[#allocation11 + $0x30] sm:$0xff]
    %v4239 = vld [vmem:[#allocation11 + $0x38] sm:$0xf]
    %v4240 = vld [vmem:[#allocation11 + $0x3c] sm:$0xff]
    %v4241 = vld [vmem:[#allocation11 + $0x44] sm:$0xf]
    %v4242 = vld [vmem:[#allocation11 + $0x48] sm:$0xff]
    %v4243 = vld [vmem:[#allocation11 + $0x50] sm:$0xf]
    %v4244 = vld [vmem:[#allocation11 + $0x54] sm:$0xff]
    %v4245 = vld [vmem:[#allocation11 + $0x5c] sm:$0xf]
    %v4246 = vld [vmem:[#allocation11 + $0x60] sm:$0xff]
    %v4247 = vld [vmem:[#allocation11 + $0x68] sm:$0xf]
    %v4248 = vld [vmem:[#allocation11 + $0x6c] sm:$0xff]
    %v4249 = vld [vmem:[#allocation11 + $0x74] sm:$0xf]
    %v4250 = vld [vmem:[#allocation11 + $0x78] sm:$0xff]
    %v4251 = vld [vmem:[#allocation11 + $0x80] sm:$0xf]
    %v4252 = vld [vmem:[#allocation11 + $0x84] sm:$0xff]
    %v4253 = vld [vmem:[#allocation11 + $0x8c] sm:$0xf]
    %v4254 = vld [vmem:[#allocation11 + $0x90] sm:$0xff]
    %v4255 = vld [vmem:[#allocation11 + $0x98] sm:$0xf]
    %v4256 = vld [vmem:[#allocation11 + $0x9c] sm:$0xff]
    %v4257 = vld [vmem:[#allocation11 + $0xa4] sm:$0xf]
    %v4258 = vld [vmem:[#allocation11 + $0xa8] sm:$0xff]
    %v4259 = vld [vmem:[#allocation11 + $0xb0] sm:$0xf]
    %v4260 = vld [vmem:[#allocation11 + $0xb4] sm:$0xff]
    %v4261 = vld [vmem:[#allocation11 + $0xbc] sm:$0xf]
    %v4262 = vld [vmem:[#allocation11 + $0xc0] sm:$0xff]
    %v4263 = vld [vmem:[#allocation11 + $0xc8] sm:$0xf]
    %v4264 = vld [vmem:[#allocation11 + $0xcc] sm:$0xff]
    %v4265 = vld [vmem:[#allocation11 + $0xd4] sm:$0xf]
    %v4266 = vld [vmem:[#allocation11 + $0xd8] sm:$0xff]
    %v4267 = vld [vmem:[#allocation11 + $0xe0] sm:$0xf]
    %v4268 = vld [vmem:[#allocation11 + $0xe4] sm:$0xff]
    %v4269 = vld [vmem:[#allocation11 + $0xec] sm:$0xf]
    %v4270 = vld [vmem:[#allocation11 + $0xf0] sm:$0xff]
    %v4271 = vld [vmem:[#allocation11 + $0xf8] sm:$0xf]
    %v4272 = vld [vmem:[#allocation11 + $0xfc] sm:$0xff]
    %v4273 = vld [vmem:[#allocation11 + $0x104] sm:$0xf]
    %v4274 = vld [vmem:[#allocation11 + $0x108] sm:$0xff]
    %v4275 = vld [vmem:[#allocation11 + $0x110] sm:$0xf]
    %v4276 = vld [vmem:[#allocation11 + $0x114] sm:$0xff]
    %v4277 = vld [vmem:[#allocation11 + $0x11c] sm:$0xf]
    %v4278 = vld [vmem:[#allocation11 + $0x120] sm:$0xff]
    %v4279 = vld [vmem:[#allocation11 + $0x128] sm:$0xf]
    %v4280 = vld [vmem:[#allocation11 + $0x12c] sm:$0xff]
    %v4281 = vld [vmem:[#allocation11 + $0x134] sm:$0xf]
    %v4282 = vld [vmem:[#allocation11 + $0x138] sm:$0xff]
    %v4283 = vld [vmem:[#allocation11 + $0x140] sm:$0xf]
    %v4284 = vld [vmem:[#allocation11 + $0x144] sm:$0xff]
    %v4285 = vld [vmem:[#allocation11 + $0x14c] sm:$0xf]
    %v4286 = vld [vmem:[#allocation11 + $0x150] sm:$0xff]
    %v4287 = vld [vmem:[#allocation11 + $0x158] sm:$0xf]
    %v4288 = vld [vmem:[#allocation11 + $0x15c] sm:$0xff]
    %v4289 = vld [vmem:[#allocation11 + $0x164] sm:$0xf]
    %v4290 = vld [vmem:[#allocation11 + $0x168] sm:$0xff]
    %v4291 = vld [vmem:[#allocation11 + $0x170] sm:$0xf]
    %v4292 = vld [vmem:[#allocation11 + $0x174] sm:$0xff]
    %v4293 = vld [vmem:[#allocation11 + $0x17c] sm:$0xf]
    %v4294 = vld [vmem:[#allocation11 + $0x180] sm:$0xff]
    %v4295 = vld [vmem:[#allocation11 + $0x188] sm:$0xf]
    %v4296 = vld [vmem:[#allocation11 + $0x18c] sm:$0xff]
    %v4297 = vld [vmem:[#allocation11 + $0x194] sm:$0xf]
    %v4298 = vld [vmem:[#allocation11 + $0x198] sm:$0xff]
    %v4299 = vld [vmem:[#allocation11 + $0x1a0] sm:$0xf]
    %v4300 = vld [vmem:[#allocation11 + $0x1a4] sm:$0xff]
    %v4301 = vld [vmem:[#allocation11 + $0x1ac] sm:$0xf]
    %v4302 = vld [vmem:[#allocation11 + $0x1b0] sm:$0xff]
    %v4303 = vld [vmem:[#allocation11 + $0x1b8] sm:$0xf]
    %v4304 = vld [vmem:[#allocation11 + $0x1bc] sm:$0xff]
    %v4305 = vld [vmem:[#allocation11 + $0x1c4] sm:$0xf]
    %v4306 = vld [vmem:[#allocation11 + $0x1c8] sm:$0xff]
    %v4307 = vld [vmem:[#allocation11 + $0x1d0] sm:$0xf]
    %v4308 = vld [vmem:[#allocation11 + $0x1d4] sm:$0xff]
    %v4309 = vld [vmem:[#allocation11 + $0x1dc] sm:$0xf]
    %v4310 = vld [vmem:[#allocation11 + $0x1e0] sm:$0xff]
    %v4311 = vld [vmem:[#allocation11 + $0x1e8] sm:$0xf]
    %v4312 = vld [vmem:[#allocation11 + $0x1ec] sm:$0xff]
    %v4313 = vld [vmem:[#allocation11 + $0x1f4] sm:$0xf]
    %v4314 = vld [vmem:[#allocation11 + $0x1f8] sm:$0xff]
    %v4315 = vld [vmem:[#allocation11 + $0x200] sm:$0xf]
    %v4316 = vld [vmem:[#allocation11 + $0x204] sm:$0xff]
    %v4317 = vld [vmem:[#allocation11 + $0x20c] sm:$0xf]
    %v4318 = vld [vmem:[#allocation11 + $0x210] sm:$0xff]
    %v4319 = vld [vmem:[#allocation11 + $0x218] sm:$0xf]
    %v4320 = vld [vmem:[#allocation11 + $0x21c] sm:$0xff]
    %v4321 = vld [vmem:[#allocation11 + $0x224] sm:$0xf]
    %v4322 = vld [vmem:[#allocation11 + $0x228] sm:$0xff]
    %v4323 = vld [vmem:[#allocation11 + $0x230] sm:$0xf]
    %v4324 = vld [vmem:[#allocation11 + $0x234] sm:$0xff]
    %v4325 = vld [vmem:[#allocation11 + $0x23c] sm:$0xf]
    %v4326 = vld [vmem:[#allocation11 + $0x240] sm:$0xff]
    %v4327 = vld [vmem:[#allocation11 + $0x248] sm:$0xf]
    %v4328 = vld [vmem:[#allocation11 + $0x24c] sm:$0xff]
    %v4329 = vld [vmem:[#allocation11 + $0x254] sm:$0xf]
    %v4330 = vld [vmem:[#allocation11 + $0x258] sm:$0xff]
    %v4331 = vld [vmem:[#allocation11 + $0x260] sm:$0xf]
    %v4332 = vld [vmem:[#allocation11 + $0x264] sm:$0xff]
    %v4333 = vld [vmem:[#allocation11 + $0x26c] sm:$0xf]
    %v4334 = vld [vmem:[#allocation11 + $0x270] sm:$0xff]
    %v4335 = vld [vmem:[#allocation11 + $0x278] sm:$0xf]
    %v4336 = vld [vmem:[#allocation11 + $0x27c] sm:$0xff]
    %v4337 = vld [vmem:[#allocation11 + $0x284] sm:$0xf]
    %v4338 = vld [vmem:[#allocation11 + $0x288] sm:$0xff]
    %v4339 = vld [vmem:[#allocation11 + $0x290] sm:$0xf]
    %v4340 = vld [vmem:[#allocation11 + $0x294] sm:$0xff]
    %v4341 = vld [vmem:[#allocation11 + $0x29c] sm:$0xf]
    %v4342 = vld [vmem:[#allocation11 + $0x2a0] sm:$0xff]
    %v4343 = vld [vmem:[#allocation11 + $0x2a8] sm:$0xf]
    %v4344 = vld [vmem:[#allocation11 + $0x2ac] sm:$0xff]
    %v4345 = vld [vmem:[#allocation11 + $0x2b4] sm:$0xf]
    %v4346 = vld [vmem:[#allocation11 + $0x2b8] sm:$0xff]
    %v4347 = vld [vmem:[#allocation11 + $0x2c0] sm:$0xf]
    %v4348 = vld [vmem:[#allocation11 + $0x2c4] sm:$0xff]
    %v4349 = vld [vmem:[#allocation11 + $0x2cc] sm:$0xf]
    %v4350 = vld [vmem:[#allocation11 + $0x2d0] sm:$0xff]
    %v4351 = vld [vmem:[#allocation11 + $0x2d8] sm:$0xf]
    %v4352 = vld [vmem:[#allocation11 + $0x2dc] sm:$0xff]
    %v4353 = vld [vmem:[#allocation11 + $0x2e4] sm:$0xf]
    %v4354 = vld [vmem:[#allocation11 + $0x2e8] sm:$0xff]
    %v4355 = vld [vmem:[#allocation11 + $0x2f0] sm:$0xf]
    %v4356 = vld [vmem:[#allocation11 + $0x2f4] sm:$0xff]
    %v4357 = vld [vmem:[#allocation11 + $0x2fc] sm:$0xf]
    %v4358 = vld [vmem:[#allocation13] sm:$0x7]
    %v4359 = vunpack.c.l.bf16 %v4358
    %v4361 = vlaneseq
    %v4362 = vshrl.u32 %v4361, 7
    %v4363 = vsub.s32 0, %v4362
    %v4364 = vrot.slane %v4359, %v4363
    %v4365 = vlaneseq
    %v4366 = vshrl.u32 %v4365, 7
    %v4367 = vsub.s32 2, %v4366
    %v4368 = vrot.slane %v4359, %v4367
    %v4369 = vlaneseq
    %v4370 = vshrl.u32 %v4369, 7
    %v4371 = vsub.s32 4, %v4370
    %v4372 = vrot.slane %v4359, %v4371
    %v4376 = vlaneseq
    %v4377 = vshrl.u32 %v4376, 7
    %v4378 = vsub.s32 0, %v4377
    %v4379 = vrot.slane %v4364, %v4378
    %v4380 = vlaneseq
    %v4381 = vshrl.u32 %v4380, 7
    %v4382 = vsub.s32 0, %v4381
    %v4383 = vrot.slane %v4368, %v4382
    %v4384 = vlaneseq
    %v4385 = vshrl.u32 %v4384, 7
    %v4386 = vsub.s32 0, %v4385
    %v4387 = vrot.slane %v4372, %v4386
    %v4516 = vunpack.c.l.b16 %v4230
    %v4517 = vunpack.c.h.b16 %v4230
    %v4518 = vunpack.c.l.b16 %v4231
    %v4519 = vunpack.c.l.b16 %v4232
    %v4520 = vunpack.c.h.b16 %v4232
    %v4521 = vunpack.c.l.b16 %v4233
    %v4522 = vunpack.c.l.b16 %v4234
    %v4523 = vunpack.c.h.b16 %v4234
    %v4524 = vunpack.c.l.b16 %v4235
    %v4525 = vunpack.c.l.b16 %v4236
    %v4526 = vunpack.c.h.b16 %v4236
    %v4527 = vunpack.c.l.b16 %v4237
    %v4528 = vunpack.c.l.b16 %v4238
    %v4529 = vunpack.c.h.b16 %v4238
    %v4530 = vunpack.c.l.b16 %v4239
    %v4531 = vunpack.c.l.b16 %v4240
    %v4532 = vunpack.c.h.b16 %v4240
    %v4533 = vunpack.c.l.b16 %v4241
    %v4534 = vunpack.c.l.b16 %v4242
    %v4535 = vunpack.c.h.b16 %v4242
    %v4536 = vunpack.c.l.b16 %v4243
    %v4537 = vunpack.c.l.b16 %v4244
    %v4538 = vunpack.c.h.b16 %v4244
    %v4539 = vunpack.c.l.b16 %v4245
    %v4540 = vunpack.c.l.b16 %v4246
    %v4541 = vunpack.c.h.b16 %v4246
    %v4542 = vunpack.c.l.b16 %v4247
    %v4543 = vunpack.c.l.b16 %v4248
    %v4544 = vunpack.c.h.b16 %v4248
    %v4545 = vunpack.c.l.b16 %v4249
    %v4546 = vunpack.c.l.b16 %v4250
    %v4547 = vunpack.c.h.b16 %v4250
    %v4548 = vunpack.c.l.b16 %v4251
    %v4549 = vunpack.c.l.b16 %v4252
    %v4550 = vunpack.c.h.b16 %v4252
    %v4551 = vunpack.c.l.b16 %v4253
    %v4552 = vunpack.c.l.b16 %v4254
    %v4553 = vunpack.c.h.b16 %v4254
    %v4554 = vunpack.c.l.b16 %v4255
    %v4555 = vunpack.c.l.b16 %v4256
    %v4556 = vunpack.c.h.b16 %v4256
    %v4557 = vunpack.c.l.b16 %v4257
    %v4558 = vunpack.c.l.b16 %v4258
    %v4559 = vunpack.c.h.b16 %v4258
    %v4560 = vunpack.c.l.b16 %v4259
    %v4561 = vunpack.c.l.b16 %v4260
    %v4562 = vunpack.c.h.b16 %v4260
    %v4563 = vunpack.c.l.b16 %v4261
    %v4564 = vunpack.c.l.b16 %v4262
    %v4565 = vunpack.c.h.b16 %v4262
    %v4566 = vunpack.c.l.b16 %v4263
    %v4567 = vunpack.c.l.b16 %v4264
    %v4568 = vunpack.c.h.b16 %v4264
    %v4569 = vunpack.c.l.b16 %v4265
    %v4570 = vunpack.c.l.b16 %v4266
    %v4571 = vunpack.c.h.b16 %v4266
    %v4572 = vunpack.c.l.b16 %v4267
    %v4573 = vunpack.c.l.b16 %v4268
    %v4574 = vunpack.c.h.b16 %v4268
    %v4575 = vunpack.c.l.b16 %v4269
    %v4576 = vunpack.c.l.b16 %v4270
    %v4577 = vunpack.c.h.b16 %v4270
    %v4578 = vunpack.c.l.b16 %v4271
    %v4579 = vunpack.c.l.b16 %v4272
    %v4580 = vunpack.c.h.b16 %v4272
    %v4581 = vunpack.c.l.b16 %v4273
    %v4582 = vunpack.c.l.b16 %v4274
    %v4583 = vunpack.c.h.b16 %v4274
    %v4584 = vunpack.c.l.b16 %v4275
    %v4585 = vunpack.c.l.b16 %v4276
    %v4586 = vunpack.c.h.b16 %v4276
    %v4587 = vunpack.c.l.b16 %v4277
    %v4588 = vunpack.c.l.b16 %v4278
    %v4589 = vunpack.c.h.b16 %v4278
    %v4590 = vunpack.c.l.b16 %v4279
    %v4591 = vunpack.c.l.b16 %v4280
    %v4592 = vunpack.c.h.b16 %v4280
    %v4593 = vunpack.c.l.b16 %v4281
    %v4594 = vunpack.c.l.b16 %v4282
    %v4595 = vunpack.c.h.b16 %v4282
    %v4596 = vunpack.c.l.b16 %v4283
    %v4597 = vunpack.c.l.b16 %v4284
    %v4598 = vunpack.c.h.b16 %v4284
    %v4599 = vunpack.c.l.b16 %v4285
    %v4600 = vunpack.c.l.b16 %v4286
    %v4601 = vunpack.c.h.b16 %v4286
    %v4602 = vunpack.c.l.b16 %v4287
    %v4603 = vunpack.c.l.b16 %v4288
    %v4604 = vunpack.c.h.b16 %v4288
    %v4605 = vunpack.c.l.b16 %v4289
    %v4606 = vunpack.c.l.b16 %v4290
    %v4607 = vunpack.c.h.b16 %v4290
    %v4608 = vunpack.c.l.b16 %v4291
    %v4609 = vunpack.c.l.b16 %v4292
    %v4610 = vunpack.c.h.b16 %v4292
    %v4611 = vunpack.c.l.b16 %v4293
    %v4612 = vunpack.c.l.b16 %v4294
    %v4613 = vunpack.c.h.b16 %v4294
    %v4614 = vunpack.c.l.b16 %v4295
    %v4615 = vunpack.c.l.b16 %v4296
    %v4616 = vunpack.c.h.b16 %v4296
    %v4617 = vunpack.c.l.b16 %v4297
    %v4618 = vunpack.c.l.b16 %v4298
    %v4619 = vunpack.c.h.b16 %v4298
    %v4620 = vunpack.c.l.b16 %v4299
    %v4621 = vunpack.c.l.b16 %v4300
    %v4622 = vunpack.c.h.b16 %v4300
    %v4623 = vunpack.c.l.b16 %v4301
    %v4624 = vunpack.c.l.b16 %v4302
    %v4625 = vunpack.c.h.b16 %v4302
    %v4626 = vunpack.c.l.b16 %v4303
    %v4627 = vunpack.c.l.b16 %v4304
    %v4628 = vunpack.c.h.b16 %v4304
    %v4629 = vunpack.c.l.b16 %v4305
    %v4630 = vunpack.c.l.b16 %v4306
    %v4631 = vunpack.c.h.b16 %v4306
    %v4632 = vunpack.c.l.b16 %v4307
    %v4633 = vunpack.c.l.b16 %v4308
    %v4634 = vunpack.c.h.b16 %v4308
    %v4635 = vunpack.c.l.b16 %v4309
    %v4636 = vunpack.c.l.b16 %v4310
    %v4637 = vunpack.c.h.b16 %v4310
    %v4638 = vunpack.c.l.b16 %v4311
    %v4639 = vunpack.c.l.b16 %v4312
    %v4640 = vunpack.c.h.b16 %v4312
    %v4641 = vunpack.c.l.b16 %v4313
    %v4642 = vunpack.c.l.b16 %v4314
    %v4643 = vunpack.c.h.b16 %v4314
    %v4644 = vunpack.c.l.b16 %v4315
    %v4645 = vunpack.c.l.b16 %v4316
    %v4646 = vunpack.c.h.b16 %v4316
    %v4647 = vunpack.c.l.b16 %v4317
    %v4648 = vunpack.c.l.b16 %v4318
    %v4649 = vunpack.c.h.b16 %v4318
    %v4650 = vunpack.c.l.b16 %v4319
    %v4651 = vunpack.c.l.b16 %v4320
    %v4652 = vunpack.c.h.b16 %v4320
    %v4653 = vunpack.c.l.b16 %v4321
    %v4654 = vunpack.c.l.b16 %v4322
    %v4655 = vunpack.c.h.b16 %v4322
    %v4656 = vunpack.c.l.b16 %v4323
    %v4657 = vunpack.c.l.b16 %v4324
    %v4658 = vunpack.c.h.b16 %v4324
    %v4659 = vunpack.c.l.b16 %v4325
    %v4660 = vunpack.c.l.b16 %v4326
    %v4661 = vunpack.c.h.b16 %v4326
    %v4662 = vunpack.c.l.b16 %v4327
    %v4663 = vunpack.c.l.b16 %v4328
    %v4664 = vunpack.c.h.b16 %v4328
    %v4665 = vunpack.c.l.b16 %v4329
    %v4666 = vunpack.c.l.b16 %v4330
    %v4667 = vunpack.c.h.b16 %v4330
    %v4668 = vunpack.c.l.b16 %v4331
    %v4669 = vunpack.c.l.b16 %v4332
    %v4670 = vunpack.c.h.b16 %v4332
    %v4671 = vunpack.c.l.b16 %v4333
    %v4672 = vunpack.c.l.b16 %v4334
    %v4673 = vunpack.c.h.b16 %v4334
    %v4674 = vunpack.c.l.b16 %v4335
    %v4675 = vunpack.c.l.b16 %v4336
    %v4676 = vunpack.c.h.b16 %v4336
    %v4677 = vunpack.c.l.b16 %v4337
    %v4678 = vunpack.c.l.b16 %v4338
    %v4679 = vunpack.c.h.b16 %v4338
    %v4680 = vunpack.c.l.b16 %v4339
    %v4681 = vunpack.c.l.b16 %v4340
    %v4682 = vunpack.c.h.b16 %v4340
    %v4683 = vunpack.c.l.b16 %v4341
    %v4684 = vunpack.c.l.b16 %v4342
    %v4685 = vunpack.c.h.b16 %v4342
    %v4686 = vunpack.c.l.b16 %v4343
    %v4687 = vunpack.c.l.b16 %v4344
    %v4688 = vunpack.c.h.b16 %v4344
    %v4689 = vunpack.c.l.b16 %v4345
    %v4690 = vunpack.c.l.b16 %v4346
    %v4691 = vunpack.c.h.b16 %v4346
    %v4692 = vunpack.c.l.b16 %v4347
    %v4693 = vunpack.c.l.b16 %v4348
    %v4694 = vunpack.c.h.b16 %v4348
    %v4695 = vunpack.c.l.b16 %v4349
    %v4696 = vunpack.c.l.b16 %v4350
    %v4697 = vunpack.c.h.b16 %v4350
    %v4698 = vunpack.c.l.b16 %v4351
    %v4699 = vunpack.c.l.b16 %v4352
    %v4700 = vunpack.c.h.b16 %v4352
    %v4701 = vunpack.c.l.b16 %v4353
    %v4702 = vunpack.c.l.b16 %v4354
    %v4703 = vunpack.c.h.b16 %v4354
    %v4704 = vunpack.c.l.b16 %v4355
    %v4705 = vunpack.c.l.b16 %v4356
    %v4706 = vunpack.c.h.b16 %v4356
    %v4707 = vunpack.c.l.b16 %v4357
    %v4708 = vpack.c.b16 %v4519, %v4516
    %v4709 = vpack.c.b16 %v4520, %v4517
    %v4710 = vpack.c.b16 %v4521, %v4518
    %v4711 = vpack.c.b16 %v4525, %v4522
    %v4712 = vpack.c.b16 %v4526, %v4523
    %v4713 = vpack.c.b16 %v4527, %v4524
    %v4714 = vpack.c.b16 %v4531, %v4528
    %v4715 = vpack.c.b16 %v4532, %v4529
    %v4716 = vpack.c.b16 %v4533, %v4530
    %v4717 = vpack.c.b16 %v4537, %v4534
    %v4718 = vpack.c.b16 %v4538, %v4535
    %v4719 = vpack.c.b16 %v4539, %v4536
    %v4720 = vpack.c.b16 %v4543, %v4540
    %v4721 = vpack.c.b16 %v4544, %v4541
    %v4722 = vpack.c.b16 %v4545, %v4542
    %v4723 = vpack.c.b16 %v4549, %v4546
    %v4724 = vpack.c.b16 %v4550, %v4547
    %v4725 = vpack.c.b16 %v4551, %v4548
    %v4726 = vpack.c.b16 %v4555, %v4552
    %v4727 = vpack.c.b16 %v4556, %v4553
    %v4728 = vpack.c.b16 %v4557, %v4554
    %v4729 = vpack.c.b16 %v4561, %v4558
    %v4730 = vpack.c.b16 %v4562, %v4559
    %v4731 = vpack.c.b16 %v4563, %v4560
    %v4732 = vpack.c.b16 %v4567, %v4564
    %v4733 = vpack.c.b16 %v4568, %v4565
    %v4734 = vpack.c.b16 %v4569, %v4566
    %v4735 = vpack.c.b16 %v4573, %v4570
    %v4736 = vpack.c.b16 %v4574, %v4571
    %v4737 = vpack.c.b16 %v4575, %v4572
    %v4738 = vpack.c.b16 %v4579, %v4576
    %v4739 = vpack.c.b16 %v4580, %v4577
    %v4740 = vpack.c.b16 %v4581, %v4578
    %v4741 = vpack.c.b16 %v4585, %v4582
    %v4742 = vpack.c.b16 %v4586, %v4583
    %v4743 = vpack.c.b16 %v4587, %v4584
    %v4744 = vpack.c.b16 %v4591, %v4588
    %v4745 = vpack.c.b16 %v4592, %v4589
    %v4746 = vpack.c.b16 %v4593, %v4590
    %v4747 = vpack.c.b16 %v4597, %v4594
    %v4748 = vpack.c.b16 %v4598, %v4595
    %v4749 = vpack.c.b16 %v4599, %v4596
    %v4750 = vpack.c.b16 %v4603, %v4600
    %v4751 = vpack.c.b16 %v4604, %v4601
    %v4752 = vpack.c.b16 %v4605, %v4602
    %v4753 = vpack.c.b16 %v4609, %v4606
    %v4754 = vpack.c.b16 %v4610, %v4607
    %v4755 = vpack.c.b16 %v4611, %v4608
    %v4756 = vpack.c.b16 %v4615, %v4612
    %v4757 = vpack.c.b16 %v4616, %v4613
    %v4758 = vpack.c.b16 %v4617, %v4614
    %v4759 = vpack.c.b16 %v4621, %v4618
    %v4760 = vpack.c.b16 %v4622, %v4619
    %v4761 = vpack.c.b16 %v4623, %v4620
    %v4762 = vpack.c.b16 %v4627, %v4624
    %v4763 = vpack.c.b16 %v4628, %v4625
    %v4764 = vpack.c.b16 %v4629, %v4626
    %v4765 = vpack.c.b16 %v4633, %v4630
    %v4766 = vpack.c.b16 %v4634, %v4631
    %v4767 = vpack.c.b16 %v4635, %v4632
    %v4768 = vpack.c.b16 %v4639, %v4636
    %v4769 = vpack.c.b16 %v4640, %v4637
    %v4770 = vpack.c.b16 %v4641, %v4638
    %v4771 = vpack.c.b16 %v4645, %v4642
    %v4772 = vpack.c.b16 %v4646, %v4643
    %v4773 = vpack.c.b16 %v4647, %v4644
    %v4774 = vpack.c.b16 %v4651, %v4648
    %v4775 = vpack.c.b16 %v4652, %v4649
    %v4776 = vpack.c.b16 %v4653, %v4650
    %v4777 = vpack.c.b16 %v4657, %v4654
    %v4778 = vpack.c.b16 %v4658, %v4655
    %v4779 = vpack.c.b16 %v4659, %v4656
    %v4780 = vpack.c.b16 %v4663, %v4660
    %v4781 = vpack.c.b16 %v4664, %v4661
    %v4782 = vpack.c.b16 %v4665, %v4662
    %v4783 = vpack.c.b16 %v4669, %v4666
    %v4784 = vpack.c.b16 %v4670, %v4667
    %v4785 = vpack.c.b16 %v4671, %v4668
    %v4786 = vpack.c.b16 %v4675, %v4672
    %v4787 = vpack.c.b16 %v4676, %v4673
    %v4788 = vpack.c.b16 %v4677, %v4674
    %v4789 = vpack.c.b16 %v4681, %v4678
    %v4790 = vpack.c.b16 %v4682, %v4679
    %v4791 = vpack.c.b16 %v4683, %v4680
    %v4792 = vpack.c.b16 %v4687, %v4684
    %v4793 = vpack.c.b16 %v4688, %v4685
    %v4794 = vpack.c.b16 %v4689, %v4686
    %v4795 = vpack.c.b16 %v4693, %v4690
    %v4796 = vpack.c.b16 %v4694, %v4691
    %v4797 = vpack.c.b16 %v4695, %v4692
    %v4798 = vpack.c.b16 %v4699, %v4696
    %v4799 = vpack.c.b16 %v4700, %v4697
    %v4800 = vpack.c.b16 %v4701, %v4698
    %v4801 = vpack.c.b16 %v4705, %v4702
    %v4802 = vpack.c.b16 %v4706, %v4703
    %v4803 = vpack.c.b16 %v4707, %v4704
    %4900 = vmatprep.subr.bf16.mxu0 %v4730
    %4901 = vmatpush1.bf16.msra.mxu0 %v4729
    %4902 = vmatprep.subr.bf16.mxu0 %v4727
    %4903 = vmatpush1.bf16.msra.mxu0 %v4726
    %4904 = vmatprep.subr.bf16.mxu0 %v4724
    %4905 = vmatpush1.bf16.msra.mxu0 %v4723
    %4906 = vmatprep.subr.bf16.mxu0 %v4721
    %4907 = vmatpush1.bf16.msra.mxu0 %v4720
    %4908 = vmatprep.subr.bf16.mxu0 %v4718
    %4909 = vmatpush1.bf16.msra.mxu0 %v4717
    %4910 = vmatprep.subr.bf16.mxu0 %v4715
    %4911 = vmatpush1.bf16.msra.mxu0 %v4714
    %4912 = vmatprep.subr.bf16.mxu0 %v4712
    %4913 = vmatpush1.bf16.msra.mxu0 %v4711
    %4914 = vmatprep.subr.bf16.mxu0 %v4709
    %4915 = vmatpush1.bf16.msra.mxu0 %v4708
    %4916 = vmatprep.subr.bf16.mxu0 %v4754
    %4917 = vmatpush2.bf16.msra.mxu0 %v4753
    %4918 = vmatprep.subr.bf16.mxu0 %v4751
    %4919 = vmatpush2.bf16.msra.mxu0 %v4750
    %4920 = vmatprep.subr.bf16.mxu0 %v4748
    %4921 = vmatpush2.bf16.msra.mxu0 %v4747
    %4922 = vmatprep.subr.bf16.mxu0 %v4745
    %4923 = vmatpush2.bf16.msra.mxu0 %v4744
    %4924 = vmatprep.subr.bf16.mxu0 %v4742
    %4925 = vmatpush2.bf16.msra.mxu0 %v4741
    %4926 = vmatprep.subr.bf16.mxu0 %v4739
    %4927 = vmatpush2.bf16.msra.mxu0 %v4738
    %4928 = vmatprep.subr.bf16.mxu0 %v4736
    %4929 = vmatpush2.bf16.msra.mxu0 %v4735
    %4930 = vmatprep.subr.bf16.mxu0 %v4733
    %4931 = vmatpush2.bf16.msra.mxu0 %v4732
    %4932 = vmatprep.mubr.bf16.mxu0 %v4227
    %4933 = vmatmul.mubr.bf16.gmra.mxu0 %v4226
    %v4934 = vpop.f32.mrf.mxu0
    %v4935 = vadd.f32 %v4379, %v4934
    %v4936 = vpop.f32.mrf.mxu0
    %v4937 = vadd.f32 %v4383, %v4936
    %v4938 = vpop.f32.mrf.mxu0
    %v4939 = vpop.f32.mrf.mxu0
    %4940 = vdwg.mxu0
    %4941 = vmatprep.subr.bf16.mxu0 %v4778
    %4942 = vmatpush1.bf16.msra.mxu0 %v4777
    %4943 = vmatprep.subr.bf16.mxu0 %v4775
    %4944 = vmatpush1.bf16.msra.mxu0 %v4774
    %4945 = vmatprep.subr.bf16.mxu0 %v4772
    %4946 = vmatpush1.bf16.msra.mxu0 %v4771
    %4947 = vmatprep.subr.bf16.mxu0 %v4769
    %4948 = vmatpush1.bf16.msra.mxu0 %v4768
    %4949 = vmatprep.subr.bf16.mxu0 %v4766
    %4950 = vmatpush1.bf16.msra.mxu0 %v4765
    %4951 = vmatprep.subr.bf16.mxu0 %v4763
    %4952 = vmatpush1.bf16.msra.mxu0 %v4762
    %4953 = vmatprep.subr.bf16.mxu0 %v4760
    %4954 = vmatpush1.bf16.msra.mxu0 %v4759
    %4955 = vmatprep.subr.bf16.mxu0 %v4757
    %4956 = vmatpush1.bf16.msra.mxu0 %v4756
    %4957 = vmatprep.subr.bf16.mxu0 %v4802
    %4958 = vmatpush2.bf16.msra.mxu0 %v4801
    %4959 = vmatprep.subr.bf16.mxu0 %v4799
    %4960 = vmatpush2.bf16.msra.mxu0 %v4798
    %4961 = vmatprep.subr.bf16.mxu0 %v4796
    %4962 = vmatpush2.bf16.msra.mxu0 %v4795
    %4963 = vmatprep.subr.bf16.mxu0 %v4793
    %4964 = vmatpush2.bf16.msra.mxu0 %v4792
    %4965 = vmatprep.subr.bf16.mxu0 %v4790
    %4966 = vmatpush2.bf16.msra.mxu0 %v4789
    %4967 = vmatprep.subr.bf16.mxu0 %v4787
    %4968 = vmatpush2.bf16.msra.mxu0 %v4786
    %4969 = vmatprep.subr.bf16.mxu0 %v4784
    %4970 = vmatpush2.bf16.msra.mxu0 %v4783
    %4971 = vmatprep.subr.bf16.mxu0 %v4781
    %4972 = vmatpush2.bf16.msra.mxu0 %v4780
    %4973 = vmatprep.mubr.bf16.mxu0 %v4229
    %4974 = vmatmul.mubr.bf16.gmra.mxu0 %v4228
    %v4975 = vpop.f32.mrf.mxu0
    %v4976 = vadd.f32 %v4935, %v4975
    %v4977 = vpop.f32.mrf.mxu0
    %v4978 = vadd.f32 %v4937, %v4977
    %v4979 = vpop.f32.mrf.mxu0
    %v4980 = vpop.f32.mrf.mxu0
    %4981 = vdwg.mxu0
    %4982 = vmatprep.subr.bf16.mxu0 0
    %4983 = vmatpush1.bf16.msra.mxu0 %v4731
    %4984 = vmatprep.subr.bf16.mxu0 0
    %4985 = vmatpush1.bf16.msra.mxu0 %v4728
    %4986 = vmatprep.subr.bf16.mxu0 0
    %4987 = vmatpush1.bf16.msra.mxu0 %v4725
    %4988 = vmatprep.subr.bf16.mxu0 0
    %4989 = vmatpush1.bf16.msra.mxu0 %v4722
    %4990 = vmatprep.subr.bf16.mxu0 0
    %4991 = vmatpush1.bf16.msra.mxu0 %v4719
    %4992 = vmatprep.subr.bf16.mxu0 0
    %4993 = vmatpush1.bf16.msra.mxu0 %v4716
    %4994 = vmatprep.subr.bf16.mxu0 0
    %4995 = vmatpush1.bf16.msra.mxu0 %v4713
    %4996 = vmatprep.subr.bf16.mxu0 0
    %4997 = vmatpush1.bf16.msra.mxu0 %v4710
    %4998 = vmatprep.subr.bf16.mxu0 0
    %4999 = vmatpush2.bf16.msra.mxu0 %v4755
    %5000 = vmatprep.subr.bf16.mxu0 0
    %5001 = vmatpush2.bf16.msra.mxu0 %v4752
    %5002 = vmatprep.subr.bf16.mxu0 0
    %5003 = vmatpush2.bf16.msra.mxu0 %v4749
    %5004 = vmatprep.subr.bf16.mxu0 0
    %5005 = vmatpush2.bf16.msra.mxu0 %v4746
    %5006 = vmatprep.subr.bf16.mxu0 0
    %5007 = vmatpush2.bf16.msra.mxu0 %v4743
    %5008 = vmatprep.subr.bf16.mxu0 0
    %5009 = vmatpush2.bf16.msra.mxu0 %v4740
    %5010 = vmatprep.subr.bf16.mxu0 0
    %5011 = vmatpush2.bf16.msra.mxu0 %v4737
    %5012 = vmatprep.subr.bf16.mxu0 0
    %5013 = vmatpush2.bf16.msra.mxu0 %v4734
    %5014 = vmatprep.mubr.bf16.mxu0 %v4227
    %5015 = vmatmul.mubr.bf16.gmra.mxu0 %v4226
    %v5016 = vpop.f32.mrf.mxu0
    %v5017 = vadd.f32 %v4387, %v5016
    %v5018 = vpop.f32.mrf.mxu0
    %v5019 = vpop.f32.mrf.mxu0
    %v5020 = vpop.f32.mrf.mxu0
    %5021 = vdwg.mxu0
    %5022 = vmatprep.subr.bf16.mxu0 0
    %5023 = vmatpush1.bf16.msra.mxu0 %v4779
    %5024 = vmatprep.subr.bf16.mxu0 0
    %5025 = vmatpush1.bf16.msra.mxu0 %v4776
    %5026 = vmatprep.subr.bf16.mxu0 0
    %5027 = vmatpush1.bf16.msra.mxu0 %v4773
    %5028 = vmatprep.subr.bf16.mxu0 0
    %5029 = vmatpush1.bf16.msra.mxu0 %v4770
    %5030 = vmatprep.subr.bf16.mxu0 0
    %5031 = vmatpush1.bf16.msra.mxu0 %v4767
    %5032 = vmatprep.subr.bf16.mxu0 0
    %5033 = vmatpush1.bf16.msra.mxu0 %v4764
    %5034 = vmatprep.subr.bf16.mxu0 0
    %5035 = vmatpush1.bf16.msra.mxu0 %v4761
    %5036 = vmatprep.subr.bf16.mxu0 0
    %5037 = vmatpush1.bf16.msra.mxu0 %v4758
    %5038 = vmatprep.subr.bf16.mxu0 0
    %5039 = vmatpush2.bf16.msra.mxu0 %v4803
    %5040 = vmatprep.subr.bf16.mxu0 0
    %5041 = vmatpush2.bf16.msra.mxu0 %v4800
    %5042 = vmatprep.subr.bf16.mxu0 0
    %5043 = vmatpush2.bf16.msra.mxu0 %v4797
    %5044 = vmatprep.subr.bf16.mxu0 0
    %5045 = vmatpush2.bf16.msra.mxu0 %v4794
    %5046 = vmatprep.subr.bf16.mxu0 0
    %5047 = vmatpush2.bf16.msra.mxu0 %v4791
    %5048 = vmatprep.subr.bf16.mxu0 0
    %5049 = vmatpush2.bf16.msra.mxu0 %v4788
    %5050 = vmatprep.subr.bf16.mxu0 0
    %5051 = vmatpush2.bf16.msra.mxu0 %v4785
    %5052 = vmatprep.subr.bf16.mxu0 0
    %5053 = vmatpush2.bf16.msra.mxu0 %v4782
    %5054 = vmatprep.mubr.bf16.mxu0 %v4229
    %5055 = vmatmul.mubr.bf16.gmra.mxu0 %v4228
    %v5056 = vpop.f32.mrf.mxu0
    %v5057 = vadd.f32 %v5017, %v5056
    %v5058 = vpop.f32.mrf.mxu0
    %v5059 = vpop.f32.mrf.mxu0
    %v5060 = vpop.f32.mrf.mxu0
    %5061 = vdwg.mxu0
    %v5062 = vmax.f32 %v4976, 0.0
    %v5063 = vmax.f32 %v4978, 0.0
    %v5064 = vmax.f32 %v5057, 0.0
    %v5065 = vpack.c.bf16 %v5062, %v5062
    %v5066 = vpack.c.bf16 %v5063, %v5063
    %v5067 = vpack.c.bf16 %v5064, %v5064
    %v5068 = vld [vmem:[#allocation14] sm:$0xf]
    %v5069 = vld [vmem:[#allocation14 + $0x4] sm:$0xf]
    %v5070 = vld [vmem:[#allocation14 + $0x8] sm:$0xf]
    %v5071 = vld [vmem:[#allocation14 + $0xc] sm:$0xf]
    %v5072 = vld [vmem:[#allocation14 + $0x10] sm:$0xf]
    %v5073 = vld [vmem:[#allocation14 + $0x14] sm:$0xf]
    %v5074 = vld [vmem:[#allocation14 + $0x18] sm:$0xf]
    %v5075 = vld [vmem:[#allocation14 + $0x1c] sm:$0xf]
    %v5076 = vld [vmem:[#allocation14 + $0x20] sm:$0xf]
    %v5077 = vld [vmem:[#allocation14 + $0x24] sm:$0xf]
    %v5078 = vld [vmem:[#allocation14 + $0x28] sm:$0xf]
    %v5079 = vld [vmem:[#allocation14 + $0x2c] sm:$0xf]
    %v5080 = vld [vmem:[#allocation14 + $0x30] sm:$0xf]
    %v5081 = vld [vmem:[#allocation14 + $0x34] sm:$0xf]
    %v5082 = vld [vmem:[#allocation14 + $0x38] sm:$0xf]
    %v5083 = vld [vmem:[#allocation14 + $0x3c] sm:$0xf]
    %v5084 = vld [vmem:[#allocation14 + $0x40] sm:$0xf]
    %v5085 = vld [vmem:[#allocation14 + $0x44] sm:$0xf]
    %v5086 = vld [vmem:[#allocation14 + $0x48] sm:$0xf]
    %v5087 = vld [vmem:[#allocation14 + $0x4c] sm:$0xf]
    %v5088 = vld [vmem:[#allocation14 + $0x50] sm:$0xf]
    %v5089 = vld [vmem:[#allocation14 + $0x54] sm:$0xf]
    %v5090 = vld [vmem:[#allocation14 + $0x58] sm:$0xf]
    %v5091 = vld [vmem:[#allocation14 + $0x5c] sm:$0xf]
    %v5092 = vld [vmem:[#allocation14 + $0x60] sm:$0xf]
    %v5093 = vld [vmem:[#allocation14 + $0x64] sm:$0xf]
    %v5094 = vld [vmem:[#allocation14 + $0x68] sm:$0xf]
    %v5095 = vld [vmem:[#allocation14 + $0x6c] sm:$0xf]
    %v5096 = vld [vmem:[#allocation14 + $0x70] sm:$0xf]
    %v5097 = vld [vmem:[#allocation14 + $0x74] sm:$0xf]
    %v5098 = vld [vmem:[#allocation14 + $0x78] sm:$0xf]
    %v5099 = vld [vmem:[#allocation14 + $0x7c] sm:$0xf]
    %v5100 = vld [vmem:[#allocation14 + $0x80] sm:$0xf]
    %v5101 = vld [vmem:[#allocation14 + $0x84] sm:$0xf]
    %v5102 = vld [vmem:[#allocation14 + $0x88] sm:$0xf]
    %v5103 = vld [vmem:[#allocation14 + $0x8c] sm:$0xf]
    %v5104 = vld [vmem:[#allocation14 + $0x90] sm:$0xf]
    %v5105 = vld [vmem:[#allocation14 + $0x94] sm:$0xf]
    %v5106 = vld [vmem:[#allocation14 + $0x98] sm:$0xf]
    %v5107 = vld [vmem:[#allocation14 + $0x9c] sm:$0xf]
    %v5108 = vld [vmem:[#allocation14 + $0xa0] sm:$0xf]
    %v5109 = vld [vmem:[#allocation14 + $0xa4] sm:$0xf]
    %v5110 = vld [vmem:[#allocation14 + $0xa8] sm:$0xf]
    %v5111 = vld [vmem:[#allocation14 + $0xac] sm:$0xf]
    %v5112 = vld [vmem:[#allocation14 + $0xb0] sm:$0xf]
    %v5113 = vld [vmem:[#allocation14 + $0xb4] sm:$0xf]
    %v5114 = vld [vmem:[#allocation14 + $0xb8] sm:$0xf]
    %v5115 = vld [vmem:[#allocation14 + $0xbc] sm:$0xf]
    %v5116 = vld [vmem:[#allocation16] sm:$0x1]
    %v5117 = vunpack.c.l.bf16 %v5116
    %v5118 = vlaneseq
    %v5119 = vshrl.u32 %v5118, 7
    %v5120 = vsub.s32 0, %v5119
    %v5121 = vrot.slane %v5117, %v5120
    %v5170 = vunpack.c.l.b16 %v5068
    %v5171 = vunpack.c.l.b16 %v5069
    %v5172 = vunpack.c.l.b16 %v5070
    %v5173 = vunpack.c.l.b16 %v5071
    %v5174 = vunpack.c.l.b16 %v5072
    %v5175 = vunpack.c.l.b16 %v5073
    %v5176 = vunpack.c.l.b16 %v5074
    %v5177 = vunpack.c.l.b16 %v5075
    %v5178 = vunpack.c.l.b16 %v5076
    %v5179 = vunpack.c.l.b16 %v5077
    %v5180 = vunpack.c.l.b16 %v5078
    %v5181 = vunpack.c.l.b16 %v5079
    %v5182 = vunpack.c.l.b16 %v5080
    %v5183 = vunpack.c.l.b16 %v5081
    %v5184 = vunpack.c.l.b16 %v5082
    %v5185 = vunpack.c.l.b16 %v5083
    %v5186 = vunpack.c.l.b16 %v5084
    %v5187 = vunpack.c.l.b16 %v5085
    %v5188 = vunpack.c.l.b16 %v5086
    %v5189 = vunpack.c.l.b16 %v5087
    %v5190 = vunpack.c.l.b16 %v5088
    %v5191 = vunpack.c.l.b16 %v5089
    %v5192 = vunpack.c.l.b16 %v5090
    %v5193 = vunpack.c.l.b16 %v5091
    %v5194 = vunpack.c.l.b16 %v5092
    %v5195 = vunpack.c.l.b16 %v5093
    %v5196 = vunpack.c.l.b16 %v5094
    %v5197 = vunpack.c.l.b16 %v5095
    %v5198 = vunpack.c.l.b16 %v5096
    %v5199 = vunpack.c.l.b16 %v5097
    %v5200 = vunpack.c.l.b16 %v5098
    %v5201 = vunpack.c.l.b16 %v5099
    %v5202 = vunpack.c.l.b16 %v5100
    %v5203 = vunpack.c.l.b16 %v5101
    %v5204 = vunpack.c.l.b16 %v5102
    %v5205 = vunpack.c.l.b16 %v5103
    %v5206 = vunpack.c.l.b16 %v5104
    %v5207 = vunpack.c.l.b16 %v5105
    %v5208 = vunpack.c.l.b16 %v5106
    %v5209 = vunpack.c.l.b16 %v5107
    %v5210 = vunpack.c.l.b16 %v5108
    %v5211 = vunpack.c.l.b16 %v5109
    %v5212 = vunpack.c.l.b16 %v5110
    %v5213 = vunpack.c.l.b16 %v5111
    %v5214 = vunpack.c.l.b16 %v5112
    %v5215 = vunpack.c.l.b16 %v5113
    %v5216 = vunpack.c.l.b16 %v5114
    %v5217 = vunpack.c.l.b16 %v5115
    %v5218 = vpack.c.b16 %v5171, %v5170
    %v5219 = vpack.c.b16 %v5173, %v5172
    %v5220 = vpack.c.b16 %v5175, %v5174
    %v5221 = vpack.c.b16 %v5177, %v5176
    %v5222 = vpack.c.b16 %v5179, %v5178
    %v5223 = vpack.c.b16 %v5181, %v5180
    %v5224 = vpack.c.b16 %v5183, %v5182
    %v5225 = vpack.c.b16 %v5185, %v5184
    %v5226 = vpack.c.b16 %v5187, %v5186
    %v5227 = vpack.c.b16 %v5189, %v5188
    %v5228 = vpack.c.b16 %v5191, %v5190
    %v5229 = vpack.c.b16 %v5193, %v5192
    %v5230 = vpack.c.b16 %v5195, %v5194
    %v5231 = vpack.c.b16 %v5197, %v5196
    %v5232 = vpack.c.b16 %v5199, %v5198
    %v5233 = vpack.c.b16 %v5201, %v5200
    %v5234 = vpack.c.b16 %v5203, %v5202
    %v5235 = vpack.c.b16 %v5205, %v5204
    %v5236 = vpack.c.b16 %v5207, %v5206
    %v5237 = vpack.c.b16 %v5209, %v5208
    %v5238 = vpack.c.b16 %v5211, %v5210
    %v5239 = vpack.c.b16 %v5213, %v5212
    %v5240 = vpack.c.b16 %v5215, %v5214
    %v5241 = vpack.c.b16 %v5217, %v5216
    %5266 = vmatprep.subr.bf16.mxu0 0
    %5267 = vmatpush1.bf16.msra.mxu0 %v5225
    %5268 = vmatprep.subr.bf16.mxu0 0
    %5269 = vmatpush1.bf16.msra.mxu0 %v5224
    %5270 = vmatprep.subr.bf16.mxu0 0
    %5271 = vmatpush1.bf16.msra.mxu0 %v5223
    %5272 = vmatprep.subr.bf16.mxu0 0
    %5273 = vmatpush1.bf16.msra.mxu0 %v5222
    %5274 = vmatprep.subr.bf16.mxu0 0
    %5275 = vmatpush1.bf16.msra.mxu0 %v5221
    %5276 = vmatprep.subr.bf16.mxu0 0
    %5277 = vmatpush1.bf16.msra.mxu0 %v5220
    %5278 = vmatprep.subr.bf16.mxu0 0
    %5279 = vmatpush1.bf16.msra.mxu0 %v5219
    %5280 = vmatprep.subr.bf16.mxu0 0
    %5281 = vmatpush1.bf16.msra.mxu0 %v5218
    %5282 = vmatprep.subr.bf16.mxu0 0
    %5283 = vmatpush2.bf16.msra.mxu0 %v5233
    %5284 = vmatprep.subr.bf16.mxu0 0
    %5285 = vmatpush2.bf16.msra.mxu0 %v5232
    %5286 = vmatprep.subr.bf16.mxu0 0
    %5287 = vmatpush2.bf16.msra.mxu0 %v5231
    %5288 = vmatprep.subr.bf16.mxu0 0
    %5289 = vmatpush2.bf16.msra.mxu0 %v5230
    %5290 = vmatprep.subr.bf16.mxu0 0
    %5291 = vmatpush2.bf16.msra.mxu0 %v5229
    %5292 = vmatprep.subr.bf16.mxu0 0
    %5293 = vmatpush2.bf16.msra.mxu0 %v5228
    %5294 = vmatprep.subr.bf16.mxu0 0
    %5295 = vmatpush2.bf16.msra.mxu0 %v5227
    %5296 = vmatprep.subr.bf16.mxu0 0
    %5297 = vmatpush2.bf16.msra.mxu0 %v5226
    %5298 = vmatprep.mubr.bf16.mxu0 %v5066
    %5299 = vmatmul.mubr.bf16.gmra.mxu0 %v5065
    %v5300 = vpop.f32.mrf.mxu0
    %v5301 = vadd.f32 %v5121, %v5300
    %v5302 = vpop.f32.mrf.mxu0
    %v5303 = vpop.f32.mrf.mxu0
    %v5304 = vpop.f32.mrf.mxu0
    %5305 = vdwg.mxu0
    %5306 = vmatprep.subr.bf16.mxu0 0
    %5307 = vmatpush1.bf16.msra.mxu0 %v5241
    %5308 = vmatprep.subr.bf16.mxu0 0
    %5309 = vmatpush1.bf16.msra.mxu0 %v5240
    %5310 = vmatprep.subr.bf16.mxu0 0
    %5311 = vmatpush1.bf16.msra.mxu0 %v5239
    %5312 = vmatprep.subr.bf16.mxu0 0
    %5313 = vmatpush1.bf16.msra.mxu0 %v5238
    %5314 = vmatprep.subr.bf16.mxu0 0
    %5315 = vmatpush1.bf16.msra.mxu0 %v5237
    %5316 = vmatprep.subr.bf16.mxu0 0
    %5317 = vmatpush1.bf16.msra.mxu0 %v5236
    %5318 = vmatprep.subr.bf16.mxu0 0
    %5319 = vmatpush1.bf16.msra.mxu0 %v5235
    %5320 = vmatprep.subr.bf16.mxu0 0
    %5321 = vmatpush1.bf16.msra.mxu0 %v5234
    %5322 = vmatprep.subr.bf16.mxu0 0
    %5323 = vmatpush2.bf16.msra.mxu0 0
    %5324 = vmatprep.subr.bf16.mxu0 0
    %5325 = vmatpush2.bf16.msra.mxu0 0
    %5326 = vmatprep.subr.bf16.mxu0 0
    %5327 = vmatpush2.bf16.msra.mxu0 0
    %5328 = vmatprep.subr.bf16.mxu0 0
    %5329 = vmatpush2.bf16.msra.mxu0 0
    %5330 = vmatprep.subr.bf16.mxu0 0
    %5331 = vmatpush2.bf16.msra.mxu0 0
    %5332 = vmatprep.subr.bf16.mxu0 0
    %5333 = vmatpush2.bf16.msra.mxu0 0
    %5334 = vmatprep.subr.bf16.mxu0 0
    %5335 = vmatpush2.bf16.msra.mxu0 0
    %5336 = vmatprep.subr.bf16.mxu0 0
    %5337 = vmatpush2.bf16.msra.mxu0 0
    %5338 = vmatprep.mubr.bf16.mxu0 0
    %5339 = vmatmul.mubr.bf16.gmra.mxu0 %v5067
    %v5340 = vpop.f32.mrf.mxu0
    %v5341 = vadd.f32 %v5301, %v5340
    %v5342 = vpop.f32.mrf.mxu0
    %v5343 = vpop.f32.mrf.mxu0
    %v5344 = vpop.f32.mrf.mxu0
    %5345 = vdwg.mxu0
    %v5346 = vmax.f32 %v5341, 0.0
    %v5347 = vpack.c.bf16 %v5346, %v5346
    %v5348 = vld [vmem:[#allocation17] sm:$0xf]
    %v5349 = vld [vmem:[#allocation17 + $0x4] sm:$0xf]
    %v5350 = vld [vmem:[#allocation17 + $0x8] sm:$0xf]
    %v5351 = vld [vmem:[#allocation17 + $0xc] sm:$0xf]
    %v5352 = vld [vmem:[#allocation17 + $0x10] sm:$0xf]
    %v5353 = vld [vmem:[#allocation17 + $0x14] sm:$0xf]
    %v5354 = vld [vmem:[#allocation17 + $0x18] sm:$0xf]
    %v5355 = vld [vmem:[#allocation17 + $0x1c] sm:$0xf]
    %v5356 = vld [vmem:[#allocation17 + $0x20] sm:$0xf]
    %v5357 = vld [vmem:[#allocation17 + $0x24] sm:$0xf]
    %v5358 = vld [vmem:[#allocation17 + $0x28] sm:$0xf]
    %v5359 = vld [vmem:[#allocation17 + $0x2c] sm:$0xf]
    %v5360 = vld [vmem:[#allocation17 + $0x30] sm:$0xf]
    %v5361 = vld [vmem:[#allocation17 + $0x34] sm:$0xf]
    %v5362 = vld [vmem:[#allocation17 + $0x38] sm:$0xf]
    %v5363 = vld [vmem:[#allocation17 + $0x3c] sm:$0xf]
    %v5364 = vld [vmem:[#allocation19] sm:$0x1]
    %v5365 = vunpack.c.l.bf16 %v5364
    %v5366 = vlaneseq
    %v5367 = vshrl.u32 %v5366, 7
    %v5368 = vsub.s32 0, %v5367
    %v5369 = vrot.slane %v5365, %v5368
    %v5386 = vunpack.c.l.b16 %v5348
    %v5387 = vunpack.c.l.b16 %v5349
    %v5388 = vunpack.c.l.b16 %v5350
    %v5389 = vunpack.c.l.b16 %v5351
    %v5390 = vunpack.c.l.b16 %v5352
    %v5391 = vunpack.c.l.b16 %v5353
    %v5392 = vunpack.c.l.b16 %v5354
    %v5393 = vunpack.c.l.b16 %v5355
    %v5394 = vunpack.c.l.b16 %v5356
    %v5395 = vunpack.c.l.b16 %v5357
    %v5396 = vunpack.c.l.b16 %v5358
    %v5397 = vunpack.c.l.b16 %v5359
    %v5398 = vunpack.c.l.b16 %v5360
    %v5399 = vunpack.c.l.b16 %v5361
    %v5400 = vunpack.c.l.b16 %v5362
    %v5401 = vunpack.c.l.b16 %v5363
    %v5402 = vpack.c.b16 %v5387, %v5386
    %v5403 = vpack.c.b16 %v5389, %v5388
    %v5404 = vpack.c.b16 %v5391, %v5390
    %v5405 = vpack.c.b16 %v5393, %v5392
    %v5406 = vpack.c.b16 %v5395, %v5394
    %v5407 = vpack.c.b16 %v5397, %v5396
    %v5408 = vpack.c.b16 %v5399, %v5398
    %v5409 = vpack.c.b16 %v5401, %v5400
    %5418 = vmatprep.subr.bf16.mxu0 0
    %5419 = vmatpush1.bf16.msra.mxu0 %v5409
    %5420 = vmatprep.subr.bf16.mxu0 0
    %5421 = vmatpush1.bf16.msra.mxu0 %v5408
    %5422 = vmatprep.subr.bf16.mxu0 0
    %5423 = vmatpush1.bf16.msra.mxu0 %v5407
    %5424 = vmatprep.subr.bf16.mxu0 0
    %5425 = vmatpush1.bf16.msra.mxu0 %v5406
    %5426 = vmatprep.subr.bf16.mxu0 0
    %5427 = vmatpush1.bf16.msra.mxu0 %v5405
    %5428 = vmatprep.subr.bf16.mxu0 0
    %5429 = vmatpush1.bf16.msra.mxu0 %v5404
    %5430 = vmatprep.subr.bf16.mxu0 0
    %5431 = vmatpush1.bf16.msra.mxu0 %v5403
    %5432 = vmatprep.subr.bf16.mxu0 0
    %5433 = vmatpush1.bf16.msra.mxu0 %v5402
    %5434 = vmatprep.subr.bf16.mxu0 0
    %5435 = vmatpush2.bf16.msra.mxu0 0
    %5436 = vmatprep.subr.bf16.mxu0 0
    %5437 = vmatpush2.bf16.msra.mxu0 0
    %5438 = vmatprep.subr.bf16.mxu0 0
    %5439 = vmatpush2.bf16.msra.mxu0 0
    %5440 = vmatprep.subr.bf16.mxu0 0
    %5441 = vmatpush2.bf16.msra.mxu0 0
    %5442 = vmatprep.subr.bf16.mxu0 0
    %5443 = vmatpush2.bf16.msra.mxu0 0
    %5444 = vmatprep.subr.bf16.mxu0 0
    %5445 = vmatpush2.bf16.msra.mxu0 0
    %5446 = vmatprep.subr.bf16.mxu0 0
    %5447 = vmatpush2.bf16.msra.mxu0 0
    %5448 = vmatprep.subr.bf16.mxu0 0
    %5449 = vmatpush2.bf16.msra.mxu0 0
    %5450 = vmatprep.mubr.bf16.mxu0 0
    %5451 = vmatmul.mubr.bf16.gmra.mxu0 %v5347
    %v5452 = vpop.f32.mrf.mxu0
    %v5453 = vadd.f32 %v5369, %v5452
    %v5454 = vpop.f32.mrf.mxu0
    %v5455 = vpop.f32.mrf.mxu0
    %v5456 = vpop.f32.mrf.mxu0
    %5457 = vdwg.mxu0
    %5458 = vst [vmem:[#allocation20] sm:$0xff] %v5453
    // Predicated region
    $region90: #{tpu_custom_call.1} parent=1 // pred_check
      _
    $region91: #{tpu_custom_call.1} parent=1 // pred_check_branch
      %5460 = sbr.rel (0) target = $region93
    $region92: #{tpu_custom_call.1} parent=1 // pred_region
      %s5462 = ssub.s32 128, 128
      %5463 = vsyncadd [#allocation4], %s5462
      %s5465 = sshll.u32 [#allocation20], 4
      %s5466 = int_to_ptr.vmem [resolvable:$true] %s5465
      %5468 = dma.vmem_to_hbm [thread:$0]  %s5466, 128, %s11, [#allocation4]
    $region93: #{tpu_custom_call.1} parent=1 // pred_fallthru
      _
    // Predicated region
    $region94: #{tpu_custom_call.1} parent=1 // pred_check
      _
    $region95: #{tpu_custom_call.1} parent=1 // pred_check_branch
      %5470 = sbr.rel (0) target = $region97
    $region96: #{tpu_custom_call.1} parent=1 // pred_region
      %5471 = dma.done [#allocation4], 128
    $region97: #{tpu_custom_call.1} parent=1 // pred_fallthru
      _
    %5472 = vsyncpa [#allocation3], 1
    %5473 = vsyncpa [#allocation6], 1
    %5474 = vsyncpa [#allocation9], 1
    %5475 = vsyncpa [#allocation12], 1
    %5476 = vsyncpa [#allocation15], 1
    %5477 = vsyncpa [#allocation18], 1
    %5478 = vsyncpa [#allocation4], 1

</llo_original>
